<compile_context>
chip_gen: v7x
topology: tpu7x:2x2x1
jax: 0.10.0
libtpu: 0.0.40
codegen_flags: <defaults>
</compile_context>

<pallas_src>
import functools

import jax
import jax.numpy as jnp
from jax.experimental import pallas as pl
from jax.experimental.pallas import tpu as pltpu


def _round_up(x, m):
    return (x + m - 1) // m * m


# squeezenet1_1 fire configs: (in_ch, squeeze, expand1x1, expand3x3)
_FIRE_CFG = [
    (64, 16, 64, 64), (128, 16, 64, 64),
    (128, 32, 128, 128), (256, 32, 128, 128),
    (256, 48, 192, 192), (384, 48, 192, 192),
    (384, 64, 256, 256), (512, 64, 256, 256),
]

_A_KEYS = ('f0.sq.w', 'f0.sq.b', 'f0.ex.w', 'f0.ex.b',
           'f1.sq.w', 'f1.sq.b', 'f1.ex.w', 'f1.ex.b')
_B_KEYS = tuple(f'f{i}.{n}' for i in range(2, 8)
                for n in ('sq.w', 'sq.b', 'ex.w', 'ex.b')) + ('cls.w', 'cls.b')


# ----------------------------- geometry helpers -----------------------------

def _fire_geometry(h, w):
    # Zero-padded (h+2, w+2) spatial map flattened row-major; the fire expand writes the
    # "wide" rows c0 .. c0+l_out-1 (h rows of width w+2, 2 junk columns per row).
    hp, wp = h + 2, w + 2
    c0 = wp + 1
    l_out = h * wp
    l_in = _round_up(hp * wp + 2, 8)            # +2 keeps the last tap slice in bounds
    return dict(hp=hp, wp=wp, c0=c0, l_out=l_out, l_in=l_in)


def _interior_mask(h, w):
    # (l_in, 1) f32 mask: 1 inside the original HxW, 0 on padding / tail rows.
    g = _fire_geometry(h, w)
    wp = g['wp']
    r = jnp.arange(g['l_in'])
    m = ((r // wp >= 1) & (r // wp <= h) & (r % wp >= 1) & (r % wp <= w))
    return m.astype(jnp.float32).reshape(g['l_in'], 1)


def _to_padded_rows(x, g):
    # NHWC -> zero-padded flattened (N, l_in, C) bf16 layout the fire kernels consume.
    n, h, w, c = x.shape
    xp = jnp.pad(x, ((0, 0), (1, 1), (1, 1), (0, 0))).reshape(n, g['hp'] * g['wp'], c)
    xp = jnp.pad(xp, ((0, 0), (0, g['l_in'] - g['hp'] * g['wp']), (0, 0)))
    return xp.astype(jnp.bfloat16)


def _rep2d(arr):
    # Whole-array (replicated across the batch grid) BlockSpec for a 2-D weight/bias.
    return pl.BlockSpec(arr.shape, lambda b: (0, 0))


# ----------------------------- Pallas kernels ------------------------------

def _gemm_bias_relu_kernel(x_ref, w_ref, b_ref, o_ref):
    # (TM, K) bf16 @ (K, Np) bf16 -> f32 acc, +bias, ReLU, bf16 store.
    acc = jnp.dot(x_ref[...], w_ref[...], preferred_element_type=jnp.float32)
    o_ref[...] = jnp.maximum(acc + b_ref[...], 0.0).astype(o_ref.dtype)


def _fire_block(x, m, wsq, bsq, wex, bex, wp, l_out):
    """One Fire module on a flattened zero-padded map held entirely in VMEM.

    x   : (l_in, Cin)   map (any garbage on padding rows is neutralized by `m`)
    m   : (l_in, 1)     interior mask
    wsq : (Cin, S)      squeeze weights (bf16)
    wex : (9*S, E1+E3)  merged expand weights: expand1x1 in the center-tap rows of the
                        first E1 columns, expand3x3 (tap-major) in the last E3 columns.
    Returns the "wide" (l_out, E1+E3) f32 ReLU'd expand output.
    """
    x = x.astype(jnp.bfloat16)
    s = jnp.dot(x, wsq, preferred_element_type=jnp.float32)
    # Mask AFTER the ReLU so the 3x3 taps see true zero padding (relu(bias) != 0 there).
    s = (jnp.maximum(s + bsq, 0.0) * m).astype(jnp.bfloat16)        # (l_in, S)
    # Gather the 9 shifted slices into one (l_out, 9*S) buffer -> ONE K-stacked matmul
    # instead of 9 shallow ones (review item: fill the MXU contraction depth).
    taps = jnp.concatenate(
        [s[(t // 3) * wp + (t % 3): (t // 3) * wp + (t % 3) + l_out, :] for t in range(9)],
        axis=-1)                                                    # (l_out, 9*S)
    e = jnp.dot(taps, wex, preferred_element_type=jnp.float32)
    return jnp.maximum(e + bex, 0.0)                                # (l_out, E1+E3) f32


def _fires_77_kernel(x_ref, m_ref,
                     w0s, b0s, w0e, b0e,
                     w1s, b1s, w1e, b1e,
                     o_ref, buf_ref, *, wp, l_out, c0):
    # fire0 + fire1 on a 7x7 map for one image; the fire0 activation never leaves VMEM.
    m = m_ref[...]
    e0 = _fire_block(x_ref[0], m, w0s[...], b0s[...], w0e[...], b0e[...], wp, l_out)
    # Re-embed fire0's wide output into fire1's zero-padded flattened layout (scratch).
    buf_ref[...] = jnp.zeros(buf_ref.shape, buf_ref.dtype)
    buf_ref[c0:c0 + l_out, :] = e0
    e1 = _fire_block(buf_ref[...], m, w1s[...], b1s[...], w1e[...], b1e[...], wp, l_out)
    o_ref[0] = e1.astype(o_ref.dtype)


def _fires_tail_kernel(x_ref, m_ref,
                       w2s, b2s, w2e, b2e,
                       w3s, b3s, w3e, b3e,
                       w4s, b4s, w4e, b4e,
                       w5s, b5s, w5e, b5e,
                       w6s, b6s, w6e, b6e,
                       w7s, b7s, w7e, b7e,
                       wc, bc, o_ref, buf_ref, *, wp, l_out, c0):
    # fire2 + fire3 (3x3 maps) + MaxPool(3,2,ceil) -> 1x1 + fire4..7 (1x1 maps) +
    # classifier 1x1 conv + ReLU + global avg pool (identity at 1x1) for one image.
    m = m_ref[...]
    e2 = _fire_block(x_ref[0], m, w2s[...], b2s[...], w2e[...], b2e[...], wp, l_out)
    buf_ref[...] = jnp.zeros(buf_ref.shape, buf_ref.dtype)
    buf_ref[c0:c0 + l_out, :] = e2
    e3f = _fire_block(buf_ref[...], m, w3s[...], b3s[...], w3e[...], b3e[...], wp, l_out)

    # MaxPool2d(3, stride=2, ceil) on a 3x3 map == max over the valid positions.
    # Junk wide columns are masked to 0, which is safe because the values are post-ReLU.
    pooled = jnp.max(e3f * m[c0:c0 + l_out, :], axis=0, keepdims=True)   # (1, 256)
    v = pooled.astype(jnp.bfloat16)

    # fire4..7 at 1x1 spatial: only the center tap of expand3x3 is live (merged weights).
    for ws_, bs_, we_, be_ in ((w4s, b4s, w4e, b4e), (w5s, b5s, w5e, b5e),
                               (w6s, b6s, w6e, b6e), (w7s, b7s, w7e, b7e)):
        sq = jnp.maximum(jnp.dot(v, ws_[...], preferred_element_type=jnp.float32)
                         + bs_[...], 0.0)
        v = jnp.maximum(jnp.dot(sq.astype(jnp.bfloat16), we_[...],
                                preferred_element_type=jnp.float32)
                        + be_[...], 0.0).astype(jnp.bfloat16)

    # Dropout (eval) -> identity; classifier conv + ReLU; avg pool over 1x1 == identity.
    y = jnp.maximum(jnp.dot(v, wc[...], preferred_element_type=jnp.float32) + bc[...], 0.0)
    o_ref[0] = y                                                         # (1, Np) f32


# ----------------------------- Pallas wrappers ------------------------------

def gemm_bias_relu(x, w, b, tm=256):
    """(M, K) bf16 @ (K, Np) bf16 + bias + ReLU -> (M, Np) bf16 (lane-dense Np)."""
    m, k = x.shape
    np_ = w.shape[1]
    mp8 = _round_up(m, 8)
    if mp8 <= tm:
        tm_, mp = mp8, mp8
    else:
        tm_, mp = tm, _round_up(m, tm)
    xb = jnp.pad(x, ((0, mp - m), (0, 0)))
    out = pl.pallas_call(
        _gemm_bias_relu_kernel,
        out_shape=jax.ShapeDtypeStruct((mp, np_), jnp.bfloat16),
        grid=(mp // tm_,),
        in_specs=[pl.BlockSpec((tm_, k), lambda i: (i, 0)),
                  pl.BlockSpec((k, np_), lambda i: (0, 0)),
                  pl.BlockSpec((1, np_), lambda i: (0, 0))],
        out_specs=pl.BlockSpec((tm_, np_), lambda i: (i, 0)),
        compiler_params=pltpu.CompilerParams(dimension_semantics=("parallel",)),
    )(xb, w, b)
    return out[:m]


def conv_stem(x, prep):
    # Conv2d(3, 64, 3, stride=2, padding=0) + ReLU: im2col glue (tiny, 3-channel input)
    # in XLA, GEMM + bias + ReLU on the MXU in Pallas, bf16 activations out.
    n, h, wd, cin = x.shape
    kh = kw = 3
    s = 2
    ho = (h - kh) // s + 1
    wo = (wd - kw) // s + 1
    pieces = [x[:, i:i + s * ho:s, j:j + s * wo:s, :] for i in range(kh) for j in range(kw)]
    patches = jnp.concatenate(pieces, axis=-1).reshape(n * ho * wo, kh * kw * cin)
    y = gemm_bias_relu(patches.astype(jnp.bfloat16), prep['stem.w'], prep['stem.b'])
    return y[:, :64].reshape(n, ho, wo, 64)


def maxpool_3x3_s2_ceil(x, valid_w=None):
    # MaxPool2d(3, stride=2, ceil_mode=True), padding=0, NHWC, bf16.  Left to XLA as a
    # fused 9-way maximum of strided slices.  `valid_w` lets it consume the fire "wide"
    # layout directly (junk columns beyond valid_w are never read by any window).
    n, h, w_full, c = x.shape
    w = w_full if valid_w is None else valid_w
    k, s = 3, 2
    ho = -(-(h - k) // s) + 1
    wo = -(-(w - k) // s) + 1
    hp = k + s * (ho - 1)
    wp = k + s * (wo - 1)
    if valid_w is not None:
        assert wp <= valid_w, "pool window would read junk wide-layout columns"
    if hp > h or (valid_w is None and wp > w_full):
        # ceil_mode: every window still contains >=1 valid element at these shapes, so
        # padding with the dtype min is equivalent to PyTorch's behavior.
        neg = jnp.asarray(jnp.finfo(x.dtype).min, x.dtype)
        x = jnp.pad(x, ((0, 0), (0, max(hp - h, 0)),
                        (0, max(wp - w_full, 0) if valid_w is None else 0), (0, 0)),
                    constant_values=neg)
    out = None
    for i in range(k):
        for j in range(k):
            win = x[:, i:i + s * ho:s, j:j + s * wo:s, :]
            out = win if out is None else jnp.maximum(out, win)
    return out


def fires_stage_a(x, prep):
    # fire0 + fire1 fused; x: (N, 7, 7, 64) bf16 -> wide (N, 7, 9, 128) bf16.
    n, h, w, cin = x.shape
    assert (h, w, cin) == (7, 7, 64), "stage A is specialized for 32x32 inputs"
    g = _fire_geometry(h, w)
    xp = _to_padded_rows(x, g)
    wts = [prep[k] for k in _A_KEYS]
    e_tot = 128
    out = pl.pallas_call(
        functools.partial(_fires_77_kernel, wp=g['wp'], l_out=g['l_out'], c0=g['c0']),
        out_shape=jax.ShapeDtypeStruct((n, g['l_out'], e_tot), jnp.bfloat16),
        grid=(n,),
        in_specs=[pl.BlockSpec((1, g['l_in'], cin), lambda b: (b, 0, 0)),
                  _rep2d(prep['mask.a'])] + [_rep2d(a) for a in wts],
        out_specs=pl.BlockSpec((1, g['l_out'], e_tot), lambda b: (b, 0, 0)),
        scratch_shapes=[pltpu.VMEM((g['l_in'], e_tot), jnp.float32)],
        compiler_params=pltpu.CompilerParams(dimension_semantics=("parallel",)),
    )(xp, prep['mask.a'], *wts)
    return out.reshape(n, h, g['wp'], e_tot)        # "wide" NHWC; cols >= w are junk


def fires_stage_b(x, prep, num_out):
    # fire2..7 + final maxpool + classifier head fused; x: (N, 3, 3, 128) bf16.
    n, h, w, cin = x.shape
    assert (h, w, cin) == (3, 3, 128), "stage B is specialized for 32x32 inputs"
    g = _fire_geometry(h, w)
    xp = _to_padded_rows(x, g)
    wts = [prep[k] for k in _B_KEYS]
    np_ = prep['cls.w'].shape[1]
    out = pl.pallas_call(
        functools.partial(_fires_tail_kernel, wp=g['wp'], l_out=g['l_out'], c0=g['c0']),
        out_shape=jax.ShapeDtypeStruct((n, 1, np_), jnp.float32),
        grid=(n,),
        in_specs=[pl.BlockSpec((1, g['l_in'], cin), lambda b: (b, 0, 0)),
                  _rep2d(prep['mask.b'])] + [_rep2d(a) for a in wts],
        out_specs=pl.BlockSpec((1, 1, np_), lambda b: (b, 0, 0)),
        scratch_shapes=[pltpu.VMEM((g['l_in'], 256), jnp.float32)],
        compiler_params=pltpu.CompilerParams(dimension_semantics=("parallel",)),
    )(xp, prep['mask.b'], *wts)
    return out[:, 0, :num_out]


# ----------------------------- parameters -----------------------------------

def init_params(key, num_out=10):
    # Deterministic random init with the same shapes as squeezenet1_1 (pretrained weights
    # are not loadable in-script).
    params = {}

    def conv_init(k, cout, cin, kh, kw):
        k1, k2 = jax.random.split(k)
        fan_in = cin * kh * kw
        wt = jax.random.normal(k1, (cout, cin, kh, kw), jnp.float32) / jnp.sqrt(float(fan_in))
        bi = 0.01 * jax.random.normal(k2, (cout,), jnp.float32)
        return wt, bi

    n_convs = 1 + 3 * len(_FIRE_CFG) + 1
    keys = jax.random.split(key, n_convs)
    ki = iter(keys)

    params['conv0.w'], params['conv0.b'] = conv_init(next(ki), 64, 3, 3, 3)
    for idx, (cin, sq, e1, e3) in enumerate(_FIRE_CFG):
        p = f'fire{idx}'
        params[f'{p}.sq.w'], params[f'{p}.sq.b'] = conv_init(next(ki), sq, cin, 1, 1)
        params[f'{p}.e1.w'], params[f'{p}.e1.b'] = conv_init(next(ki), e1, sq, 1, 1)
        params[f'{p}.e3.w'], params[f'{p}.e3.b'] = conv_init(next(ki), e3, sq, 3, 3)
    params['cls.w'], params['cls.b'] = conv_init(next(ki), num_out, 512, 1, 1)
    return params


def prepare_params(params, num_out):
    """One-time weight preprocessing (reshape/transpose/pad/bf16) OUTSIDE the jitted fwd."""
    prep = {}
    # stem
    prep['stem.w'] = jnp.pad(jnp.transpose(params['conv0.w'], (2, 3, 1, 0)).reshape(27, 64),
                             ((0, 0), (0, 64))).astype(jnp.bfloat16)
    prep['stem.b'] = jnp.pad(params['conv0.b'].reshape(1, 64),
                             ((0, 0), (0, 64))).astype(jnp.float32)
    # spatial fires 0-3: merged expand weight (9*S, E1+E3); expand1x1 in center-tap rows.
    for idx in range(4):
        cin, s_ch, e1, e3 = _FIRE_CFG[idx]
        p = f'fire{idx}'
        w3 = jnp.transpose(params[f'{p}.e3.w'], (2, 3, 1, 0)).reshape(9 * s_ch, e3)
        w1 = jnp.zeros((9 * s_ch, e1), jnp.float32)
        w1 = w1.at[4 * s_ch:5 * s_ch, :].set(params[f'{p}.e1.w'].reshape(e1, s_ch).T)
        prep[f'f{idx}.sq.w'] = params[f'{p}.sq.w'].reshape(s_ch, cin).T.astype(jnp.bfloat16)
        prep[f'f{idx}.sq.b'] = params[f'{p}.sq.b'].reshape(1, s_ch).astype(jnp.float32)
        prep[f'f{idx}.ex.w'] = jnp.concatenate([w1, w3], axis=1).astype(jnp.bfloat16)
        prep[f'f{idx}.ex.b'] = jnp.concatenate(
            [params[f'{p}.e1.b'], params[f'{p}.e3.b']]).reshape(1, e1 + e3).astype(jnp.float32)
    # 1x1-spatial fires 4-7: only the center tap of expand3x3 is live at 32x32 inputs.
    for idx in range(4, 8):
        cin, s_ch, e1, e3 = _FIRE_CFG[idx]
        p = f'fire{idx}'
        prep[f'f{idx}.sq.w'] = params[f'{p}.sq.w'].reshape(s_ch, cin).T.astype(jnp.bfloat16)
        prep[f'f{idx}.sq.b'] = params[f'{p}.sq.b'].reshape(1, s_ch).astype(jnp.float32)
        prep[f'f{idx}.ex.w'] = jnp.concatenate(
            [params[f'{p}.e1.w'].reshape(e1, s_ch).T,
             params[f'{p}.e3.w'][:, :, 1, 1].T], axis=1).astype(jnp.bfloat16)
        prep[f'f{idx}.ex.b'] = jnp.concatenate(
            [params[f'{p}.e1.b'], params[f'{p}.e3.b']]).reshape(1, e1 + e3).astype(jnp.float32)
    # classifier (lane-dense 128-padded output channels)
    np_ = _round_up(num_out, 128)
    prep['cls.w'] = jnp.pad(params['cls.w'].reshape(num_out, 512).T,
                            ((0, 0), (0, np_ - num_out))).astype(jnp.bfloat16)
    prep['cls.b'] = jnp.pad(params['cls.b'].reshape(1, num_out),
                            ((0, 0), (0, np_ - num_out))).astype(jnp.float32)
    # interior masks for the two spatial-fire geometries (7x7 and 3x3)
    prep['mask.a'] = _interior_mask(7, 7)
    prep['mask.b'] = _interior_mask(3, 3)
    return prep


# ----------------------------- forward pass ---------------------------------

def squeezenet_forward(prep, x_nchw, *, num_out):
    x = jnp.transpose(x_nchw, (0, 2, 3, 1))        # NCHW -> NHWC once at the boundary
    x = conv_stem(x, prep)                         # (N,15,15,64) bf16
    x = maxpool_3x3_s2_ceil(x)                     # (N,7,7,64)
    x = fires_stage_a(x, prep)                     # (N,7,9,128) wide bf16 (fire0+fire1)
    x = maxpool_3x3_s2_ceil(x, valid_w=7)          # (N,3,3,128)
    # fire2..7 + maxpool + dropout(eval) + 1x1 conv + ReLU + avgpool + flatten, fused.
    return fires_stage_b(x, prep, num_out)         # (N,num_out) f32


if __name__ == "__main__":
    key = jax.random.PRNGKey(0)
    kx, kp = jax.random.split(key)

    num_out = 10
    x = jax.random.normal(kx, (2, 3, 32, 32), jnp.float32)   # NCHW like PyTorch
    raw_params = init_params(kp, num_out=num_out)
    prep = prepare_params(raw_params, num_out=num_out)       # one-time, outside jit

    fwd = jax.jit(functools.partial(squeezenet_forward, num_out=num_out))
    out = jax.block_until_ready(fwd(prep, x))

    assert out.shape == (2, num_out), out.shape
    assert out.dtype == jnp.float32
    assert bool(jnp.all(jnp.isfinite(out)))
    print("KERNEL_OK")
</pallas_src>

<mosaic_0001>
module attributes {stable_mosaic.version = 11 : i64} {
  func.func @_gemm_bias_relu_kernel(%arg0: i32, %arg1: memref<256x27xbf16, #tpu.memory_space<vmem>>, %arg2: memref<27x128xbf16, #tpu.memory_space<vmem>>, %arg3: memref<1x128xf32, #tpu.memory_space<vmem>>, %arg4: memref<256x128xbf16, #tpu.memory_space<vmem>>) attributes {dimension_semantics = [#tpu.dimension_semantics<parallel>], iteration_bounds = array<i64: 2>, scalar_prefetch = 0 : i64, scratch_operands = 0 : i64, tpu.core_type = #tpu.core_type<tc>, window_params = [{transform_indices = @transform_0, window_bounds = array<i64: 256, 27>}, {pipeline_mode = #tpu.pipeline_mode<synchronous>, transform_indices = @transform_1, window_bounds = array<i64: 27, 128>}, {pipeline_mode = #tpu.pipeline_mode<synchronous>, transform_indices = @transform_2, window_bounds = array<i64: 1, 128>}, {transform_indices = @transform_3, window_bounds = array<i64: 256, 128>}]} {
    %c0 = arith.constant 0 : index
    %c0_0 = arith.constant 0 : index
    %0 = vector.load %arg1[%c0, %c0_0] : memref<256x27xbf16, #tpu.memory_space<vmem>>, vector<256x27xbf16>
    %c0_1 = arith.constant 0 : index
    %c0_2 = arith.constant 0 : index
    %1 = vector.load %arg2[%c0_1, %c0_2] : memref<27x128xbf16, #tpu.memory_space<vmem>>, vector<27x128xbf16>
    %cst = arith.constant dense<0.000000e+00> : vector<256x128xf32>
    %2 = tpu.matmul %0, %1, %cst {dimension_numbers = #tpu.dot_dimension_numbers<[1], [0], [0], [1], [0, 0, 1, 1], [], []>} : vector<256x27xbf16>, vector<27x128xbf16>, vector<256x128xf32> -> vector<256x128xf32>
    %c0_3 = arith.constant 0 : index
    %c0_4 = arith.constant 0 : index
    %3 = vector.load %arg3[%c0_3, %c0_4] : memref<1x128xf32, #tpu.memory_space<vmem>>, vector<1x128xf32>
    %4 = vector.broadcast %3 : vector<1x128xf32> to vector<256x128xf32>
    %5 = arith.addf %2, %4 : vector<256x128xf32>
    %cst_5 = arith.constant 0.000000e+00 : f32
    %6 = vector.broadcast %cst_5 : f32 to vector<256x128xf32>
    %7 = arith.maximumf %5, %6 : vector<256x128xf32>
    %8 = arith.truncf %7 : vector<256x128xf32> to vector<256x128xbf16>
    %c0_6 = arith.constant 0 : index
    %c0_7 = arith.constant 0 : index
    %9 = vector.load %arg4[%c0_6, %c0_7] : memref<256x128xbf16, #tpu.memory_space<vmem>>, vector<256x128xbf16>
    tpu.vector_store %arg4[%c0_6, %c0_7], %8 {strides = array<i32>} : memref<256x128xbf16, #tpu.memory_space<vmem>>, vector<256x128xbf16>,
    return
  }
  func.func @transform_0(%arg0: i32) -> (i32, i32) {
    %c0_i32 = arith.constant 0 : i32
    %c0_i32_0 = arith.constant 0 : i32
    return %arg0, %c0_i32 : i32, i32
  }
  func.func @transform_1(%arg0: i32) -> (i32, i32) {
    %c0_i32 = arith.constant 0 : i32
    %c0_i32_0 = arith.constant 0 : i32
    %c0_i32_1 = arith.constant 0 : i32
    return %c0_i32, %c0_i32_0 : i32, i32
  }
  func.func @transform_2(%arg0: i32) -> (i32, i32) {
    %c0_i32 = arith.constant 0 : i32
    %c0_i32_0 = arith.constant 0 : i32
    %c0_i32_1 = arith.constant 0 : i32
    return %c0_i32, %c0_i32_0 : i32, i32
  }
  func.func @transform_3(%arg0: i32) -> (i32, i32) {
    %c0_i32 = arith.constant 0 : i32
    %c0_i32_0 = arith.constant 0 : i32
    return %arg0, %c0_i32 : i32, i32
  }
}

module attributes {stable_mosaic.version = 11 : i64} {
  func.func @_fires_77_kernel(%arg0: i32, %arg1: memref<1x88x64xbf16, #tpu.memory_space<vmem>>, %arg2: memref<88x1xf32, #tpu.memory_space<vmem>>, %arg3: memref<64x16xbf16, #tpu.memory_space<vmem>>, %arg4: memref<1x16xf32, #tpu.memory_space<vmem>>, %arg5: memref<144x128xbf16, #tpu.memory_space<vmem>>, %arg6: memref<1x128xf32, #tpu.memory_space<vmem>>, %arg7: memref<128x16xbf16, #tpu.memory_space<vmem>>, %arg8: memref<1x16xf32, #tpu.memory_space<vmem>>, %arg9: memref<144x128xbf16, #tpu.memory_space<vmem>>, %arg10: memref<1x128xf32, #tpu.memory_space<vmem>>, %arg11: memref<1x63x128xbf16, #tpu.memory_space<vmem>>, %arg12: memref<88x128xf32, #tpu.memory_space<vmem>>) attributes {dimension_semantics = [#tpu.dimension_semantics<parallel>], iteration_bounds = array<i64: 2>, scalar_prefetch = 0 : i64, scratch_operands = 1 : i64, tpu.core_type = #tpu.core_type<tc>, window_params = [{transform_indices = @transform_0, window_bounds = array<i64: 1, 88, 64>}, {pipeline_mode = #tpu.pipeline_mode<synchronous>, transform_indices = @transform_1, window_bounds = array<i64: 88, 1>}, {pipeline_mode = #tpu.pipeline_mode<synchronous>, transform_indices = @transform_2, window_bounds = array<i64: 64, 16>}, {pipeline_mode = #tpu.pipeline_mode<synchronous>, transform_indices = @transform_3, window_bounds = array<i64: 1, 16>}, {pipeline_mode = #tpu.pipeline_mode<synchronous>, transform_indices = @transform_4, window_bounds = array<i64: 144, 128>}, {pipeline_mode = #tpu.pipeline_mode<synchronous>, transform_indices = @transform_5, window_bounds = array<i64: 1, 128>}, {pipeline_mode = #tpu.pipeline_mode<synchronous>, transform_indices = @transform_6, window_bounds = array<i64: 128, 16>}, {pipeline_mode = #tpu.pipeline_mode<synchronous>, transform_indices = @transform_7, window_bounds = array<i64: 1, 16>}, {pipeline_mode = #tpu.pipeline_mode<synchronous>, transform_indices = @transform_8, window_bounds = array<i64: 144, 128>}, {pipeline_mode = #tpu.pipeline_mode<synchronous>, transform_indices = @transform_9, window_bounds = array<i64: 1, 128>}, {transform_indices = @transform_10, window_bounds = array<i64: 1, 63, 128>}]} {
    %c0 = arith.constant 0 : index
    %c0_0 = arith.constant 0 : index
    %0 = vector.load %arg2[%c0, %c0_0] : memref<88x1xf32, #tpu.memory_space<vmem>>, vector<88x1xf32>
    %c0_1 = arith.constant 0 : index
    %c0_2 = arith.constant 0 : index
    %c0_3 = arith.constant 0 : index
    %1 = vector.load %arg1[%c0_1, %c0_2, %c0_3] : memref<1x88x64xbf16, #tpu.memory_space<vmem>>, vector<1x88x64xbf16>
    %2 = vector.shape_cast %1 : vector<1x88x64xbf16> to vector<88x64xbf16>
    %c0_4 = arith.constant 0 : index
    %c0_5 = arith.constant 0 : index
    %3 = vector.load %arg3[%c0_4, %c0_5] : memref<64x16xbf16, #tpu.memory_space<vmem>>, vector<64x16xbf16>
    %c0_6 = arith.constant 0 : index
    %c0_7 = arith.constant 0 : index
    %4 = vector.load %arg4[%c0_6, %c0_7] : memref<1x16xf32, #tpu.memory_space<vmem>>, vector<1x16xf32>
    %c0_8 = arith.constant 0 : index
    %c0_9 = arith.constant 0 : index
    %5 = vector.load %arg5[%c0_8, %c0_9] : memref<144x128xbf16, #tpu.memory_space<vmem>>, vector<144x128xbf16>
    %c0_10 = arith.constant 0 : index
    %c0_11 = arith.constant 0 : index
    %6 = vector.load %arg6[%c0_10, %c0_11] : memref<1x128xf32, #tpu.memory_space<vmem>>, vector<1x128xf32>
    %cst = arith.constant dense<0.000000e+00> : vector<88x16xf32>
    %7 = tpu.matmul %2, %3, %cst {dimension_numbers = #tpu.dot_dimension_numbers<[1], [0], [0], [1], [0, 0, 1, 1], [], []>} : vector<88x64xbf16>, vector<64x16xbf16>, vector<88x16xf32> -> vector<88x16xf32>
    %8 = vector.broadcast %4 : vector<1x16xf32> to vector<88x16xf32>
    %9 = arith.addf %7, %8 : vector<88x16xf32>
    %cst_12 = arith.constant 0.000000e+00 : f32
    %10 = vector.broadcast %cst_12 : f32 to vector<88x16xf32>
    %11 = arith.maximumf %9, %10 : vector<88x16xf32>
    %12 = vector.broadcast %0 : vector<88x1xf32> to vector<88x16xf32>
    %13 = arith.mulf %11, %12 : vector<88x16xf32>
    %14 = arith.truncf %13 : vector<88x16xf32> to vector<88x16xbf16>
    %15 = vector.extract_strided_slice %14 {offsets = [0, 0], sizes = [63, 16], strides = [1, 1]} : vector<88x16xbf16> to vector<63x16xbf16>
    %16 = vector.extract_strided_slice %14 {offsets = [1, 0], sizes = [63, 16], strides = [1, 1]} : vector<88x16xbf16> to vector<63x16xbf16>
    %17 = vector.extract_strided_slice %14 {offsets = [2, 0], sizes = [63, 16], strides = [1, 1]} : vector<88x16xbf16> to vector<63x16xbf16>
    %18 = vector.extract_strided_slice %14 {offsets = [9, 0], sizes = [63, 16], strides = [1, 1]} : vector<88x16xbf16> to vector<63x16xbf16>
    %19 = vector.extract_strided_slice %14 {offsets = [10, 0], sizes = [63, 16], strides = [1, 1]} : vector<88x16xbf16> to vector<63x16xbf16>
    %20 = vector.extract_strided_slice %14 {offsets = [11, 0], sizes = [63, 16], strides = [1, 1]} : vector<88x16xbf16> to vector<63x16xbf16>
    %21 = vector.extract_strided_slice %14 {offsets = [18, 0], sizes = [63, 16], strides = [1, 1]} : vector<88x16xbf16> to vector<63x16xbf16>
    %22 = vector.extract_strided_slice %14 {offsets = [19, 0], sizes = [63, 16], strides = [1, 1]} : vector<88x16xbf16> to vector<63x16xbf16>
    %23 = vector.extract_strided_slice %14 {offsets = [20, 0], sizes = [63, 16], strides = [1, 1]} : vector<88x16xbf16> to vector<63x16xbf16>
    %24 = tpu.concatenate %15, %16, %17, %18, %19, %20, %21, %22, %23 in 1 : vector<63x16xbf16>, vector<63x16xbf16>, vector<63x16xbf16>, vector<63x16xbf16>, vector<63x16xbf16>, vector<63x16xbf16>, vector<63x16xbf16>, vector<63x16xbf16>, vector<63x16xbf16> -> vector<63x144xbf16>
    %cst_13 = arith.constant dense<0.000000e+00> : vector<63x128xf32>
    %25 = tpu.matmul %24, %5, %cst_13 {dimension_numbers = #tpu.dot_dimension_numbers<[1], [0], [0], [1], [0, 0, 1, 1], [], []>} : vector<63x144xbf16>, vector<144x128xbf16>, vector<63x128xf32> -> vector<63x128xf32>
    %26 = vector.broadcast %6 : vector<1x128xf32> to vector<63x128xf32>
    %27 = arith.addf %25, %26 : vector<63x128xf32>
    %cst_14 = arith.constant 0.000000e+00 : f32
    %28 = vector.broadcast %cst_14 : f32 to vector<63x128xf32>
    %29 = arith.maximumf %27, %28 : vector<63x128xf32>
    %cst_15 = arith.constant 0.000000e+00 : f32
    %30 = vector.broadcast %cst_15 : f32 to vector<88x128xf32>
    %c0_16 = arith.constant 0 : index
    %c0_17 = arith.constant 0 : index
    %31 = vector.load %arg12[%c0_16, %c0_17] : memref<88x128xf32, #tpu.memory_space<vmem>>, vector<88x128xf32>
    tpu.vector_store %arg12[%c0_16, %c0_17], %30 {strides = array<i32>} : memref<88x128xf32, #tpu.memory_space<vmem>>, vector<88x128xf32>,
    %c10 = arith.constant 10 : index
    %c0_18 = arith.constant 0 : index
    %32 = vector.load %arg12[%c10, %c0_18] : memref<88x128xf32, #tpu.memory_space<vmem>>, vector<63x128xf32>
    tpu.vector_store %arg12[%c10, %c0_18], %29 {strides = array<i32>} : memref<88x128xf32, #tpu.memory_space<vmem>>, vector<63x128xf32>,
    %c0_19 = arith.constant 0 : index
    %c0_20 = arith.constant 0 : index
    %33 = vector.load %arg12[%c0_19, %c0_20] : memref<88x128xf32, #tpu.memory_space<vmem>>, vector<88x128xf32>
    %c0_21 = arith.constant 0 : index
    %c0_22 = arith.constant 0 : index
    %34 = vector.load %arg7[%c0_21, %c0_22] : memref<128x16xbf16, #tpu.memory_space<vmem>>, vector<128x16xbf16>
    %c0_23 = arith.constant 0 : index
    %c0_24 = arith.constant 0 : index
    %35 = vector.load %arg8[%c0_23, %c0_24] : memref<1x16xf32, #tpu.memory_space<vmem>>, vector<1x16xf32>
    %c0_25 = arith.constant 0 : index
    %c0_26 = arith.constant 0 : index
    %36 = vector.load %arg9[%c0_25, %c0_26] : memref<144x128xbf16, #tpu.memory_space<vmem>>, vector<144x128xbf16>
    %c0_27 = arith.constant 0 : index
    %c0_28 = arith.constant 0 : index
    %37 = vector.load %arg10[%c0_27, %c0_28] : memref<1x128xf32, #tpu.memory_space<vmem>>, vector<1x128xf32>
    %38 = arith.truncf %33 : vector<88x128xf32> to vector<88x128xbf16>
    %cst_29 = arith.constant dense<0.000000e+00> : vector<88x16xf32>
    %39 = tpu.matmul %38, %34, %cst_29 {dimension_numbers = #tpu.dot_dimension_numbers<[1], [0], [0], [1], [0, 0, 1, 1], [], []>} : vector<88x128xbf16>, vector<128x16xbf16>, vector<88x16xf32> -> vector<88x16xf32>
    %40 = vector.broadcast %35 : vector<1x16xf32> to vector<88x16xf32>
    %41 = arith.addf %39, %40 : vector<88x16xf32>
    %cst_30 = arith.constant 0.000000e+00 : f32
    %42 = vector.broadcast %cst_30 : f32 to vector<88x16xf32>
    %43 = arith.maximumf %41, %42 : vector<88x16xf32>
    %44 = vector.broadcast %0 : vector<88x1xf32> to vector<88x16xf32>
    %45 = arith.mulf %43, %44 : vector<88x16xf32>
    %46 = arith.truncf %45 : vector<88x16xf32> to vector<88x16xbf16>
    %47 = vector.extract_strided_slice %46 {offsets = [0, 0], sizes = [63, 16], strides = [1, 1]} : vector<88x16xbf16> to vector<63x16xbf16>
    %48 = vector.extract_strided_slice %46 {offsets = [1, 0], sizes = [63, 16], strides = [1, 1]} : vector<88x16xbf16> to vector<63x16xbf16>
    %49 = vector.extract_strided_slice %46 {offsets = [2, 0], sizes = [63, 16], strides = [1, 1]} : vector<88x16xbf16> to vector<63x16xbf16>
    %50 = vector.extract_strided_slice %46 {offsets = [9, 0], sizes = [63, 16], strides = [1, 1]} : vector<88x16xbf16> to vector<63x16xbf16>
    %51 = vector.extract_strided_slice %46 {offsets = [10, 0], sizes = [63, 16], strides = [1, 1]} : vector<88x16xbf16> to vector<63x16xbf16>
    %52 = vector.extract_strided_slice %46 {offsets = [11, 0], sizes = [63, 16], strides = [1, 1]} : vector<88x16xbf16> to vector<63x16xbf16>
    %53 = vector.extract_strided_slice %46 {offsets = [18, 0], sizes = [63, 16], strides = [1, 1]} : vector<88x16xbf16> to vector<63x16xbf16>
    %54 = vector.extract_strided_slice %46 {offsets = [19, 0], sizes = [63, 16], strides = [1, 1]} : vector<88x16xbf16> to vector<63x16xbf16>
    %55 = vector.extract_strided_slice %46 {offsets = [20, 0], sizes = [63, 16], strides = [1, 1]} : vector<88x16xbf16> to vector<63x16xbf16>
    %56 = tpu.concatenate %47, %48, %49, %50, %51, %52, %53, %54, %55 in 1 : vector<63x16xbf16>, vector<63x16xbf16>, vector<63x16xbf16>, vector<63x16xbf16>, vector<63x16xbf16>, vector<63x16xbf16>, vector<63x16xbf16>, vector<63x16xbf16>, vector<63x16xbf16> -> vector<63x144xbf16>
    %cst_31 = arith.constant dense<0.000000e+00> : vector<63x128xf32>
    %57 = tpu.matmul %56, %36, %cst_31 {dimension_numbers = #tpu.dot_dimension_numbers<[1], [0], [0], [1], [0, 0, 1, 1], [], []>} : vector<63x144xbf16>, vector<144x128xbf16>, vector<63x128xf32> -> vector<63x128xf32>
    %58 = vector.broadcast %37 : vector<1x128xf32> to vector<63x128xf32>
    %59 = arith.addf %57, %58 : vector<63x128xf32>
    %cst_32 = arith.constant 0.000000e+00 : f32
    %60 = vector.broadcast %cst_32 : f32 to vector<63x128xf32>
    %61 = arith.maximumf %59, %60 : vector<63x128xf32>
    %62 = arith.truncf %61 : vector<63x128xf32> to vector<63x128xbf16>
    %c0_33 = arith.constant 0 : index
    %c0_34 = arith.constant 0 : index
    %c0_35 = arith.constant 0 : index
    %63 = vector.load %arg11[%c0_33, %c0_34, %c0_35] : memref<1x63x128xbf16, #tpu.memory_space<vmem>>, vector<1x63x128xbf16>
    %64 = vector.shape_cast %63 : vector<1x63x128xbf16> to vector<63x128xbf16>
    %65 = vector.shape_cast %62 : vector<63x128xbf16> to vector<1x63x128xbf16>
    tpu.vector_store %arg11[%c0_33, %c0_34, %c0_35], %65 {strides = array<i32>} : memref<1x63x128xbf16, #tpu.memory_space<vmem>>, vector<1x63x128xbf16>,
    return
  }
  func.func @transform_0(%arg0: i32) -> (i32, i32, i32) {
    %c0_i32 = arith.constant 0 : i32
    %c0_i32_0 = arith.constant 0 : i32
    %c0_i32_1 = arith.constant 0 : i32
    return %arg0, %c0_i32, %c0_i32_0 : i32, i32, i32
  }
  func.func @transform_1(%arg0: i32) -> (i32, i32) {
    %c0_i32 = arith.constant 0 : i32
    %c0_i32_0 = arith.constant 0 : i32
    %c0_i32_1 = arith.constant 0 : i32
    return %c0_i32, %c0_i32_0 : i32, i32
  }
  func.func @transform_2(%arg0: i32) -> (i32, i32) {
    %c0_i32 = arith.constant 0 : i32
    %c0_i32_0 = arith.constant 0 : i32
    %c0_i32_1 = arith.constant 0 : i32
    return %c0_i32, %c0_i32_0 : i32, i32
  }
  func.func @transform_3(%arg0: i32) -> (i32, i32) {
    %c0_i32 = arith.constant 0 : i32
    %c0_i32_0 = arith.constant 0 : i32
    %c0_i32_1 = arith.constant 0 : i32
    return %c0_i32, %c0_i32_0 : i32, i32
  }
  func.func @transform_4(%arg0: i32) -> (i32, i32) {
    %c0_i32 = arith.constant 0 : i32
    %c0_i32_0 = arith.constant 0 : i32
    %c0_i32_1 = arith.constant 0 : i32
    return %c0_i32, %c0_i32_0 : i32, i32
  }
  func.func @transform_5(%arg0: i32) -> (i32, i32) {
    %c0_i32 = arith.constant 0 : i32
    %c0_i32_0 = arith.constant 0 : i32
    %c0_i32_1 = arith.constant 0 : i32
    return %c0_i32, %c0_i32_0 : i32, i32
  }
  func.func @transform_6(%arg0: i32) -> (i32, i32) {
    %c0_i32 = arith.constant 0 : i32
    %c0_i32_0 = arith.constant 0 : i32
    %c0_i32_1 = arith.constant 0 : i32
    return %c0_i32, %c0_i32_0 : i32, i32
  }
  func.func @transform_7(%arg0: i32) -> (i32, i32) {
    %c0_i32 = arith.constant 0 : i32
    %c0_i32_0 = arith.constant 0 : i32
    %c0_i32_1 = arith.constant 0 : i32
    return %c0_i32, %c0_i32_0 : i32, i32
  }
  func.func @transform_8(%arg0: i32) -> (i32, i32) {
    %c0_i32 = arith.constant 0 : i32
    %c0_i32_0 = arith.constant 0 : i32
    %c0_i32_1 = arith.constant 0 : i32
    return %c0_i32, %c0_i32_0 : i32, i32
  }
  func.func @transform_9(%arg0: i32) -> (i32, i32) {
    %c0_i32 = arith.constant 0 : i32
    %c0_i32_0 = arith.constant 0 : i32
    %c0_i32_1 = arith.constant 0 : i32
    return %c0_i32, %c0_i32_0 : i32, i32
  }
  func.func @transform_10(%arg0: i32) -> (i32, i32, i32) {
    %c0_i32 = arith.constant 0 : i32
    %c0_i32_0 = arith.constant 0 : i32
    %c0_i32_1 = arith.constant 0 : i32
    return %arg0, %c0_i32, %c0_i32_0 : i32, i32, i32
  }
}

module attributes {stable_mosaic.version = 11 : i64} {
  func.func @_fires_tail_kernel(%arg0: i32, %arg1: memref<1x32x128xbf16, #tpu.memory_space<vmem>>, %arg2: memref<32x1xf32, #tpu.memory_space<vmem>>, %arg3: memref<128x32xbf16, #tpu.memory_space<vmem>>, %arg4: memref<1x32xf32, #tpu.memory_space<vmem>>, %arg5: memref<288x256xbf16, #tpu.memory_space<vmem>>, %arg6: memref<1x256xf32, #tpu.memory_space<vmem>>, %arg7: memref<256x32xbf16, #tpu.memory_space<vmem>>, %arg8: memref<1x32xf32, #tpu.memory_space<vmem>>, %arg9: memref<288x256xbf16, #tpu.memory_space<vmem>>, %arg10: memref<1x256xf32, #tpu.memory_space<vmem>>, %arg11: memref<256x48xbf16, #tpu.memory_space<vmem>>, %arg12: memref<1x48xf32, #tpu.memory_space<vmem>>, %arg13: memref<48x384xbf16, #tpu.memory_space<vmem>>, %arg14: memref<1x384xf32, #tpu.memory_space<vmem>>, %arg15: memref<384x48xbf16, #tpu.memory_space<vmem>>, %arg16: memref<1x48xf32, #tpu.memory_space<vmem>>, %arg17: memref<48x384xbf16, #tpu.memory_space<vmem>>, %arg18: memref<1x384xf32, #tpu.memory_space<vmem>>, %arg19: memref<384x64xbf16, #tpu.memory_space<vmem>>, %arg20: memref<1x64xf32, #tpu.memory_space<vmem>>, %arg21: memref<64x512xbf16, #tpu.memory_space<vmem>>, %arg22: memref<1x512xf32, #tpu.memory_space<vmem>>, %arg23: memref<512x64xbf16, #tpu.memory_space<vmem>>, %arg24: memref<1x64xf32, #tpu.memory_space<vmem>>, %arg25: memref<64x512xbf16, #tpu.memory_space<vmem>>, %arg26: memref<1x512xf32, #tpu.memory_space<vmem>>, %arg27: memref<512x128xbf16, #tpu.memory_space<vmem>>, %arg28: memref<1x128xf32, #tpu.memory_space<vmem>>, %arg29: memref<1x1x128xf32, #tpu.memory_space<vmem>>, %arg30: memref<32x256xf32, #tpu.memory_space<vmem>>) attributes {dimension_semantics = [#tpu.dimension_semantics<parallel>], iteration_bounds = array<i64: 2>, scalar_prefetch = 0 : i64, scratch_operands = 1 : i64, tpu.core_type = #tpu.core_type<tc>, window_params = [{transform_indices = @transform_0, window_bounds = array<i64: 1, 32, 128>}, {pipeline_mode = #tpu.pipeline_mode<synchronous>, transform_indices = @transform_1, window_bounds = array<i64: 32, 1>}, {pipeline_mode = #tpu.pipeline_mode<synchronous>, transform_indices = @transform_2, window_bounds = array<i64: 128, 32>}, {pipeline_mode = #tpu.pipeline_mode<synchronous>, transform_indices = @transform_3, window_bounds = array<i64: 1, 32>}, {pipeline_mode = #tpu.pipeline_mode<synchronous>, transform_indices = @transform_4, window_bounds = array<i64: 288, 256>}, {pipeline_mode = #tpu.pipeline_mode<synchronous>, transform_indices = @transform_5, window_bounds = array<i64: 1, 256>}, {pipeline_mode = #tpu.pipeline_mode<synchronous>, transform_indices = @transform_6, window_bounds = array<i64: 256, 32>}, {pipeline_mode = #tpu.pipeline_mode<synchronous>, transform_indices = @transform_7, window_bounds = array<i64: 1, 32>}, {pipeline_mode = #tpu.pipeline_mode<synchronous>, transform_indices = @transform_8, window_bounds = array<i64: 288, 256>}, {pipeline_mode = #tpu.pipeline_mode<synchronous>, transform_indices = @transform_9, window_bounds = array<i64: 1, 256>}, {pipeline_mode = #tpu.pipeline_mode<synchronous>, transform_indices = @transform_10, window_bounds = array<i64: 256, 48>}, {pipeline_mode = #tpu.pipeline_mode<synchronous>, transform_indices = @transform_11, window_bounds = array<i64: 1, 48>}, {pipeline_mode = #tpu.pipeline_mode<synchronous>, transform_indices = @transform_12, window_bounds = array<i64: 48, 384>}, {pipeline_mode = #tpu.pipeline_mode<synchronous>, transform_indices = @transform_13, window_bounds = array<i64: 1, 384>}, {pipeline_mode = #tpu.pipeline_mode<synchronous>, transform_indices = @transform_14, window_bounds = array<i64: 384, 48>}, {pipeline_mode = #tpu.pipeline_mode<synchronous>, transform_indices = @transform_15, window_bounds = array<i64: 1, 48>}, {pipeline_mode = #tpu.pipeline_mode<synchronous>, transform_indices = @transform_16, window_bounds = array<i64: 48, 384>}, {pipeline_mode = #tpu.pipeline_mode<synchronous>, transform_indices = @transform_17, window_bounds = array<i64: 1, 384>}, {pipeline_mode = #tpu.pipeline_mode<synchronous>, transform_indices = @transform_18, window_bounds = array<i64: 384, 64>}, {pipeline_mode = #tpu.pipeline_mode<synchronous>, transform_indices = @transform_19, window_bounds = array<i64: 1, 64>}, {pipeline_mode = #tpu.pipeline_mode<synchronous>, transform_indices = @transform_20, window_bounds = array<i64: 64, 512>}, {pipeline_mode = #tpu.pipeline_mode<synchronous>, transform_indices = @transform_21, window_bounds = array<i64: 1, 512>}, {pipeline_mode = #tpu.pipeline_mode<synchronous>, transform_indices = @transform_22, window_bounds = array<i64: 512, 64>}, {pipeline_mode = #tpu.pipeline_mode<synchronous>, transform_indices = @transform_23, window_bounds = array<i64: 1, 64>}, {pipeline_mode = #tpu.pipeline_mode<synchronous>, transform_indices = @transform_24, window_bounds = array<i64: 64, 512>}, {pipeline_mode = #tpu.pipeline_mode<synchronous>, transform_indices = @transform_25, window_bounds = array<i64: 1, 512>}, {pipeline_mode = #tpu.pipeline_mode<synchronous>, transform_indices = @transform_26, window_bounds = array<i64: 512, 128>}, {pipeline_mode = #tpu.pipeline_mode<synchronous>, transform_indices = @transform_27, window_bounds = array<i64: 1, 128>}, {transform_indices = @transform_28, window_bounds = array<i64: 1, 1, 128>}]} {
    %c0 = arith.constant 0 : index
    %c0_0 = arith.constant 0 : index
    %0 = vector.load %arg2[%c0, %c0_0] : memref<32x1xf32, #tpu.memory_space<vmem>>, vector<32x1xf32>
    %c0_1 = arith.constant 0 : index
    %c0_2 = arith.constant 0 : index
    %c0_3 = arith.constant 0 : index
    %1 = vector.load %arg1[%c0_1, %c0_2, %c0_3] : memref<1x32x128xbf16, #tpu.memory_space<vmem>>, vector<1x32x128xbf16>
    %2 = vector.shape_cast %1 : vector<1x32x128xbf16> to vector<32x128xbf16>
    %c0_4 = arith.constant 0 : index
    %c0_5 = arith.constant 0 : index
    %3 = vector.load %arg3[%c0_4, %c0_5] : memref<128x32xbf16, #tpu.memory_space<vmem>>, vector<128x32xbf16>
    %c0_6 = arith.constant 0 : index
    %c0_7 = arith.constant 0 : index
    %4 = vector.load %arg4[%c0_6, %c0_7] : memref<1x32xf32, #tpu.memory_space<vmem>>, vector<1x32xf32>
    %c0_8 = arith.constant 0 : index
    %c0_9 = arith.constant 0 : index
    %5 = vector.load %arg5[%c0_8, %c0_9] : memref<288x256xbf16, #tpu.memory_space<vmem>>, vector<288x256xbf16>
    %c0_10 = arith.constant 0 : index
    %c0_11 = arith.constant 0 : index
    %6 = vector.load %arg6[%c0_10, %c0_11] : memref<1x256xf32, #tpu.memory_space<vmem>>, vector<1x256xf32>
    %cst = arith.constant dense<0.000000e+00> : vector<32x32xf32>
    %7 = tpu.matmul %2, %3, %cst {dimension_numbers = #tpu.dot_dimension_numbers<[1], [0], [0], [1], [0, 0, 1, 1], [], []>} : vector<32x128xbf16>, vector<128x32xbf16>, vector<32x32xf32> -> vector<32x32xf32>
    %8 = vector.broadcast %4 : vector<1x32xf32> to vector<32x32xf32>
    %9 = arith.addf %7, %8 : vector<32x32xf32>
    %cst_12 = arith.constant 0.000000e+00 : f32
    %10 = vector.broadcast %cst_12 : f32 to vector<32x32xf32>
    %11 = arith.maximumf %9, %10 : vector<32x32xf32>
    %12 = vector.broadcast %0 : vector<32x1xf32> to vector<32x32xf32>
    %13 = arith.mulf %11, %12 : vector<32x32xf32>
    %14 = arith.truncf %13 : vector<32x32xf32> to vector<32x32xbf16>
    %15 = vector.extract_strided_slice %14 {offsets = [0, 0], sizes = [15, 32], strides = [1, 1]} : vector<32x32xbf16> to vector<15x32xbf16>
    %16 = vector.extract_strided_slice %14 {offsets = [1, 0], sizes = [15, 32], strides = [1, 1]} : vector<32x32xbf16> to vector<15x32xbf16>
    %17 = vector.extract_strided_slice %14 {offsets = [2, 0], sizes = [15, 32], strides = [1, 1]} : vector<32x32xbf16> to vector<15x32xbf16>
    %18 = vector.extract_strided_slice %14 {offsets = [5, 0], sizes = [15, 32], strides = [1, 1]} : vector<32x32xbf16> to vector<15x32xbf16>
    %19 = vector.extract_strided_slice %14 {offsets = [6, 0], sizes = [15, 32], strides = [1, 1]} : vector<32x32xbf16> to vector<15x32xbf16>
    %20 = vector.extract_strided_slice %14 {offsets = [7, 0], sizes = [15, 32], strides = [1, 1]} : vector<32x32xbf16> to vector<15x32xbf16>
    %21 = vector.extract_strided_slice %14 {offsets = [10, 0], sizes = [15, 32], strides = [1, 1]} : vector<32x32xbf16> to vector<15x32xbf16>
    %22 = vector.extract_strided_slice %14 {offsets = [11, 0], sizes = [15, 32], strides = [1, 1]} : vector<32x32xbf16> to vector<15x32xbf16>
    %23 = vector.extract_strided_slice %14 {offsets = [12, 0], sizes = [15, 32], strides = [1, 1]} : vector<32x32xbf16> to vector<15x32xbf16>
    %24 = tpu.concatenate %15, %16, %17, %18, %19, %20, %21, %22, %23 in 1 : vector<15x32xbf16>, vector<15x32xbf16>, vector<15x32xbf16>, vector<15x32xbf16>, vector<15x32xbf16>, vector<15x32xbf16>, vector<15x32xbf16>, vector<15x32xbf16>, vector<15x32xbf16> -> vector<15x288xbf16>
    %cst_13 = arith.constant dense<0.000000e+00> : vector<15x256xf32>
    %25 = tpu.matmul %24, %5, %cst_13 {dimension_numbers = #tpu.dot_dimension_numbers<[1], [0], [0], [1], [0, 0, 1, 1], [], []>} : vector<15x288xbf16>, vector<288x256xbf16>, vector<15x256xf32> -> vector<15x256xf32>
    %26 = vector.broadcast %6 : vector<1x256xf32> to vector<15x256xf32>
    %27 = arith.addf %25, %26 : vector<15x256xf32>
    %cst_14 = arith.constant 0.000000e+00 : f32
    %28 = vector.broadcast %cst_14 : f32 to vector<15x256xf32>
    %29 = arith.maximumf %27, %28 : vector<15x256xf32>
    %cst_15 = arith.constant 0.000000e+00 : f32
    %30 = vector.broadcast %cst_15 : f32 to vector<32x256xf32>
    %c0_16 = arith.constant 0 : index
    %c0_17 = arith.constant 0 : index
    %31 = vector.load %arg30[%c0_16, %c0_17] : memref<32x256xf32, #tpu.memory_space<vmem>>, vector<32x256xf32>
    tpu.vector_store %arg30[%c0_16, %c0_17], %30 {strides = array<i32>} : memref<32x256xf32, #tpu.memory_space<vmem>>, vector<32x256xf32>,
    %c6 = arith.constant 6 : index
    %c0_18 = arith.constant 0 : index
    %32 = vector.load %arg30[%c6, %c0_18] : memref<32x256xf32, #tpu.memory_space<vmem>>, vector<15x256xf32>
    tpu.vector_store %arg30[%c6, %c0_18], %29 {strides = array<i32>} : memref<32x256xf32, #tpu.memory_space<vmem>>, vector<15x256xf32>,
    %c0_19 = arith.constant 0 : index
    %c0_20 = arith.constant 0 : index
    %33 = vector.load %arg30[%c0_19, %c0_20] : memref<32x256xf32, #tpu.memory_space<vmem>>, vector<32x256xf32>
    %c0_21 = arith.constant 0 : index
    %c0_22 = arith.constant 0 : index
    %34 = vector.load %arg7[%c0_21, %c0_22] : memref<256x32xbf16, #tpu.memory_space<vmem>>, vector<256x32xbf16>
    %c0_23 = arith.constant 0 : index
    %c0_24 = arith.constant 0 : index
    %35 = vector.load %arg8[%c0_23, %c0_24] : memref<1x32xf32, #tpu.memory_space<vmem>>, vector<1x32xf32>
    %c0_25 = arith.constant 0 : index
    %c0_26 = arith.constant 0 : index
    %36 = vector.load %arg9[%c0_25, %c0_26] : memref<288x256xbf16, #tpu.memory_space<vmem>>, vector<288x256xbf16>
    %c0_27 = arith.constant 0 : index
    %c0_28 = arith.constant 0 : index
    %37 = vector.load %arg10[%c0_27, %c0_28] : memref<1x256xf32, #tpu.memory_space<vmem>>, vector<1x256xf32>
    %38 = arith.truncf %33 : vector<32x256xf32> to vector<32x256xbf16>
    %cst_29 = arith.constant dense<0.000000e+00> : vector<32x32xf32>
    %39 = tpu.matmul %38, %34, %cst_29 {dimension_numbers = #tpu.dot_dimension_numbers<[1], [0], [0], [1], [0, 0, 1, 1], [], []>} : vector<32x256xbf16>, vector<256x32xbf16>, vector<32x32xf32> -> vector<32x32xf32>
    %40 = vector.broadcast %35 : vector<1x32xf32> to vector<32x32xf32>
    %41 = arith.addf %39, %40 : vector<32x32xf32>
    %cst_30 = arith.constant 0.000000e+00 : f32
    %42 = vector.broadcast %cst_30 : f32 to vector<32x32xf32>
    %43 = arith.maximumf %41, %42 : vector<32x32xf32>
    %44 = vector.broadcast %0 : vector<32x1xf32> to vector<32x32xf32>
    %45 = arith.mulf %43, %44 : vector<32x32xf32>
    %46 = arith.truncf %45 : vector<32x32xf32> to vector<32x32xbf16>
    %47 = vector.extract_strided_slice %46 {offsets = [0, 0], sizes = [15, 32], strides = [1, 1]} : vector<32x32xbf16> to vector<15x32xbf16>
    %48 = vector.extract_strided_slice %46 {offsets = [1, 0], sizes = [15, 32], strides = [1, 1]} : vector<32x32xbf16> to vector<15x32xbf16>
    %49 = vector.extract_strided_slice %46 {offsets = [2, 0], sizes = [15, 32], strides = [1, 1]} : vector<32x32xbf16> to vector<15x32xbf16>
    %50 = vector.extract_strided_slice %46 {offsets = [5, 0], sizes = [15, 32], strides = [1, 1]} : vector<32x32xbf16> to vector<15x32xbf16>
    %51 = vector.extract_strided_slice %46 {offsets = [6, 0], sizes = [15, 32], strides = [1, 1]} : vector<32x32xbf16> to vector<15x32xbf16>
    %52 = vector.extract_strided_slice %46 {offsets = [7, 0], sizes = [15, 32], strides = [1, 1]} : vector<32x32xbf16> to vector<15x32xbf16>
    %53 = vector.extract_strided_slice %46 {offsets = [10, 0], sizes = [15, 32], strides = [1, 1]} : vector<32x32xbf16> to vector<15x32xbf16>
    %54 = vector.extract_strided_slice %46 {offsets = [11, 0], sizes = [15, 32], strides = [1, 1]} : vector<32x32xbf16> to vector<15x32xbf16>
    %55 = vector.extract_strided_slice %46 {offsets = [12, 0], sizes = [15, 32], strides = [1, 1]} : vector<32x32xbf16> to vector<15x32xbf16>
    %56 = tpu.concatenate %47, %48, %49, %50, %51, %52, %53, %54, %55 in 1 : vector<15x32xbf16>, vector<15x32xbf16>, vector<15x32xbf16>, vector<15x32xbf16>, vector<15x32xbf16>, vector<15x32xbf16>, vector<15x32xbf16>, vector<15x32xbf16>, vector<15x32xbf16> -> vector<15x288xbf16>
    %cst_31 = arith.constant dense<0.000000e+00> : vector<15x256xf32>
    %57 = tpu.matmul %56, %36, %cst_31 {dimension_numbers = #tpu.dot_dimension_numbers<[1], [0], [0], [1], [0, 0, 1, 1], [], []>} : vector<15x288xbf16>, vector<288x256xbf16>, vector<15x256xf32> -> vector<15x256xf32>
    %58 = vector.broadcast %37 : vector<1x256xf32> to vector<15x256xf32>
    %59 = arith.addf %57, %58 : vector<15x256xf32>
    %cst_32 = arith.constant 0.000000e+00 : f32
    %60 = vector.broadcast %cst_32 : f32 to vector<15x256xf32>
    %61 = arith.maximumf %59, %60 : vector<15x256xf32>
    %62 = vector.extract_strided_slice %0 {offsets = [6, 0], sizes = [15, 1], strides = [1, 1]} : vector<32x1xf32> to vector<15x1xf32>
    %63 = vector.broadcast %62 : vector<15x1xf32> to vector<15x256xf32>
    %64 = arith.mulf %61, %63 : vector<15x256xf32>
    %cst_33 = arith.constant dense<0xFF800000> : vector<256xf32>
    %65 = vector.multi_reduction <maximumf>, %64, %cst_33 [0] : vector<15x256xf32> to vector<256xf32>
    %66 = vector.shape_cast %65 : vector<256xf32> to vector<1x256xf32>
    %67 = arith.truncf %66 : vector<1x256xf32> to vector<1x256xbf16>
    %c0_34 = arith.constant 0 : index
    %c0_35 = arith.constant 0 : index
    %68 = vector.load %arg11[%c0_34, %c0_35] : memref<256x48xbf16, #tpu.memory_space<vmem>>, vector<256x48xbf16>
    %cst_36 = arith.constant dense<0.000000e+00> : vector<1x48xf32>
    %69 = tpu.matmul %67, %68, %cst_36 {dimension_numbers = #tpu.dot_dimension_numbers<[1], [0], [0], [1], [0, 0, 1, 1], [], []>} : vector<1x256xbf16>, vector<256x48xbf16>, vector<1x48xf32> -> vector<1x48xf32>
    %c0_37 = arith.constant 0 : index
    %c0_38 = arith.constant 0 : index
    %70 = vector.load %arg12[%c0_37, %c0_38] : memref<1x48xf32, #tpu.memory_space<vmem>>, vector<1x48xf32>
    %71 = arith.addf %69, %70 : vector<1x48xf32>
    %cst_39 = arith.constant 0.000000e+00 : f32
    %72 = vector.broadcast %cst_39 : f32 to vector<1x48xf32>
    %73 = arith.maximumf %71, %72 : vector<1x48xf32>
    %74 = arith.truncf %73 : vector<1x48xf32> to vector<1x48xbf16>
    %c0_40 = arith.constant 0 : index
    %c0_41 = arith.constant 0 : index
    %75 = vector.load %arg13[%c0_40, %c0_41] : memref<48x384xbf16, #tpu.memory_space<vmem>>, vector<48x384xbf16>
    %cst_42 = arith.constant dense<0.000000e+00> : vector<1x384xf32>
    %76 = tpu.matmul %74, %75, %cst_42 {dimension_numbers = #tpu.dot_dimension_numbers<[1], [0], [0], [1], [0, 0, 1, 1], [], []>} : vector<1x48xbf16>, vector<48x384xbf16>, vector<1x384xf32> -> vector<1x384xf32>
    %c0_43 = arith.constant 0 : index
    %c0_44 = arith.constant 0 : index
    %77 = vector.load %arg14[%c0_43, %c0_44] : memref<1x384xf32, #tpu.memory_space<vmem>>, vector<1x384xf32>
    %78 = arith.addf %76, %77 : vector<1x384xf32>
    %cst_45 = arith.constant 0.000000e+00 : f32
    %79 = vector.broadcast %cst_45 : f32 to vector<1x384xf32>
    %80 = arith.maximumf %78, %79 : vector<1x384xf32>
    %81 = arith.truncf %80 : vector<1x384xf32> to vector<1x384xbf16>
    %c0_46 = arith.constant 0 : index
    %c0_47 = arith.constant 0 : index
    %82 = vector.load %arg15[%c0_46, %c0_47] : memref<384x48xbf16, #tpu.memory_space<vmem>>, vector<384x48xbf16>
    %cst_48 = arith.constant dense<0.000000e+00> : vector<1x48xf32>
    %83 = tpu.matmul %81, %82, %cst_48 {dimension_numbers = #tpu.dot_dimension_numbers<[1], [0], [0], [1], [0, 0, 1, 1], [], []>} : vector<1x384xbf16>, vector<384x48xbf16>, vector<1x48xf32> -> vector<1x48xf32>
    %c0_49 = arith.constant 0 : index
    %c0_50 = arith.constant 0 : index
    %84 = vector.load %arg16[%c0_49, %c0_50] : memref<1x48xf32, #tpu.memory_space<vmem>>, vector<1x48xf32>
    %85 = arith.addf %83, %84 : vector<1x48xf32>
    %cst_51 = arith.constant 0.000000e+00 : f32
    %86 = vector.broadcast %cst_51 : f32 to vector<1x48xf32>
    %87 = arith.maximumf %85, %86 : vector<1x48xf32>
    %88 = arith.truncf %87 : vector<1x48xf32> to vector<1x48xbf16>
    %c0_52 = arith.constant 0 : index
    %c0_53 = arith.constant 0 : index
    %89 = vector.load %arg17[%c0_52, %c0_53] : memref<48x384xbf16, #tpu.memory_space<vmem>>, vector<48x384xbf16>
    %cst_54 = arith.constant dense<0.000000e+00> : vector<1x384xf32>
    %90 = tpu.matmul %88, %89, %cst_54 {dimension_numbers = #tpu.dot_dimension_numbers<[1], [0], [0], [1], [0, 0, 1, 1], [], []>} : vector<1x48xbf16>, vector<48x384xbf16>, vector<1x384xf32> -> vector<1x384xf32>
    %c0_55 = arith.constant 0 : index
    %c0_56 = arith.constant 0 : index
    %91 = vector.load %arg18[%c0_55, %c0_56] : memref<1x384xf32, #tpu.memory_space<vmem>>, vector<1x384xf32>
    %92 = arith.addf %90, %91 : vector<1x384xf32>
    %cst_57 = arith.constant 0.000000e+00 : f32
    %93 = vector.broadcast %cst_57 : f32 to vector<1x384xf32>
    %94 = arith.maximumf %92, %93 : vector<1x384xf32>
    %95 = arith.truncf %94 : vector<1x384xf32> to vector<1x384xbf16>
    %c0_58 = arith.constant 0 : index
    %c0_59 = arith.constant 0 : index
    %96 = vector.load %arg19[%c0_58, %c0_59] : memref<384x64xbf16, #tpu.memory_space<vmem>>, vector<384x64xbf16>
    %cst_60 = arith.constant dense<0.000000e+00> : vector<1x64xf32>
    %97 = tpu.matmul %95, %96, %cst_60 {dimension_numbers = #tpu.dot_dimension_numbers<[1], [0], [0], [1], [0, 0, 1, 1], [], []>} : vector<1x384xbf16>, vector<384x64xbf16>, vector<1x64xf32> -> vector<1x64xf32>
    %c0_61 = arith.constant 0 : index
    %c0_62 = arith.constant 0 : index
    %98 = vector.load %arg20[%c0_61, %c0_62] : memref<1x64xf32, #tpu.memory_space<vmem>>, vector<1x64xf32>
    %99 = arith.addf %97, %98 : vector<1x64xf32>
    %cst_63 = arith.constant 0.000000e+00 : f32
    %100 = vector.broadcast %cst_63 : f32 to vector<1x64xf32>
    %101 = arith.maximumf %99, %100 : vector<1x64xf32>
    %102 = arith.truncf %101 : vector<1x64xf32> to vector<1x64xbf16>
    %c0_64 = arith.constant 0 : index
    %c0_65 = arith.constant 0 : index
    %103 = vector.load %arg21[%c0_64, %c0_65] : memref<64x512xbf16, #tpu.memory_space<vmem>>, vector<64x512xbf16>
    %cst_66 = arith.constant dense<0.000000e+00> : vector<1x512xf32>
    %104 = tpu.matmul %102, %103, %cst_66 {dimension_numbers = #tpu.dot_dimension_numbers<[1], [0], [0], [1], [0, 0, 1, 1], [], []>} : vector<1x64xbf16>, vector<64x512xbf16>, vector<1x512xf32> -> vector<1x512xf32>
    %c0_67 = arith.constant 0 : index
    %c0_68 = arith.constant 0 : index
    %105 = vector.load %arg22[%c0_67, %c0_68] : memref<1x512xf32, #tpu.memory_space<vmem>>, vector<1x512xf32>
    %106 = arith.addf %104, %105 : vector<1x512xf32>
    %cst_69 = arith.constant 0.000000e+00 : f32
    %107 = vector.broadcast %cst_69 : f32 to vector<1x512xf32>
    %108 = arith.maximumf %106, %107 : vector<1x512xf32>
    %109 = arith.truncf %108 : vector<1x512xf32> to vector<1x512xbf16>
    %c0_70 = arith.constant 0 : index
    %c0_71 = arith.constant 0 : index
    %110 = vector.load %arg23[%c0_70, %c0_71] : memref<512x64xbf16, #tpu.memory_space<vmem>>, vector<512x64xbf16>
    %cst_72 = arith.constant dense<0.000000e+00> : vector<1x64xf32>
    %111 = tpu.matmul %109, %110, %cst_72 {dimension_numbers = #tpu.dot_dimension_numbers<[1], [0], [0], [1], [0, 0, 1, 1], [], []>} : vector<1x512xbf16>, vector<512x64xbf16>, vector<1x64xf32> -> vector<1x64xf32>
    %c0_73 = arith.constant 0 : index
    %c0_74 = arith.constant 0 : index
    %112 = vector.load %arg24[%c0_73, %c0_74] : memref<1x64xf32, #tpu.memory_space<vmem>>, vector<1x64xf32>
    %113 = arith.addf %111, %112 : vector<1x64xf32>
    %cst_75 = arith.constant 0.000000e+00 : f32
    %114 = vector.broadcast %cst_75 : f32 to vector<1x64xf32>
    %115 = arith.maximumf %113, %114 : vector<1x64xf32>
    %116 = arith.truncf %115 : vector<1x64xf32> to vector<1x64xbf16>
    %c0_76 = arith.constant 0 : index
    %c0_77 = arith.constant 0 : index
    %117 = vector.load %arg25[%c0_76, %c0_77] : memref<64x512xbf16, #tpu.memory_space<vmem>>, vector<64x512xbf16>
    %cst_78 = arith.constant dense<0.000000e+00> : vector<1x512xf32>
    %118 = tpu.matmul %116, %117, %cst_78 {dimension_numbers = #tpu.dot_dimension_numbers<[1], [0], [0], [1], [0, 0, 1, 1], [], []>} : vector<1x64xbf16>, vector<64x512xbf16>, vector<1x512xf32> -> vector<1x512xf32>
    %c0_79 = arith.constant 0 : index
    %c0_80 = arith.constant 0 : index
    %119 = vector.load %arg26[%c0_79, %c0_80] : memref<1x512xf32, #tpu.memory_space<vmem>>, vector<1x512xf32>
    %120 = arith.addf %118, %119 : vector<1x512xf32>
    %cst_81 = arith.constant 0.000000e+00 : f32
    %121 = vector.broadcast %cst_81 : f32 to vector<1x512xf32>
    %122 = arith.maximumf %120, %121 : vector<1x512xf32>
    %123 = arith.truncf %122 : vector<1x512xf32> to vector<1x512xbf16>
    %c0_82 = arith.constant 0 : index
    %c0_83 = arith.constant 0 : index
    %124 = vector.load %arg27[%c0_82, %c0_83] : memref<512x128xbf16, #tpu.memory_space<vmem>>, vector<512x128xbf16>
    %cst_84 = arith.constant dense<0.000000e+00> : vector<1x128xf32>
    %125 = tpu.matmul %123, %124, %cst_84 {dimension_numbers = #tpu.dot_dimension_numbers<[1], [0], [0], [1], [0, 0, 1, 1], [], []>} : vector<1x512xbf16>, vector<512x128xbf16>, vector<1x128xf32> -> vector<1x128xf32>
    %c0_85 = arith.constant 0 : index
    %c0_86 = arith.constant 0 : index
    %126 = vector.load %arg28[%c0_85, %c0_86] : memref<1x128xf32, #tpu.memory_space<vmem>>, vector<1x128xf32>
    %127 = arith.addf %125, %126 : vector<1x128xf32>
    %cst_87 = arith.constant 0.000000e+00 : f32
    %128 = vector.broadcast %cst_87 : f32 to vector<1x128xf32>
    %129 = arith.maximumf %127, %128 : vector<1x128xf32>
    %c0_88 = arith.constant 0 : index
    %c0_89 = arith.constant 0 : index
    %c0_90 = arith.constant 0 : index
    %130 = vector.load %arg29[%c0_88, %c0_89, %c0_90] : memref<1x1x128xf32, #tpu.memory_space<vmem>>, vector<1x1x128xf32>
    %131 = vector.shape_cast %130 : vector<1x1x128xf32> to vector<1x128xf32>
    %132 = vector.shape_cast %129 : vector<1x128xf32> to vector<1x1x128xf32>
    tpu.vector_store %arg29[%c0_88, %c0_89, %c0_90], %132 {strides = array<i32>} : memref<1x1x128xf32, #tpu.memory_space<vmem>>, vector<1x1x128xf32>,
    return
  }
  func.func @transform_0(%arg0: i32) -> (i32, i32, i32) {
    %c0_i32 = arith.constant 0 : i32
    %c0_i32_0 = arith.constant 0 : i32
    %c0_i32_1 = arith.constant 0 : i32
    return %arg0, %c0_i32, %c0_i32_0 : i32, i32, i32
  }
  func.func @transform_1(%arg0: i32) -> (i32, i32) {
    %c0_i32 = arith.constant 0 : i32
    %c0_i32_0 = arith.constant 0 : i32
    %c0_i32_1 = arith.constant 0 : i32
    return %c0_i32, %c0_i32_0 : i32, i32
  }
  func.func @transform_2(%arg0: i32) -> (i32, i32) {
    %c0_i32 = arith.constant 0 : i32
    %c0_i32_0 = arith.constant 0 : i32
    %c0_i32_1 = arith.constant 0 : i32
    return %c0_i32, %c0_i32_0 : i32, i32
  }
  func.func @transform_3(%arg0: i32) -> (i32, i32) {
    %c0_i32 = arith.constant 0 : i32
    %c0_i32_0 = arith.constant 0 : i32
    %c0_i32_1 = arith.constant 0 : i32
    return %c0_i32, %c0_i32_0 : i32, i32
  }
  func.func @transform_4(%arg0: i32) -> (i32, i32) {
    %c0_i32 = arith.constant 0 : i32
    %c0_i32_0 = arith.constant 0 : i32
    %c0_i32_1 = arith.constant 0 : i32
    return %c0_i32, %c0_i32_0 : i32, i32
  }
  func.func @transform_5(%arg0: i32) -> (i32, i32) {
    %c0_i32 = arith.constant 0 : i32
    %c0_i32_0 = arith.constant 0 : i32
    %c0_i32_1 = arith.constant 0 : i32
    return %c0_i32, %c0_i32_0 : i32, i32
  }
  func.func @transform_6(%arg0: i32) -> (i32, i32) {
    %c0_i32 = arith.constant 0 : i32
    %c0_i32_0 = arith.constant 0 : i32
    %c0_i32_1 = arith.constant 0 : i32
    return %c0_i32, %c0_i32_0 : i32, i32
  }
  func.func @transform_7(%arg0: i32) -> (i32, i32) {
    %c0_i32 = arith.constant 0 : i32
    %c0_i32_0 = arith.constant 0 : i32
    %c0_i32_1 = arith.constant 0 : i32
    return %c0_i32, %c0_i32_0 : i32, i32
  }
  func.func @transform_8(%arg0: i32) -> (i32, i32) {
    %c0_i32 = arith.constant 0 : i32
    %c0_i32_0 = arith.constant 0 : i32
    %c0_i32_1 = arith.constant 0 : i32
    return %c0_i32, %c0_i32_0 : i32, i32
  }
  func.func @transform_9(%arg0: i32) -> (i32, i32) {
    %c0_i32 = arith.constant 0 : i32
    %c0_i32_0 = arith.constant 0 : i32
    %c0_i32_1 = arith.constant 0 : i32
    return %c0_i32, %c0_i32_0 : i32, i32
  }
  func.func @transform_10(%arg0: i32) -> (i32, i32) {
    %c0_i32 = arith.constant 0 : i32
    %c0_i32_0 = arith.constant 0 : i32
    %c0_i32_1 = arith.constant 0 : i32
    return %c0_i32, %c0_i32_0 : i32, i32
  }
  func.func @transform_11(%arg0: i32) -> (i32, i32) {
    %c0_i32 = arith.constant 0 : i32
    %c0_i32_0 = arith.constant 0 : i32
    %c0_i32_1 = arith.constant 0 : i32
    return %c0_i32, %c0_i32_0 : i32, i32
  }
  func.func @transform_12(%arg0: i32) -> (i32, i32) {
    %c0_i32 = arith.constant 0 : i32
    %c0_i32_0 = arith.constant 0 : i32
    %c0_i32_1 = arith.constant 0 : i32
    return %c0_i32, %c0_i32_0 : i32, i32
  }
  func.func @transform_13(%arg0: i32) -> (i32, i32) {
    %c0_i32 = arith.constant 0 : i32
    %c0_i32_0 = arith.constant 0 : i32
    %c0_i32_1 = arith.constant 0 : i32
    return %c0_i32, %c0_i32_0 : i32, i32
  }
  func.func @transform_14(%arg0: i32) -> (i32, i32) {
    %c0_i32 = arith.constant 0 : i32
    %c0_i32_0 = arith.constant 0 : i32
    %c0_i32_1 = arith.constant 0 : i32
    return %c0_i32, %c0_i32_0 : i32, i32
  }
  func.func @transform_15(%arg0: i32) -> (i32, i32) {
    %c0_i32 = arith.constant 0 : i32
    %c0_i32_0 = arith.constant 0 : i32
    %c0_i32_1 = arith.constant 0 : i32
    return %c0_i32, %c0_i32_0 : i32, i32
  }
  func.func @transform_16(%arg0: i32) -> (i32, i32) {
    %c0_i32 = arith.constant 0 : i32
    %c0_i32_0 = arith.constant 0 : i32
    %c0_i32_1 = arith.constant 0 : i32
    return %c0_i32, %c0_i32_0 : i32, i32
  }
  func.func @transform_17(%arg0: i32) -> (i32, i32) {
    %c0_i32 = arith.constant 0 : i32
    %c0_i32_0 = arith.constant 0 : i32
    %c0_i32_1 = arith.constant 0 : i32
    return %c0_i32, %c0_i32_0 : i32, i32
  }
  func.func @transform_18(%arg0: i32) -> (i32, i32) {
    %c0_i32 = arith.constant 0 : i32
    %c0_i32_0 = arith.constant 0 : i32
    %c0_i32_1 = arith.constant 0 : i32
    return %c0_i32, %c0_i32_0 : i32, i32
  }
  func.func @transform_19(%arg0: i32) -> (i32, i32) {
    %c0_i32 = arith.constant 0 : i32
    %c0_i32_0 = arith.constant 0 : i32
    %c0_i32_1 = arith.constant 0 : i32
    return %c0_i32, %c0_i32_0 : i32, i32
  }
  func.func @transform_20(%arg0: i32) -> (i32, i32) {
    %c0_i32 = arith.constant 0 : i32
    %c0_i32_0 = arith.constant 0 : i32
    %c0_i32_1 = arith.constant 0 : i32
    return %c0_i32, %c0_i32_0 : i32, i32
  }
  func.func @transform_21(%arg0: i32) -> (i32, i32) {
    %c0_i32 = arith.constant 0 : i32
    %c0_i32_0 = arith.constant 0 : i32
    %c0_i32_1 = arith.constant 0 : i32
    return %c0_i32, %c0_i32_0 : i32, i32
  }
  func.func @transform_22(%arg0: i32) -> (i32, i32) {
    %c0_i32 = arith.constant 0 : i32
    %c0_i32_0 = arith.constant 0 : i32
    %c0_i32_1 = arith.constant 0 : i32
    return %c0_i32, %c0_i32_0 : i32, i32
  }
  func.func @transform_23(%arg0: i32) -> (i32, i32) {
    %c0_i32 = arith.constant 0 : i32
    %c0_i32_0 = arith.constant 0 : i32
    %c0_i32_1 = arith.constant 0 : i32
    return %c0_i32, %c0_i32_0 : i32, i32
  }
  func.func @transform_24(%arg0: i32) -> (i32, i32) {
    %c0_i32 = arith.constant 0 : i32
    %c0_i32_0 = arith.constant 0 : i32
    %c0_i32_1 = arith.constant 0 : i32
    return %c0_i32, %c0_i32_0 : i32, i32
  }
  func.func @transform_25(%arg0: i32) -> (i32, i32) {
    %c0_i32 = arith.constant 0 : i32
    %c0_i32_0 = arith.constant 0 : i32
    %c0_i32_1 = arith.constant 0 : i32
    return %c0_i32, %c0_i32_0 : i32, i32
  }
  func.func @transform_26(%arg0: i32) -> (i32, i32) {
    %c0_i32 = arith.constant 0 : i32
    %c0_i32_0 = arith.constant 0 : i32
    %c0_i32_1 = arith.constant 0 : i32
    return %c0_i32, %c0_i32_0 : i32, i32
  }
  func.func @transform_27(%arg0: i32) -> (i32, i32) {
    %c0_i32 = arith.constant 0 : i32
    %c0_i32_0 = arith.constant 0 : i32
    %c0_i32_1 = arith.constant 0 : i32
    return %c0_i32, %c0_i32_0 : i32, i32
  }
  func.func @transform_28(%arg0: i32) -> (i32, i32, i32) {
    %c0_i32 = arith.constant 0 : i32
    %c0_i32_0 = arith.constant 0 : i32
    %c0_i32_1 = arith.constant 0 : i32
    return %arg0, %c0_i32, %c0_i32_0 : i32, i32, i32
  }
}

</mosaic_0001>

<llo_original>
// kernel: squeezenet_forward.3
$region0: #{squeezenet_forward.3}
  #allocation0 [shape = 'u32[]', space=smem, size = 0x4, offset = 0x4, fixed_abs, tag = 'smem constant byte address 0x4 - core index']
  #allocation1 [shape = 'u32[144,128]{1,0:T(1,128)}', space=vmem, size = 0x12000, scoped, tag = 'internal scratch']
  %s0 = inlined_call_operand.vmem [shape: bf16[512,27], index: 0, kind: input, shape index: {}]
  %s1 = inlined_call_operand.vmem [shape: bf16[27,128], index: 1, kind: input, shape index: {}]
  %s2 = inlined_call_operand.vmem [shape: f32[1,128], index: 2, kind: input, shape index: {}]
  %s3 = inlined_call_operand.vmem [shape: bf16[512,128], index: 3, kind: output, shape index: {}]
  %s4 = sld [smem:[#allocation0]]
  $region45: #{squeezenet_forward.3} parent=0
    _
  %s6 = ssub.s32 1, %s4
  %s7 = scalar_select 0, %s6, %s4
  loop: start=0, step=1, limit=4
  $region2: #{squeezenet_forward.3} parent=0 // loop_pre_header
    _
  $region3: #{squeezenet_forward.3} parent=0 // loop_header
    %s9 = sphi 0, %s13
    %p10 = scmp.ge.s32.totalorder %s9, 4
    %s19 = sphi 0, %s21
    %s22 = sphi 0, %s19
    %s23 = sphi 0, %s22
    %s39 = sphi 0, %s23
    %s43 = sphi 0, %s43
    %s45 = sphi 0, %s43
    %s46 = sphi 0, %s45
    %s60 = sphi 0, %s46
    %s64 = sphi 0, %s64
    %s66 = sphi 0, %s64
    %s67 = sphi 0, %s66
    %s81 = sphi 0, %s67
    %s87 = sphi 0, %s89
    %s90 = sphi 0, %s87
    %s91 = sphi 0, %s90
    %s107 = sphi 0, %s91
  $region4: #{squeezenet_forward.3} parent=0 // loop_header_branch
    %12 = sbr.rel (%p10) target = $region8
  $region5: #{squeezenet_forward.3} parent=0 // loop_body
    %s14 = ssub.s32 %s9, 1
    %s15 = ssub.s32 %s9, 2
    %s16 = sadd.s32 %s9, 1
    %s17 = ssub.s32 %s9, %s16
    %p18 = scmp.eq.s32.totalorder %s17, 0
    %s20 = sadd.s32 %s19, 1
    %s21 = scalar_select %p18, %s19, %s20
    %p24 = pneg %p18
    %p25 = scmp.eq.s32.totalorder %s9, 1
    %p26 = por %p24, %p25
    %p27 = scmp.ne.s32.totalorder %s19, %s22
    %p28 = scmp.eq.s32.totalorder %s9, 0
    %p29 = por %p27, %p28
    %p30 = scmp.ne.s32.totalorder %s19, %s22
    %p31 = scmp.eq.s32.totalorder %s14, 1
    %p32 = por %p30, %p31
    %p33 = scmp.ne.s32.totalorder %s22, %s23
    %p34 = scmp.eq.s32.totalorder %s14, 0
    %p35 = por %p33, %p34
    %p36 = scmp.ne.s32.totalorder %s22, %s23
    %p37 = scmp.eq.s32.totalorder %s15, 1
    %p38 = por %p36, %p37
    %p40 = scmp.ne.s32.totalorder %s23, %s39
    %p41 = scmp.eq.s32.totalorder %s15, 0
    %p42 = por %p40, %p41
    %s44 = sadd.s32 %s43, 1
    %p47 = scmp.eq.s32.totalorder %s9, 1
    %p48 = scmp.ne.s32.totalorder %s43, %s45
    %p49 = scmp.eq.s32.totalorder %s9, 0
    %p50 = por %p48, %p49
    %p51 = scmp.ne.s32.totalorder %s43, %s45
    %p52 = scmp.eq.s32.totalorder %s14, 1
    %p53 = por %p51, %p52
    %p54 = scmp.ne.s32.totalorder %s45, %s46
    %p55 = scmp.eq.s32.totalorder %s14, 0
    %p56 = por %p54, %p55
    %p57 = scmp.ne.s32.totalorder %s45, %s46
    %p58 = scmp.eq.s32.totalorder %s15, 1
    %p59 = por %p57, %p58
    %p61 = scmp.ne.s32.totalorder %s46, %s60
    %p62 = scmp.eq.s32.totalorder %s15, 0
    %p63 = por %p61, %p62
    %s65 = sadd.s32 %s64, 1
    %p68 = scmp.eq.s32.totalorder %s9, 1
    %p69 = scmp.ne.s32.totalorder %s64, %s66
    %p70 = scmp.eq.s32.totalorder %s9, 0
    %p71 = por %p69, %p70
    %p72 = scmp.ne.s32.totalorder %s64, %s66
    %p73 = scmp.eq.s32.totalorder %s14, 1
    %p74 = por %p72, %p73
    %p75 = scmp.ne.s32.totalorder %s66, %s67
    %p76 = scmp.eq.s32.totalorder %s14, 0
    %p77 = por %p75, %p76
    %p78 = scmp.ne.s32.totalorder %s66, %s67
    %p79 = scmp.eq.s32.totalorder %s15, 1
    %p80 = por %p78, %p79
    %p82 = scmp.ne.s32.totalorder %s67, %s81
    %p83 = scmp.eq.s32.totalorder %s15, 0
    %p84 = por %p82, %p83
    %s85 = ssub.s32 %s9, %s16
    %p86 = scmp.eq.s32.totalorder %s85, 0
    %s88 = sadd.s32 %s87, 1
    %s89 = scalar_select %p86, %s87, %s88
    %p92 = pneg %p86
    %p93 = scmp.eq.s32.totalorder %s9, 1
    %p94 = por %p92, %p93
    %p95 = scmp.ne.s32.totalorder %s87, %s90
    %p96 = scmp.eq.s32.totalorder %s9, 0
    %p97 = por %p95, %p96
    %p98 = scmp.ne.s32.totalorder %s87, %s90
    %p99 = scmp.eq.s32.totalorder %s14, 1
    %p100 = por %p98, %p99
    %p101 = scmp.ne.s32.totalorder %s90, %s91
    %p102 = scmp.eq.s32.totalorder %s14, 0
    %p103 = por %p101, %p102
    %p104 = scmp.ne.s32.totalorder %s90, %s91
    %p105 = scmp.eq.s32.totalorder %s15, 1
    %p106 = por %p104, %p105
    %p108 = scmp.ne.s32.totalorder %s91, %s107
    %p109 = scmp.eq.s32.totalorder %s15, 0
    %p110 = por %p108, %p109
    %p111 = scmp.le.s32.totalorder 1, %s9
    %p112 = scmp.lt.s32.totalorder %s9, 3
    %p113 = pnand %p111, %p112
    %p114 = pneg %p113
    // Predicated region
    $region9: #{squeezenet_forward.3} parent=5 // pred_check
      _
    $region10: #{squeezenet_forward.3} parent=5 // pred_check_branch
      %116 = sbr.rel (%p113) target = $region12
    $region11: #{squeezenet_forward.3} parent=5 // pred_region
      %s117 = ssub.s32 %s9, 1
      // Predicated region
      $region13: #{squeezenet_forward.3} parent=11 // pred_check
        %p118 = pneg %p56
      $region14: #{squeezenet_forward.3} parent=11 // pred_check_branch
        %120 = sbr.rel (%p118) target = $region16
      $region15: #{squeezenet_forward.3} parent=11 // pred_region
        _
      $region16: #{squeezenet_forward.3} parent=11 // pred_fallthru
        _
      // Predicated region
      $region17: #{squeezenet_forward.3} parent=11 // pred_check
        %p121 = pneg %p77
      $region18: #{squeezenet_forward.3} parent=11 // pred_check_branch
        %123 = sbr.rel (%p121) target = $region20
      $region19: #{squeezenet_forward.3} parent=11 // pred_region
        _
      $region20: #{squeezenet_forward.3} parent=11 // pred_fallthru
        _
    $region12: #{squeezenet_forward.3} parent=5 // pred_fallthru
      _
    %p124 = scmp.lt.s32.totalorder %s9, 2
    // Predicated region
    $region21: #{squeezenet_forward.3} parent=5 // pred_check
      %p125 = pneg %p124
    $region22: #{squeezenet_forward.3} parent=5 // pred_check_branch
      %127 = sbr.rel (%p125) target = $region24
    $region23: #{squeezenet_forward.3} parent=5 // pred_region
      // Predicated region
      $region25: #{squeezenet_forward.3} parent=23 // pred_check
        %p128 = pneg %p29
      $region26: #{squeezenet_forward.3} parent=23 // pred_check_branch
        %130 = sbr.rel (%p128) target = $region28
      $region27: #{squeezenet_forward.3} parent=23 // pred_region
        %s131 = smul.u32 32, %s9
        %p132 = scmp.lt.s32.totalorder %s131, 63
        %s133 = scalar_select %p132, %s131, 63
        %s134 = smul.addr %s133, 4
        %s135 = scalar_lea.vmem %s0, %s134
        %s136 = smul.u32 32, %s9
      $region28: #{squeezenet_forward.3} parent=23 // pred_fallthru
        _
    $region24: #{squeezenet_forward.3} parent=5 // pred_fallthru
      _
    %p137 = scmp.le.s32.totalorder 1, %s9
    %p138 = scmp.lt.s32.totalorder %s9, 3
    %p139 = pnand %p137, %p138
    %p140 = pneg %p139
    // Predicated region
    $region29: #{squeezenet_forward.3} parent=5 // pred_check
      _
    $region30: #{squeezenet_forward.3} parent=5 // pred_check_branch
      %142 = sbr.rel (%p139) target = $region32
    $region31: #{squeezenet_forward.3} parent=5 // pred_region
      %s143 = ssub.s32 %s9, 1
      %s144 = smul.u32 32, %s14
      %p145 = scmp.lt.s32.totalorder %s144, 63
      %s146 = scalar_select %p145, %s144, 63
      %s147 = smul.addr %s146, 4
      %s148 = scalar_lea.vmem %s0, %s147
      %p149 = pneg %p35
      %p150 = pneg %p32
      %p151 = pneg %p56
      %p152 = pneg %p53
      %p153 = pneg %p77
      %p154 = pneg %p74
      %p155 = pneg %p103
      %p156 = pneg %p100
      %s157 = smul.u32 32, %s14
      %p158 = scmp.lt.s32.totalorder %s157, 63
      %s159 = scalar_select %p158, %s157, 63
      %s160 = smul.addr %s159, 4
      %s161 = scalar_lea.vmem %s3, %s160
      %s162 = smul.u32 32, %s14
      %p163 = scmp.lt.s32.totalorder %s162, 63
      %s164 = scalar_select %p163, %s162, 63
      %s165 = smul.addr %s164, 4
      %s166 = scalar_lea.vmem %s0, %s165
      %s167 = smul.u32 32, %s14
      %s168 = smul.u32 32, %s14
      %p169 = scmp.lt.s32.totalorder %s168, 63
      %s170 = scalar_select %p169, %s168, 63
      %s171 = smul.addr %s170, 4
      %s172 = scalar_lea.vmem %s3, %s171
      %s173 = smul.u32 32, %s14
      %v175 = vld [vmem:[%s166] sm:$0xf]
      %v176 = vld [vmem:[%s166 + $0x4] sm:$0xf]
      %v177 = vld [vmem:[%s166 + $0x8] sm:$0xf]
      %v178 = vld [vmem:[%s166 + $0xc] sm:$0xf]
      %v179 = vld [vmem:[%s166 + $0x10] sm:$0xf]
      %v180 = vld [vmem:[%s166 + $0x14] sm:$0xf]
      %v181 = vld [vmem:[%s166 + $0x18] sm:$0xf]
      %v182 = vld [vmem:[%s166 + $0x1c] sm:$0xf]
      %v183 = vld [vmem:[%s166 + $0x20] sm:$0xf]
      %v184 = vld [vmem:[%s166 + $0x24] sm:$0xf]
      %v185 = vld [vmem:[%s166 + $0x28] sm:$0xf]
      %v186 = vld [vmem:[%s166 + $0x2c] sm:$0xf]
      %v187 = vld [vmem:[%s166 + $0x30] sm:$0xf]
      %v188 = vld [vmem:[%s166 + $0x34] sm:$0xf]
      %v189 = vld [vmem:[%s166 + $0x38] sm:$0xf]
      %v190 = vld [vmem:[%s166 + $0x3c] sm:$0xf]
      %v191 = vld [vmem:[%s166 + $0x40] sm:$0xf]
      %v192 = vld [vmem:[%s166 + $0x44] sm:$0xf]
      %v193 = vld [vmem:[%s166 + $0x48] sm:$0xf]
      %v194 = vld [vmem:[%s166 + $0x4c] sm:$0xf]
      %v195 = vld [vmem:[%s166 + $0x50] sm:$0xf]
      %v196 = vld [vmem:[%s166 + $0x54] sm:$0xf]
      %v197 = vld [vmem:[%s166 + $0x58] sm:$0xf]
      %v198 = vld [vmem:[%s166 + $0x5c] sm:$0xf]
      %v199 = vld [vmem:[%s166 + $0x60] sm:$0xf]
      %v200 = vld [vmem:[%s166 + $0x64] sm:$0xf]
      %v201 = vld [vmem:[%s166 + $0x68] sm:$0xf]
      %v202 = vld [vmem:[%s166 + $0x6c] sm:$0xf]
      %v203 = vld [vmem:[%s166 + $0x70] sm:$0xf]
      %v204 = vld [vmem:[%s166 + $0x74] sm:$0xf]
      %v205 = vld [vmem:[%s166 + $0x78] sm:$0xf]
      %v206 = vld [vmem:[%s166 + $0x7c] sm:$0xf]
      %v207 = vld [vmem:[%s1] sm:$0xf]
      %v208 = vld [vmem:[%s1 + $0x4] sm:$0xf]
      %v209 = vld [vmem:[%s1 + $0x8] sm:$0xf]
      %v210 = vld [vmem:[%s1 + $0xc] sm:$0x3]
      %v211 = vld [vmem:[%s2] sm:$0x1]
      %v213 = vlaneseq
      %v214 = vshrl.u32 %v213, 7
      %v215 = vsub.s32 0, %v214
      %v216 = vrot.slane %v211, %v215
      %v250 = vunpack.c.l.b16 %v175
      %v251 = vunpack.c.l.b16 %v176
      %v252 = vunpack.c.l.b16 %v177
      %v253 = vunpack.c.l.b16 %v178
      %v254 = vunpack.c.l.b16 %v179
      %v255 = vunpack.c.l.b16 %v180
      %v256 = vunpack.c.l.b16 %v181
      %v257 = vunpack.c.l.b16 %v182
      %v258 = vunpack.c.l.b16 %v183
      %v259 = vunpack.c.l.b16 %v184
      %v260 = vunpack.c.l.b16 %v185
      %v261 = vunpack.c.l.b16 %v186
      %v262 = vunpack.c.l.b16 %v187
      %v263 = vunpack.c.l.b16 %v188
      %v264 = vunpack.c.l.b16 %v189
      %v265 = vunpack.c.l.b16 %v190
      %v266 = vunpack.c.l.b16 %v191
      %v267 = vunpack.c.l.b16 %v192
      %v268 = vunpack.c.l.b16 %v193
      %v269 = vunpack.c.l.b16 %v194
      %v270 = vunpack.c.l.b16 %v195
      %v271 = vunpack.c.l.b16 %v196
      %v272 = vunpack.c.l.b16 %v197
      %v273 = vunpack.c.l.b16 %v198
      %v274 = vunpack.c.l.b16 %v199
      %v275 = vunpack.c.l.b16 %v200
      %v276 = vunpack.c.l.b16 %v201
      %v277 = vunpack.c.l.b16 %v202
      %v278 = vunpack.c.l.b16 %v203
      %v279 = vunpack.c.l.b16 %v204
      %v280 = vunpack.c.l.b16 %v205
      %v281 = vunpack.c.l.b16 %v206
      %v282 = vpack.c.b16 %v251, %v250
      %v283 = vpack.c.b16 %v253, %v252
      %v284 = vpack.c.b16 %v255, %v254
      %v285 = vpack.c.b16 %v257, %v256
      %v286 = vpack.c.b16 %v259, %v258
      %v287 = vpack.c.b16 %v261, %v260
      %v288 = vpack.c.b16 %v263, %v262
      %v289 = vpack.c.b16 %v265, %v264
      %v290 = vpack.c.b16 %v267, %v266
      %v291 = vpack.c.b16 %v269, %v268
      %v292 = vpack.c.b16 %v271, %v270
      %v293 = vpack.c.b16 %v273, %v272
      %v294 = vpack.c.b16 %v275, %v274
      %v295 = vpack.c.b16 %v277, %v276
      %v296 = vpack.c.b16 %v279, %v278
      %v297 = vpack.c.b16 %v281, %v280
      %v302 = vunpack.c.l.b16 %v207
      %v303 = vunpack.c.l.b16 %v208
      %v304 = vunpack.c.l.b16 %v209
      %v305 = vunpack.c.l.b16 %v210
      %v306 = vpack.c.b16 %v303, %v302
      %v307 = vpack.c.b16 %v305, %v304
      %vm309 = vcmask 220160
      %v311 = vsel %vm309, %v282, 0
      %v314 = vsel %vm309, %v283, 0
      %v317 = vsel %vm309, %v284, 0
      %v320 = vsel %vm309, %v285, 0
      %v323 = vsel %vm309, %v286, 0
      %v326 = vsel %vm309, %v287, 0
      %v329 = vsel %vm309, %v288, 0
      %v332 = vsel %vm309, %v289, 0
      %v335 = vsel %vm309, %v290, 0
      %v338 = vsel %vm309, %v291, 0
      %v341 = vsel %vm309, %v292, 0
      %v344 = vsel %vm309, %v293, 0
      %v347 = vsel %vm309, %v294, 0
      %v350 = vsel %vm309, %v295, 0
      %v353 = vsel %vm309, %v296, 0
      %v356 = vsel %vm309, %v297, 0
      %vm358 = vcmask 1044480
      %vm359 = vcmask 1045504
      %v360 = vsel %vm358, 4294967295, 65535
      %v361 = vsel %vm359, %v360, 0
      %v363 = vand.u32 %v307, %v361
      %365 = vmatprep.subr.bf16.mxu0 0
      %366 = vmatpush1.bf16.msra.mxu0 %v306
      %367 = vmatprep.subr.bf16.mxu0 0
      %368 = vmatpush1.bf16.msra.mxu0 %v363
      %369 = vmatprep.subr.bf16.mxu0 0
      %370 = vmatpush1.bf16.msra.mxu0 0
      %371 = vmatprep.subr.bf16.mxu0 0
      %372 = vmatpush1.bf16.msra.mxu0 0
      %373 = vmatprep.subr.bf16.mxu0 0
      %374 = vmatpush1.bf16.msra.mxu0 0
      %375 = vmatprep.subr.bf16.mxu0 0
      %376 = vmatpush1.bf16.msra.mxu0 0
      %377 = vmatprep.subr.bf16.mxu0 0
      %378 = vmatpush1.bf16.msra.mxu0 0
      %379 = vmatprep.subr.bf16.mxu0 0
      %380 = vmatpush1.bf16.msra.mxu0 0
      %381 = vmatprep.subr.bf16.mxu0 0
      %382 = vmatpush1.bf16.msra.mxu0 0
      %383 = vmatprep.subr.bf16.mxu0 0
      %384 = vmatpush1.bf16.msra.mxu0 0
      %385 = vmatprep.subr.bf16.mxu0 0
      %386 = vmatpush1.bf16.msra.mxu0 0
      %387 = vmatprep.subr.bf16.mxu0 0
      %388 = vmatpush1.bf16.msra.mxu0 0
      %389 = vmatprep.subr.bf16.mxu0 0
      %390 = vmatpush1.bf16.msra.mxu0 0
      %391 = vmatprep.subr.bf16.mxu0 0
      %392 = vmatpush1.bf16.msra.mxu0 0
      %393 = vmatprep.subr.bf16.mxu0 0
      %394 = vmatpush1.bf16.msra.mxu0 0
      %395 = vmatprep.subr.bf16.mxu0 0
      %396 = vmatpush1.bf16.msra.mxu0 0
      %397 = vmatprep.mubr.bf16.mxu0 0
      %398 = vmatmul.mubr.bf16.gmra.mrb[0].mxu0 %v311
      %v399 = vpop.f32.mrb[0].mxu0
      %v400 = vadd.f32 %v216, %v399
      %v401 = vpop.f32.mrb[0].mxu0
      %v402 = vpop.f32.mrb[0].mxu0
      %v403 = vadd.f32 %v216, %v402
      %v404 = vpop.f32.mrb[0].mxu0
      %405 = vmatprep.mubr.bf16.mxu0 0
      %406 = vmatmul.mubr.bf16.gmra.mrb[0].mxu0 %v314
      %v407 = vpop.f32.mrb[0].mxu0
      %v408 = vadd.f32 %v216, %v407
      %v409 = vpop.f32.mrb[0].mxu0
      %v410 = vpop.f32.mrb[0].mxu0
      %v411 = vadd.f32 %v216, %v410
      %v412 = vpop.f32.mrb[0].mxu0
      %413 = vmatprep.mubr.bf16.mxu0 0
      %414 = vmatmul.mubr.bf16.gmra.mrb[0].mxu0 %v317
      %v415 = vpop.f32.mrb[0].mxu0
      %v416 = vadd.f32 %v216, %v415
      %v417 = vpop.f32.mrb[0].mxu0
      %v418 = vpop.f32.mrb[0].mxu0
      %v419 = vadd.f32 %v216, %v418
      %v420 = vpop.f32.mrb[0].mxu0
      %421 = vmatprep.mubr.bf16.mxu0 0
      %422 = vmatmul.mubr.bf16.gmra.mrb[0].mxu0 %v320
      %v423 = vpop.f32.mrb[0].mxu0
      %v424 = vadd.f32 %v216, %v423
      %v425 = vpop.f32.mrb[0].mxu0
      %v426 = vpop.f32.mrb[0].mxu0
      %v427 = vadd.f32 %v216, %v426
      %v428 = vpop.f32.mrb[0].mxu0
      %429 = vmatprep.mubr.bf16.mxu0 0
      %430 = vmatmul.mubr.bf16.gmra.mrb[0].mxu0 %v323
      %v431 = vpop.f32.mrb[0].mxu0
      %v432 = vadd.f32 %v216, %v431
      %v433 = vpop.f32.mrb[0].mxu0
      %v434 = vpop.f32.mrb[0].mxu0
      %v435 = vadd.f32 %v216, %v434
      %v436 = vpop.f32.mrb[0].mxu0
      %437 = vmatprep.mubr.bf16.mxu0 0
      %438 = vmatmul.mubr.bf16.gmra.mrb[0].mxu0 %v326
      %v439 = vpop.f32.mrb[0].mxu0
      %v440 = vadd.f32 %v216, %v439
      %v441 = vpop.f32.mrb[0].mxu0
      %v442 = vpop.f32.mrb[0].mxu0
      %v443 = vadd.f32 %v216, %v442
      %v444 = vpop.f32.mrb[0].mxu0
      %445 = vmatprep.mubr.bf16.mxu0 0
      %446 = vmatmul.mubr.bf16.gmra.mrb[0].mxu0 %v329
      %v447 = vpop.f32.mrb[0].mxu0
      %v448 = vadd.f32 %v216, %v447
      %v449 = vpop.f32.mrb[0].mxu0
      %v450 = vpop.f32.mrb[0].mxu0
      %v451 = vadd.f32 %v216, %v450
      %v452 = vpop.f32.mrb[0].mxu0
      %453 = vmatprep.mubr.bf16.mxu0 0
      %454 = vmatmul.mubr.bf16.gmra.mrb[0].mxu0 %v332
      %v455 = vpop.f32.mrb[0].mxu0
      %v456 = vadd.f32 %v216, %v455
      %v457 = vpop.f32.mrb[0].mxu0
      %v458 = vpop.f32.mrb[0].mxu0
      %v459 = vadd.f32 %v216, %v458
      %v460 = vpop.f32.mrb[0].mxu0
      %461 = vmatprep.mubr.bf16.mxu0 0
      %462 = vmatmul.mubr.bf16.gmra.mrb[0].mxu0 %v335
      %v463 = vpop.f32.mrb[0].mxu0
      %v464 = vadd.f32 %v216, %v463
      %v465 = vpop.f32.mrb[0].mxu0
      %v466 = vpop.f32.mrb[0].mxu0
      %v467 = vadd.f32 %v216, %v466
      %v468 = vpop.f32.mrb[0].mxu0
      %469 = vmatprep.mubr.bf16.mxu0 0
      %470 = vmatmul.mubr.bf16.gmra.mrb[0].mxu0 %v338
      %v471 = vpop.f32.mrb[0].mxu0
      %v472 = vadd.f32 %v216, %v471
      %v473 = vpop.f32.mrb[0].mxu0
      %v474 = vpop.f32.mrb[0].mxu0
      %v475 = vadd.f32 %v216, %v474
      %v476 = vpop.f32.mrb[0].mxu0
      %477 = vmatprep.mubr.bf16.mxu0 0
      %478 = vmatmul.mubr.bf16.gmra.mrb[0].mxu0 %v341
      %v479 = vpop.f32.mrb[0].mxu0
      %v480 = vadd.f32 %v216, %v479
      %v481 = vpop.f32.mrb[0].mxu0
      %v482 = vpop.f32.mrb[0].mxu0
      %v483 = vadd.f32 %v216, %v482
      %v484 = vpop.f32.mrb[0].mxu0
      %485 = vmatprep.mubr.bf16.mxu0 0
      %486 = vmatmul.mubr.bf16.gmra.mrb[0].mxu0 %v344
      %v487 = vpop.f32.mrb[0].mxu0
      %v488 = vadd.f32 %v216, %v487
      %v489 = vpop.f32.mrb[0].mxu0
      %v490 = vpop.f32.mrb[0].mxu0
      %v491 = vadd.f32 %v216, %v490
      %v492 = vpop.f32.mrb[0].mxu0
      %493 = vmatprep.mubr.bf16.mxu0 0
      %494 = vmatmul.mubr.bf16.gmra.mrb[0].mxu0 %v347
      %v495 = vpop.f32.mrb[0].mxu0
      %v496 = vadd.f32 %v216, %v495
      %v497 = vpop.f32.mrb[0].mxu0
      %v498 = vpop.f32.mrb[0].mxu0
      %v499 = vadd.f32 %v216, %v498
      %v500 = vpop.f32.mrb[0].mxu0
      %501 = vmatprep.mubr.bf16.mxu0 0
      %502 = vmatmul.mubr.bf16.gmra.mrb[0].mxu0 %v350
      %v503 = vpop.f32.mrb[0].mxu0
      %v504 = vadd.f32 %v216, %v503
      %v505 = vpop.f32.mrb[0].mxu0
      %v506 = vpop.f32.mrb[0].mxu0
      %v507 = vadd.f32 %v216, %v506
      %v508 = vpop.f32.mrb[0].mxu0
      %509 = vmatprep.mubr.bf16.mxu0 0
      %510 = vmatmul.mubr.bf16.gmra.mrb[0].mxu0 %v353
      %v511 = vpop.f32.mrb[0].mxu0
      %v512 = vadd.f32 %v216, %v511
      %v513 = vpop.f32.mrb[0].mxu0
      %v514 = vpop.f32.mrb[0].mxu0
      %v515 = vadd.f32 %v216, %v514
      %v516 = vpop.f32.mrb[0].mxu0
      %517 = vmatprep.mubr.bf16.mxu0 0
      %518 = vmatmul.mubr.bf16.gmra.mrb[0].mxu0 %v356
      %v519 = vpop.f32.mrb[0].mxu0
      %v520 = vadd.f32 %v216, %v519
      %v521 = vpop.f32.mrb[0].mxu0
      %v522 = vpop.f32.mrb[0].mxu0
      %v523 = vadd.f32 %v216, %v522
      %v524 = vpop.f32.mrb[0].mxu0
      %525 = vdwg.mxu0
      %v526 = vmax.f32 %v400, 0.0
      %v527 = vmax.f32 %v403, 0.0
      %v528 = vmax.f32 %v408, 0.0
      %v529 = vmax.f32 %v411, 0.0
      %v530 = vmax.f32 %v416, 0.0
      %v531 = vmax.f32 %v419, 0.0
      %v532 = vmax.f32 %v424, 0.0
      %v533 = vmax.f32 %v427, 0.0
      %v534 = vmax.f32 %v432, 0.0
      %v535 = vmax.f32 %v435, 0.0
      %v536 = vmax.f32 %v440, 0.0
      %v537 = vmax.f32 %v443, 0.0
      %v538 = vmax.f32 %v448, 0.0
      %v539 = vmax.f32 %v451, 0.0
      %v540 = vmax.f32 %v456, 0.0
      %v541 = vmax.f32 %v459, 0.0
      %v542 = vmax.f32 %v464, 0.0
      %v543 = vmax.f32 %v467, 0.0
      %v544 = vmax.f32 %v472, 0.0
      %v545 = vmax.f32 %v475, 0.0
      %v546 = vmax.f32 %v480, 0.0
      %v547 = vmax.f32 %v483, 0.0
      %v548 = vmax.f32 %v488, 0.0
      %v549 = vmax.f32 %v491, 0.0
      %v550 = vmax.f32 %v496, 0.0
      %v551 = vmax.f32 %v499, 0.0
      %v552 = vmax.f32 %v504, 0.0
      %v553 = vmax.f32 %v507, 0.0
      %v554 = vmax.f32 %v512, 0.0
      %v555 = vmax.f32 %v515, 0.0
      %v556 = vmax.f32 %v520, 0.0
      %v557 = vmax.f32 %v523, 0.0
      %v558 = vpack.c.bf16 %v527, %v526
      %v559 = vpack.c.bf16 %v529, %v528
      %v560 = vpack.c.bf16 %v531, %v530
      %v561 = vpack.c.bf16 %v533, %v532
      %v562 = vpack.c.bf16 %v535, %v534
      %v563 = vpack.c.bf16 %v537, %v536
      %v564 = vpack.c.bf16 %v539, %v538
      %v565 = vpack.c.bf16 %v541, %v540
      %v566 = vpack.c.bf16 %v543, %v542
      %v567 = vpack.c.bf16 %v545, %v544
      %v568 = vpack.c.bf16 %v547, %v546
      %v569 = vpack.c.bf16 %v549, %v548
      %v570 = vpack.c.bf16 %v551, %v550
      %v571 = vpack.c.bf16 %v553, %v552
      %v572 = vpack.c.bf16 %v555, %v554
      %v573 = vpack.c.bf16 %v557, %v556
      %v590 = vunpack.c.l.b16 %v558
      %v591 = vunpack.c.h.b16 %v558
      %v592 = vunpack.c.l.b16 %v559
      %v593 = vunpack.c.h.b16 %v559
      %v594 = vunpack.c.l.b16 %v560
      %v595 = vunpack.c.h.b16 %v560
      %v596 = vunpack.c.l.b16 %v561
      %v597 = vunpack.c.h.b16 %v561
      %v598 = vunpack.c.l.b16 %v562
      %v599 = vunpack.c.h.b16 %v562
      %v600 = vunpack.c.l.b16 %v563
      %v601 = vunpack.c.h.b16 %v563
      %v602 = vunpack.c.l.b16 %v564
      %v603 = vunpack.c.h.b16 %v564
      %v604 = vunpack.c.l.b16 %v565
      %v605 = vunpack.c.h.b16 %v565
      %v606 = vunpack.c.l.b16 %v566
      %v607 = vunpack.c.h.b16 %v566
      %v608 = vunpack.c.l.b16 %v567
      %v609 = vunpack.c.h.b16 %v567
      %v610 = vunpack.c.l.b16 %v568
      %v611 = vunpack.c.h.b16 %v568
      %v612 = vunpack.c.l.b16 %v569
      %v613 = vunpack.c.h.b16 %v569
      %v614 = vunpack.c.l.b16 %v570
      %v615 = vunpack.c.h.b16 %v570
      %v616 = vunpack.c.l.b16 %v571
      %v617 = vunpack.c.h.b16 %v571
      %v618 = vunpack.c.l.b16 %v572
      %v619 = vunpack.c.h.b16 %v572
      %v620 = vunpack.c.l.b16 %v573
      %v621 = vunpack.c.h.b16 %v573
      %v622 = vpack.c.b16 %v590, %v590
      %v623 = vpack.c.b16 %v591, %v591
      %v624 = vpack.c.b16 %v592, %v592
      %v625 = vpack.c.b16 %v593, %v593
      %v626 = vpack.c.b16 %v594, %v594
      %v627 = vpack.c.b16 %v595, %v595
      %v628 = vpack.c.b16 %v596, %v596
      %v629 = vpack.c.b16 %v597, %v597
      %v630 = vpack.c.b16 %v598, %v598
      %v631 = vpack.c.b16 %v599, %v599
      %v632 = vpack.c.b16 %v600, %v600
      %v633 = vpack.c.b16 %v601, %v601
      %v634 = vpack.c.b16 %v602, %v602
      %v635 = vpack.c.b16 %v603, %v603
      %v636 = vpack.c.b16 %v604, %v604
      %v637 = vpack.c.b16 %v605, %v605
      %v638 = vpack.c.b16 %v606, %v606
      %v639 = vpack.c.b16 %v607, %v607
      %v640 = vpack.c.b16 %v608, %v608
      %v641 = vpack.c.b16 %v609, %v609
      %v642 = vpack.c.b16 %v610, %v610
      %v643 = vpack.c.b16 %v611, %v611
      %v644 = vpack.c.b16 %v612, %v612
      %v645 = vpack.c.b16 %v613, %v613
      %v646 = vpack.c.b16 %v614, %v614
      %v647 = vpack.c.b16 %v615, %v615
      %v648 = vpack.c.b16 %v616, %v616
      %v649 = vpack.c.b16 %v617, %v617
      %v650 = vpack.c.b16 %v618, %v618
      %v651 = vpack.c.b16 %v619, %v619
      %v652 = vpack.c.b16 %v620, %v620
      %v653 = vpack.c.b16 %v621, %v621
      %686 = vst [vmem:[%s172] sm:$0xf] %v622
      %687 = vst [vmem:[%s172 + $0x4] sm:$0xf] %v623
      %688 = vst [vmem:[%s172 + $0x8] sm:$0xf] %v624
      %689 = vst [vmem:[%s172 + $0xc] sm:$0xf] %v625
      %690 = vst [vmem:[%s172 + $0x10] sm:$0xf] %v626
      %691 = vst [vmem:[%s172 + $0x14] sm:$0xf] %v627
      %692 = vst [vmem:[%s172 + $0x18] sm:$0xf] %v628
      %693 = vst [vmem:[%s172 + $0x1c] sm:$0xf] %v629
      %694 = vst [vmem:[%s172 + $0x20] sm:$0xf] %v630
      %695 = vst [vmem:[%s172 + $0x24] sm:$0xf] %v631
      %696 = vst [vmem:[%s172 + $0x28] sm:$0xf] %v632
      %697 = vst [vmem:[%s172 + $0x2c] sm:$0xf] %v633
      %698 = vst [vmem:[%s172 + $0x30] sm:$0xf] %v634
      %699 = vst [vmem:[%s172 + $0x34] sm:$0xf] %v635
      %700 = vst [vmem:[%s172 + $0x38] sm:$0xf] %v636
      %701 = vst [vmem:[%s172 + $0x3c] sm:$0xf] %v637
      %702 = vst [vmem:[%s172 + $0x40] sm:$0xf] %v638
      %703 = vst [vmem:[%s172 + $0x44] sm:$0xf] %v639
      %704 = vst [vmem:[%s172 + $0x48] sm:$0xf] %v640
      %705 = vst [vmem:[%s172 + $0x4c] sm:$0xf] %v641
      %706 = vst [vmem:[%s172 + $0x50] sm:$0xf] %v642
      %707 = vst [vmem:[%s172 + $0x54] sm:$0xf] %v643
      %708 = vst [vmem:[%s172 + $0x58] sm:$0xf] %v644
      %709 = vst [vmem:[%s172 + $0x5c] sm:$0xf] %v645
      %710 = vst [vmem:[%s172 + $0x60] sm:$0xf] %v646
      %711 = vst [vmem:[%s172 + $0x64] sm:$0xf] %v647
      %712 = vst [vmem:[%s172 + $0x68] sm:$0xf] %v648
      %713 = vst [vmem:[%s172 + $0x6c] sm:$0xf] %v649
      %714 = vst [vmem:[%s172 + $0x70] sm:$0xf] %v650
      %715 = vst [vmem:[%s172 + $0x74] sm:$0xf] %v651
      %716 = vst [vmem:[%s172 + $0x78] sm:$0xf] %v652
      %717 = vst [vmem:[%s172 + $0x7c] sm:$0xf] %v653
      %s718 = smul.u32 32, %s14
      %p719 = scmp.lt.s32.totalorder %s718, 63
      %s720 = scalar_select %p719, %s718, 63
      %s721 = smul.addr %s720, 4
      %s722 = scalar_lea.vmem %s3, %s721
      // Predicated region
      $region33: #{squeezenet_forward.3} parent=31 // pred_check
        %p723 = pneg %p100
      $region34: #{squeezenet_forward.3} parent=31 // pred_check_branch
        %725 = sbr.rel (%p723) target = $region36
      $region35: #{squeezenet_forward.3} parent=31 // pred_region
        %s726 = smul.u32 32, %s14
      $region36: #{squeezenet_forward.3} parent=31 // pred_fallthru
        _
    $region32: #{squeezenet_forward.3} parent=5 // pred_fallthru
      _
    %p727 = scmp.le.s32.totalorder 2, %s9
    // Predicated region
    $region37: #{squeezenet_forward.3} parent=5 // pred_check
      %p728 = pneg %p727
    $region38: #{squeezenet_forward.3} parent=5 // pred_check_branch
      %730 = sbr.rel (%p728) target = $region40
    $region39: #{squeezenet_forward.3} parent=5 // pred_region
      %s731 = ssub.s32 %s9, 2
      // Predicated region
      $region41: #{squeezenet_forward.3} parent=39 // pred_check
        %p732 = pneg %p106
      $region42: #{squeezenet_forward.3} parent=39 // pred_check_branch
        %734 = sbr.rel (%p732) target = $region44
      $region43: #{squeezenet_forward.3} parent=39 // pred_region
        %s735 = smul.u32 32, %s15
        %p736 = scmp.lt.s32.totalorder %s735, 63
        %s737 = scalar_select %p736, %s735, 63
        %s738 = smul.addr %s737, 4
        %s739 = scalar_lea.vmem %s3, %s738
      $region44: #{squeezenet_forward.3} parent=39 // pred_fallthru
        _
    $region40: #{squeezenet_forward.3} parent=5 // pred_fallthru
      _
  $region6: #{squeezenet_forward.3} parent=0 // loop_footer
    %s13 = sadd.s32 1, %s9
  $region7: #{squeezenet_forward.3} parent=0 // loop_footer_branch
    %8 = sbr.rel target = $region3
  $region8: #{squeezenet_forward.3} parent=0 // loop_exit
    _

// kernel: squeezenet_forward.4
$region0: #{squeezenet_forward.4}
  #allocation0 [shape = 'u32[]', space=smem, size = 0x4, offset = 0x4, fixed_abs, tag = 'smem constant byte address 0x4 - core index']
  #allocation1 [shape = 'u32[144,128]{1,0:T(1,128)}', space=vmem, size = 0x12000, scoped, tag = 'internal scratch']
  #allocation2 [shape = 'f32[88,128]{1,0:T(8,128)}', space=vmem, size = 0xb000, scoped, tag = 'scratch operand']
  %s0 = inlined_call_operand.vmem [shape: bf16[2,88,64], index: 0, kind: input, shape index: {}]
  %s1 = inlined_call_operand.vmem [shape: f32[88,1], index: 1, kind: input, shape index: {}]
  %s2 = inlined_call_operand.vmem [shape: bf16[64,16], index: 2, kind: input, shape index: {}]
  %s3 = inlined_call_operand.vmem [shape: f32[1,16], index: 3, kind: input, shape index: {}]
  %s4 = inlined_call_operand.vmem [shape: bf16[144,128], index: 4, kind: input, shape index: {}]
  %s5 = inlined_call_operand.vmem [shape: f32[1,128], index: 5, kind: input, shape index: {}]
  %s6 = inlined_call_operand.vmem [shape: bf16[128,16], index: 6, kind: input, shape index: {}]
  %s7 = inlined_call_operand.vmem [shape: f32[1,16], index: 7, kind: input, shape index: {}]
  %s8 = inlined_call_operand.vmem [shape: bf16[144,128], index: 8, kind: input, shape index: {}]
  %s9 = inlined_call_operand.vmem [shape: f32[1,128], index: 9, kind: input, shape index: {}]
  %s10 = inlined_call_operand.vmem [shape: bf16[2,63,128], index: 10, kind: output, shape index: {}]
  %s11 = sld [smem:[#allocation0]]
  $region73: #{squeezenet_forward.4} parent=0
    _
  %s13 = ssub.s32 1, %s11
  %s14 = scalar_select 0, %s13, %s11
  loop: start=0, step=1, limit=4
  $region2: #{squeezenet_forward.4} parent=0 // loop_pre_header
    _
  $region3: #{squeezenet_forward.4} parent=0 // loop_header
    %s16 = sphi 0, %s20
    %p17 = scmp.ge.s32.totalorder %s16, 4
    %s26 = sphi 0, %s28
    %s29 = sphi 0, %s26
    %s30 = sphi 0, %s29
    %s46 = sphi 0, %s30
    %s50 = sphi 0, %s50
    %s52 = sphi 0, %s50
    %s53 = sphi 0, %s52
    %s67 = sphi 0, %s53
    %s71 = sphi 0, %s71
    %s73 = sphi 0, %s71
    %s74 = sphi 0, %s73
    %s88 = sphi 0, %s74
    %s92 = sphi 0, %s92
    %s94 = sphi 0, %s92
    %s95 = sphi 0, %s94
    %s109 = sphi 0, %s95
    %s113 = sphi 0, %s113
    %s115 = sphi 0, %s113
    %s116 = sphi 0, %s115
    %s130 = sphi 0, %s116
    %s134 = sphi 0, %s134
    %s136 = sphi 0, %s134
    %s137 = sphi 0, %s136
    %s151 = sphi 0, %s137
    %s155 = sphi 0, %s155
    %s157 = sphi 0, %s155
    %s158 = sphi 0, %s157
    %s172 = sphi 0, %s158
    %s176 = sphi 0, %s176
    %s178 = sphi 0, %s176
    %s179 = sphi 0, %s178
    %s193 = sphi 0, %s179
    %s197 = sphi 0, %s197
    %s199 = sphi 0, %s197
    %s200 = sphi 0, %s199
    %s214 = sphi 0, %s200
    %s218 = sphi 0, %s218
    %s220 = sphi 0, %s218
    %s221 = sphi 0, %s220
    %s235 = sphi 0, %s221
    %s241 = sphi 0, %s243
    %s244 = sphi 0, %s241
    %s245 = sphi 0, %s244
    %s261 = sphi 0, %s245
  $region4: #{squeezenet_forward.4} parent=0 // loop_header_branch
    %19 = sbr.rel (%p17) target = $region8
  $region5: #{squeezenet_forward.4} parent=0 // loop_body
    %s21 = ssub.s32 %s16, 1
    %s22 = ssub.s32 %s16, 2
    %s23 = sadd.s32 %s16, 1
    %s24 = ssub.s32 %s16, %s23
    %p25 = scmp.eq.s32.totalorder %s24, 0
    %s27 = sadd.s32 %s26, 1
    %s28 = scalar_select %p25, %s26, %s27
    %p31 = pneg %p25
    %p32 = scmp.eq.s32.totalorder %s16, 1
    %p33 = por %p31, %p32
    %p34 = scmp.ne.s32.totalorder %s26, %s29
    %p35 = scmp.eq.s32.totalorder %s16, 0
    %p36 = por %p34, %p35
    %p37 = scmp.ne.s32.totalorder %s26, %s29
    %p38 = scmp.eq.s32.totalorder %s21, 1
    %p39 = por %p37, %p38
    %p40 = scmp.ne.s32.totalorder %s29, %s30
    %p41 = scmp.eq.s32.totalorder %s21, 0
    %p42 = por %p40, %p41
    %p43 = scmp.ne.s32.totalorder %s29, %s30
    %p44 = scmp.eq.s32.totalorder %s22, 1
    %p45 = por %p43, %p44
    %p47 = scmp.ne.s32.totalorder %s30, %s46
    %p48 = scmp.eq.s32.totalorder %s22, 0
    %p49 = por %p47, %p48
    %s51 = sadd.s32 %s50, 1
    %p54 = scmp.eq.s32.totalorder %s16, 1
    %p55 = scmp.ne.s32.totalorder %s50, %s52
    %p56 = scmp.eq.s32.totalorder %s16, 0
    %p57 = por %p55, %p56
    %p58 = scmp.ne.s32.totalorder %s50, %s52
    %p59 = scmp.eq.s32.totalorder %s21, 1
    %p60 = por %p58, %p59
    %p61 = scmp.ne.s32.totalorder %s52, %s53
    %p62 = scmp.eq.s32.totalorder %s21, 0
    %p63 = por %p61, %p62
    %p64 = scmp.ne.s32.totalorder %s52, %s53
    %p65 = scmp.eq.s32.totalorder %s22, 1
    %p66 = por %p64, %p65
    %p68 = scmp.ne.s32.totalorder %s53, %s67
    %p69 = scmp.eq.s32.totalorder %s22, 0
    %p70 = por %p68, %p69
    %s72 = sadd.s32 %s71, 1
    %p75 = scmp.eq.s32.totalorder %s16, 1
    %p76 = scmp.ne.s32.totalorder %s71, %s73
    %p77 = scmp.eq.s32.totalorder %s16, 0
    %p78 = por %p76, %p77
    %p79 = scmp.ne.s32.totalorder %s71, %s73
    %p80 = scmp.eq.s32.totalorder %s21, 1
    %p81 = por %p79, %p80
    %p82 = scmp.ne.s32.totalorder %s73, %s74
    %p83 = scmp.eq.s32.totalorder %s21, 0
    %p84 = por %p82, %p83
    %p85 = scmp.ne.s32.totalorder %s73, %s74
    %p86 = scmp.eq.s32.totalorder %s22, 1
    %p87 = por %p85, %p86
    %p89 = scmp.ne.s32.totalorder %s74, %s88
    %p90 = scmp.eq.s32.totalorder %s22, 0
    %p91 = por %p89, %p90
    %s93 = sadd.s32 %s92, 1
    %p96 = scmp.eq.s32.totalorder %s16, 1
    %p97 = scmp.ne.s32.totalorder %s92, %s94
    %p98 = scmp.eq.s32.totalorder %s16, 0
    %p99 = por %p97, %p98
    %p100 = scmp.ne.s32.totalorder %s92, %s94
    %p101 = scmp.eq.s32.totalorder %s21, 1
    %p102 = por %p100, %p101
    %p103 = scmp.ne.s32.totalorder %s94, %s95
    %p104 = scmp.eq.s32.totalorder %s21, 0
    %p105 = por %p103, %p104
    %p106 = scmp.ne.s32.totalorder %s94, %s95
    %p107 = scmp.eq.s32.totalorder %s22, 1
    %p108 = por %p106, %p107
    %p110 = scmp.ne.s32.totalorder %s95, %s109
    %p111 = scmp.eq.s32.totalorder %s22, 0
    %p112 = por %p110, %p111
    %s114 = sadd.s32 %s113, 1
    %p117 = scmp.eq.s32.totalorder %s16, 1
    %p118 = scmp.ne.s32.totalorder %s113, %s115
    %p119 = scmp.eq.s32.totalorder %s16, 0
    %p120 = por %p118, %p119
    %p121 = scmp.ne.s32.totalorder %s113, %s115
    %p122 = scmp.eq.s32.totalorder %s21, 1
    %p123 = por %p121, %p122
    %p124 = scmp.ne.s32.totalorder %s115, %s116
    %p125 = scmp.eq.s32.totalorder %s21, 0
    %p126 = por %p124, %p125
    %p127 = scmp.ne.s32.totalorder %s115, %s116
    %p128 = scmp.eq.s32.totalorder %s22, 1
    %p129 = por %p127, %p128
    %p131 = scmp.ne.s32.totalorder %s116, %s130
    %p132 = scmp.eq.s32.totalorder %s22, 0
    %p133 = por %p131, %p132
    %s135 = sadd.s32 %s134, 1
    %p138 = scmp.eq.s32.totalorder %s16, 1
    %p139 = scmp.ne.s32.totalorder %s134, %s136
    %p140 = scmp.eq.s32.totalorder %s16, 0
    %p141 = por %p139, %p140
    %p142 = scmp.ne.s32.totalorder %s134, %s136
    %p143 = scmp.eq.s32.totalorder %s21, 1
    %p144 = por %p142, %p143
    %p145 = scmp.ne.s32.totalorder %s136, %s137
    %p146 = scmp.eq.s32.totalorder %s21, 0
    %p147 = por %p145, %p146
    %p148 = scmp.ne.s32.totalorder %s136, %s137
    %p149 = scmp.eq.s32.totalorder %s22, 1
    %p150 = por %p148, %p149
    %p152 = scmp.ne.s32.totalorder %s137, %s151
    %p153 = scmp.eq.s32.totalorder %s22, 0
    %p154 = por %p152, %p153
    %s156 = sadd.s32 %s155, 1
    %p159 = scmp.eq.s32.totalorder %s16, 1
    %p160 = scmp.ne.s32.totalorder %s155, %s157
    %p161 = scmp.eq.s32.totalorder %s16, 0
    %p162 = por %p160, %p161
    %p163 = scmp.ne.s32.totalorder %s155, %s157
    %p164 = scmp.eq.s32.totalorder %s21, 1
    %p165 = por %p163, %p164
    %p166 = scmp.ne.s32.totalorder %s157, %s158
    %p167 = scmp.eq.s32.totalorder %s21, 0
    %p168 = por %p166, %p167
    %p169 = scmp.ne.s32.totalorder %s157, %s158
    %p170 = scmp.eq.s32.totalorder %s22, 1
    %p171 = por %p169, %p170
    %p173 = scmp.ne.s32.totalorder %s158, %s172
    %p174 = scmp.eq.s32.totalorder %s22, 0
    %p175 = por %p173, %p174
    %s177 = sadd.s32 %s176, 1
    %p180 = scmp.eq.s32.totalorder %s16, 1
    %p181 = scmp.ne.s32.totalorder %s176, %s178
    %p182 = scmp.eq.s32.totalorder %s16, 0
    %p183 = por %p181, %p182
    %p184 = scmp.ne.s32.totalorder %s176, %s178
    %p185 = scmp.eq.s32.totalorder %s21, 1
    %p186 = por %p184, %p185
    %p187 = scmp.ne.s32.totalorder %s178, %s179
    %p188 = scmp.eq.s32.totalorder %s21, 0
    %p189 = por %p187, %p188
    %p190 = scmp.ne.s32.totalorder %s178, %s179
    %p191 = scmp.eq.s32.totalorder %s22, 1
    %p192 = por %p190, %p191
    %p194 = scmp.ne.s32.totalorder %s179, %s193
    %p195 = scmp.eq.s32.totalorder %s22, 0
    %p196 = por %p194, %p195
    %s198 = sadd.s32 %s197, 1
    %p201 = scmp.eq.s32.totalorder %s16, 1
    %p202 = scmp.ne.s32.totalorder %s197, %s199
    %p203 = scmp.eq.s32.totalorder %s16, 0
    %p204 = por %p202, %p203
    %p205 = scmp.ne.s32.totalorder %s197, %s199
    %p206 = scmp.eq.s32.totalorder %s21, 1
    %p207 = por %p205, %p206
    %p208 = scmp.ne.s32.totalorder %s199, %s200
    %p209 = scmp.eq.s32.totalorder %s21, 0
    %p210 = por %p208, %p209
    %p211 = scmp.ne.s32.totalorder %s199, %s200
    %p212 = scmp.eq.s32.totalorder %s22, 1
    %p213 = por %p211, %p212
    %p215 = scmp.ne.s32.totalorder %s200, %s214
    %p216 = scmp.eq.s32.totalorder %s22, 0
    %p217 = por %p215, %p216
    %s219 = sadd.s32 %s218, 1
    %p222 = scmp.eq.s32.totalorder %s16, 1
    %p223 = scmp.ne.s32.totalorder %s218, %s220
    %p224 = scmp.eq.s32.totalorder %s16, 0
    %p225 = por %p223, %p224
    %p226 = scmp.ne.s32.totalorder %s218, %s220
    %p227 = scmp.eq.s32.totalorder %s21, 1
    %p228 = por %p226, %p227
    %p229 = scmp.ne.s32.totalorder %s220, %s221
    %p230 = scmp.eq.s32.totalorder %s21, 0
    %p231 = por %p229, %p230
    %p232 = scmp.ne.s32.totalorder %s220, %s221
    %p233 = scmp.eq.s32.totalorder %s22, 1
    %p234 = por %p232, %p233
    %p236 = scmp.ne.s32.totalorder %s221, %s235
    %p237 = scmp.eq.s32.totalorder %s22, 0
    %p238 = por %p236, %p237
    %s239 = ssub.s32 %s16, %s23
    %p240 = scmp.eq.s32.totalorder %s239, 0
    %s242 = sadd.s32 %s241, 1
    %s243 = scalar_select %p240, %s241, %s242
    %p246 = pneg %p240
    %p247 = scmp.eq.s32.totalorder %s16, 1
    %p248 = por %p246, %p247
    %p249 = scmp.ne.s32.totalorder %s241, %s244
    %p250 = scmp.eq.s32.totalorder %s16, 0
    %p251 = por %p249, %p250
    %p252 = scmp.ne.s32.totalorder %s241, %s244
    %p253 = scmp.eq.s32.totalorder %s21, 1
    %p254 = por %p252, %p253
    %p255 = scmp.ne.s32.totalorder %s244, %s245
    %p256 = scmp.eq.s32.totalorder %s21, 0
    %p257 = por %p255, %p256
    %p258 = scmp.ne.s32.totalorder %s244, %s245
    %p259 = scmp.eq.s32.totalorder %s22, 1
    %p260 = por %p258, %p259
    %p262 = scmp.ne.s32.totalorder %s245, %s261
    %p263 = scmp.eq.s32.totalorder %s22, 0
    %p264 = por %p262, %p263
    %p265 = scmp.le.s32.totalorder 1, %s16
    %p266 = scmp.lt.s32.totalorder %s16, 3
    %p267 = pnand %p265, %p266
    %p268 = pneg %p267
    // Predicated region
    $region9: #{squeezenet_forward.4} parent=5 // pred_check
      _
    $region10: #{squeezenet_forward.4} parent=5 // pred_check_branch
      %270 = sbr.rel (%p267) target = $region12
    $region11: #{squeezenet_forward.4} parent=5 // pred_region
      %s271 = ssub.s32 %s16, 1
      // Predicated region
      $region13: #{squeezenet_forward.4} parent=11 // pred_check
        %p272 = pneg %p63
      $region14: #{squeezenet_forward.4} parent=11 // pred_check_branch
        %274 = sbr.rel (%p272) target = $region16
      $region15: #{squeezenet_forward.4} parent=11 // pred_region
        _
      $region16: #{squeezenet_forward.4} parent=11 // pred_fallthru
        _
      // Predicated region
      $region17: #{squeezenet_forward.4} parent=11 // pred_check
        %p275 = pneg %p84
      $region18: #{squeezenet_forward.4} parent=11 // pred_check_branch
        %277 = sbr.rel (%p275) target = $region20
      $region19: #{squeezenet_forward.4} parent=11 // pred_region
        _
      $region20: #{squeezenet_forward.4} parent=11 // pred_fallthru
        _
      // Predicated region
      $region21: #{squeezenet_forward.4} parent=11 // pred_check
        %p278 = pneg %p105
      $region22: #{squeezenet_forward.4} parent=11 // pred_check_branch
        %280 = sbr.rel (%p278) target = $region24
      $region23: #{squeezenet_forward.4} parent=11 // pred_region
        _
      $region24: #{squeezenet_forward.4} parent=11 // pred_fallthru
        _
      // Predicated region
      $region25: #{squeezenet_forward.4} parent=11 // pred_check
        %p281 = pneg %p126
      $region26: #{squeezenet_forward.4} parent=11 // pred_check_branch
        %283 = sbr.rel (%p281) target = $region28
      $region27: #{squeezenet_forward.4} parent=11 // pred_region
        _
      $region28: #{squeezenet_forward.4} parent=11 // pred_fallthru
        _
      // Predicated region
      $region29: #{squeezenet_forward.4} parent=11 // pred_check
        %p284 = pneg %p147
      $region30: #{squeezenet_forward.4} parent=11 // pred_check_branch
        %286 = sbr.rel (%p284) target = $region32
      $region31: #{squeezenet_forward.4} parent=11 // pred_region
        _
      $region32: #{squeezenet_forward.4} parent=11 // pred_fallthru
        _
      // Predicated region
      $region33: #{squeezenet_forward.4} parent=11 // pred_check
        %p287 = pneg %p168
      $region34: #{squeezenet_forward.4} parent=11 // pred_check_branch
        %289 = sbr.rel (%p287) target = $region36
      $region35: #{squeezenet_forward.4} parent=11 // pred_region
        _
      $region36: #{squeezenet_forward.4} parent=11 // pred_fallthru
        _
      // Predicated region
      $region37: #{squeezenet_forward.4} parent=11 // pred_check
        %p290 = pneg %p189
      $region38: #{squeezenet_forward.4} parent=11 // pred_check_branch
        %292 = sbr.rel (%p290) target = $region40
      $region39: #{squeezenet_forward.4} parent=11 // pred_region
        _
      $region40: #{squeezenet_forward.4} parent=11 // pred_fallthru
        _
      // Predicated region
      $region41: #{squeezenet_forward.4} parent=11 // pred_check
        %p293 = pneg %p210
      $region42: #{squeezenet_forward.4} parent=11 // pred_check_branch
        %295 = sbr.rel (%p293) target = $region44
      $region43: #{squeezenet_forward.4} parent=11 // pred_region
        _
      $region44: #{squeezenet_forward.4} parent=11 // pred_fallthru
        _
      // Predicated region
      $region45: #{squeezenet_forward.4} parent=11 // pred_check
        %p296 = pneg %p231
      $region46: #{squeezenet_forward.4} parent=11 // pred_check_branch
        %298 = sbr.rel (%p296) target = $region48
      $region47: #{squeezenet_forward.4} parent=11 // pred_region
        _
      $region48: #{squeezenet_forward.4} parent=11 // pred_fallthru
        _
    $region12: #{squeezenet_forward.4} parent=5 // pred_fallthru
      _
    %p299 = scmp.lt.s32.totalorder %s16, 2
    // Predicated region
    $region49: #{squeezenet_forward.4} parent=5 // pred_check
      %p300 = pneg %p299
    $region50: #{squeezenet_forward.4} parent=5 // pred_check_branch
      %302 = sbr.rel (%p300) target = $region52
    $region51: #{squeezenet_forward.4} parent=5 // pred_region
      // Predicated region
      $region53: #{squeezenet_forward.4} parent=51 // pred_check
        %p303 = pneg %p36
      $region54: #{squeezenet_forward.4} parent=51 // pred_check_branch
        %305 = sbr.rel (%p303) target = $region56
      $region55: #{squeezenet_forward.4} parent=51 // pred_region
        %p306 = scmp.lt.s32.totalorder %s16, 1
        %s307 = scalar_select %p306, %s16, 1
        %s308 = smul.addr %s307, 11
        %s309 = smul.addr %s308, 4
        %s310 = scalar_lea.vmem %s0, %s309
      $region56: #{squeezenet_forward.4} parent=51 // pred_fallthru
        _
    $region52: #{squeezenet_forward.4} parent=5 // pred_fallthru
      _
    %p311 = scmp.le.s32.totalorder 1, %s16
    %p312 = scmp.lt.s32.totalorder %s16, 3
    %p313 = pnand %p311, %p312
    %p314 = pneg %p313
    // Predicated region
    $region57: #{squeezenet_forward.4} parent=5 // pred_check
      _
    $region58: #{squeezenet_forward.4} parent=5 // pred_check_branch
      %316 = sbr.rel (%p313) target = $region60
    $region59: #{squeezenet_forward.4} parent=5 // pred_region
      %s317 = ssub.s32 %s16, 1
      %p318 = scmp.lt.s32.totalorder %s21, 1
      %s319 = scalar_select %p318, %s21, 1
      %s320 = smul.addr %s319, 11
      %s321 = smul.addr %s320, 4
      %s322 = scalar_lea.vmem %s0, %s321
      %p323 = pneg %p42
      %p324 = pneg %p39
      %p325 = pneg %p63
      %p326 = pneg %p60
      %p327 = pneg %p84
      %p328 = pneg %p81
      %p329 = pneg %p105
      %p330 = pneg %p102
      %p331 = pneg %p126
      %p332 = pneg %p123
      %p333 = pneg %p147
      %p334 = pneg %p144
      %p335 = pneg %p168
      %p336 = pneg %p165
      %p337 = pneg %p189
      %p338 = pneg %p186
      %p339 = pneg %p210
      %p340 = pneg %p207
      %p341 = pneg %p231
      %p342 = pneg %p228
      %p343 = pneg %p257
      %p344 = pneg %p254
      %p345 = scmp.lt.s32.totalorder %s21, 1
      %s346 = scalar_select %p345, %s21, 1
      %s347 = smul.addr %s346, 8
      %s348 = smul.addr %s347, 4
      %s349 = scalar_lea.vmem %s10, %s348
      %p350 = scmp.lt.s32.totalorder %s21, 1
      %s351 = scalar_select %p350, %s21, 1
      %s352 = smul.addr %s351, 11
      %s353 = smul.addr %s352, 4
      %s354 = scalar_lea.vmem %s0, %s353
      %p355 = scmp.lt.s32.totalorder %s21, 1
      %s356 = scalar_select %p355, %s21, 1
      %s357 = smul.addr %s356, 8
      %s358 = smul.addr %s357, 4
      %s359 = scalar_lea.vmem %s10, %s358
      %v361 = vld [vmem:[%s1] sm:$0xff]
      %v362 = vld [vmem:[%s1 + $0x8] sm:$0xff]
      %v363 = vld [vmem:[%s1 + $0x10] sm:$0xff]
      %v364 = vld [vmem:[%s1 + $0x18] sm:$0xff]
      %v365 = vld [vmem:[%s1 + $0x20] sm:$0xff]
      %v366 = vld [vmem:[%s1 + $0x28] sm:$0xff]
      %v367 = vld [vmem:[%s1 + $0x30] sm:$0xff]
      %v368 = vld [vmem:[%s1 + $0x38] sm:$0xff]
      %v369 = vld [vmem:[%s1 + $0x40] sm:$0xff]
      %v370 = vld [vmem:[%s1 + $0x48] sm:$0xff]
      %v371 = vld [vmem:[%s1 + $0x50] sm:$0xff]
      %v372 = vld [vmem:[%s354] sm:$0xf]
      %v373 = vld [vmem:[%s354 + $0x4] sm:$0xf]
      %v374 = vld [vmem:[%s354 + $0x8] sm:$0xf]
      %v375 = vld [vmem:[%s354 + $0xc] sm:$0xf]
      %v376 = vld [vmem:[%s354 + $0x10] sm:$0xf]
      %v377 = vld [vmem:[%s354 + $0x14] sm:$0xf]
      %v378 = vld [vmem:[%s354 + $0x18] sm:$0xf]
      %v379 = vld [vmem:[%s354 + $0x1c] sm:$0xf]
      %v380 = vld [vmem:[%s354 + $0x20] sm:$0xf]
      %v381 = vld [vmem:[%s354 + $0x24] sm:$0xf]
      %v382 = vld [vmem:[%s354 + $0x28] sm:$0xf]
      %v383 = vld [vmem:[%s2] sm:$0xf]
      %v384 = vld [vmem:[%s2 + $0x4] sm:$0xf]
      %v385 = vld [vmem:[%s2 + $0x8] sm:$0xf]
      %v386 = vld [vmem:[%s2 + $0xc] sm:$0xf]
      %v387 = vld [vmem:[%s2 + $0x10] sm:$0xf]
      %v388 = vld [vmem:[%s2 + $0x14] sm:$0xf]
      %v389 = vld [vmem:[%s2 + $0x18] sm:$0xf]
      %v390 = vld [vmem:[%s2 + $0x1c] sm:$0xf]
      %v391 = vld [vmem:[%s3] sm:$0x1]
      %v392 = vld [vmem:[%s4] sm:$0xf]
      %v393 = vld [vmem:[%s4 + $0x4] sm:$0xf]
      %v394 = vld [vmem:[%s4 + $0x8] sm:$0xf]
      %v395 = vld [vmem:[%s4 + $0xc] sm:$0xf]
      %v396 = vld [vmem:[%s4 + $0x10] sm:$0xf]
      %v397 = vld [vmem:[%s4 + $0x14] sm:$0xf]
      %v398 = vld [vmem:[%s4 + $0x18] sm:$0xf]
      %v399 = vld [vmem:[%s4 + $0x1c] sm:$0xf]
      %v400 = vld [vmem:[%s4 + $0x20] sm:$0xf]
      %v401 = vld [vmem:[%s4 + $0x24] sm:$0xf]
      %v402 = vld [vmem:[%s4 + $0x28] sm:$0xf]
      %v403 = vld [vmem:[%s4 + $0x2c] sm:$0xf]
      %v404 = vld [vmem:[%s4 + $0x30] sm:$0xf]
      %v405 = vld [vmem:[%s4 + $0x34] sm:$0xf]
      %v406 = vld [vmem:[%s4 + $0x38] sm:$0xf]
      %v407 = vld [vmem:[%s4 + $0x3c] sm:$0xf]
      %v408 = vld [vmem:[%s4 + $0x40] sm:$0xf]
      %v409 = vld [vmem:[%s4 + $0x44] sm:$0xf]
      %v410 = vld [vmem:[%s5] sm:$0x1]
      %v412 = vlaneseq
      %v413 = vshrl.u32 %v412, 7
      %v414 = vsub.s32 0, %v413
      %v415 = vrot.slane %v391, %v414
      %v428 = vunpack.c.l.b16 %v372
      %v429 = vunpack.c.l.b16 %v373
      %v430 = vunpack.c.l.b16 %v374
      %v431 = vunpack.c.l.b16 %v375
      %v432 = vunpack.c.l.b16 %v376
      %v433 = vunpack.c.l.b16 %v377
      %v434 = vunpack.c.l.b16 %v378
      %v435 = vunpack.c.l.b16 %v379
      %v436 = vunpack.c.l.b16 %v380
      %v437 = vunpack.c.l.b16 %v381
      %v438 = vunpack.c.l.b16 %v382
      %v439 = vpack.c.b16 %v429, %v428
      %v440 = vpack.c.b16 %v431, %v430
      %v441 = vpack.c.b16 %v433, %v432
      %v442 = vpack.c.b16 %v435, %v434
      %v443 = vpack.c.b16 %v437, %v436
      %v444 = vpack.c.b16 %v438, %v438
      %v453 = vunpack.c.l.b16 %v383
      %v454 = vunpack.c.l.b16 %v384
      %v455 = vunpack.c.l.b16 %v385
      %v456 = vunpack.c.l.b16 %v386
      %v457 = vunpack.c.l.b16 %v387
      %v458 = vunpack.c.l.b16 %v388
      %v459 = vunpack.c.l.b16 %v389
      %v460 = vunpack.c.l.b16 %v390
      %v461 = vpack.c.b16 %v454, %v453
      %v462 = vpack.c.b16 %v456, %v455
      %v463 = vpack.c.b16 %v458, %v457
      %v464 = vpack.c.b16 %v460, %v459
      %vm469 = vcmask 523264
      %v471 = vsel %vm469, %v439, 0
      %v474 = vsel %vm469, %v440, 0
      %v477 = vsel %vm469, %v441, 0
      %v480 = vsel %vm469, %v442, 0
      %v483 = vsel %vm469, %v443, 0
      %v486 = vsel %vm469, %v444, 0
      %488 = vmatprep.subr.bf16.mxu0 0
      %489 = vmatpush1.bf16.msra.mxu0 %v461
      %490 = vmatprep.subr.bf16.mxu0 0
      %491 = vmatpush1.bf16.msra.mxu0 %v462
      %492 = vmatprep.subr.bf16.mxu0 0
      %493 = vmatpush1.bf16.msra.mxu0 %v463
      %494 = vmatprep.subr.bf16.mxu0 0
      %495 = vmatpush1.bf16.msra.mxu0 %v464
      %496 = vmatprep.subr.bf16.mxu0 0
      %497 = vmatpush1.bf16.msra.mxu0 0
      %498 = vmatprep.subr.bf16.mxu0 0
      %499 = vmatpush1.bf16.msra.mxu0 0
      %500 = vmatprep.subr.bf16.mxu0 0
      %501 = vmatpush1.bf16.msra.mxu0 0
      %502 = vmatprep.subr.bf16.mxu0 0
      %503 = vmatpush1.bf16.msra.mxu0 0
      %504 = vmatprep.subr.bf16.mxu0 0
      %505 = vmatpush1.bf16.msra.mxu0 0
      %506 = vmatprep.subr.bf16.mxu0 0
      %507 = vmatpush1.bf16.msra.mxu0 0
      %508 = vmatprep.subr.bf16.mxu0 0
      %509 = vmatpush1.bf16.msra.mxu0 0
      %510 = vmatprep.subr.bf16.mxu0 0
      %511 = vmatpush1.bf16.msra.mxu0 0
      %512 = vmatprep.subr.bf16.mxu0 0
      %513 = vmatpush1.bf16.msra.mxu0 0
      %514 = vmatprep.subr.bf16.mxu0 0
      %515 = vmatpush1.bf16.msra.mxu0 0
      %516 = vmatprep.subr.bf16.mxu0 0
      %517 = vmatpush1.bf16.msra.mxu0 0
      %518 = vmatprep.subr.bf16.mxu0 0
      %519 = vmatpush1.bf16.msra.mxu0 0
      %520 = vmatprep.mubr.bf16.mxu0 0
      %521 = vmatmul.mubr.bf16.gmra.mrb[0].mxu0 %v471
      %v522 = vpop.f32.mrb[0].mxu0
      %v523 = vadd.f32 %v415, %v522
      %v524 = vpop.f32.mrb[0].mxu0
      %v525 = vpop.f32.mrb[0].mxu0
      %v526 = vadd.f32 %v415, %v525
      %v527 = vpop.f32.mrb[0].mxu0
      %528 = vmatprep.mubr.bf16.mxu0 0
      %529 = vmatmul.mubr.bf16.gmra.mrb[0].mxu0 %v474
      %v530 = vpop.f32.mrb[0].mxu0
      %v531 = vadd.f32 %v415, %v530
      %v532 = vpop.f32.mrb[0].mxu0
      %v533 = vpop.f32.mrb[0].mxu0
      %v534 = vadd.f32 %v415, %v533
      %v535 = vpop.f32.mrb[0].mxu0
      %536 = vmatprep.mubr.bf16.mxu0 0
      %537 = vmatmul.mubr.bf16.gmra.mrb[0].mxu0 %v477
      %v538 = vpop.f32.mrb[0].mxu0
      %v539 = vadd.f32 %v415, %v538
      %v540 = vpop.f32.mrb[0].mxu0
      %v541 = vpop.f32.mrb[0].mxu0
      %v542 = vadd.f32 %v415, %v541
      %v543 = vpop.f32.mrb[0].mxu0
      %544 = vmatprep.mubr.bf16.mxu0 0
      %545 = vmatmul.mubr.bf16.gmra.mrb[0].mxu0 %v480
      %v546 = vpop.f32.mrb[0].mxu0
      %v547 = vadd.f32 %v415, %v546
      %v548 = vpop.f32.mrb[0].mxu0
      %v549 = vpop.f32.mrb[0].mxu0
      %v550 = vadd.f32 %v415, %v549
      %v551 = vpop.f32.mrb[0].mxu0
      %552 = vmatprep.mubr.bf16.mxu0 0
      %553 = vmatmul.mubr.bf16.gmra.mrb[0].mxu0 %v483
      %v554 = vpop.f32.mrb[0].mxu0
      %v555 = vadd.f32 %v415, %v554
      %v556 = vpop.f32.mrb[0].mxu0
      %v557 = vpop.f32.mrb[0].mxu0
      %v558 = vadd.f32 %v415, %v557
      %v559 = vpop.f32.mrb[0].mxu0
      %560 = vmatprep.mubr.bf16.mxu0 0
      %561 = vmatmul.mubr.bf16.gmra.mrb[0].mxu0 %v486
      %v562 = vpop.f32.mrb[0].mxu0
      %v563 = vadd.f32 %v415, %v562
      %v564 = vpop.f32.mrb[0].mxu0
      %v565 = vpop.f32.mrb[0].mxu0
      %v566 = vpop.f32.mrb[0].mxu0
      %567 = vdwg.mxu0
      %v568 = vmax.f32 %v523, 0.0
      %v569 = vmax.f32 %v526, 0.0
      %v570 = vmax.f32 %v531, 0.0
      %v571 = vmax.f32 %v534, 0.0
      %v572 = vmax.f32 %v539, 0.0
      %v573 = vmax.f32 %v542, 0.0
      %v574 = vmax.f32 %v547, 0.0
      %v575 = vmax.f32 %v550, 0.0
      %v576 = vmax.f32 %v555, 0.0
      %v577 = vmax.f32 %v558, 0.0
      %v578 = vmax.f32 %v563, 0.0
      %580 = vset.pattern.permute.xlu0 0
      %581 = vperm.xlu0 %580, %v361
      %v582 = vpop.permute.xlu0 %581
      %585 = vset.pattern.permute.xlu0 0
      %586 = vperm.xlu0 %585, %v362
      %v587 = vpop.permute.xlu0 %586
      %590 = vset.pattern.permute.xlu0 0
      %591 = vperm.xlu0 %590, %v363
      %v592 = vpop.permute.xlu0 %591
      %595 = vset.pattern.permute.xlu0 0
      %596 = vperm.xlu0 %595, %v364
      %v597 = vpop.permute.xlu0 %596
      %600 = vset.pattern.permute.xlu0 0
      %601 = vperm.xlu0 %600, %v365
      %v602 = vpop.permute.xlu0 %601
      %605 = vset.pattern.permute.xlu0 0
      %606 = vperm.xlu0 %605, %v366
      %v607 = vpop.permute.xlu0 %606
      %610 = vset.pattern.permute.xlu0 0
      %611 = vperm.xlu0 %610, %v367
      %v612 = vpop.permute.xlu0 %611
      %615 = vset.pattern.permute.xlu0 0
      %616 = vperm.xlu0 %615, %v368
      %v617 = vpop.permute.xlu0 %616
      %620 = vset.pattern.permute.xlu0 0
      %621 = vperm.xlu0 %620, %v369
      %v622 = vpop.permute.xlu0 %621
      %625 = vset.pattern.permute.xlu0 0
      %626 = vperm.xlu0 %625, %v370
      %v627 = vpop.permute.xlu0 %626
      %630 = vset.pattern.permute.xlu0 0
      %631 = vperm.xlu0 %630, %v371
      %v632 = vpop.permute.xlu0 %631
      %v634 = vmul.f32 %v568, %v582
      %v635 = vmul.f32 %v569, %v587
      %v636 = vmul.f32 %v570, %v592
      %v637 = vmul.f32 %v571, %v597
      %v638 = vmul.f32 %v572, %v602
      %v639 = vmul.f32 %v573, %v607
      %v640 = vmul.f32 %v574, %v612
      %v641 = vmul.f32 %v575, %v617
      %v642 = vmul.f32 %v576, %v622
      %v643 = vmul.f32 %v577, %v627
      %v644 = vmul.f32 %v578, %v632
      %v645 = vpack.c.bf16 %v635, %v634
      %v646 = vpack.c.bf16 %v637, %v636
      %v647 = vpack.c.bf16 %v639, %v638
      %v648 = vpack.c.bf16 %v641, %v640
      %v649 = vpack.c.bf16 %v643, %v642
      %v650 = vpack.c.bf16 %v644, %v644
      %vm651 = vsmask.f32 7424
      %v653 = vshrl.u32 %v645, 16
      %v655 = vshll.u32 %v645, 16
      %v657 = vrot.slane %v655, 1
      %v658 = vor.u32 %v653, %v657
      %v660 = vshll.u32 %v646, 16
      %v662 = vrot.slane %v660, 1
      %v663 = vsel %vm651, %v658, %v662
      %v664 = vshrl.u32 %v646, 16
      %v666 = vor.u32 %v664, %v662
      %v668 = vshll.u32 %v647, 16
      %v670 = vrot.slane %v668, 1
      %v671 = vsel %vm651, %v666, %v670
      %v672 = vshrl.u32 %v647, 16
      %v674 = vor.u32 %v672, %v670
      %v676 = vshll.u32 %v648, 16
      %v678 = vrot.slane %v676, 1
      %v679 = vsel %vm651, %v674, %v678
      %v680 = vshrl.u32 %v648, 16
      %v682 = vor.u32 %v680, %v678
      %683 = vrot.lane.b32.xlu0 %v663, 16
      %v684 = vpop.permute.xlu0 %683
      %685 = vrot.lane.b32.xlu0 %v671, 16
      %v686 = vpop.permute.xlu0 %685
      %687 = vrot.lane.b32.xlu0 %v679, 16
      %v688 = vpop.permute.xlu0 %687
      %689 = vrot.lane.b32.xlu0 %v682, 16
      %v690 = vpop.permute.xlu0 %689
      %vm696 = vcmask 1046528
      %v697 = vrot.slane %v645, 1
      %v698 = vrot.slane %v646, 1
      %v699 = vsel %vm696, %v697, %v698
      %v700 = vrot.slane %v647, 1
      %v701 = vsel %vm696, %v698, %v700
      %v702 = vrot.slane %v648, 1
      %v703 = vsel %vm696, %v700, %v702
      %v704 = vrot.slane %v649, 1
      %v705 = vsel %vm696, %v702, %v704
      %706 = vrot.lane.b32.xlu0 %v699, 32
      %v707 = vpop.permute.xlu0 %706
      %708 = vrot.lane.b32.xlu0 %v701, 32
      %v709 = vpop.permute.xlu0 %708
      %710 = vrot.lane.b32.xlu0 %v703, 32
      %v711 = vpop.permute.xlu0 %710
      %712 = vrot.lane.b32.xlu0 %v705, 32
      %v713 = vpop.permute.xlu0 %712
      %vm714 = vsmask.f32 3328
      %v715 = vrot.slane %v653, 4
      %v716 = vrot.slane %v655, 5
      %v717 = vor.u32 %v715, %v716
      %v718 = vrot.slane %v664, 4
      %v719 = vrot.slane %v660, 5
      %v720 = vor.u32 %v718, %v719
      %v721 = vsel %vm714, %v717, %v720
      %v722 = vrot.slane %v672, 4
      %v723 = vrot.slane %v668, 5
      %v724 = vor.u32 %v722, %v723
      %v725 = vsel %vm714, %v720, %v724
      %v726 = vrot.slane %v680, 4
      %v727 = vrot.slane %v676, 5
      %v728 = vor.u32 %v726, %v727
      %v729 = vsel %vm714, %v724, %v728
      %v731 = vshrl.u32 %v649, 16
      %v733 = vrot.slane %v731, 4
      %v734 = vshll.u32 %v649, 16
      %v736 = vrot.slane %v734, 5
      %v737 = vor.u32 %v733, %v736
      %v738 = vsel %vm714, %v728, %v737
      %739 = vrot.lane.b32.xlu0 %v721, 48
      %v740 = vpop.permute.xlu0 %739
      %741 = vrot.lane.b32.xlu0 %v725, 48
      %v742 = vpop.permute.xlu0 %741
      %743 = vrot.lane.b32.xlu0 %v729, 48
      %v744 = vpop.permute.xlu0 %743
      %745 = vrot.lane.b32.xlu0 %v738, 48
      %v746 = vpop.permute.xlu0 %745
      %vm747 = vcmask 1042432
      %v748 = vrot.slane %v645, 5
      %v749 = vrot.slane %v646, 5
      %v750 = vsel %vm747, %v748, %v749
      %v751 = vrot.slane %v647, 5
      %v752 = vsel %vm747, %v749, %v751
      %v753 = vrot.slane %v648, 5
      %v754 = vsel %vm747, %v751, %v753
      %v755 = vrot.slane %v649, 5
      %v756 = vsel %vm747, %v753, %v755
      %757 = vrot.lane.b32.xlu0 %v750, 64
      %v758 = vpop.permute.xlu0 %757
      %759 = vrot.lane.b32.xlu0 %v752, 64
      %v760 = vpop.permute.xlu0 %759
      %761 = vrot.lane.b32.xlu0 %v754, 64
      %v762 = vpop.permute.xlu0 %761
      %763 = vrot.lane.b32.xlu0 %v756, 64
      %v764 = vpop.permute.xlu0 %763
      %vm765 = vsmask.f32 2304
      %v766 = vrot.slane %v653, 5
      %v767 = vrot.slane %v655, 6
      %v768 = vor.u32 %v766, %v767
      %v769 = vrot.slane %v664, 5
      %v770 = vrot.slane %v660, 6
      %v771 = vor.u32 %v769, %v770
      %v772 = vsel %vm765, %v768, %v771
      %v773 = vrot.slane %v672, 5
      %v774 = vrot.slane %v668, 6
      %v775 = vor.u32 %v773, %v774
      %v776 = vsel %vm765, %v771, %v775
      %v777 = vrot.slane %v680, 5
      %v778 = vrot.slane %v676, 6
      %v779 = vor.u32 %v777, %v778
      %v780 = vsel %vm765, %v775, %v779
      %v781 = vrot.slane %v731, 5
      %v782 = vrot.slane %v734, 6
      %v783 = vor.u32 %v781, %v782
      %v784 = vsel %vm765, %v779, %v783
      %785 = vrot.lane.b32.xlu0 %v772, 80
      %v786 = vpop.permute.xlu0 %785
      %787 = vrot.lane.b32.xlu0 %v776, 80
      %v788 = vpop.permute.xlu0 %787
      %789 = vrot.lane.b32.xlu0 %v780, 80
      %v790 = vpop.permute.xlu0 %789
      %791 = vrot.lane.b32.xlu0 %v784, 80
      %v792 = vpop.permute.xlu0 %791
      %v794 = vrot.slane %v650, 1
      %v795 = vsel %vm696, %v704, %v794
      %796 = vrot.lane.b32.xlu0 %v701, 96
      %v797 = vpop.permute.xlu0 %796
      %798 = vrot.lane.b32.xlu0 %v703, 96
      %v799 = vpop.permute.xlu0 %798
      %800 = vrot.lane.b32.xlu0 %v705, 96
      %v801 = vpop.permute.xlu0 %800
      %802 = vrot.lane.b32.xlu0 %v795, 96
      %v803 = vpop.permute.xlu0 %802
      %vm804 = vsmask.f32 6400
      %v805 = vrot.slane %v664, 1
      %v806 = vrot.slane %v660, 2
      %v807 = vor.u32 %v805, %v806
      %v808 = vrot.slane %v672, 1
      %v809 = vrot.slane %v668, 2
      %v810 = vor.u32 %v808, %v809
      %v811 = vsel %vm804, %v807, %v810
      %v812 = vrot.slane %v680, 1
      %v813 = vrot.slane %v676, 2
      %v814 = vor.u32 %v812, %v813
      %v815 = vsel %vm804, %v810, %v814
      %v816 = vrot.slane %v731, 1
      %v817 = vrot.slane %v734, 2
      %v818 = vor.u32 %v816, %v817
      %v819 = vsel %vm804, %v814, %v818
      %v821 = vshrl.u32 %v650, 16
      %v823 = vrot.slane %v821, 1
      %v824 = vshll.u32 %v650, 16
      %v826 = vrot.slane %v824, 2
      %v827 = vor.u32 %v823, %v826
      %v828 = vsel %vm804, %v818, %v827
      %829 = vrot.lane.b32.xlu0 %v811, 112
      %v830 = vpop.permute.xlu0 %829
      %831 = vrot.lane.b32.xlu0 %v815, 112
      %v832 = vpop.permute.xlu0 %831
      %833 = vrot.lane.b32.xlu0 %v819, 112
      %v834 = vpop.permute.xlu0 %833
      %835 = vrot.lane.b32.xlu0 %v828, 112
      %v836 = vpop.permute.xlu0 %835
      %vm837 = vcmask 1045504
      %v838 = vrot.slane %v646, 2
      %v839 = vrot.slane %v647, 2
      %v840 = vsel %vm837, %v838, %v839
      %v841 = vrot.slane %v648, 2
      %v842 = vsel %vm837, %v839, %v841
      %v843 = vrot.slane %v649, 2
      %v844 = vsel %vm837, %v841, %v843
      %v845 = vrot.slane %v650, 2
      %v846 = vsel %vm837, %v843, %v845
      %vm847 = vcmask 130048
      %v849 = vsel %vm847, %v645, %v684
      %v851 = vsel %vm847, %v646, %v686
      %v853 = vsel %vm847, %v647, %v688
      %v855 = vsel %vm847, %v648, %v690
      %vm856 = vcmask 261120
      %v858 = vsel %vm856, %v849, %v707
      %v860 = vsel %vm856, %v851, %v709
      %v862 = vsel %vm856, %v853, %v711
      %v864 = vsel %vm856, %v855, %v713
      %vm865 = vcmask 392192
      %v867 = vsel %vm865, %v858, %v740
      %v869 = vsel %vm865, %v860, %v742
      %v871 = vsel %vm865, %v862, %v744
      %v873 = vsel %vm865, %v864, %v746
      %v875 = vsel %vm469, %v867, %v758
      %v877 = vsel %vm469, %v869, %v760
      %v879 = vsel %vm469, %v871, %v762
      %v881 = vsel %vm469, %v873, %v764
      %vm882 = vcmask 654336
      %v884 = vsel %vm882, %v875, %v786
      %v886 = vsel %vm882, %v877, %v788
      %v888 = vsel %vm882, %v879, %v790
      %v890 = vsel %vm882, %v881, %v792
      %vm891 = vcmask 785408
      %v893 = vsel %vm891, %v884, %v797
      %v895 = vsel %vm891, %v886, %v799
      %v897 = vsel %vm891, %v888, %v801
      %v899 = vsel %vm891, %v890, %v803
      %vm900 = vcmask 916480
      %v902 = vsel %vm900, %v893, %v830
      %v905 = vsel %vm900, %v895, %v832
      %v908 = vsel %vm900, %v897, %v834
      %v911 = vsel %vm900, %v899, %v836
      %v914 = vlaneseq
      %v915 = vshrl.u32 %v914, 7
      %v916 = vsub.s32 0, %v915
      %v917 = vrot.slane %v410, %v916
      %v937 = vunpack.c.l.b16 %v392
      %v938 = vunpack.c.l.b16 %v393
      %v939 = vunpack.c.l.b16 %v394
      %v940 = vunpack.c.l.b16 %v395
      %v941 = vunpack.c.l.b16 %v396
      %v942 = vunpack.c.l.b16 %v397
      %v943 = vunpack.c.l.b16 %v398
      %v944 = vunpack.c.l.b16 %v399
      %v945 = vunpack.c.l.b16 %v400
      %v946 = vunpack.c.l.b16 %v401
      %v947 = vunpack.c.l.b16 %v402
      %v948 = vunpack.c.l.b16 %v403
      %v949 = vunpack.c.l.b16 %v404
      %v950 = vunpack.c.l.b16 %v405
      %v951 = vunpack.c.l.b16 %v406
      %v952 = vunpack.c.l.b16 %v407
      %v953 = vunpack.c.l.b16 %v408
      %v954 = vunpack.c.l.b16 %v409
      %v955 = vpack.c.b16 %v938, %v937
      %v956 = vpack.c.b16 %v940, %v939
      %v957 = vpack.c.b16 %v942, %v941
      %v958 = vpack.c.b16 %v944, %v943
      %v959 = vpack.c.b16 %v946, %v945
      %v960 = vpack.c.b16 %v948, %v947
      %v961 = vpack.c.b16 %v950, %v949
      %v962 = vpack.c.b16 %v952, %v951
      %v963 = vpack.c.b16 %v954, %v953
      %v974 = vsel %vm847, %v840, 0
      %v977 = vsel %vm847, %v842, 0
      %v980 = vsel %vm847, %v844, 0
      %v983 = vsel %vm847, %v846, 0
      %985 = vmatprep.subr.bf16.mxu0 0
      %986 = vmatpush1.bf16.msra.mxu0 %v955
      %987 = vmatprep.subr.bf16.mxu0 0
      %988 = vmatpush1.bf16.msra.mxu0 %v956
      %989 = vmatprep.subr.bf16.mxu0 0
      %990 = vmatpush1.bf16.msra.mxu0 %v957
      %991 = vmatprep.subr.bf16.mxu0 0
      %992 = vmatpush1.bf16.msra.mxu0 %v958
      %993 = vmatprep.subr.bf16.mxu0 0
      %994 = vmatpush1.bf16.msra.mxu0 %v959
      %995 = vmatprep.subr.bf16.mxu0 0
      %996 = vmatpush1.bf16.msra.mxu0 %v960
      %997 = vmatprep.subr.bf16.mxu0 0
      %998 = vmatpush1.bf16.msra.mxu0 %v961
      %999 = vmatprep.subr.bf16.mxu0 0
      %1000 = vmatpush1.bf16.msra.mxu0 %v962
      %1001 = vmatprep.subr.bf16.mxu0 0
      %1002 = vmatpush1.bf16.msra.mxu0 %v963
      %1003 = vmatprep.subr.bf16.mxu0 0
      %1004 = vmatpush1.bf16.msra.mxu0 0
      %1005 = vmatprep.subr.bf16.mxu0 0
      %1006 = vmatpush1.bf16.msra.mxu0 0
      %1007 = vmatprep.subr.bf16.mxu0 0
      %1008 = vmatpush1.bf16.msra.mxu0 0
      %1009 = vmatprep.subr.bf16.mxu0 0
      %1010 = vmatpush1.bf16.msra.mxu0 0
      %1011 = vmatprep.subr.bf16.mxu0 0
      %1012 = vmatpush1.bf16.msra.mxu0 0
      %1013 = vmatprep.subr.bf16.mxu0 0
      %1014 = vmatpush1.bf16.msra.mxu0 0
      %1015 = vmatprep.subr.bf16.mxu0 0
      %1016 = vmatpush1.bf16.msra.mxu0 0
      %1017 = vmatprep.mubr.bf16.mxu0 %v974
      %1018 = vmatmul.mubr.bf16.gmra.mrb[0].mxu0 %v902
      %v1019 = vpop.f32.mrb[0].mxu0
      %v1020 = vadd.f32 %v917, %v1019
      %v1021 = vpop.f32.mrb[0].mxu0
      %v1022 = vpop.f32.mrb[0].mxu0
      %v1023 = vadd.f32 %v917, %v1022
      %v1024 = vpop.f32.mrb[0].mxu0
      %1025 = vmatprep.mubr.bf16.mxu0 %v977
      %1026 = vmatmul.mubr.bf16.gmra.mrb[0].mxu0 %v905
      %v1027 = vpop.f32.mrb[0].mxu0
      %v1028 = vadd.f32 %v917, %v1027
      %v1029 = vpop.f32.mrb[0].mxu0
      %v1030 = vpop.f32.mrb[0].mxu0
      %v1031 = vadd.f32 %v917, %v1030
      %v1032 = vpop.f32.mrb[0].mxu0
      %1033 = vmatprep.mubr.bf16.mxu0 %v980
      %1034 = vmatmul.mubr.bf16.gmra.mrb[0].mxu0 %v908
      %v1035 = vpop.f32.mrb[0].mxu0
      %v1036 = vadd.f32 %v917, %v1035
      %v1037 = vpop.f32.mrb[0].mxu0
      %v1038 = vpop.f32.mrb[0].mxu0
      %v1039 = vadd.f32 %v917, %v1038
      %v1040 = vpop.f32.mrb[0].mxu0
      %1041 = vmatprep.mubr.bf16.mxu0 %v983
      %1042 = vmatmul.mubr.bf16.gmra.mrb[0].mxu0 %v911
      %v1043 = vpop.f32.mrb[0].mxu0
      %v1044 = vadd.f32 %v917, %v1043
      %v1045 = vpop.f32.mrb[0].mxu0
      %v1046 = vpop.f32.mrb[0].mxu0
      %v1047 = vadd.f32 %v917, %v1046
      %v1048 = vpop.f32.mrb[0].mxu0
      %1049 = vdwg.mxu0
      %v1050 = vmax.f32 %v1020, 0.0
      %v1051 = vmax.f32 %v1023, 0.0
      %v1052 = vmax.f32 %v1028, 0.0
      %v1053 = vmax.f32 %v1031, 0.0
      %v1054 = vmax.f32 %v1036, 0.0
      %v1055 = vmax.f32 %v1039, 0.0
      %v1056 = vmax.f32 %v1044, 0.0
      %v1057 = vmax.f32 %v1047, 0.0
      %1058 = vst [vmem:[#allocation2] sm:$0xff] 0.0
      %1059 = vst [vmem:[#allocation2 + $0x8] sm:$0xff] 0.0
      %1060 = vst [vmem:[#allocation2 + $0x10] sm:$0xff] 0.0
      %1061 = vst [vmem:[#allocation2 + $0x18] sm:$0xff] 0.0
      %1062 = vst [vmem:[#allocation2 + $0x20] sm:$0xff] 0.0
      %1063 = vst [vmem:[#allocation2 + $0x28] sm:$0xff] 0.0
      %1064 = vst [vmem:[#allocation2 + $0x30] sm:$0xff] 0.0
      %1065 = vst [vmem:[#allocation2 + $0x38] sm:$0xff] 0.0
      %1066 = vst [vmem:[#allocation2 + $0x40] sm:$0xff] 0.0
      %1067 = vst [vmem:[#allocation2 + $0x48] sm:$0xff] 0.0
      %1068 = vst [vmem:[#allocation2 + $0x50] sm:$0xff] 0.0
      %1069 = vst [vmem:[#allocation2 + $0xa] sm:$0xff] %v1050
      %1070 = vst [vmem:[#allocation2 + $0x12] sm:$0xff] %v1051
      %1071 = vst [vmem:[#allocation2 + $0x1a] sm:$0xff] %v1052
      %1072 = vst [vmem:[#allocation2 + $0x22] sm:$0xff] %v1053
      %1073 = vst [vmem:[#allocation2 + $0x2a] sm:$0xff] %v1054
      %1074 = vst [vmem:[#allocation2 + $0x32] sm:$0xff] %v1055
      %1075 = vst [vmem:[#allocation2 + $0x3a] sm:$0xff] %v1056
      %1076 = vst [vmem:[#allocation2 + $0x42] sm:$0x7f] %v1057
      %v1077 = vld [vmem:[#allocation2] sm:$0xff]
      %v1078 = vld [vmem:[#allocation2 + $0x8] sm:$0xff]
      %v1079 = vld [vmem:[#allocation2 + $0x10] sm:$0xff]
      %v1080 = vld [vmem:[#allocation2 + $0x18] sm:$0xff]
      %v1081 = vld [vmem:[#allocation2 + $0x20] sm:$0xff]
      %v1082 = vld [vmem:[#allocation2 + $0x28] sm:$0xff]
      %v1083 = vld [vmem:[#allocation2 + $0x30] sm:$0xff]
      %v1084 = vld [vmem:[#allocation2 + $0x38] sm:$0xff]
      %v1085 = vld [vmem:[#allocation2 + $0x40] sm:$0xff]
      %v1086 = vld [vmem:[#allocation2 + $0x48] sm:$0xff]
      %v1087 = vld [vmem:[#allocation2 + $0x50] sm:$0xff]
      %v1088 = vld [vmem:[%s6] sm:$0xf]
      %v1089 = vld [vmem:[%s6 + $0x4] sm:$0xf]
      %v1090 = vld [vmem:[%s6 + $0x8] sm:$0xf]
      %v1091 = vld [vmem:[%s6 + $0xc] sm:$0xf]
      %v1092 = vld [vmem:[%s6 + $0x10] sm:$0xf]
      %v1093 = vld [vmem:[%s6 + $0x14] sm:$0xf]
      %v1094 = vld [vmem:[%s6 + $0x18] sm:$0xf]
      %v1095 = vld [vmem:[%s6 + $0x1c] sm:$0xf]
      %v1096 = vld [vmem:[%s6 + $0x20] sm:$0xf]
      %v1097 = vld [vmem:[%s6 + $0x24] sm:$0xf]
      %v1098 = vld [vmem:[%s6 + $0x28] sm:$0xf]
      %v1099 = vld [vmem:[%s6 + $0x2c] sm:$0xf]
      %v1100 = vld [vmem:[%s6 + $0x30] sm:$0xf]
      %v1101 = vld [vmem:[%s6 + $0x34] sm:$0xf]
      %v1102 = vld [vmem:[%s6 + $0x38] sm:$0xf]
      %v1103 = vld [vmem:[%s6 + $0x3c] sm:$0xf]
      %v1104 = vld [vmem:[%s7] sm:$0x1]
      %v1105 = vld [vmem:[%s8] sm:$0xf]
      %v1106 = vld [vmem:[%s8 + $0x4] sm:$0xf]
      %v1107 = vld [vmem:[%s8 + $0x8] sm:$0xf]
      %v1108 = vld [vmem:[%s8 + $0xc] sm:$0xf]
      %v1109 = vld [vmem:[%s8 + $0x10] sm:$0xf]
      %v1110 = vld [vmem:[%s8 + $0x14] sm:$0xf]
      %v1111 = vld [vmem:[%s8 + $0x18] sm:$0xf]
      %v1112 = vld [vmem:[%s8 + $0x1c] sm:$0xf]
      %v1113 = vld [vmem:[%s8 + $0x20] sm:$0xf]
      %v1114 = vld [vmem:[%s8 + $0x24] sm:$0xf]
      %v1115 = vld [vmem:[%s8 + $0x28] sm:$0xf]
      %v1116 = vld [vmem:[%s8 + $0x2c] sm:$0xf]
      %v1117 = vld [vmem:[%s8 + $0x30] sm:$0xf]
      %v1118 = vld [vmem:[%s8 + $0x34] sm:$0xf]
      %v1119 = vld [vmem:[%s8 + $0x38] sm:$0xf]
      %v1120 = vld [vmem:[%s8 + $0x3c] sm:$0xf]
      %v1121 = vld [vmem:[%s8 + $0x40] sm:$0xf]
      %v1122 = vld [vmem:[%s8 + $0x44] sm:$0xf]
      %v1123 = vld [vmem:[%s9] sm:$0x1]
      %v1124 = vpack.c.bf16 %v1078, %v1077
      %v1125 = vpack.c.bf16 %v1080, %v1079
      %v1126 = vpack.c.bf16 %v1082, %v1081
      %v1127 = vpack.c.bf16 %v1084, %v1083
      %v1128 = vpack.c.bf16 %v1086, %v1085
      %v1129 = vpack.c.bf16 %v1087, %v1087
      %v1131 = vlaneseq
      %v1132 = vshrl.u32 %v1131, 7
      %v1133 = vsub.s32 0, %v1132
      %v1134 = vrot.slane %v1104, %v1133
      %v1152 = vunpack.c.l.b16 %v1088
      %v1153 = vunpack.c.l.b16 %v1089
      %v1154 = vunpack.c.l.b16 %v1090
      %v1155 = vunpack.c.l.b16 %v1091
      %v1156 = vunpack.c.l.b16 %v1092
      %v1157 = vunpack.c.l.b16 %v1093
      %v1158 = vunpack.c.l.b16 %v1094
      %v1159 = vunpack.c.l.b16 %v1095
      %v1160 = vunpack.c.l.b16 %v1096
      %v1161 = vunpack.c.l.b16 %v1097
      %v1162 = vunpack.c.l.b16 %v1098
      %v1163 = vunpack.c.l.b16 %v1099
      %v1164 = vunpack.c.l.b16 %v1100
      %v1165 = vunpack.c.l.b16 %v1101
      %v1166 = vunpack.c.l.b16 %v1102
      %v1167 = vunpack.c.l.b16 %v1103
      %v1168 = vpack.c.b16 %v1153, %v1152
      %v1169 = vpack.c.b16 %v1155, %v1154
      %v1170 = vpack.c.b16 %v1157, %v1156
      %v1171 = vpack.c.b16 %v1159, %v1158
      %v1172 = vpack.c.b16 %v1161, %v1160
      %v1173 = vpack.c.b16 %v1163, %v1162
      %v1174 = vpack.c.b16 %v1165, %v1164
      %v1175 = vpack.c.b16 %v1167, %v1166
      %1184 = vmatprep.subr.bf16.mxu0 0
      %1185 = vmatpush1.bf16.msra.mxu0 %v1168
      %1186 = vmatprep.subr.bf16.mxu0 0
      %1187 = vmatpush1.bf16.msra.mxu0 %v1169
      %1188 = vmatprep.subr.bf16.mxu0 0
      %1189 = vmatpush1.bf16.msra.mxu0 %v1170
      %1190 = vmatprep.subr.bf16.mxu0 0
      %1191 = vmatpush1.bf16.msra.mxu0 %v1171
      %1192 = vmatprep.subr.bf16.mxu0 0
      %1193 = vmatpush1.bf16.msra.mxu0 %v1172
      %1194 = vmatprep.subr.bf16.mxu0 0
      %1195 = vmatpush1.bf16.msra.mxu0 %v1173
      %1196 = vmatprep.subr.bf16.mxu0 0
      %1197 = vmatpush1.bf16.msra.mxu0 %v1174
      %1198 = vmatprep.subr.bf16.mxu0 0
      %1199 = vmatpush1.bf16.msra.mxu0 %v1175
      %1200 = vmatprep.subr.bf16.mxu0 0
      %1201 = vmatpush1.bf16.msra.mxu0 0
      %1202 = vmatprep.subr.bf16.mxu0 0
      %1203 = vmatpush1.bf16.msra.mxu0 0
      %1204 = vmatprep.subr.bf16.mxu0 0
      %1205 = vmatpush1.bf16.msra.mxu0 0
      %1206 = vmatprep.subr.bf16.mxu0 0
      %1207 = vmatpush1.bf16.msra.mxu0 0
      %1208 = vmatprep.subr.bf16.mxu0 0
      %1209 = vmatpush1.bf16.msra.mxu0 0
      %1210 = vmatprep.subr.bf16.mxu0 0
      %1211 = vmatpush1.bf16.msra.mxu0 0
      %1212 = vmatprep.subr.bf16.mxu0 0
      %1213 = vmatpush1.bf16.msra.mxu0 0
      %1214 = vmatprep.subr.bf16.mxu0 0
      %1215 = vmatpush1.bf16.msra.mxu0 0
      %1216 = vmatprep.mubr.bf16.mxu0 0
      %1217 = vmatmul.mubr.bf16.gmra.mrb[0].mxu0 %v1124
      %v1218 = vpop.f32.mrb[0].mxu0
      %v1219 = vadd.f32 %v1134, %v1218
      %v1220 = vpop.f32.mrb[0].mxu0
      %v1221 = vpop.f32.mrb[0].mxu0
      %v1222 = vadd.f32 %v1134, %v1221
      %v1223 = vpop.f32.mrb[0].mxu0
      %1224 = vmatprep.mubr.bf16.mxu0 0
      %1225 = vmatmul.mubr.bf16.gmra.mrb[0].mxu0 %v1125
      %v1226 = vpop.f32.mrb[0].mxu0
      %v1227 = vadd.f32 %v1134, %v1226
      %v1228 = vpop.f32.mrb[0].mxu0
      %v1229 = vpop.f32.mrb[0].mxu0
      %v1230 = vadd.f32 %v1134, %v1229
      %v1231 = vpop.f32.mrb[0].mxu0
      %1232 = vmatprep.mubr.bf16.mxu0 0
      %1233 = vmatmul.mubr.bf16.gmra.mrb[0].mxu0 %v1126
      %v1234 = vpop.f32.mrb[0].mxu0
      %v1235 = vadd.f32 %v1134, %v1234
      %v1236 = vpop.f32.mrb[0].mxu0
      %v1237 = vpop.f32.mrb[0].mxu0
      %v1238 = vadd.f32 %v1134, %v1237
      %v1239 = vpop.f32.mrb[0].mxu0
      %1240 = vmatprep.mubr.bf16.mxu0 0
      %1241 = vmatmul.mubr.bf16.gmra.mrb[0].mxu0 %v1127
      %v1242 = vpop.f32.mrb[0].mxu0
      %v1243 = vadd.f32 %v1134, %v1242
      %v1244 = vpop.f32.mrb[0].mxu0
      %v1245 = vpop.f32.mrb[0].mxu0
      %v1246 = vadd.f32 %v1134, %v1245
      %v1247 = vpop.f32.mrb[0].mxu0
      %1248 = vmatprep.mubr.bf16.mxu0 0
      %1249 = vmatmul.mubr.bf16.gmra.mrb[0].mxu0 %v1128
      %v1250 = vpop.f32.mrb[0].mxu0
      %v1251 = vadd.f32 %v1134, %v1250
      %v1252 = vpop.f32.mrb[0].mxu0
      %v1253 = vpop.f32.mrb[0].mxu0
      %v1254 = vadd.f32 %v1134, %v1253
      %v1255 = vpop.f32.mrb[0].mxu0
      %1256 = vmatprep.mubr.bf16.mxu0 0
      %1257 = vmatmul.mubr.bf16.gmra.mrb[0].mxu0 %v1129
      %v1258 = vpop.f32.mrb[0].mxu0
      %v1259 = vadd.f32 %v1134, %v1258
      %v1260 = vpop.f32.mrb[0].mxu0
      %v1261 = vpop.f32.mrb[0].mxu0
      %v1262 = vpop.f32.mrb[0].mxu0
      %1263 = vdwg.mxu0
      %v1264 = vmax.f32 %v1219, 0.0
      %v1265 = vmax.f32 %v1222, 0.0
      %v1266 = vmax.f32 %v1227, 0.0
      %v1267 = vmax.f32 %v1230, 0.0
      %v1268 = vmax.f32 %v1235, 0.0
      %v1269 = vmax.f32 %v1238, 0.0
      %v1270 = vmax.f32 %v1243, 0.0
      %v1271 = vmax.f32 %v1246, 0.0
      %v1272 = vmax.f32 %v1251, 0.0
      %v1273 = vmax.f32 %v1254, 0.0
      %v1274 = vmax.f32 %v1259, 0.0
      %v1275 = vmul.f32 %v1264, %v582
      %v1276 = vmul.f32 %v1265, %v587
      %v1277 = vmul.f32 %v1266, %v592
      %v1278 = vmul.f32 %v1267, %v597
      %v1279 = vmul.f32 %v1268, %v602
      %v1280 = vmul.f32 %v1269, %v607
      %v1281 = vmul.f32 %v1270, %v612
      %v1282 = vmul.f32 %v1271, %v617
      %v1283 = vmul.f32 %v1272, %v622
      %v1284 = vmul.f32 %v1273, %v627
      %v1285 = vmul.f32 %v1274, %v632
      %v1286 = vpack.c.bf16 %v1276, %v1275
      %v1287 = vpack.c.bf16 %v1278, %v1277
      %v1288 = vpack.c.bf16 %v1280, %v1279
      %v1289 = vpack.c.bf16 %v1282, %v1281
      %v1290 = vpack.c.bf16 %v1284, %v1283
      %v1291 = vpack.c.bf16 %v1285, %v1285
      %v1293 = vshrl.u32 %v1286, 16
      %v1295 = vshll.u32 %v1286, 16
      %v1297 = vrot.slane %v1295, 1
      %v1298 = vor.u32 %v1293, %v1297
      %v1300 = vshll.u32 %v1287, 16
      %v1302 = vrot.slane %v1300, 1
      %v1303 = vsel %vm651, %v1298, %v1302
      %v1304 = vshrl.u32 %v1287, 16
      %v1306 = vor.u32 %v1304, %v1302
      %v1308 = vshll.u32 %v1288, 16
      %v1310 = vrot.slane %v1308, 1
      %v1311 = vsel %vm651, %v1306, %v1310
      %v1312 = vshrl.u32 %v1288, 16
      %v1314 = vor.u32 %v1312, %v1310
      %v1316 = vshll.u32 %v1289, 16
      %v1318 = vrot.slane %v1316, 1
      %v1319 = vsel %vm651, %v1314, %v1318
      %v1320 = vshrl.u32 %v1289, 16
      %v1322 = vor.u32 %v1320, %v1318
      %1323 = vrot.lane.b32.xlu0 %v1303, 16
      %v1324 = vpop.permute.xlu0 %1323
      %1325 = vrot.lane.b32.xlu0 %v1311, 16
      %v1326 = vpop.permute.xlu0 %1325
      %1327 = vrot.lane.b32.xlu0 %v1319, 16
      %v1328 = vpop.permute.xlu0 %1327
      %1329 = vrot.lane.b32.xlu0 %v1322, 16
      %v1330 = vpop.permute.xlu0 %1329
      %v1336 = vrot.slane %v1286, 1
      %v1337 = vrot.slane %v1287, 1
      %v1338 = vsel %vm696, %v1336, %v1337
      %v1339 = vrot.slane %v1288, 1
      %v1340 = vsel %vm696, %v1337, %v1339
      %v1341 = vrot.slane %v1289, 1
      %v1342 = vsel %vm696, %v1339, %v1341
      %v1343 = vrot.slane %v1290, 1
      %v1344 = vsel %vm696, %v1341, %v1343
      %1345 = vrot.lane.b32.xlu0 %v1338, 32
      %v1346 = vpop.permute.xlu0 %1345
      %1347 = vrot.lane.b32.xlu0 %v1340, 32
      %v1348 = vpop.permute.xlu0 %1347
      %1349 = vrot.lane.b32.xlu0 %v1342, 32
      %v1350 = vpop.permute.xlu0 %1349
      %1351 = vrot.lane.b32.xlu0 %v1344, 32
      %v1352 = vpop.permute.xlu0 %1351
      %v1353 = vrot.slane %v1293, 4
      %v1354 = vrot.slane %v1295, 5
      %v1355 = vor.u32 %v1353, %v1354
      %v1356 = vrot.slane %v1304, 4
      %v1357 = vrot.slane %v1300, 5
      %v1358 = vor.u32 %v1356, %v1357
      %v1359 = vsel %vm714, %v1355, %v1358
      %v1360 = vrot.slane %v1312, 4
      %v1361 = vrot.slane %v1308, 5
      %v1362 = vor.u32 %v1360, %v1361
      %v1363 = vsel %vm714, %v1358, %v1362
      %v1364 = vrot.slane %v1320, 4
      %v1365 = vrot.slane %v1316, 5
      %v1366 = vor.u32 %v1364, %v1365
      %v1367 = vsel %vm714, %v1362, %v1366
      %v1369 = vshrl.u32 %v1290, 16
      %v1371 = vrot.slane %v1369, 4
      %v1372 = vshll.u32 %v1290, 16
      %v1374 = vrot.slane %v1372, 5
      %v1375 = vor.u32 %v1371, %v1374
      %v1376 = vsel %vm714, %v1366, %v1375
      %1377 = vrot.lane.b32.xlu0 %v1359, 48
      %v1378 = vpop.permute.xlu0 %1377
      %1379 = vrot.lane.b32.xlu0 %v1363, 48
      %v1380 = vpop.permute.xlu0 %1379
      %1381 = vrot.lane.b32.xlu0 %v1367, 48
      %v1382 = vpop.permute.xlu0 %1381
      %1383 = vrot.lane.b32.xlu0 %v1376, 48
      %v1384 = vpop.permute.xlu0 %1383
      %v1385 = vrot.slane %v1286, 5
      %v1386 = vrot.slane %v1287, 5
      %v1387 = vsel %vm747, %v1385, %v1386
      %v1388 = vrot.slane %v1288, 5
      %v1389 = vsel %vm747, %v1386, %v1388
      %v1390 = vrot.slane %v1289, 5
      %v1391 = vsel %vm747, %v1388, %v1390
      %v1392 = vrot.slane %v1290, 5
      %v1393 = vsel %vm747, %v1390, %v1392
      %1394 = vrot.lane.b32.xlu0 %v1387, 64
      %v1395 = vpop.permute.xlu0 %1394
      %1396 = vrot.lane.b32.xlu0 %v1389, 64
      %v1397 = vpop.permute.xlu0 %1396
      %1398 = vrot.lane.b32.xlu0 %v1391, 64
      %v1399 = vpop.permute.xlu0 %1398
      %1400 = vrot.lane.b32.xlu0 %v1393, 64
      %v1401 = vpop.permute.xlu0 %1400
      %v1402 = vrot.slane %v1293, 5
      %v1403 = vrot.slane %v1295, 6
      %v1404 = vor.u32 %v1402, %v1403
      %v1405 = vrot.slane %v1304, 5
      %v1406 = vrot.slane %v1300, 6
      %v1407 = vor.u32 %v1405, %v1406
      %v1408 = vsel %vm765, %v1404, %v1407
      %v1409 = vrot.slane %v1312, 5
      %v1410 = vrot.slane %v1308, 6
      %v1411 = vor.u32 %v1409, %v1410
      %v1412 = vsel %vm765, %v1407, %v1411
      %v1413 = vrot.slane %v1320, 5
      %v1414 = vrot.slane %v1316, 6
      %v1415 = vor.u32 %v1413, %v1414
      %v1416 = vsel %vm765, %v1411, %v1415
      %v1417 = vrot.slane %v1369, 5
      %v1418 = vrot.slane %v1372, 6
      %v1419 = vor.u32 %v1417, %v1418
      %v1420 = vsel %vm765, %v1415, %v1419
      %1421 = vrot.lane.b32.xlu0 %v1408, 80
      %v1422 = vpop.permute.xlu0 %1421
      %1423 = vrot.lane.b32.xlu0 %v1412, 80
      %v1424 = vpop.permute.xlu0 %1423
      %1425 = vrot.lane.b32.xlu0 %v1416, 80
      %v1426 = vpop.permute.xlu0 %1425
      %1427 = vrot.lane.b32.xlu0 %v1420, 80
      %v1428 = vpop.permute.xlu0 %1427
      %v1430 = vrot.slane %v1291, 1
      %v1431 = vsel %vm696, %v1343, %v1430
      %1432 = vrot.lane.b32.xlu0 %v1340, 96
      %v1433 = vpop.permute.xlu0 %1432
      %1434 = vrot.lane.b32.xlu0 %v1342, 96
      %v1435 = vpop.permute.xlu0 %1434
      %1436 = vrot.lane.b32.xlu0 %v1344, 96
      %v1437 = vpop.permute.xlu0 %1436
      %1438 = vrot.lane.b32.xlu0 %v1431, 96
      %v1439 = vpop.permute.xlu0 %1438
      %v1440 = vrot.slane %v1304, 1
      %v1441 = vrot.slane %v1300, 2
      %v1442 = vor.u32 %v1440, %v1441
      %v1443 = vrot.slane %v1312, 1
      %v1444 = vrot.slane %v1308, 2
      %v1445 = vor.u32 %v1443, %v1444
      %v1446 = vsel %vm804, %v1442, %v1445
      %v1447 = vrot.slane %v1320, 1
      %v1448 = vrot.slane %v1316, 2
      %v1449 = vor.u32 %v1447, %v1448
      %v1450 = vsel %vm804, %v1445, %v1449
      %v1451 = vrot.slane %v1369, 1
      %v1452 = vrot.slane %v1372, 2
      %v1453 = vor.u32 %v1451, %v1452
      %v1454 = vsel %vm804, %v1449, %v1453
      %v1456 = vshrl.u32 %v1291, 16
      %v1458 = vrot.slane %v1456, 1
      %v1459 = vshll.u32 %v1291, 16
      %v1461 = vrot.slane %v1459, 2
      %v1462 = vor.u32 %v1458, %v1461
      %v1463 = vsel %vm804, %v1453, %v1462
      %1464 = vrot.lane.b32.xlu0 %v1446, 112
      %v1465 = vpop.permute.xlu0 %1464
      %1466 = vrot.lane.b32.xlu0 %v1450, 112
      %v1467 = vpop.permute.xlu0 %1466
      %1468 = vrot.lane.b32.xlu0 %v1454, 112
      %v1469 = vpop.permute.xlu0 %1468
      %1470 = vrot.lane.b32.xlu0 %v1463, 112
      %v1471 = vpop.permute.xlu0 %1470
      %v1472 = vrot.slane %v1287, 2
      %v1473 = vrot.slane %v1288, 2
      %v1474 = vsel %vm837, %v1472, %v1473
      %v1475 = vrot.slane %v1289, 2
      %v1476 = vsel %vm837, %v1473, %v1475
      %v1477 = vrot.slane %v1290, 2
      %v1478 = vsel %vm837, %v1475, %v1477
      %v1479 = vrot.slane %v1291, 2
      %v1480 = vsel %vm837, %v1477, %v1479
      %v1482 = vsel %vm847, %v1286, %v1324
      %v1484 = vsel %vm847, %v1287, %v1326
      %v1486 = vsel %vm847, %v1288, %v1328
      %v1488 = vsel %vm847, %v1289, %v1330
      %v1490 = vsel %vm856, %v1482, %v1346
      %v1492 = vsel %vm856, %v1484, %v1348
      %v1494 = vsel %vm856, %v1486, %v1350
      %v1496 = vsel %vm856, %v1488, %v1352
      %v1498 = vsel %vm865, %v1490, %v1378
      %v1500 = vsel %vm865, %v1492, %v1380
      %v1502 = vsel %vm865, %v1494, %v1382
      %v1504 = vsel %vm865, %v1496, %v1384
      %v1506 = vsel %vm469, %v1498, %v1395
      %v1508 = vsel %vm469, %v1500, %v1397
      %v1510 = vsel %vm469, %v1502, %v1399
      %v1512 = vsel %vm469, %v1504, %v1401
      %v1514 = vsel %vm882, %v1506, %v1422
      %v1516 = vsel %vm882, %v1508, %v1424
      %v1518 = vsel %vm882, %v1510, %v1426
      %v1520 = vsel %vm882, %v1512, %v1428
      %v1522 = vsel %vm891, %v1514, %v1433
      %v1524 = vsel %vm891, %v1516, %v1435
      %v1526 = vsel %vm891, %v1518, %v1437
      %v1528 = vsel %vm891, %v1520, %v1439
      %v1530 = vsel %vm900, %v1522, %v1465
      %v1533 = vsel %vm900, %v1524, %v1467
      %v1536 = vsel %vm900, %v1526, %v1469
      %v1539 = vsel %vm900, %v1528, %v1471
      %v1542 = vlaneseq
      %v1543 = vshrl.u32 %v1542, 7
      %v1544 = vsub.s32 0, %v1543
      %v1545 = vrot.slane %v1123, %v1544
      %v1565 = vunpack.c.l.b16 %v1105
      %v1566 = vunpack.c.l.b16 %v1106
      %v1567 = vunpack.c.l.b16 %v1107
      %v1568 = vunpack.c.l.b16 %v1108
      %v1569 = vunpack.c.l.b16 %v1109
      %v1570 = vunpack.c.l.b16 %v1110
      %v1571 = vunpack.c.l.b16 %v1111
      %v1572 = vunpack.c.l.b16 %v1112
      %v1573 = vunpack.c.l.b16 %v1113
      %v1574 = vunpack.c.l.b16 %v1114
      %v1575 = vunpack.c.l.b16 %v1115
      %v1576 = vunpack.c.l.b16 %v1116
      %v1577 = vunpack.c.l.b16 %v1117
      %v1578 = vunpack.c.l.b16 %v1118
      %v1579 = vunpack.c.l.b16 %v1119
      %v1580 = vunpack.c.l.b16 %v1120
      %v1581 = vunpack.c.l.b16 %v1121
      %v1582 = vunpack.c.l.b16 %v1122
      %v1583 = vpack.c.b16 %v1566, %v1565
      %v1584 = vpack.c.b16 %v1568, %v1567
      %v1585 = vpack.c.b16 %v1570, %v1569
      %v1586 = vpack.c.b16 %v1572, %v1571
      %v1587 = vpack.c.b16 %v1574, %v1573
      %v1588 = vpack.c.b16 %v1576, %v1575
      %v1589 = vpack.c.b16 %v1578, %v1577
      %v1590 = vpack.c.b16 %v1580, %v1579
      %v1591 = vpack.c.b16 %v1582, %v1581
      %v1602 = vsel %vm847, %v1474, 0
      %v1605 = vsel %vm847, %v1476, 0
      %v1608 = vsel %vm847, %v1478, 0
      %v1611 = vsel %vm847, %v1480, 0
      %1613 = vmatprep.subr.bf16.mxu0 0
      %1614 = vmatpush1.bf16.msra.mxu0 %v1583
      %1615 = vmatprep.subr.bf16.mxu0 0
      %1616 = vmatpush1.bf16.msra.mxu0 %v1584
      %1617 = vmatprep.subr.bf16.mxu0 0
      %1618 = vmatpush1.bf16.msra.mxu0 %v1585
      %1619 = vmatprep.subr.bf16.mxu0 0
      %1620 = vmatpush1.bf16.msra.mxu0 %v1586
      %1621 = vmatprep.subr.bf16.mxu0 0
      %1622 = vmatpush1.bf16.msra.mxu0 %v1587
      %1623 = vmatprep.subr.bf16.mxu0 0
      %1624 = vmatpush1.bf16.msra.mxu0 %v1588
      %1625 = vmatprep.subr.bf16.mxu0 0
      %1626 = vmatpush1.bf16.msra.mxu0 %v1589
      %1627 = vmatprep.subr.bf16.mxu0 0
      %1628 = vmatpush1.bf16.msra.mxu0 %v1590
      %1629 = vmatprep.subr.bf16.mxu0 0
      %1630 = vmatpush1.bf16.msra.mxu0 %v1591
      %1631 = vmatprep.subr.bf16.mxu0 0
      %1632 = vmatpush1.bf16.msra.mxu0 0
      %1633 = vmatprep.subr.bf16.mxu0 0
      %1634 = vmatpush1.bf16.msra.mxu0 0
      %1635 = vmatprep.subr.bf16.mxu0 0
      %1636 = vmatpush1.bf16.msra.mxu0 0
      %1637 = vmatprep.subr.bf16.mxu0 0
      %1638 = vmatpush1.bf16.msra.mxu0 0
      %1639 = vmatprep.subr.bf16.mxu0 0
      %1640 = vmatpush1.bf16.msra.mxu0 0
      %1641 = vmatprep.subr.bf16.mxu0 0
      %1642 = vmatpush1.bf16.msra.mxu0 0
      %1643 = vmatprep.subr.bf16.mxu0 0
      %1644 = vmatpush1.bf16.msra.mxu0 0
      %1645 = vmatprep.mubr.bf16.mxu0 %v1602
      %1646 = vmatmul.mubr.bf16.gmra.mrb[0].mxu0 %v1530
      %v1647 = vpop.f32.mrb[0].mxu0
      %v1648 = vadd.f32 %v1545, %v1647
      %v1649 = vpop.f32.mrb[0].mxu0
      %v1650 = vpop.f32.mrb[0].mxu0
      %v1651 = vadd.f32 %v1545, %v1650
      %v1652 = vpop.f32.mrb[0].mxu0
      %1653 = vmatprep.mubr.bf16.mxu0 %v1605
      %1654 = vmatmul.mubr.bf16.gmra.mrb[0].mxu0 %v1533
      %v1655 = vpop.f32.mrb[0].mxu0
      %v1656 = vadd.f32 %v1545, %v1655
      %v1657 = vpop.f32.mrb[0].mxu0
      %v1658 = vpop.f32.mrb[0].mxu0
      %v1659 = vadd.f32 %v1545, %v1658
      %v1660 = vpop.f32.mrb[0].mxu0
      %1661 = vmatprep.mubr.bf16.mxu0 %v1608
      %1662 = vmatmul.mubr.bf16.gmra.mrb[0].mxu0 %v1536
      %v1663 = vpop.f32.mrb[0].mxu0
      %v1664 = vadd.f32 %v1545, %v1663
      %v1665 = vpop.f32.mrb[0].mxu0
      %v1666 = vpop.f32.mrb[0].mxu0
      %v1667 = vadd.f32 %v1545, %v1666
      %v1668 = vpop.f32.mrb[0].mxu0
      %1669 = vmatprep.mubr.bf16.mxu0 %v1611
      %1670 = vmatmul.mubr.bf16.gmra.mrb[0].mxu0 %v1539
      %v1671 = vpop.f32.mrb[0].mxu0
      %v1672 = vadd.f32 %v1545, %v1671
      %v1673 = vpop.f32.mrb[0].mxu0
      %v1674 = vpop.f32.mrb[0].mxu0
      %v1675 = vadd.f32 %v1545, %v1674
      %v1676 = vpop.f32.mrb[0].mxu0
      %1677 = vdwg.mxu0
      %v1678 = vmax.f32 %v1648, 0.0
      %v1679 = vmax.f32 %v1651, 0.0
      %v1680 = vmax.f32 %v1656, 0.0
      %v1681 = vmax.f32 %v1659, 0.0
      %v1682 = vmax.f32 %v1664, 0.0
      %v1683 = vmax.f32 %v1667, 0.0
      %v1684 = vmax.f32 %v1672, 0.0
      %v1685 = vmax.f32 %v1675, 0.0
      %v1686 = vpack.c.bf16 %v1679, %v1678
      %v1687 = vpack.c.bf16 %v1681, %v1680
      %v1688 = vpack.c.bf16 %v1683, %v1682
      %v1689 = vpack.c.bf16 %v1685, %v1684
      %v1694 = vunpack.c.l.b16 %v1686
      %v1695 = vunpack.c.h.b16 %v1686
      %v1696 = vunpack.c.l.b16 %v1687
      %v1697 = vunpack.c.h.b16 %v1687
      %v1698 = vunpack.c.l.b16 %v1688
      %v1699 = vunpack.c.h.b16 %v1688
      %v1700 = vunpack.c.l.b16 %v1689
      %v1701 = vunpack.c.h.b16 %v1689
      %v1702 = vpack.c.b16 %v1694, %v1694
      %v1703 = vpack.c.b16 %v1695, %v1695
      %v1704 = vpack.c.b16 %v1696, %v1696
      %v1705 = vpack.c.b16 %v1697, %v1697
      %v1706 = vpack.c.b16 %v1698, %v1698
      %v1707 = vpack.c.b16 %v1699, %v1699
      %v1708 = vpack.c.b16 %v1700, %v1700
      %v1709 = vpack.c.b16 %v1701, %v1701
      %1718 = vst [vmem:[%s359] sm:$0xf] %v1702
      %1719 = vst [vmem:[%s359 + $0x4] sm:$0xf] %v1703
      %1720 = vst [vmem:[%s359 + $0x8] sm:$0xf] %v1704
      %1721 = vst [vmem:[%s359 + $0xc] sm:$0xf] %v1705
      %1722 = vst [vmem:[%s359 + $0x10] sm:$0xf] %v1706
      %1723 = vst [vmem:[%s359 + $0x14] sm:$0xf] %v1707
      %1724 = vst [vmem:[%s359 + $0x18] sm:$0xf] %v1708
      %vm1725 = vcmask 1043456
      %vm1726 = vmand %vm1725, %vm714
      %v1727 = vld [vmem:[%s359 + $0x1c] sm:$0xf]
      %v1728 = vsel %vm1726, %v1709, %v1727
      %1729 = vst [vmem:[%s359 + $0x1c] sm:$0xf] %v1728
      %p1730 = scmp.lt.s32.totalorder %s21, 1
      %s1731 = scalar_select %p1730, %s21, 1
      %s1732 = smul.addr %s1731, 8
      %s1733 = smul.addr %s1732, 4
      %s1734 = scalar_lea.vmem %s10, %s1733
      // Predicated region
      $region61: #{squeezenet_forward.4} parent=59 // pred_check
        %p1735 = pneg %p254
      $region62: #{squeezenet_forward.4} parent=59 // pred_check_branch
        %1737 = sbr.rel (%p1735) target = $region64
      $region63: #{squeezenet_forward.4} parent=59 // pred_region
        _
      $region64: #{squeezenet_forward.4} parent=59 // pred_fallthru
        _
    $region60: #{squeezenet_forward.4} parent=5 // pred_fallthru
      _
    %p1738 = scmp.le.s32.totalorder 2, %s16
    // Predicated region
    $region65: #{squeezenet_forward.4} parent=5 // pred_check
      %p1739 = pneg %p1738
    $region66: #{squeezenet_forward.4} parent=5 // pred_check_branch
      %1741 = sbr.rel (%p1739) target = $region68
    $region67: #{squeezenet_forward.4} parent=5 // pred_region
      %s1742 = ssub.s32 %s16, 2
      // Predicated region
      $region69: #{squeezenet_forward.4} parent=67 // pred_check
        %p1743 = pneg %p260
      $region70: #{squeezenet_forward.4} parent=67 // pred_check_branch
        %1745 = sbr.rel (%p1743) target = $region72
      $region71: #{squeezenet_forward.4} parent=67 // pred_region
        %p1746 = scmp.lt.s32.totalorder %s22, 1
        %s1747 = scalar_select %p1746, %s22, 1
        %s1748 = smul.addr %s1747, 8
        %s1749 = smul.addr %s1748, 4
        %s1750 = scalar_lea.vmem %s10, %s1749
      $region72: #{squeezenet_forward.4} parent=67 // pred_fallthru
        _
    $region68: #{squeezenet_forward.4} parent=5 // pred_fallthru
      _
  $region6: #{squeezenet_forward.4} parent=0 // loop_footer
    %s20 = sadd.s32 1, %s16
  $region7: #{squeezenet_forward.4} parent=0 // loop_footer_branch
    %15 = sbr.rel target = $region3
  $region8: #{squeezenet_forward.4} parent=0 // loop_exit
    _

// kernel: squeezenet_forward.5
$region0: #{squeezenet_forward.5}
  #allocation0 [shape = 'u32[]', space=smem, size = 0x4, offset = 0x4, fixed_abs, tag = 'smem constant byte address 0x4 - core index']
  #allocation1 [shape = 'u32[144,128]{1,0:T(1,128)}', space=vmem, size = 0x12000, scoped, tag = 'internal scratch']
  #allocation2 [shape = 'f32[32,256]{1,0:T(8,128)}', space=vmem, size = 0x8000, scoped, tag = 'scratch operand']
  %s0 = inlined_call_operand.vmem [shape: bf16[2,32,128], index: 0, kind: input, shape index: {}]
  %s1 = inlined_call_operand.vmem [shape: f32[32,1], index: 1, kind: input, shape index: {}]
  %s2 = inlined_call_operand.vmem [shape: bf16[128,32], index: 2, kind: input, shape index: {}]
  %s3 = inlined_call_operand.vmem [shape: f32[1,32], index: 3, kind: input, shape index: {}]
  %s4 = inlined_call_operand.vmem [shape: bf16[288,256], index: 4, kind: input, shape index: {}]
  %s5 = inlined_call_operand.vmem [shape: f32[1,256], index: 5, kind: input, shape index: {}]
  %s6 = inlined_call_operand.vmem [shape: bf16[256,32], index: 6, kind: input, shape index: {}]
  %s7 = inlined_call_operand.vmem [shape: f32[1,32], index: 7, kind: input, shape index: {}]
  %s8 = inlined_call_operand.vmem [shape: bf16[288,256], index: 8, kind: input, shape index: {}]
  %s9 = inlined_call_operand.vmem [shape: f32[1,256], index: 9, kind: input, shape index: {}]
  %s10 = inlined_call_operand.vmem [shape: bf16[256,48], index: 10, kind: input, shape index: {}]
  %s11 = inlined_call_operand.vmem [shape: f32[1,48], index: 11, kind: input, shape index: {}]
  %s12 = inlined_call_operand.vmem [shape: bf16[48,384], index: 12, kind: input, shape index: {}]
  %s13 = inlined_call_operand.vmem [shape: f32[1,384], index: 13, kind: input, shape index: {}]
  %s14 = inlined_call_operand.vmem [shape: bf16[384,48], index: 14, kind: input, shape index: {}]
  %s15 = inlined_call_operand.vmem [shape: f32[1,48], index: 15, kind: input, shape index: {}]
  %s16 = inlined_call_operand.vmem [shape: bf16[48,384], index: 16, kind: input, shape index: {}]
  %s17 = inlined_call_operand.vmem [shape: f32[1,384], index: 17, kind: input, shape index: {}]
  %s18 = inlined_call_operand.vmem [shape: bf16[384,64], index: 18, kind: input, shape index: {}]
  %s19 = inlined_call_operand.vmem [shape: f32[1,64], index: 19, kind: input, shape index: {}]
  %s20 = inlined_call_operand.vmem [shape: bf16[64,512], index: 20, kind: input, shape index: {}]
  %s21 = inlined_call_operand.vmem [shape: f32[1,512], index: 21, kind: input, shape index: {}]
  %s22 = inlined_call_operand.vmem [shape: bf16[512,64], index: 22, kind: input, shape index: {}]
  %s23 = inlined_call_operand.vmem [shape: f32[1,64], index: 23, kind: input, shape index: {}]
  %s24 = inlined_call_operand.vmem [shape: bf16[64,512], index: 24, kind: input, shape index: {}]
  %s25 = inlined_call_operand.vmem [shape: f32[1,512], index: 25, kind: input, shape index: {}]
  %s26 = inlined_call_operand.vmem [shape: bf16[512,128], index: 26, kind: input, shape index: {}]
  %s27 = inlined_call_operand.vmem [shape: f32[1,128], index: 27, kind: input, shape index: {}]
  %s28 = inlined_call_operand.hbm [shape: f32[2,1,128], index: 28, kind: output, shape index: {}]
  %s29 = sld [smem:[#allocation0]]
  $region145: #{squeezenet_forward.5} parent=0
    _
  %s31 = ssub.s32 1, %s29
  %s32 = scalar_select 0, %s31, %s29
  $region1: #{squeezenet_forward.5} parent=0
    #allocation3 [shape = 'u8[1024]{0}', space=vmem, size = 0x400, scoped, tag = 'output window, operand 0']
    #allocation4 [shape = 's32[2]{0}', space=sflag, size = 0x8, scoped, tag = 'scoped memory for squeezenet_forward.5']
    %33 = vsyncpa [#allocation4], 0
    %s34 = scalar_lea.sflag [#allocation4], 1
    %35 = vsyncpa %s34, 0
    loop: start=0, step=1, limit=4
    $region2: #{squeezenet_forward.5} parent=1 // loop_pre_header
      _
    $region3: #{squeezenet_forward.5} parent=1 // loop_header
      %s37 = sphi 0, %s41
      %p38 = scmp.ge.s32.totalorder %s37, 4
      %s47 = sphi 0, %s49
      %s50 = sphi 0, %s47
      %s51 = sphi 0, %s50
      %s67 = sphi 0, %s51
      %s71 = sphi 0, %s71
      %s73 = sphi 0, %s71
      %s74 = sphi 0, %s73
      %s88 = sphi 0, %s74
      %s92 = sphi 0, %s92
      %s94 = sphi 0, %s92
      %s95 = sphi 0, %s94
      %s109 = sphi 0, %s95
      %s113 = sphi 0, %s113
      %s115 = sphi 0, %s113
      %s116 = sphi 0, %s115
      %s130 = sphi 0, %s116
      %s134 = sphi 0, %s134
      %s136 = sphi 0, %s134
      %s137 = sphi 0, %s136
      %s151 = sphi 0, %s137
      %s155 = sphi 0, %s155
      %s157 = sphi 0, %s155
      %s158 = sphi 0, %s157
      %s172 = sphi 0, %s158
      %s176 = sphi 0, %s176
      %s178 = sphi 0, %s176
      %s179 = sphi 0, %s178
      %s193 = sphi 0, %s179
      %s197 = sphi 0, %s197
      %s199 = sphi 0, %s197
      %s200 = sphi 0, %s199
      %s214 = sphi 0, %s200
      %s218 = sphi 0, %s218
      %s220 = sphi 0, %s218
      %s221 = sphi 0, %s220
      %s235 = sphi 0, %s221
      %s239 = sphi 0, %s239
      %s241 = sphi 0, %s239
      %s242 = sphi 0, %s241
      %s256 = sphi 0, %s242
      %s260 = sphi 0, %s260
      %s262 = sphi 0, %s260
      %s263 = sphi 0, %s262
      %s277 = sphi 0, %s263
      %s281 = sphi 0, %s281
      %s283 = sphi 0, %s281
      %s284 = sphi 0, %s283
      %s298 = sphi 0, %s284
      %s302 = sphi 0, %s302
      %s304 = sphi 0, %s302
      %s305 = sphi 0, %s304
      %s319 = sphi 0, %s305
      %s323 = sphi 0, %s323
      %s325 = sphi 0, %s323
      %s326 = sphi 0, %s325
      %s340 = sphi 0, %s326
      %s344 = sphi 0, %s344
      %s346 = sphi 0, %s344
      %s347 = sphi 0, %s346
      %s361 = sphi 0, %s347
      %s365 = sphi 0, %s365
      %s367 = sphi 0, %s365
      %s368 = sphi 0, %s367
      %s382 = sphi 0, %s368
      %s386 = sphi 0, %s386
      %s388 = sphi 0, %s386
      %s389 = sphi 0, %s388
      %s403 = sphi 0, %s389
      %s407 = sphi 0, %s407
      %s409 = sphi 0, %s407
      %s410 = sphi 0, %s409
      %s424 = sphi 0, %s410
      %s428 = sphi 0, %s428
      %s430 = sphi 0, %s428
      %s431 = sphi 0, %s430
      %s445 = sphi 0, %s431
      %s449 = sphi 0, %s449
      %s451 = sphi 0, %s449
      %s452 = sphi 0, %s451
      %s466 = sphi 0, %s452
      %s470 = sphi 0, %s470
      %s472 = sphi 0, %s470
      %s473 = sphi 0, %s472
      %s487 = sphi 0, %s473
      %s491 = sphi 0, %s491
      %s493 = sphi 0, %s491
      %s494 = sphi 0, %s493
      %s508 = sphi 0, %s494
      %s512 = sphi 0, %s512
      %s514 = sphi 0, %s512
      %s515 = sphi 0, %s514
      %s529 = sphi 0, %s515
      %s533 = sphi 0, %s533
      %s535 = sphi 0, %s533
      %s536 = sphi 0, %s535
      %s550 = sphi 0, %s536
      %s554 = sphi 0, %s554
      %s556 = sphi 0, %s554
      %s557 = sphi 0, %s556
      %s571 = sphi 0, %s557
      %s575 = sphi 0, %s575
      %s577 = sphi 0, %s575
      %s578 = sphi 0, %s577
      %s592 = sphi 0, %s578
      %s596 = sphi 0, %s596
      %s598 = sphi 0, %s596
      %s599 = sphi 0, %s598
      %s613 = sphi 0, %s599
      %s617 = sphi 0, %s617
      %s619 = sphi 0, %s617
      %s620 = sphi 0, %s619
      %s634 = sphi 0, %s620
      %s640 = sphi 0, %s642
      %s643 = sphi 0, %s640
      %s644 = sphi 0, %s643
      %s660 = sphi 0, %s644
    $region4: #{squeezenet_forward.5} parent=1 // loop_header_branch
      %40 = sbr.rel (%p38) target = $region8
    $region5: #{squeezenet_forward.5} parent=1 // loop_body
      %s42 = ssub.s32 %s37, 1
      %s43 = ssub.s32 %s37, 2
      %s44 = sadd.s32 %s37, 1
      %s45 = ssub.s32 %s37, %s44
      %p46 = scmp.eq.s32.totalorder %s45, 0
      %s48 = sadd.s32 %s47, 1
      %s49 = scalar_select %p46, %s47, %s48
      %p52 = pneg %p46
      %p53 = scmp.eq.s32.totalorder %s37, 1
      %p54 = por %p52, %p53
      %p55 = scmp.ne.s32.totalorder %s47, %s50
      %p56 = scmp.eq.s32.totalorder %s37, 0
      %p57 = por %p55, %p56
      %p58 = scmp.ne.s32.totalorder %s47, %s50
      %p59 = scmp.eq.s32.totalorder %s42, 1
      %p60 = por %p58, %p59
      %p61 = scmp.ne.s32.totalorder %s50, %s51
      %p62 = scmp.eq.s32.totalorder %s42, 0
      %p63 = por %p61, %p62
      %p64 = scmp.ne.s32.totalorder %s50, %s51
      %p65 = scmp.eq.s32.totalorder %s43, 1
      %p66 = por %p64, %p65
      %p68 = scmp.ne.s32.totalorder %s51, %s67
      %p69 = scmp.eq.s32.totalorder %s43, 0
      %p70 = por %p68, %p69
      %s72 = sadd.s32 %s71, 1
      %p75 = scmp.eq.s32.totalorder %s37, 1
      %p76 = scmp.ne.s32.totalorder %s71, %s73
      %p77 = scmp.eq.s32.totalorder %s37, 0
      %p78 = por %p76, %p77
      %p79 = scmp.ne.s32.totalorder %s71, %s73
      %p80 = scmp.eq.s32.totalorder %s42, 1
      %p81 = por %p79, %p80
      %p82 = scmp.ne.s32.totalorder %s73, %s74
      %p83 = scmp.eq.s32.totalorder %s42, 0
      %p84 = por %p82, %p83
      %p85 = scmp.ne.s32.totalorder %s73, %s74
      %p86 = scmp.eq.s32.totalorder %s43, 1
      %p87 = por %p85, %p86
      %p89 = scmp.ne.s32.totalorder %s74, %s88
      %p90 = scmp.eq.s32.totalorder %s43, 0
      %p91 = por %p89, %p90
      %s93 = sadd.s32 %s92, 1
      %p96 = scmp.eq.s32.totalorder %s37, 1
      %p97 = scmp.ne.s32.totalorder %s92, %s94
      %p98 = scmp.eq.s32.totalorder %s37, 0
      %p99 = por %p97, %p98
      %p100 = scmp.ne.s32.totalorder %s92, %s94
      %p101 = scmp.eq.s32.totalorder %s42, 1
      %p102 = por %p100, %p101
      %p103 = scmp.ne.s32.totalorder %s94, %s95
      %p104 = scmp.eq.s32.totalorder %s42, 0
      %p105 = por %p103, %p104
      %p106 = scmp.ne.s32.totalorder %s94, %s95
      %p107 = scmp.eq.s32.totalorder %s43, 1
      %p108 = por %p106, %p107
      %p110 = scmp.ne.s32.totalorder %s95, %s109
      %p111 = scmp.eq.s32.totalorder %s43, 0
      %p112 = por %p110, %p111
      %s114 = sadd.s32 %s113, 1
      %p117 = scmp.eq.s32.totalorder %s37, 1
      %p118 = scmp.ne.s32.totalorder %s113, %s115
      %p119 = scmp.eq.s32.totalorder %s37, 0
      %p120 = por %p118, %p119
      %p121 = scmp.ne.s32.totalorder %s113, %s115
      %p122 = scmp.eq.s32.totalorder %s42, 1
      %p123 = por %p121, %p122
      %p124 = scmp.ne.s32.totalorder %s115, %s116
      %p125 = scmp.eq.s32.totalorder %s42, 0
      %p126 = por %p124, %p125
      %p127 = scmp.ne.s32.totalorder %s115, %s116
      %p128 = scmp.eq.s32.totalorder %s43, 1
      %p129 = por %p127, %p128
      %p131 = scmp.ne.s32.totalorder %s116, %s130
      %p132 = scmp.eq.s32.totalorder %s43, 0
      %p133 = por %p131, %p132
      %s135 = sadd.s32 %s134, 1
      %p138 = scmp.eq.s32.totalorder %s37, 1
      %p139 = scmp.ne.s32.totalorder %s134, %s136
      %p140 = scmp.eq.s32.totalorder %s37, 0
      %p141 = por %p139, %p140
      %p142 = scmp.ne.s32.totalorder %s134, %s136
      %p143 = scmp.eq.s32.totalorder %s42, 1
      %p144 = por %p142, %p143
      %p145 = scmp.ne.s32.totalorder %s136, %s137
      %p146 = scmp.eq.s32.totalorder %s42, 0
      %p147 = por %p145, %p146
      %p148 = scmp.ne.s32.totalorder %s136, %s137
      %p149 = scmp.eq.s32.totalorder %s43, 1
      %p150 = por %p148, %p149
      %p152 = scmp.ne.s32.totalorder %s137, %s151
      %p153 = scmp.eq.s32.totalorder %s43, 0
      %p154 = por %p152, %p153
      %s156 = sadd.s32 %s155, 1
      %p159 = scmp.eq.s32.totalorder %s37, 1
      %p160 = scmp.ne.s32.totalorder %s155, %s157
      %p161 = scmp.eq.s32.totalorder %s37, 0
      %p162 = por %p160, %p161
      %p163 = scmp.ne.s32.totalorder %s155, %s157
      %p164 = scmp.eq.s32.totalorder %s42, 1
      %p165 = por %p163, %p164
      %p166 = scmp.ne.s32.totalorder %s157, %s158
      %p167 = scmp.eq.s32.totalorder %s42, 0
      %p168 = por %p166, %p167
      %p169 = scmp.ne.s32.totalorder %s157, %s158
      %p170 = scmp.eq.s32.totalorder %s43, 1
      %p171 = por %p169, %p170
      %p173 = scmp.ne.s32.totalorder %s158, %s172
      %p174 = scmp.eq.s32.totalorder %s43, 0
      %p175 = por %p173, %p174
      %s177 = sadd.s32 %s176, 1
      %p180 = scmp.eq.s32.totalorder %s37, 1
      %p181 = scmp.ne.s32.totalorder %s176, %s178
      %p182 = scmp.eq.s32.totalorder %s37, 0
      %p183 = por %p181, %p182
      %p184 = scmp.ne.s32.totalorder %s176, %s178
      %p185 = scmp.eq.s32.totalorder %s42, 1
      %p186 = por %p184, %p185
      %p187 = scmp.ne.s32.totalorder %s178, %s179
      %p188 = scmp.eq.s32.totalorder %s42, 0
      %p189 = por %p187, %p188
      %p190 = scmp.ne.s32.totalorder %s178, %s179
      %p191 = scmp.eq.s32.totalorder %s43, 1
      %p192 = por %p190, %p191
      %p194 = scmp.ne.s32.totalorder %s179, %s193
      %p195 = scmp.eq.s32.totalorder %s43, 0
      %p196 = por %p194, %p195
      %s198 = sadd.s32 %s197, 1
      %p201 = scmp.eq.s32.totalorder %s37, 1
      %p202 = scmp.ne.s32.totalorder %s197, %s199
      %p203 = scmp.eq.s32.totalorder %s37, 0
      %p204 = por %p202, %p203
      %p205 = scmp.ne.s32.totalorder %s197, %s199
      %p206 = scmp.eq.s32.totalorder %s42, 1
      %p207 = por %p205, %p206
      %p208 = scmp.ne.s32.totalorder %s199, %s200
      %p209 = scmp.eq.s32.totalorder %s42, 0
      %p210 = por %p208, %p209
      %p211 = scmp.ne.s32.totalorder %s199, %s200
      %p212 = scmp.eq.s32.totalorder %s43, 1
      %p213 = por %p211, %p212
      %p215 = scmp.ne.s32.totalorder %s200, %s214
      %p216 = scmp.eq.s32.totalorder %s43, 0
      %p217 = por %p215, %p216
      %s219 = sadd.s32 %s218, 1
      %p222 = scmp.eq.s32.totalorder %s37, 1
      %p223 = scmp.ne.s32.totalorder %s218, %s220
      %p224 = scmp.eq.s32.totalorder %s37, 0
      %p225 = por %p223, %p224
      %p226 = scmp.ne.s32.totalorder %s218, %s220
      %p227 = scmp.eq.s32.totalorder %s42, 1
      %p228 = por %p226, %p227
      %p229 = scmp.ne.s32.totalorder %s220, %s221
      %p230 = scmp.eq.s32.totalorder %s42, 0
      %p231 = por %p229, %p230
      %p232 = scmp.ne.s32.totalorder %s220, %s221
      %p233 = scmp.eq.s32.totalorder %s43, 1
      %p234 = por %p232, %p233
      %p236 = scmp.ne.s32.totalorder %s221, %s235
      %p237 = scmp.eq.s32.totalorder %s43, 0
      %p238 = por %p236, %p237
      %s240 = sadd.s32 %s239, 1
      %p243 = scmp.eq.s32.totalorder %s37, 1
      %p244 = scmp.ne.s32.totalorder %s239, %s241
      %p245 = scmp.eq.s32.totalorder %s37, 0
      %p246 = por %p244, %p245
      %p247 = scmp.ne.s32.totalorder %s239, %s241
      %p248 = scmp.eq.s32.totalorder %s42, 1
      %p249 = por %p247, %p248
      %p250 = scmp.ne.s32.totalorder %s241, %s242
      %p251 = scmp.eq.s32.totalorder %s42, 0
      %p252 = por %p250, %p251
      %p253 = scmp.ne.s32.totalorder %s241, %s242
      %p254 = scmp.eq.s32.totalorder %s43, 1
      %p255 = por %p253, %p254
      %p257 = scmp.ne.s32.totalorder %s242, %s256
      %p258 = scmp.eq.s32.totalorder %s43, 0
      %p259 = por %p257, %p258
      %s261 = sadd.s32 %s260, 1
      %p264 = scmp.eq.s32.totalorder %s37, 1
      %p265 = scmp.ne.s32.totalorder %s260, %s262
      %p266 = scmp.eq.s32.totalorder %s37, 0
      %p267 = por %p265, %p266
      %p268 = scmp.ne.s32.totalorder %s260, %s262
      %p269 = scmp.eq.s32.totalorder %s42, 1
      %p270 = por %p268, %p269
      %p271 = scmp.ne.s32.totalorder %s262, %s263
      %p272 = scmp.eq.s32.totalorder %s42, 0
      %p273 = por %p271, %p272
      %p274 = scmp.ne.s32.totalorder %s262, %s263
      %p275 = scmp.eq.s32.totalorder %s43, 1
      %p276 = por %p274, %p275
      %p278 = scmp.ne.s32.totalorder %s263, %s277
      %p279 = scmp.eq.s32.totalorder %s43, 0
      %p280 = por %p278, %p279
      %s282 = sadd.s32 %s281, 1
      %p285 = scmp.eq.s32.totalorder %s37, 1
      %p286 = scmp.ne.s32.totalorder %s281, %s283
      %p287 = scmp.eq.s32.totalorder %s37, 0
      %p288 = por %p286, %p287
      %p289 = scmp.ne.s32.totalorder %s281, %s283
      %p290 = scmp.eq.s32.totalorder %s42, 1
      %p291 = por %p289, %p290
      %p292 = scmp.ne.s32.totalorder %s283, %s284
      %p293 = scmp.eq.s32.totalorder %s42, 0
      %p294 = por %p292, %p293
      %p295 = scmp.ne.s32.totalorder %s283, %s284
      %p296 = scmp.eq.s32.totalorder %s43, 1
      %p297 = por %p295, %p296
      %p299 = scmp.ne.s32.totalorder %s284, %s298
      %p300 = scmp.eq.s32.totalorder %s43, 0
      %p301 = por %p299, %p300
      %s303 = sadd.s32 %s302, 1
      %p306 = scmp.eq.s32.totalorder %s37, 1
      %p307 = scmp.ne.s32.totalorder %s302, %s304
      %p308 = scmp.eq.s32.totalorder %s37, 0
      %p309 = por %p307, %p308
      %p310 = scmp.ne.s32.totalorder %s302, %s304
      %p311 = scmp.eq.s32.totalorder %s42, 1
      %p312 = por %p310, %p311
      %p313 = scmp.ne.s32.totalorder %s304, %s305
      %p314 = scmp.eq.s32.totalorder %s42, 0
      %p315 = por %p313, %p314
      %p316 = scmp.ne.s32.totalorder %s304, %s305
      %p317 = scmp.eq.s32.totalorder %s43, 1
      %p318 = por %p316, %p317
      %p320 = scmp.ne.s32.totalorder %s305, %s319
      %p321 = scmp.eq.s32.totalorder %s43, 0
      %p322 = por %p320, %p321
      %s324 = sadd.s32 %s323, 1
      %p327 = scmp.eq.s32.totalorder %s37, 1
      %p328 = scmp.ne.s32.totalorder %s323, %s325
      %p329 = scmp.eq.s32.totalorder %s37, 0
      %p330 = por %p328, %p329
      %p331 = scmp.ne.s32.totalorder %s323, %s325
      %p332 = scmp.eq.s32.totalorder %s42, 1
      %p333 = por %p331, %p332
      %p334 = scmp.ne.s32.totalorder %s325, %s326
      %p335 = scmp.eq.s32.totalorder %s42, 0
      %p336 = por %p334, %p335
      %p337 = scmp.ne.s32.totalorder %s325, %s326
      %p338 = scmp.eq.s32.totalorder %s43, 1
      %p339 = por %p337, %p338
      %p341 = scmp.ne.s32.totalorder %s326, %s340
      %p342 = scmp.eq.s32.totalorder %s43, 0
      %p343 = por %p341, %p342
      %s345 = sadd.s32 %s344, 1
      %p348 = scmp.eq.s32.totalorder %s37, 1
      %p349 = scmp.ne.s32.totalorder %s344, %s346
      %p350 = scmp.eq.s32.totalorder %s37, 0
      %p351 = por %p349, %p350
      %p352 = scmp.ne.s32.totalorder %s344, %s346
      %p353 = scmp.eq.s32.totalorder %s42, 1
      %p354 = por %p352, %p353
      %p355 = scmp.ne.s32.totalorder %s346, %s347
      %p356 = scmp.eq.s32.totalorder %s42, 0
      %p357 = por %p355, %p356
      %p358 = scmp.ne.s32.totalorder %s346, %s347
      %p359 = scmp.eq.s32.totalorder %s43, 1
      %p360 = por %p358, %p359
      %p362 = scmp.ne.s32.totalorder %s347, %s361
      %p363 = scmp.eq.s32.totalorder %s43, 0
      %p364 = por %p362, %p363
      %s366 = sadd.s32 %s365, 1
      %p369 = scmp.eq.s32.totalorder %s37, 1
      %p370 = scmp.ne.s32.totalorder %s365, %s367
      %p371 = scmp.eq.s32.totalorder %s37, 0
      %p372 = por %p370, %p371
      %p373 = scmp.ne.s32.totalorder %s365, %s367
      %p374 = scmp.eq.s32.totalorder %s42, 1
      %p375 = por %p373, %p374
      %p376 = scmp.ne.s32.totalorder %s367, %s368
      %p377 = scmp.eq.s32.totalorder %s42, 0
      %p378 = por %p376, %p377
      %p379 = scmp.ne.s32.totalorder %s367, %s368
      %p380 = scmp.eq.s32.totalorder %s43, 1
      %p381 = por %p379, %p380
      %p383 = scmp.ne.s32.totalorder %s368, %s382
      %p384 = scmp.eq.s32.totalorder %s43, 0
      %p385 = por %p383, %p384
      %s387 = sadd.s32 %s386, 1
      %p390 = scmp.eq.s32.totalorder %s37, 1
      %p391 = scmp.ne.s32.totalorder %s386, %s388
      %p392 = scmp.eq.s32.totalorder %s37, 0
      %p393 = por %p391, %p392
      %p394 = scmp.ne.s32.totalorder %s386, %s388
      %p395 = scmp.eq.s32.totalorder %s42, 1
      %p396 = por %p394, %p395
      %p397 = scmp.ne.s32.totalorder %s388, %s389
      %p398 = scmp.eq.s32.totalorder %s42, 0
      %p399 = por %p397, %p398
      %p400 = scmp.ne.s32.totalorder %s388, %s389
      %p401 = scmp.eq.s32.totalorder %s43, 1
      %p402 = por %p400, %p401
      %p404 = scmp.ne.s32.totalorder %s389, %s403
      %p405 = scmp.eq.s32.totalorder %s43, 0
      %p406 = por %p404, %p405
      %s408 = sadd.s32 %s407, 1
      %p411 = scmp.eq.s32.totalorder %s37, 1
      %p412 = scmp.ne.s32.totalorder %s407, %s409
      %p413 = scmp.eq.s32.totalorder %s37, 0
      %p414 = por %p412, %p413
      %p415 = scmp.ne.s32.totalorder %s407, %s409
      %p416 = scmp.eq.s32.totalorder %s42, 1
      %p417 = por %p415, %p416
      %p418 = scmp.ne.s32.totalorder %s409, %s410
      %p419 = scmp.eq.s32.totalorder %s42, 0
      %p420 = por %p418, %p419
      %p421 = scmp.ne.s32.totalorder %s409, %s410
      %p422 = scmp.eq.s32.totalorder %s43, 1
      %p423 = por %p421, %p422
      %p425 = scmp.ne.s32.totalorder %s410, %s424
      %p426 = scmp.eq.s32.totalorder %s43, 0
      %p427 = por %p425, %p426
      %s429 = sadd.s32 %s428, 1
      %p432 = scmp.eq.s32.totalorder %s37, 1
      %p433 = scmp.ne.s32.totalorder %s428, %s430
      %p434 = scmp.eq.s32.totalorder %s37, 0
      %p435 = por %p433, %p434
      %p436 = scmp.ne.s32.totalorder %s428, %s430
      %p437 = scmp.eq.s32.totalorder %s42, 1
      %p438 = por %p436, %p437
      %p439 = scmp.ne.s32.totalorder %s430, %s431
      %p440 = scmp.eq.s32.totalorder %s42, 0
      %p441 = por %p439, %p440
      %p442 = scmp.ne.s32.totalorder %s430, %s431
      %p443 = scmp.eq.s32.totalorder %s43, 1
      %p444 = por %p442, %p443
      %p446 = scmp.ne.s32.totalorder %s431, %s445
      %p447 = scmp.eq.s32.totalorder %s43, 0
      %p448 = por %p446, %p447
      %s450 = sadd.s32 %s449, 1
      %p453 = scmp.eq.s32.totalorder %s37, 1
      %p454 = scmp.ne.s32.totalorder %s449, %s451
      %p455 = scmp.eq.s32.totalorder %s37, 0
      %p456 = por %p454, %p455
      %p457 = scmp.ne.s32.totalorder %s449, %s451
      %p458 = scmp.eq.s32.totalorder %s42, 1
      %p459 = por %p457, %p458
      %p460 = scmp.ne.s32.totalorder %s451, %s452
      %p461 = scmp.eq.s32.totalorder %s42, 0
      %p462 = por %p460, %p461
      %p463 = scmp.ne.s32.totalorder %s451, %s452
      %p464 = scmp.eq.s32.totalorder %s43, 1
      %p465 = por %p463, %p464
      %p467 = scmp.ne.s32.totalorder %s452, %s466
      %p468 = scmp.eq.s32.totalorder %s43, 0
      %p469 = por %p467, %p468
      %s471 = sadd.s32 %s470, 1
      %p474 = scmp.eq.s32.totalorder %s37, 1
      %p475 = scmp.ne.s32.totalorder %s470, %s472
      %p476 = scmp.eq.s32.totalorder %s37, 0
      %p477 = por %p475, %p476
      %p478 = scmp.ne.s32.totalorder %s470, %s472
      %p479 = scmp.eq.s32.totalorder %s42, 1
      %p480 = por %p478, %p479
      %p481 = scmp.ne.s32.totalorder %s472, %s473
      %p482 = scmp.eq.s32.totalorder %s42, 0
      %p483 = por %p481, %p482
      %p484 = scmp.ne.s32.totalorder %s472, %s473
      %p485 = scmp.eq.s32.totalorder %s43, 1
      %p486 = por %p484, %p485
      %p488 = scmp.ne.s32.totalorder %s473, %s487
      %p489 = scmp.eq.s32.totalorder %s43, 0
      %p490 = por %p488, %p489
      %s492 = sadd.s32 %s491, 1
      %p495 = scmp.eq.s32.totalorder %s37, 1
      %p496 = scmp.ne.s32.totalorder %s491, %s493
      %p497 = scmp.eq.s32.totalorder %s37, 0
      %p498 = por %p496, %p497
      %p499 = scmp.ne.s32.totalorder %s491, %s493
      %p500 = scmp.eq.s32.totalorder %s42, 1
      %p501 = por %p499, %p500
      %p502 = scmp.ne.s32.totalorder %s493, %s494
      %p503 = scmp.eq.s32.totalorder %s42, 0
      %p504 = por %p502, %p503
      %p505 = scmp.ne.s32.totalorder %s493, %s494
      %p506 = scmp.eq.s32.totalorder %s43, 1
      %p507 = por %p505, %p506
      %p509 = scmp.ne.s32.totalorder %s494, %s508
      %p510 = scmp.eq.s32.totalorder %s43, 0
      %p511 = por %p509, %p510
      %s513 = sadd.s32 %s512, 1
      %p516 = scmp.eq.s32.totalorder %s37, 1
      %p517 = scmp.ne.s32.totalorder %s512, %s514
      %p518 = scmp.eq.s32.totalorder %s37, 0
      %p519 = por %p517, %p518
      %p520 = scmp.ne.s32.totalorder %s512, %s514
      %p521 = scmp.eq.s32.totalorder %s42, 1
      %p522 = por %p520, %p521
      %p523 = scmp.ne.s32.totalorder %s514, %s515
      %p524 = scmp.eq.s32.totalorder %s42, 0
      %p525 = por %p523, %p524
      %p526 = scmp.ne.s32.totalorder %s514, %s515
      %p527 = scmp.eq.s32.totalorder %s43, 1
      %p528 = por %p526, %p527
      %p530 = scmp.ne.s32.totalorder %s515, %s529
      %p531 = scmp.eq.s32.totalorder %s43, 0
      %p532 = por %p530, %p531
      %s534 = sadd.s32 %s533, 1
      %p537 = scmp.eq.s32.totalorder %s37, 1
      %p538 = scmp.ne.s32.totalorder %s533, %s535
      %p539 = scmp.eq.s32.totalorder %s37, 0
      %p540 = por %p538, %p539
      %p541 = scmp.ne.s32.totalorder %s533, %s535
      %p542 = scmp.eq.s32.totalorder %s42, 1
      %p543 = por %p541, %p542
      %p544 = scmp.ne.s32.totalorder %s535, %s536
      %p545 = scmp.eq.s32.totalorder %s42, 0
      %p546 = por %p544, %p545
      %p547 = scmp.ne.s32.totalorder %s535, %s536
      %p548 = scmp.eq.s32.totalorder %s43, 1
      %p549 = por %p547, %p548
      %p551 = scmp.ne.s32.totalorder %s536, %s550
      %p552 = scmp.eq.s32.totalorder %s43, 0
      %p553 = por %p551, %p552
      %s555 = sadd.s32 %s554, 1
      %p558 = scmp.eq.s32.totalorder %s37, 1
      %p559 = scmp.ne.s32.totalorder %s554, %s556
      %p560 = scmp.eq.s32.totalorder %s37, 0
      %p561 = por %p559, %p560
      %p562 = scmp.ne.s32.totalorder %s554, %s556
      %p563 = scmp.eq.s32.totalorder %s42, 1
      %p564 = por %p562, %p563
      %p565 = scmp.ne.s32.totalorder %s556, %s557
      %p566 = scmp.eq.s32.totalorder %s42, 0
      %p567 = por %p565, %p566
      %p568 = scmp.ne.s32.totalorder %s556, %s557
      %p569 = scmp.eq.s32.totalorder %s43, 1
      %p570 = por %p568, %p569
      %p572 = scmp.ne.s32.totalorder %s557, %s571
      %p573 = scmp.eq.s32.totalorder %s43, 0
      %p574 = por %p572, %p573
      %s576 = sadd.s32 %s575, 1
      %p579 = scmp.eq.s32.totalorder %s37, 1
      %p580 = scmp.ne.s32.totalorder %s575, %s577
      %p581 = scmp.eq.s32.totalorder %s37, 0
      %p582 = por %p580, %p581
      %p583 = scmp.ne.s32.totalorder %s575, %s577
      %p584 = scmp.eq.s32.totalorder %s42, 1
      %p585 = por %p583, %p584
      %p586 = scmp.ne.s32.totalorder %s577, %s578
      %p587 = scmp.eq.s32.totalorder %s42, 0
      %p588 = por %p586, %p587
      %p589 = scmp.ne.s32.totalorder %s577, %s578
      %p590 = scmp.eq.s32.totalorder %s43, 1
      %p591 = por %p589, %p590
      %p593 = scmp.ne.s32.totalorder %s578, %s592
      %p594 = scmp.eq.s32.totalorder %s43, 0
      %p595 = por %p593, %p594
      %s597 = sadd.s32 %s596, 1
      %p600 = scmp.eq.s32.totalorder %s37, 1
      %p601 = scmp.ne.s32.totalorder %s596, %s598
      %p602 = scmp.eq.s32.totalorder %s37, 0
      %p603 = por %p601, %p602
      %p604 = scmp.ne.s32.totalorder %s596, %s598
      %p605 = scmp.eq.s32.totalorder %s42, 1
      %p606 = por %p604, %p605
      %p607 = scmp.ne.s32.totalorder %s598, %s599
      %p608 = scmp.eq.s32.totalorder %s42, 0
      %p609 = por %p607, %p608
      %p610 = scmp.ne.s32.totalorder %s598, %s599
      %p611 = scmp.eq.s32.totalorder %s43, 1
      %p612 = por %p610, %p611
      %p614 = scmp.ne.s32.totalorder %s599, %s613
      %p615 = scmp.eq.s32.totalorder %s43, 0
      %p616 = por %p614, %p615
      %s618 = sadd.s32 %s617, 1
      %p621 = scmp.eq.s32.totalorder %s37, 1
      %p622 = scmp.ne.s32.totalorder %s617, %s619
      %p623 = scmp.eq.s32.totalorder %s37, 0
      %p624 = por %p622, %p623
      %p625 = scmp.ne.s32.totalorder %s617, %s619
      %p626 = scmp.eq.s32.totalorder %s42, 1
      %p627 = por %p625, %p626
      %p628 = scmp.ne.s32.totalorder %s619, %s620
      %p629 = scmp.eq.s32.totalorder %s42, 0
      %p630 = por %p628, %p629
      %p631 = scmp.ne.s32.totalorder %s619, %s620
      %p632 = scmp.eq.s32.totalorder %s43, 1
      %p633 = por %p631, %p632
      %p635 = scmp.ne.s32.totalorder %s620, %s634
      %p636 = scmp.eq.s32.totalorder %s43, 0
      %p637 = por %p635, %p636
      %s638 = ssub.s32 %s37, %s44
      %p639 = scmp.eq.s32.totalorder %s638, 0
      %s641 = sadd.s32 %s640, 1
      %s642 = scalar_select %p639, %s640, %s641
      %p645 = pneg %p639
      %p646 = scmp.eq.s32.totalorder %s37, 1
      %p647 = por %p645, %p646
      %p648 = scmp.ne.s32.totalorder %s640, %s643
      %p649 = scmp.eq.s32.totalorder %s37, 0
      %p650 = por %p648, %p649
      %p651 = scmp.ne.s32.totalorder %s640, %s643
      %p652 = scmp.eq.s32.totalorder %s42, 1
      %p653 = por %p651, %p652
      %p654 = scmp.ne.s32.totalorder %s643, %s644
      %p655 = scmp.eq.s32.totalorder %s42, 0
      %p656 = por %p654, %p655
      %p657 = scmp.ne.s32.totalorder %s643, %s644
      %p658 = scmp.eq.s32.totalorder %s43, 1
      %p659 = por %p657, %p658
      %p661 = scmp.ne.s32.totalorder %s644, %s660
      %p662 = scmp.eq.s32.totalorder %s43, 0
      %p663 = por %p661, %p662
      %p664 = scmp.le.s32.totalorder 1, %s37
      %p665 = scmp.lt.s32.totalorder %s37, 3
      %p666 = pnand %p664, %p665
      %p667 = pneg %p666
      // Predicated region
      $region9: #{squeezenet_forward.5} parent=5 // pred_check
        _
      $region10: #{squeezenet_forward.5} parent=5 // pred_check_branch
        %669 = sbr.rel (%p666) target = $region12
      $region11: #{squeezenet_forward.5} parent=5 // pred_region
        %s670 = ssub.s32 %s37, 1
        // Predicated region
        $region13: #{squeezenet_forward.5} parent=11 // pred_check
          %p671 = pneg %p84
        $region14: #{squeezenet_forward.5} parent=11 // pred_check_branch
          %673 = sbr.rel (%p671) target = $region16
        $region15: #{squeezenet_forward.5} parent=11 // pred_region
          _
        $region16: #{squeezenet_forward.5} parent=11 // pred_fallthru
          _
        // Predicated region
        $region17: #{squeezenet_forward.5} parent=11 // pred_check
          %p674 = pneg %p105
        $region18: #{squeezenet_forward.5} parent=11 // pred_check_branch
          %676 = sbr.rel (%p674) target = $region20
        $region19: #{squeezenet_forward.5} parent=11 // pred_region
          _
        $region20: #{squeezenet_forward.5} parent=11 // pred_fallthru
          _
        // Predicated region
        $region21: #{squeezenet_forward.5} parent=11 // pred_check
          %p677 = pneg %p126
        $region22: #{squeezenet_forward.5} parent=11 // pred_check_branch
          %679 = sbr.rel (%p677) target = $region24
        $region23: #{squeezenet_forward.5} parent=11 // pred_region
          _
        $region24: #{squeezenet_forward.5} parent=11 // pred_fallthru
          _
        // Predicated region
        $region25: #{squeezenet_forward.5} parent=11 // pred_check
          %p680 = pneg %p147
        $region26: #{squeezenet_forward.5} parent=11 // pred_check_branch
          %682 = sbr.rel (%p680) target = $region28
        $region27: #{squeezenet_forward.5} parent=11 // pred_region
          _
        $region28: #{squeezenet_forward.5} parent=11 // pred_fallthru
          _
        // Predicated region
        $region29: #{squeezenet_forward.5} parent=11 // pred_check
          %p683 = pneg %p168
        $region30: #{squeezenet_forward.5} parent=11 // pred_check_branch
          %685 = sbr.rel (%p683) target = $region32
        $region31: #{squeezenet_forward.5} parent=11 // pred_region
          _
        $region32: #{squeezenet_forward.5} parent=11 // pred_fallthru
          _
        // Predicated region
        $region33: #{squeezenet_forward.5} parent=11 // pred_check
          %p686 = pneg %p189
        $region34: #{squeezenet_forward.5} parent=11 // pred_check_branch
          %688 = sbr.rel (%p686) target = $region36
        $region35: #{squeezenet_forward.5} parent=11 // pred_region
          _
        $region36: #{squeezenet_forward.5} parent=11 // pred_fallthru
          _
        // Predicated region
        $region37: #{squeezenet_forward.5} parent=11 // pred_check
          %p689 = pneg %p210
        $region38: #{squeezenet_forward.5} parent=11 // pred_check_branch
          %691 = sbr.rel (%p689) target = $region40
        $region39: #{squeezenet_forward.5} parent=11 // pred_region
          _
        $region40: #{squeezenet_forward.5} parent=11 // pred_fallthru
          _
        // Predicated region
        $region41: #{squeezenet_forward.5} parent=11 // pred_check
          %p692 = pneg %p231
        $region42: #{squeezenet_forward.5} parent=11 // pred_check_branch
          %694 = sbr.rel (%p692) target = $region44
        $region43: #{squeezenet_forward.5} parent=11 // pred_region
          _
        $region44: #{squeezenet_forward.5} parent=11 // pred_fallthru
          _
        // Predicated region
        $region45: #{squeezenet_forward.5} parent=11 // pred_check
          %p695 = pneg %p252
        $region46: #{squeezenet_forward.5} parent=11 // pred_check_branch
          %697 = sbr.rel (%p695) target = $region48
        $region47: #{squeezenet_forward.5} parent=11 // pred_region
          _
        $region48: #{squeezenet_forward.5} parent=11 // pred_fallthru
          _
        // Predicated region
        $region49: #{squeezenet_forward.5} parent=11 // pred_check
          %p698 = pneg %p273
        $region50: #{squeezenet_forward.5} parent=11 // pred_check_branch
          %700 = sbr.rel (%p698) target = $region52
        $region51: #{squeezenet_forward.5} parent=11 // pred_region
          _
        $region52: #{squeezenet_forward.5} parent=11 // pred_fallthru
          _
        // Predicated region
        $region53: #{squeezenet_forward.5} parent=11 // pred_check
          %p701 = pneg %p294
        $region54: #{squeezenet_forward.5} parent=11 // pred_check_branch
          %703 = sbr.rel (%p701) target = $region56
        $region55: #{squeezenet_forward.5} parent=11 // pred_region
          _
        $region56: #{squeezenet_forward.5} parent=11 // pred_fallthru
          _
        // Predicated region
        $region57: #{squeezenet_forward.5} parent=11 // pred_check
          %p704 = pneg %p315
        $region58: #{squeezenet_forward.5} parent=11 // pred_check_branch
          %706 = sbr.rel (%p704) target = $region60
        $region59: #{squeezenet_forward.5} parent=11 // pred_region
          _
        $region60: #{squeezenet_forward.5} parent=11 // pred_fallthru
          _
        // Predicated region
        $region61: #{squeezenet_forward.5} parent=11 // pred_check
          %p707 = pneg %p336
        $region62: #{squeezenet_forward.5} parent=11 // pred_check_branch
          %709 = sbr.rel (%p707) target = $region64
        $region63: #{squeezenet_forward.5} parent=11 // pred_region
          _
        $region64: #{squeezenet_forward.5} parent=11 // pred_fallthru
          _
        // Predicated region
        $region65: #{squeezenet_forward.5} parent=11 // pred_check
          %p710 = pneg %p357
        $region66: #{squeezenet_forward.5} parent=11 // pred_check_branch
          %712 = sbr.rel (%p710) target = $region68
        $region67: #{squeezenet_forward.5} parent=11 // pred_region
          _
        $region68: #{squeezenet_forward.5} parent=11 // pred_fallthru
          _
        // Predicated region
        $region69: #{squeezenet_forward.5} parent=11 // pred_check
          %p713 = pneg %p378
        $region70: #{squeezenet_forward.5} parent=11 // pred_check_branch
          %715 = sbr.rel (%p713) target = $region72
        $region71: #{squeezenet_forward.5} parent=11 // pred_region
          _
        $region72: #{squeezenet_forward.5} parent=11 // pred_fallthru
          _
        // Predicated region
        $region73: #{squeezenet_forward.5} parent=11 // pred_check
          %p716 = pneg %p399
        $region74: #{squeezenet_forward.5} parent=11 // pred_check_branch
          %718 = sbr.rel (%p716) target = $region76
        $region75: #{squeezenet_forward.5} parent=11 // pred_region
          _
        $region76: #{squeezenet_forward.5} parent=11 // pred_fallthru
          _
        // Predicated region
        $region77: #{squeezenet_forward.5} parent=11 // pred_check
          %p719 = pneg %p420
        $region78: #{squeezenet_forward.5} parent=11 // pred_check_branch
          %721 = sbr.rel (%p719) target = $region80
        $region79: #{squeezenet_forward.5} parent=11 // pred_region
          _
        $region80: #{squeezenet_forward.5} parent=11 // pred_fallthru
          _
        // Predicated region
        $region81: #{squeezenet_forward.5} parent=11 // pred_check
          %p722 = pneg %p441
        $region82: #{squeezenet_forward.5} parent=11 // pred_check_branch
          %724 = sbr.rel (%p722) target = $region84
        $region83: #{squeezenet_forward.5} parent=11 // pred_region
          _
        $region84: #{squeezenet_forward.5} parent=11 // pred_fallthru
          _
        // Predicated region
        $region85: #{squeezenet_forward.5} parent=11 // pred_check
          %p725 = pneg %p462
        $region86: #{squeezenet_forward.5} parent=11 // pred_check_branch
          %727 = sbr.rel (%p725) target = $region88
        $region87: #{squeezenet_forward.5} parent=11 // pred_region
          _
        $region88: #{squeezenet_forward.5} parent=11 // pred_fallthru
          _
        // Predicated region
        $region89: #{squeezenet_forward.5} parent=11 // pred_check
          %p728 = pneg %p483
        $region90: #{squeezenet_forward.5} parent=11 // pred_check_branch
          %730 = sbr.rel (%p728) target = $region92
        $region91: #{squeezenet_forward.5} parent=11 // pred_region
          _
        $region92: #{squeezenet_forward.5} parent=11 // pred_fallthru
          _
        // Predicated region
        $region93: #{squeezenet_forward.5} parent=11 // pred_check
          %p731 = pneg %p504
        $region94: #{squeezenet_forward.5} parent=11 // pred_check_branch
          %733 = sbr.rel (%p731) target = $region96
        $region95: #{squeezenet_forward.5} parent=11 // pred_region
          _
        $region96: #{squeezenet_forward.5} parent=11 // pred_fallthru
          _
        // Predicated region
        $region97: #{squeezenet_forward.5} parent=11 // pred_check
          %p734 = pneg %p525
        $region98: #{squeezenet_forward.5} parent=11 // pred_check_branch
          %736 = sbr.rel (%p734) target = $region100
        $region99: #{squeezenet_forward.5} parent=11 // pred_region
          _
        $region100: #{squeezenet_forward.5} parent=11 // pred_fallthru
          _
        // Predicated region
        $region101: #{squeezenet_forward.5} parent=11 // pred_check
          %p737 = pneg %p546
        $region102: #{squeezenet_forward.5} parent=11 // pred_check_branch
          %739 = sbr.rel (%p737) target = $region104
        $region103: #{squeezenet_forward.5} parent=11 // pred_region
          _
        $region104: #{squeezenet_forward.5} parent=11 // pred_fallthru
          _
        // Predicated region
        $region105: #{squeezenet_forward.5} parent=11 // pred_check
          %p740 = pneg %p567
        $region106: #{squeezenet_forward.5} parent=11 // pred_check_branch
          %742 = sbr.rel (%p740) target = $region108
        $region107: #{squeezenet_forward.5} parent=11 // pred_region
          _
        $region108: #{squeezenet_forward.5} parent=11 // pred_fallthru
          _
        // Predicated region
        $region109: #{squeezenet_forward.5} parent=11 // pred_check
          %p743 = pneg %p588
        $region110: #{squeezenet_forward.5} parent=11 // pred_check_branch
          %745 = sbr.rel (%p743) target = $region112
        $region111: #{squeezenet_forward.5} parent=11 // pred_region
          _
        $region112: #{squeezenet_forward.5} parent=11 // pred_fallthru
          _
        // Predicated region
        $region113: #{squeezenet_forward.5} parent=11 // pred_check
          %p746 = pneg %p609
        $region114: #{squeezenet_forward.5} parent=11 // pred_check_branch
          %748 = sbr.rel (%p746) target = $region116
        $region115: #{squeezenet_forward.5} parent=11 // pred_region
          _
        $region116: #{squeezenet_forward.5} parent=11 // pred_fallthru
          _
        // Predicated region
        $region117: #{squeezenet_forward.5} parent=11 // pred_check
          %p749 = pneg %p630
        $region118: #{squeezenet_forward.5} parent=11 // pred_check_branch
          %751 = sbr.rel (%p749) target = $region120
        $region119: #{squeezenet_forward.5} parent=11 // pred_region
          _
        $region120: #{squeezenet_forward.5} parent=11 // pred_fallthru
          _
      $region12: #{squeezenet_forward.5} parent=5 // pred_fallthru
        _
      %p752 = scmp.lt.s32.totalorder %s37, 2
      // Predicated region
      $region121: #{squeezenet_forward.5} parent=5 // pred_check
        %p753 = pneg %p752
      $region122: #{squeezenet_forward.5} parent=5 // pred_check_branch
        %755 = sbr.rel (%p753) target = $region124
      $region123: #{squeezenet_forward.5} parent=5 // pred_region
        // Predicated region
        $region125: #{squeezenet_forward.5} parent=123 // pred_check
          %p756 = pneg %p57
        $region126: #{squeezenet_forward.5} parent=123 // pred_check_branch
          %758 = sbr.rel (%p756) target = $region128
        $region127: #{squeezenet_forward.5} parent=123 // pred_region
          %p759 = scmp.lt.s32.totalorder %s37, 1
          %s760 = scalar_select %p759, %s37, 1
          %s761 = smul.addr %s760, 4
          %s762 = smul.addr %s761, 4
          %s763 = scalar_lea.vmem %s0, %s762
        $region128: #{squeezenet_forward.5} parent=123 // pred_fallthru
          _
      $region124: #{squeezenet_forward.5} parent=5 // pred_fallthru
        _
      %p764 = scmp.le.s32.totalorder 1, %s37
      %p765 = scmp.lt.s32.totalorder %s37, 3
      %p766 = pnand %p764, %p765
      %p767 = pneg %p766
      // Predicated region
      $region129: #{squeezenet_forward.5} parent=5 // pred_check
        _
      $region130: #{squeezenet_forward.5} parent=5 // pred_check_branch
        %769 = sbr.rel (%p766) target = $region132
      $region131: #{squeezenet_forward.5} parent=5 // pred_region
        %s770 = ssub.s32 %s37, 1
        %p771 = scmp.lt.s32.totalorder %s42, 1
        %s772 = scalar_select %p771, %s42, 1
        %s773 = smul.addr %s772, 4
        %s774 = smul.addr %s773, 4
        %s775 = scalar_lea.vmem %s0, %s774
        %p776 = pneg %p63
        %p777 = pneg %p60
        %p778 = pneg %p84
        %p779 = pneg %p81
        %p780 = pneg %p105
        %p781 = pneg %p102
        %p782 = pneg %p126
        %p783 = pneg %p123
        %p784 = pneg %p147
        %p785 = pneg %p144
        %p786 = pneg %p168
        %p787 = pneg %p165
        %p788 = pneg %p189
        %p789 = pneg %p186
        %p790 = pneg %p210
        %p791 = pneg %p207
        %p792 = pneg %p231
        %p793 = pneg %p228
        %p794 = pneg %p252
        %p795 = pneg %p249
        %p796 = pneg %p273
        %p797 = pneg %p270
        %p798 = pneg %p294
        %p799 = pneg %p291
        %p800 = pneg %p315
        %p801 = pneg %p312
        %p802 = pneg %p336
        %p803 = pneg %p333
        %p804 = pneg %p357
        %p805 = pneg %p354
        %p806 = pneg %p378
        %p807 = pneg %p375
        %p808 = pneg %p399
        %p809 = pneg %p396
        %p810 = pneg %p420
        %p811 = pneg %p417
        %p812 = pneg %p441
        %p813 = pneg %p438
        %p814 = pneg %p462
        %p815 = pneg %p459
        %p816 = pneg %p483
        %p817 = pneg %p480
        %p818 = pneg %p504
        %p819 = pneg %p501
        %p820 = pneg %p525
        %p821 = pneg %p522
        %p822 = pneg %p546
        %p823 = pneg %p543
        %p824 = pneg %p567
        %p825 = pneg %p564
        %p826 = pneg %p588
        %p827 = pneg %p585
        %p828 = pneg %p609
        %p829 = pneg %p606
        %p830 = pneg %p630
        %p831 = pneg %p627
        %p832 = pneg %p656
        %p833 = pneg %p653
        %s834 = sand.u32 %s643, 1
        %s835 = scalar_lea.sflag [#allocation4], %s834
        %s836 = sand.u32 %s643, 1
        %s837 = scalar_lea.vmem [#allocation3], %s836
        %p838 = scmp.lt.s32.totalorder %s42, 1
        %s839 = scalar_select %p838, %s42, 1
        %s840 = smul.addr %s839, 4
        %s841 = smul.addr %s840, 4
        %s842 = scalar_lea.vmem %s0, %s841
        %v844 = vld [vmem:[%s1] sm:$0xff]
        %v845 = vld [vmem:[%s1 + $0x8] sm:$0xff]
        %v846 = vld [vmem:[%s1 + $0x10] sm:$0xff]
        %v847 = vld [vmem:[%s1 + $0x18] sm:$0xff]
        %v848 = vld [vmem:[%s842] sm:$0xf]
        %v849 = vld [vmem:[%s842 + $0x4] sm:$0xf]
        %v850 = vld [vmem:[%s842 + $0x8] sm:$0xf]
        %v851 = vld [vmem:[%s842 + $0xc] sm:$0xf]
        %v852 = vld [vmem:[%s2] sm:$0xf]
        %v853 = vld [vmem:[%s2 + $0x4] sm:$0xf]
        %v854 = vld [vmem:[%s2 + $0x8] sm:$0xf]
        %v855 = vld [vmem:[%s2 + $0xc] sm:$0xf]
        %v856 = vld [vmem:[%s2 + $0x10] sm:$0xf]
        %v857 = vld [vmem:[%s2 + $0x14] sm:$0xf]
        %v858 = vld [vmem:[%s2 + $0x18] sm:$0xf]
        %v859 = vld [vmem:[%s2 + $0x1c] sm:$0xf]
        %v860 = vld [vmem:[%s2 + $0x20] sm:$0xf]
        %v861 = vld [vmem:[%s2 + $0x24] sm:$0xf]
        %v862 = vld [vmem:[%s2 + $0x28] sm:$0xf]
        %v863 = vld [vmem:[%s2 + $0x2c] sm:$0xf]
        %v864 = vld [vmem:[%s2 + $0x30] sm:$0xf]
        %v865 = vld [vmem:[%s2 + $0x34] sm:$0xf]
        %v866 = vld [vmem:[%s2 + $0x38] sm:$0xf]
        %v867 = vld [vmem:[%s2 + $0x3c] sm:$0xf]
        %v868 = vld [vmem:[%s3] sm:$0x1]
        %v869 = vld [vmem:[%s4] sm:$0xff]
        %v870 = vld [vmem:[%s4 + $0x8] sm:$0xff]
        %v871 = vld [vmem:[%s4 + $0x10] sm:$0xff]
        %v872 = vld [vmem:[%s4 + $0x18] sm:$0xff]
        %v873 = vld [vmem:[%s4 + $0x20] sm:$0xff]
        %v874 = vld [vmem:[%s4 + $0x28] sm:$0xff]
        %v875 = vld [vmem:[%s4 + $0x30] sm:$0xff]
        %v876 = vld [vmem:[%s4 + $0x38] sm:$0xff]
        %v877 = vld [vmem:[%s4 + $0x40] sm:$0xff]
        %v878 = vld [vmem:[%s4 + $0x48] sm:$0xff]
        %v879 = vld [vmem:[%s4 + $0x50] sm:$0xff]
        %v880 = vld [vmem:[%s4 + $0x58] sm:$0xff]
        %v881 = vld [vmem:[%s4 + $0x60] sm:$0xff]
        %v882 = vld [vmem:[%s4 + $0x68] sm:$0xff]
        %v883 = vld [vmem:[%s4 + $0x70] sm:$0xff]
        %v884 = vld [vmem:[%s4 + $0x78] sm:$0xff]
        %v885 = vld [vmem:[%s4 + $0x80] sm:$0xff]
        %v886 = vld [vmem:[%s4 + $0x88] sm:$0xff]
        %v887 = vld [vmem:[%s4 + $0x90] sm:$0xff]
        %v888 = vld [vmem:[%s4 + $0x98] sm:$0xff]
        %v889 = vld [vmem:[%s4 + $0xa0] sm:$0xff]
        %v890 = vld [vmem:[%s4 + $0xa8] sm:$0xff]
        %v891 = vld [vmem:[%s4 + $0xb0] sm:$0xff]
        %v892 = vld [vmem:[%s4 + $0xb8] sm:$0xff]
        %v893 = vld [vmem:[%s4 + $0xc0] sm:$0xff]
        %v894 = vld [vmem:[%s4 + $0xc8] sm:$0xff]
        %v895 = vld [vmem:[%s4 + $0xd0] sm:$0xff]
        %v896 = vld [vmem:[%s4 + $0xd8] sm:$0xff]
        %v897 = vld [vmem:[%s4 + $0xe0] sm:$0xff]
        %v898 = vld [vmem:[%s4 + $0xe8] sm:$0xff]
        %v899 = vld [vmem:[%s4 + $0xf0] sm:$0xff]
        %v900 = vld [vmem:[%s4 + $0xf8] sm:$0xff]
        %v901 = vld [vmem:[%s4 + $0x100] sm:$0xff]
        %v902 = vld [vmem:[%s4 + $0x108] sm:$0xff]
        %v903 = vld [vmem:[%s4 + $0x110] sm:$0xff]
        %v904 = vld [vmem:[%s4 + $0x118] sm:$0xff]
        %v905 = vld [vmem:[%s5] sm:$0x3]
        %v907 = vlaneseq
        %v908 = vshrl.u32 %v907, 7
        %v909 = vsub.s32 0, %v908
        %v910 = vrot.slane %v868, %v909
        %v916 = vunpack.c.l.b16 %v848
        %v917 = vunpack.c.l.b16 %v849
        %v918 = vunpack.c.l.b16 %v850
        %v919 = vunpack.c.l.b16 %v851
        %v920 = vpack.c.b16 %v917, %v916
        %v921 = vpack.c.b16 %v919, %v918
        %v940 = vunpack.c.l.b16 %v852
        %v941 = vunpack.c.l.b16 %v853
        %v942 = vunpack.c.l.b16 %v854
        %v943 = vunpack.c.l.b16 %v855
        %v944 = vunpack.c.l.b16 %v856
        %v945 = vunpack.c.l.b16 %v857
        %v946 = vunpack.c.l.b16 %v858
        %v947 = vunpack.c.l.b16 %v859
        %v948 = vunpack.c.l.b16 %v860
        %v949 = vunpack.c.l.b16 %v861
        %v950 = vunpack.c.l.b16 %v862
        %v951 = vunpack.c.l.b16 %v863
        %v952 = vunpack.c.l.b16 %v864
        %v953 = vunpack.c.l.b16 %v865
        %v954 = vunpack.c.l.b16 %v866
        %v955 = vunpack.c.l.b16 %v867
        %v956 = vpack.c.b16 %v941, %v940
        %v957 = vpack.c.b16 %v943, %v942
        %v958 = vpack.c.b16 %v945, %v944
        %v959 = vpack.c.b16 %v947, %v946
        %v960 = vpack.c.b16 %v949, %v948
        %v961 = vpack.c.b16 %v951, %v950
        %v962 = vpack.c.b16 %v953, %v952
        %v963 = vpack.c.b16 %v955, %v954
        %972 = vmatprep.subr.bf16.mxu0 0
        %973 = vmatpush1.bf16.msra.mxu0 %v956
        %974 = vmatprep.subr.bf16.mxu0 0
        %975 = vmatpush1.bf16.msra.mxu0 %v957
        %976 = vmatprep.subr.bf16.mxu0 0
        %977 = vmatpush1.bf16.msra.mxu0 %v958
        %978 = vmatprep.subr.bf16.mxu0 0
        %979 = vmatpush1.bf16.msra.mxu0 %v959
        %980 = vmatprep.subr.bf16.mxu0 0
        %981 = vmatpush1.bf16.msra.mxu0 %v960
        %982 = vmatprep.subr.bf16.mxu0 0
        %983 = vmatpush1.bf16.msra.mxu0 %v961
        %984 = vmatprep.subr.bf16.mxu0 0
        %985 = vmatpush1.bf16.msra.mxu0 %v962
        %986 = vmatprep.subr.bf16.mxu0 0
        %987 = vmatpush1.bf16.msra.mxu0 %v963
        %988 = vmatprep.subr.bf16.mxu0 0
        %989 = vmatpush1.bf16.msra.mxu0 0
        %990 = vmatprep.subr.bf16.mxu0 0
        %991 = vmatpush1.bf16.msra.mxu0 0
        %992 = vmatprep.subr.bf16.mxu0 0
        %993 = vmatpush1.bf16.msra.mxu0 0
        %994 = vmatprep.subr.bf16.mxu0 0
        %995 = vmatpush1.bf16.msra.mxu0 0
        %996 = vmatprep.subr.bf16.mxu0 0
        %997 = vmatpush1.bf16.msra.mxu0 0
        %998 = vmatprep.subr.bf16.mxu0 0
        %999 = vmatpush1.bf16.msra.mxu0 0
        %1000 = vmatprep.subr.bf16.mxu0 0
        %1001 = vmatpush1.bf16.msra.mxu0 0
        %1002 = vmatprep.subr.bf16.mxu0 0
        %1003 = vmatpush1.bf16.msra.mxu0 0
        %1004 = vmatprep.mubr.bf16.mxu0 0
        %1005 = vmatmul.mubr.bf16.gmra.mrb[0].mxu0 %v920
        %v1006 = vpop.f32.mrb[0].mxu0
        %v1007 = vadd.f32 %v910, %v1006
        %v1008 = vpop.f32.mrb[0].mxu0
        %v1009 = vpop.f32.mrb[0].mxu0
        %v1010 = vadd.f32 %v910, %v1009
        %v1011 = vpop.f32.mrb[0].mxu0
        %1012 = vmatprep.mubr.bf16.mxu0 0
        %1013 = vmatmul.mubr.bf16.gmra.mrb[0].mxu0 %v921
        %v1014 = vpop.f32.mrb[0].mxu0
        %v1015 = vadd.f32 %v910, %v1014
        %v1016 = vpop.f32.mrb[0].mxu0
        %v1017 = vpop.f32.mrb[0].mxu0
        %v1018 = vadd.f32 %v910, %v1017
        %v1019 = vpop.f32.mrb[0].mxu0
        %1020 = vdwg.mxu0
        %v1021 = vmax.f32 %v1007, 0.0
        %v1022 = vmax.f32 %v1010, 0.0
        %v1023 = vmax.f32 %v1015, 0.0
        %v1024 = vmax.f32 %v1018, 0.0
        %1026 = vset.pattern.permute.xlu0 0
        %1027 = vperm.xlu0 %1026, %v844
        %v1028 = vpop.permute.xlu0 %1027
        %1031 = vset.pattern.permute.xlu0 0
        %1032 = vperm.xlu0 %1031, %v845
        %v1033 = vpop.permute.xlu0 %1032
        %1036 = vset.pattern.permute.xlu0 0
        %1037 = vperm.xlu0 %1036, %v846
        %v1038 = vpop.permute.xlu0 %1037
        %1041 = vset.pattern.permute.xlu0 0
        %1042 = vperm.xlu0 %1041, %v847
        %v1043 = vpop.permute.xlu0 %1042
        %v1045 = vmul.f32 %v1021, %v1028
        %v1046 = vmul.f32 %v1022, %v1033
        %v1047 = vmul.f32 %v1023, %v1038
        %v1048 = vmul.f32 %v1024, %v1043
        %v1049 = vpack.c.bf16 %v1046, %v1045
        %v1050 = vpack.c.bf16 %v1048, %v1047
        %v1052 = vshrl.u32 %v1049, 16
        %v1054 = vshll.u32 %v1049, 16
        %v1056 = vrot.slane %v1054, 1
        %v1057 = vor.u32 %v1052, %v1056
        %1058 = vrot.lane.b32.xlu0 %v1057, 32
        %v1059 = vpop.permute.xlu0 %1058
        %vm1062 = vcmask 1046528
        %v1063 = vrot.slane %v1049, 1
        %v1064 = vrot.slane %v1050, 1
        %v1065 = vsel %vm1062, %v1063, %v1064
        %1066 = vrot.lane.b32.xlu0 %v1065, 64
        %v1067 = vpop.permute.xlu0 %1066
        %vm1068 = vsmask.f32 5376
        %v1069 = vrot.slane %v1052, 2
        %v1070 = vrot.slane %v1054, 3
        %v1071 = vor.u32 %v1069, %v1070
        %v1073 = vshrl.u32 %v1050, 16
        %v1075 = vrot.slane %v1073, 2
        %v1076 = vshll.u32 %v1050, 16
        %v1078 = vrot.slane %v1076, 3
        %v1079 = vor.u32 %v1075, %v1078
        %v1080 = vsel %vm1068, %v1071, %v1079
        %1081 = vrot.lane.b32.xlu0 %v1080, 96
        %v1082 = vpop.permute.xlu0 %1081
        %vm1083 = vcmask 1044480
        %v1084 = vrot.slane %v1049, 3
        %v1085 = vrot.slane %v1050, 3
        %v1086 = vsel %vm1083, %v1084, %v1085
        %vm1087 = vsmask.f32 4352
        %v1088 = vrot.slane %v1052, 3
        %v1089 = vrot.slane %v1054, 4
        %v1090 = vor.u32 %v1088, %v1089
        %v1091 = vrot.slane %v1073, 3
        %v1092 = vrot.slane %v1076, 4
        %v1093 = vor.u32 %v1091, %v1092
        %v1094 = vsel %vm1087, %v1090, %v1093
        %1095 = vrot.lane.b32.xlu0 %v1094, 32
        %v1096 = vpop.permute.xlu0 %1095
        %vm1097 = vcmask 1042432
        %v1098 = vrot.slane %v1049, 5
        %v1099 = vrot.slane %v1050, 5
        %v1100 = vsel %vm1097, %v1098, %v1099
        %1101 = vrot.lane.b32.xlu0 %v1100, 64
        %v1102 = vpop.permute.xlu0 %1101
        %vm1103 = vsmask.f32 2304
        %v1104 = vrot.slane %v1052, 5
        %v1105 = vrot.slane %v1054, 6
        %v1106 = vor.u32 %v1104, %v1105
        %v1107 = vrot.slane %v1073, 5
        %v1108 = vrot.slane %v1076, 6
        %v1109 = vor.u32 %v1107, %v1108
        %v1110 = vsel %vm1103, %v1106, %v1109
        %1111 = vrot.lane.b32.xlu0 %v1110, 96
        %v1112 = vpop.permute.xlu0 %1111
        %vm1113 = vcmask 1041408
        %v1114 = vrot.slane %v1049, 6
        %v1115 = vrot.slane %v1050, 6
        %v1116 = vsel %vm1113, %v1114, %v1115
        %vm1117 = vcmask 261120
        %v1119 = vsel %vm1117, %v1049, %v1059
        %vm1120 = vcmask 523264
        %v1122 = vsel %vm1120, %v1119, %v1067
        %vm1123 = vcmask 785408
        %v1125 = vsel %vm1123, %v1122, %v1082
        %v1129 = vsel %vm1117, %v1086, %v1096
        %v1131 = vsel %vm1120, %v1129, %v1102
        %v1133 = vsel %vm1123, %v1131, %v1112
        %v1136 = vlaneseq
        %v1137 = vshrl.u32 %v1136, 7
        %v1138 = vsub.s32 0, %v1137
        %v1139 = vrot.slane %v905, %v1138
        %v1140 = vlaneseq
        %v1141 = vshrl.u32 %v1140, 7
        %v1142 = vsub.s32 1, %v1141
        %v1143 = vrot.slane %v905, %v1142
        %v1182 = vunpack.c.l.b16 %v869
        %v1183 = vunpack.c.h.b16 %v869
        %v1184 = vunpack.c.l.b16 %v870
        %v1185 = vunpack.c.h.b16 %v870
        %v1186 = vunpack.c.l.b16 %v871
        %v1187 = vunpack.c.h.b16 %v871
        %v1188 = vunpack.c.l.b16 %v872
        %v1189 = vunpack.c.h.b16 %v872
        %v1190 = vunpack.c.l.b16 %v873
        %v1191 = vunpack.c.h.b16 %v873
        %v1192 = vunpack.c.l.b16 %v874
        %v1193 = vunpack.c.h.b16 %v874
        %v1194 = vunpack.c.l.b16 %v875
        %v1195 = vunpack.c.h.b16 %v875
        %v1196 = vunpack.c.l.b16 %v876
        %v1197 = vunpack.c.h.b16 %v876
        %v1198 = vunpack.c.l.b16 %v877
        %v1199 = vunpack.c.h.b16 %v877
        %v1200 = vunpack.c.l.b16 %v878
        %v1201 = vunpack.c.h.b16 %v878
        %v1202 = vunpack.c.l.b16 %v879
        %v1203 = vunpack.c.h.b16 %v879
        %v1204 = vunpack.c.l.b16 %v880
        %v1205 = vunpack.c.h.b16 %v880
        %v1206 = vunpack.c.l.b16 %v881
        %v1207 = vunpack.c.h.b16 %v881
        %v1208 = vunpack.c.l.b16 %v882
        %v1209 = vunpack.c.h.b16 %v882
        %v1210 = vunpack.c.l.b16 %v883
        %v1211 = vunpack.c.h.b16 %v883
        %v1212 = vunpack.c.l.b16 %v884
        %v1213 = vunpack.c.h.b16 %v884
        %v1214 = vunpack.c.l.b16 %v885
        %v1215 = vunpack.c.h.b16 %v885
        %v1216 = vunpack.c.l.b16 %v886
        %v1217 = vunpack.c.h.b16 %v886
        %v1218 = vunpack.c.l.b16 %v887
        %v1219 = vunpack.c.h.b16 %v887
        %v1220 = vunpack.c.l.b16 %v888
        %v1221 = vunpack.c.h.b16 %v888
        %v1222 = vunpack.c.l.b16 %v889
        %v1223 = vunpack.c.h.b16 %v889
        %v1224 = vunpack.c.l.b16 %v890
        %v1225 = vunpack.c.h.b16 %v890
        %v1226 = vunpack.c.l.b16 %v891
        %v1227 = vunpack.c.h.b16 %v891
        %v1228 = vunpack.c.l.b16 %v892
        %v1229 = vunpack.c.h.b16 %v892
        %v1230 = vunpack.c.l.b16 %v893
        %v1231 = vunpack.c.h.b16 %v893
        %v1232 = vunpack.c.l.b16 %v894
        %v1233 = vunpack.c.h.b16 %v894
        %v1234 = vunpack.c.l.b16 %v895
        %v1235 = vunpack.c.h.b16 %v895
        %v1236 = vunpack.c.l.b16 %v896
        %v1237 = vunpack.c.h.b16 %v896
        %v1238 = vunpack.c.l.b16 %v897
        %v1239 = vunpack.c.h.b16 %v897
        %v1240 = vunpack.c.l.b16 %v898
        %v1241 = vunpack.c.h.b16 %v898
        %v1242 = vunpack.c.l.b16 %v899
        %v1243 = vunpack.c.h.b16 %v899
        %v1244 = vunpack.c.l.b16 %v900
        %v1245 = vunpack.c.h.b16 %v900
        %v1246 = vunpack.c.l.b16 %v901
        %v1247 = vunpack.c.h.b16 %v901
        %v1248 = vunpack.c.l.b16 %v902
        %v1249 = vunpack.c.h.b16 %v902
        %v1250 = vunpack.c.l.b16 %v903
        %v1251 = vunpack.c.h.b16 %v903
        %v1252 = vunpack.c.l.b16 %v904
        %v1253 = vunpack.c.h.b16 %v904
        %v1254 = vpack.c.b16 %v1184, %v1182
        %v1255 = vpack.c.b16 %v1185, %v1183
        %v1256 = vpack.c.b16 %v1188, %v1186
        %v1257 = vpack.c.b16 %v1189, %v1187
        %v1258 = vpack.c.b16 %v1192, %v1190
        %v1259 = vpack.c.b16 %v1193, %v1191
        %v1260 = vpack.c.b16 %v1196, %v1194
        %v1261 = vpack.c.b16 %v1197, %v1195
        %v1262 = vpack.c.b16 %v1200, %v1198
        %v1263 = vpack.c.b16 %v1201, %v1199
        %v1264 = vpack.c.b16 %v1204, %v1202
        %v1265 = vpack.c.b16 %v1205, %v1203
        %v1266 = vpack.c.b16 %v1208, %v1206
        %v1267 = vpack.c.b16 %v1209, %v1207
        %v1268 = vpack.c.b16 %v1212, %v1210
        %v1269 = vpack.c.b16 %v1213, %v1211
        %v1270 = vpack.c.b16 %v1216, %v1214
        %v1271 = vpack.c.b16 %v1217, %v1215
        %v1272 = vpack.c.b16 %v1220, %v1218
        %v1273 = vpack.c.b16 %v1221, %v1219
        %v1274 = vpack.c.b16 %v1224, %v1222
        %v1275 = vpack.c.b16 %v1225, %v1223
        %v1276 = vpack.c.b16 %v1228, %v1226
        %v1277 = vpack.c.b16 %v1229, %v1227
        %v1278 = vpack.c.b16 %v1232, %v1230
        %v1279 = vpack.c.b16 %v1233, %v1231
        %v1280 = vpack.c.b16 %v1236, %v1234
        %v1281 = vpack.c.b16 %v1237, %v1235
        %v1282 = vpack.c.b16 %v1240, %v1238
        %v1283 = vpack.c.b16 %v1241, %v1239
        %v1284 = vpack.c.b16 %v1244, %v1242
        %v1285 = vpack.c.b16 %v1245, %v1243
        %v1286 = vpack.c.b16 %v1248, %v1246
        %v1287 = vpack.c.b16 %v1249, %v1247
        %v1288 = vpack.c.b16 %v1252, %v1250
        %v1289 = vpack.c.b16 %v1253, %v1251
        %v1327 = vsel %vm1117, %v1116, 0
        %1329 = vmatprep.subr.bf16.mxu0 %v1255
        %1330 = vmatpush1.bf16.msra.mxu0 %v1254
        %1331 = vmatprep.subr.bf16.mxu0 %v1257
        %1332 = vmatpush1.bf16.msra.mxu0 %v1256
        %1333 = vmatprep.subr.bf16.mxu0 %v1259
        %1334 = vmatpush1.bf16.msra.mxu0 %v1258
        %1335 = vmatprep.subr.bf16.mxu0 %v1261
        %1336 = vmatpush1.bf16.msra.mxu0 %v1260
        %1337 = vmatprep.subr.bf16.mxu0 %v1263
        %1338 = vmatpush1.bf16.msra.mxu0 %v1262
        %1339 = vmatprep.subr.bf16.mxu0 %v1265
        %1340 = vmatpush1.bf16.msra.mxu0 %v1264
        %1341 = vmatprep.subr.bf16.mxu0 %v1267
        %1342 = vmatpush1.bf16.msra.mxu0 %v1266
        %1343 = vmatprep.subr.bf16.mxu0 %v1269
        %1344 = vmatpush1.bf16.msra.mxu0 %v1268
        %1345 = vmatprep.subr.bf16.mxu0 %v1271
        %1346 = vmatpush1.bf16.msra.mxu0 %v1270
        %1347 = vmatprep.subr.bf16.mxu0 %v1273
        %1348 = vmatpush1.bf16.msra.mxu0 %v1272
        %1349 = vmatprep.subr.bf16.mxu0 %v1275
        %1350 = vmatpush1.bf16.msra.mxu0 %v1274
        %1351 = vmatprep.subr.bf16.mxu0 %v1277
        %1352 = vmatpush1.bf16.msra.mxu0 %v1276
        %1353 = vmatprep.subr.bf16.mxu0 %v1279
        %1354 = vmatpush1.bf16.msra.mxu0 %v1278
        %1355 = vmatprep.subr.bf16.mxu0 %v1281
        %1356 = vmatpush1.bf16.msra.mxu0 %v1280
        %1357 = vmatprep.subr.bf16.mxu0 %v1283
        %1358 = vmatpush1.bf16.msra.mxu0 %v1282
        %1359 = vmatprep.subr.bf16.mxu0 %v1285
        %1360 = vmatpush1.bf16.msra.mxu0 %v1284
        %1361 = vmatprep.mubr.bf16.mxu0 %v1133
        %1362 = vmatmul.mubr.bf16.gmra.mrb[0].mxu0 %v1125
        %v1363 = vpop.f32.mrb[0].mxu0
        %v1364 = vadd.f32 %v1139, %v1363
        %v1365 = vpop.f32.mrb[0].mxu0
        %v1366 = vadd.f32 %v1143, %v1365
        %v1367 = vpop.f32.mrb[0].mxu0
        %v1368 = vadd.f32 %v1139, %v1367
        %v1369 = vpop.f32.mrb[0].mxu0
        %v1370 = vadd.f32 %v1143, %v1369
        %1371 = vdwg.mxu0
        %1372 = vmatprep.subr.bf16.mxu0 %v1287
        %1373 = vmatpush1.bf16.msra.mxu0 %v1286
        %1374 = vmatprep.subr.bf16.mxu0 %v1289
        %1375 = vmatpush1.bf16.msra.mxu0 %v1288
        %1376 = vmatprep.subr.bf16.mxu0 0
        %1377 = vmatpush1.bf16.msra.mxu0 0
        %1378 = vmatprep.subr.bf16.mxu0 0
        %1379 = vmatpush1.bf16.msra.mxu0 0
        %1380 = vmatprep.subr.bf16.mxu0 0
        %1381 = vmatpush1.bf16.msra.mxu0 0
        %1382 = vmatprep.subr.bf16.mxu0 0
        %1383 = vmatpush1.bf16.msra.mxu0 0
        %1384 = vmatprep.subr.bf16.mxu0 0
        %1385 = vmatpush1.bf16.msra.mxu0 0
        %1386 = vmatprep.subr.bf16.mxu0 0
        %1387 = vmatpush1.bf16.msra.mxu0 0
        %1388 = vmatprep.subr.bf16.mxu0 0
        %1389 = vmatpush1.bf16.msra.mxu0 0
        %1390 = vmatprep.subr.bf16.mxu0 0
        %1391 = vmatpush1.bf16.msra.mxu0 0
        %1392 = vmatprep.subr.bf16.mxu0 0
        %1393 = vmatpush1.bf16.msra.mxu0 0
        %1394 = vmatprep.subr.bf16.mxu0 0
        %1395 = vmatpush1.bf16.msra.mxu0 0
        %1396 = vmatprep.subr.bf16.mxu0 0
        %1397 = vmatpush1.bf16.msra.mxu0 0
        %1398 = vmatprep.subr.bf16.mxu0 0
        %1399 = vmatpush1.bf16.msra.mxu0 0
        %1400 = vmatprep.subr.bf16.mxu0 0
        %1401 = vmatpush1.bf16.msra.mxu0 0
        %1402 = vmatprep.subr.bf16.mxu0 0
        %1403 = vmatpush1.bf16.msra.mxu0 0
        %1404 = vmatprep.mubr.bf16.mxu0 0
        %1405 = vmatmul.mubr.bf16.gmra.mrb[0].mxu0 %v1327
        %v1406 = vpop.f32.mrb[0].mxu0
        %v1407 = vadd.f32 %v1364, %v1406
        %v1408 = vpop.f32.mrb[0].mxu0
        %v1409 = vadd.f32 %v1366, %v1408
        %v1410 = vpop.f32.mrb[0].mxu0
        %v1411 = vadd.f32 %v1368, %v1410
        %v1412 = vpop.f32.mrb[0].mxu0
        %v1413 = vadd.f32 %v1370, %v1412
        %1414 = vdwg.mxu0
        %v1415 = vmax.f32 %v1407, 0.0
        %v1416 = vmax.f32 %v1409, 0.0
        %v1417 = vmax.f32 %v1411, 0.0
        %v1418 = vmax.f32 %v1413, 0.0
        %1419 = vst [vmem:[#allocation2] sm:$0xff] 0.0
        %1420 = vst [vmem:[#allocation2 + $0x8] sm:$0xff] 0.0
        %1421 = vst [vmem:[#allocation2 + $0x10] sm:$0xff] 0.0
        %1422 = vst [vmem:[#allocation2 + $0x18] sm:$0xff] 0.0
        %1423 = vst [vmem:[#allocation2 + $0x20] sm:$0xff] 0.0
        %1424 = vst [vmem:[#allocation2 + $0x28] sm:$0xff] 0.0
        %1425 = vst [vmem:[#allocation2 + $0x30] sm:$0xff] 0.0
        %1426 = vst [vmem:[#allocation2 + $0x38] sm:$0xff] 0.0
        %vm1431 = vcmask 1045504
        %v1432 = vrot.slane %v1415, 2
        %v1433 = vrot.slane %v1416, 2
        %v1434 = vrot.slane %v1417, 2
        %v1435 = vsel %vm1431, %v1432, %v1434
        %v1436 = vrot.slane %v1418, 2
        %v1437 = vsel %vm1431, %v1433, %v1436
        %1444 = vst [vmem:[#allocation2] sm:$0xc0] %v1432
        %1445 = vst [vmem:[#allocation2 + $0x8] sm:$0xc0] %v1433
        %1446 = vst [vmem:[#allocation2 + $0x10] sm:$0xff] %v1435
        %1447 = vst [vmem:[#allocation2 + $0x18] sm:$0xff] %v1437
        %1448 = vst [vmem:[#allocation2 + $0x20] sm:$0x1f] %v1434
        %1449 = vst [vmem:[#allocation2 + $0x28] sm:$0x1f] %v1436
        %v1450 = vld [vmem:[#allocation2] sm:$0xff]
        %v1451 = vld [vmem:[#allocation2 + $0x8] sm:$0xff]
        %v1452 = vld [vmem:[#allocation2 + $0x10] sm:$0xff]
        %v1453 = vld [vmem:[#allocation2 + $0x18] sm:$0xff]
        %v1454 = vld [vmem:[#allocation2 + $0x20] sm:$0xff]
        %v1455 = vld [vmem:[#allocation2 + $0x28] sm:$0xff]
        %v1456 = vld [vmem:[#allocation2 + $0x30] sm:$0xff]
        %v1457 = vld [vmem:[#allocation2 + $0x38] sm:$0xff]
        %v1458 = vld [vmem:[%s6] sm:$0xf]
        %v1459 = vld [vmem:[%s6 + $0x4] sm:$0xf]
        %v1460 = vld [vmem:[%s6 + $0x8] sm:$0xf]
        %v1461 = vld [vmem:[%s6 + $0xc] sm:$0xf]
        %v1462 = vld [vmem:[%s6 + $0x10] sm:$0xf]
        %v1463 = vld [vmem:[%s6 + $0x14] sm:$0xf]
        %v1464 = vld [vmem:[%s6 + $0x18] sm:$0xf]
        %v1465 = vld [vmem:[%s6 + $0x1c] sm:$0xf]
        %v1466 = vld [vmem:[%s6 + $0x20] sm:$0xf]
        %v1467 = vld [vmem:[%s6 + $0x24] sm:$0xf]
        %v1468 = vld [vmem:[%s6 + $0x28] sm:$0xf]
        %v1469 = vld [vmem:[%s6 + $0x2c] sm:$0xf]
        %v1470 = vld [vmem:[%s6 + $0x30] sm:$0xf]
        %v1471 = vld [vmem:[%s6 + $0x34] sm:$0xf]
        %v1472 = vld [vmem:[%s6 + $0x38] sm:$0xf]
        %v1473 = vld [vmem:[%s6 + $0x3c] sm:$0xf]
        %v1474 = vld [vmem:[%s6 + $0x40] sm:$0xf]
        %v1475 = vld [vmem:[%s6 + $0x44] sm:$0xf]
        %v1476 = vld [vmem:[%s6 + $0x48] sm:$0xf]
        %v1477 = vld [vmem:[%s6 + $0x4c] sm:$0xf]
        %v1478 = vld [vmem:[%s6 + $0x50] sm:$0xf]
        %v1479 = vld [vmem:[%s6 + $0x54] sm:$0xf]
        %v1480 = vld [vmem:[%s6 + $0x58] sm:$0xf]
        %v1481 = vld [vmem:[%s6 + $0x5c] sm:$0xf]
        %v1482 = vld [vmem:[%s6 + $0x60] sm:$0xf]
        %v1483 = vld [vmem:[%s6 + $0x64] sm:$0xf]
        %v1484 = vld [vmem:[%s6 + $0x68] sm:$0xf]
        %v1485 = vld [vmem:[%s6 + $0x6c] sm:$0xf]
        %v1486 = vld [vmem:[%s6 + $0x70] sm:$0xf]
        %v1487 = vld [vmem:[%s6 + $0x74] sm:$0xf]
        %v1488 = vld [vmem:[%s6 + $0x78] sm:$0xf]
        %v1489 = vld [vmem:[%s6 + $0x7c] sm:$0xf]
        %v1490 = vld [vmem:[%s7] sm:$0x1]
        %v1491 = vld [vmem:[%s8] sm:$0xff]
        %v1492 = vld [vmem:[%s8 + $0x8] sm:$0xff]
        %v1493 = vld [vmem:[%s8 + $0x10] sm:$0xff]
        %v1494 = vld [vmem:[%s8 + $0x18] sm:$0xff]
        %v1495 = vld [vmem:[%s8 + $0x20] sm:$0xff]
        %v1496 = vld [vmem:[%s8 + $0x28] sm:$0xff]
        %v1497 = vld [vmem:[%s8 + $0x30] sm:$0xff]
        %v1498 = vld [vmem:[%s8 + $0x38] sm:$0xff]
        %v1499 = vld [vmem:[%s8 + $0x40] sm:$0xff]
        %v1500 = vld [vmem:[%s8 + $0x48] sm:$0xff]
        %v1501 = vld [vmem:[%s8 + $0x50] sm:$0xff]
        %v1502 = vld [vmem:[%s8 + $0x58] sm:$0xff]
        %v1503 = vld [vmem:[%s8 + $0x60] sm:$0xff]
        %v1504 = vld [vmem:[%s8 + $0x68] sm:$0xff]
        %v1505 = vld [vmem:[%s8 + $0x70] sm:$0xff]
        %v1506 = vld [vmem:[%s8 + $0x78] sm:$0xff]
        %v1507 = vld [vmem:[%s8 + $0x80] sm:$0xff]
        %v1508 = vld [vmem:[%s8 + $0x88] sm:$0xff]
        %v1509 = vld [vmem:[%s8 + $0x90] sm:$0xff]
        %v1510 = vld [vmem:[%s8 + $0x98] sm:$0xff]
        %v1511 = vld [vmem:[%s8 + $0xa0] sm:$0xff]
        %v1512 = vld [vmem:[%s8 + $0xa8] sm:$0xff]
        %v1513 = vld [vmem:[%s8 + $0xb0] sm:$0xff]
        %v1514 = vld [vmem:[%s8 + $0xb8] sm:$0xff]
        %v1515 = vld [vmem:[%s8 + $0xc0] sm:$0xff]
        %v1516 = vld [vmem:[%s8 + $0xc8] sm:$0xff]
        %v1517 = vld [vmem:[%s8 + $0xd0] sm:$0xff]
        %v1518 = vld [vmem:[%s8 + $0xd8] sm:$0xff]
        %v1519 = vld [vmem:[%s8 + $0xe0] sm:$0xff]
        %v1520 = vld [vmem:[%s8 + $0xe8] sm:$0xff]
        %v1521 = vld [vmem:[%s8 + $0xf0] sm:$0xff]
        %v1522 = vld [vmem:[%s8 + $0xf8] sm:$0xff]
        %v1523 = vld [vmem:[%s8 + $0x100] sm:$0xff]
        %v1524 = vld [vmem:[%s8 + $0x108] sm:$0xff]
        %v1525 = vld [vmem:[%s8 + $0x110] sm:$0xff]
        %v1526 = vld [vmem:[%s8 + $0x118] sm:$0xff]
        %v1527 = vld [vmem:[%s9] sm:$0x3]
        %v1528 = vpack.c.bf16 %v1452, %v1450
        %v1529 = vpack.c.bf16 %v1453, %v1451
        %v1530 = vpack.c.bf16 %v1456, %v1454
        %v1531 = vpack.c.bf16 %v1457, %v1455
        %v1533 = vlaneseq
        %v1534 = vshrl.u32 %v1533, 7
        %v1535 = vsub.s32 0, %v1534
        %v1536 = vrot.slane %v1490, %v1535
        %v1570 = vunpack.c.l.b16 %v1458
        %v1571 = vunpack.c.l.b16 %v1459
        %v1572 = vunpack.c.l.b16 %v1460
        %v1573 = vunpack.c.l.b16 %v1461
        %v1574 = vunpack.c.l.b16 %v1462
        %v1575 = vunpack.c.l.b16 %v1463
        %v1576 = vunpack.c.l.b16 %v1464
        %v1577 = vunpack.c.l.b16 %v1465
        %v1578 = vunpack.c.l.b16 %v1466
        %v1579 = vunpack.c.l.b16 %v1467
        %v1580 = vunpack.c.l.b16 %v1468
        %v1581 = vunpack.c.l.b16 %v1469
        %v1582 = vunpack.c.l.b16 %v1470
        %v1583 = vunpack.c.l.b16 %v1471
        %v1584 = vunpack.c.l.b16 %v1472
        %v1585 = vunpack.c.l.b16 %v1473
        %v1586 = vunpack.c.l.b16 %v1474
        %v1587 = vunpack.c.l.b16 %v1475
        %v1588 = vunpack.c.l.b16 %v1476
        %v1589 = vunpack.c.l.b16 %v1477
        %v1590 = vunpack.c.l.b16 %v1478
        %v1591 = vunpack.c.l.b16 %v1479
        %v1592 = vunpack.c.l.b16 %v1480
        %v1593 = vunpack.c.l.b16 %v1481
        %v1594 = vunpack.c.l.b16 %v1482
        %v1595 = vunpack.c.l.b16 %v1483
        %v1596 = vunpack.c.l.b16 %v1484
        %v1597 = vunpack.c.l.b16 %v1485
        %v1598 = vunpack.c.l.b16 %v1486
        %v1599 = vunpack.c.l.b16 %v1487
        %v1600 = vunpack.c.l.b16 %v1488
        %v1601 = vunpack.c.l.b16 %v1489
        %v1602 = vpack.c.b16 %v1571, %v1570
        %v1603 = vpack.c.b16 %v1573, %v1572
        %v1604 = vpack.c.b16 %v1575, %v1574
        %v1605 = vpack.c.b16 %v1577, %v1576
        %v1606 = vpack.c.b16 %v1579, %v1578
        %v1607 = vpack.c.b16 %v1581, %v1580
        %v1608 = vpack.c.b16 %v1583, %v1582
        %v1609 = vpack.c.b16 %v1585, %v1584
        %v1610 = vpack.c.b16 %v1587, %v1586
        %v1611 = vpack.c.b16 %v1589, %v1588
        %v1612 = vpack.c.b16 %v1591, %v1590
        %v1613 = vpack.c.b16 %v1593, %v1592
        %v1614 = vpack.c.b16 %v1595, %v1594
        %v1615 = vpack.c.b16 %v1597, %v1596
        %v1616 = vpack.c.b16 %v1599, %v1598
        %v1617 = vpack.c.b16 %v1601, %v1600
        %1634 = vmatprep.subr.bf16.mxu0 0
        %1635 = vmatpush1.bf16.msra.mxu0 %v1602
        %1636 = vmatprep.subr.bf16.mxu0 0
        %1637 = vmatpush1.bf16.msra.mxu0 %v1603
        %1638 = vmatprep.subr.bf16.mxu0 0
        %1639 = vmatpush1.bf16.msra.mxu0 %v1604
        %1640 = vmatprep.subr.bf16.mxu0 0
        %1641 = vmatpush1.bf16.msra.mxu0 %v1605
        %1642 = vmatprep.subr.bf16.mxu0 0
        %1643 = vmatpush1.bf16.msra.mxu0 %v1606
        %1644 = vmatprep.subr.bf16.mxu0 0
        %1645 = vmatpush1.bf16.msra.mxu0 %v1607
        %1646 = vmatprep.subr.bf16.mxu0 0
        %1647 = vmatpush1.bf16.msra.mxu0 %v1608
        %1648 = vmatprep.subr.bf16.mxu0 0
        %1649 = vmatpush1.bf16.msra.mxu0 %v1609
        %1650 = vmatprep.subr.bf16.mxu0 0
        %1651 = vmatpush1.bf16.msra.mxu0 %v1610
        %1652 = vmatprep.subr.bf16.mxu0 0
        %1653 = vmatpush1.bf16.msra.mxu0 %v1611
        %1654 = vmatprep.subr.bf16.mxu0 0
        %1655 = vmatpush1.bf16.msra.mxu0 %v1612
        %1656 = vmatprep.subr.bf16.mxu0 0
        %1657 = vmatpush1.bf16.msra.mxu0 %v1613
        %1658 = vmatprep.subr.bf16.mxu0 0
        %1659 = vmatpush1.bf16.msra.mxu0 %v1614
        %1660 = vmatprep.subr.bf16.mxu0 0
        %1661 = vmatpush1.bf16.msra.mxu0 %v1615
        %1662 = vmatprep.subr.bf16.mxu0 0
        %1663 = vmatpush1.bf16.msra.mxu0 %v1616
        %1664 = vmatprep.subr.bf16.mxu0 0
        %1665 = vmatpush1.bf16.msra.mxu0 %v1617
        %1666 = vmatprep.mubr.bf16.mxu0 %v1529
        %1667 = vmatmul.mubr.bf16.gmra.mrb[0].mxu0 %v1528
        %v1668 = vpop.f32.mrb[0].mxu0
        %v1669 = vadd.f32 %v1536, %v1668
        %v1670 = vpop.f32.mrb[0].mxu0
        %v1671 = vpop.f32.mrb[0].mxu0
        %v1672 = vadd.f32 %v1536, %v1671
        %v1673 = vpop.f32.mrb[0].mxu0
        %1674 = vmatprep.mubr.bf16.mxu0 %v1531
        %1675 = vmatmul.mubr.bf16.gmra.mrb[0].mxu0 %v1530
        %v1676 = vpop.f32.mrb[0].mxu0
        %v1677 = vadd.f32 %v1536, %v1676
        %v1678 = vpop.f32.mrb[0].mxu0
        %v1679 = vpop.f32.mrb[0].mxu0
        %v1680 = vadd.f32 %v1536, %v1679
        %v1681 = vpop.f32.mrb[0].mxu0
        %1682 = vdwg.mxu0
        %v1683 = vmax.f32 %v1669, 0.0
        %v1684 = vmax.f32 %v1672, 0.0
        %v1685 = vmax.f32 %v1677, 0.0
        %v1686 = vmax.f32 %v1680, 0.0
        %v1687 = vmul.f32 %v1683, %v1028
        %v1688 = vmul.f32 %v1684, %v1033
        %v1689 = vmul.f32 %v1685, %v1038
        %v1690 = vmul.f32 %v1686, %v1043
        %v1691 = vpack.c.bf16 %v1688, %v1687
        %v1692 = vpack.c.bf16 %v1690, %v1689
        %v1694 = vshrl.u32 %v1691, 16
        %v1696 = vshll.u32 %v1691, 16
        %v1698 = vrot.slane %v1696, 1
        %v1699 = vor.u32 %v1694, %v1698
        %1700 = vrot.lane.b32.xlu0 %v1699, 32
        %v1701 = vpop.permute.xlu0 %1700
        %v1704 = vrot.slane %v1691, 1
        %v1705 = vrot.slane %v1692, 1
        %v1706 = vsel %vm1062, %v1704, %v1705
        %1707 = vrot.lane.b32.xlu0 %v1706, 64
        %v1708 = vpop.permute.xlu0 %1707
        %v1709 = vrot.slane %v1694, 2
        %v1710 = vrot.slane %v1696, 3
        %v1711 = vor.u32 %v1709, %v1710
        %v1713 = vshrl.u32 %v1692, 16
        %v1715 = vrot.slane %v1713, 2
        %v1716 = vshll.u32 %v1692, 16
        %v1718 = vrot.slane %v1716, 3
        %v1719 = vor.u32 %v1715, %v1718
        %v1720 = vsel %vm1068, %v1711, %v1719
        %1721 = vrot.lane.b32.xlu0 %v1720, 96
        %v1722 = vpop.permute.xlu0 %1721
        %v1723 = vrot.slane %v1691, 3
        %v1724 = vrot.slane %v1692, 3
        %v1725 = vsel %vm1083, %v1723, %v1724
        %v1726 = vrot.slane %v1694, 3
        %v1727 = vrot.slane %v1696, 4
        %v1728 = vor.u32 %v1726, %v1727
        %v1729 = vrot.slane %v1713, 3
        %v1730 = vrot.slane %v1716, 4
        %v1731 = vor.u32 %v1729, %v1730
        %v1732 = vsel %vm1087, %v1728, %v1731
        %1733 = vrot.lane.b32.xlu0 %v1732, 32
        %v1734 = vpop.permute.xlu0 %1733
        %v1735 = vrot.slane %v1691, 5
        %v1736 = vrot.slane %v1692, 5
        %v1737 = vsel %vm1097, %v1735, %v1736
        %1738 = vrot.lane.b32.xlu0 %v1737, 64
        %v1739 = vpop.permute.xlu0 %1738
        %v1740 = vrot.slane %v1694, 5
        %v1741 = vrot.slane %v1696, 6
        %v1742 = vor.u32 %v1740, %v1741
        %v1743 = vrot.slane %v1713, 5
        %v1744 = vrot.slane %v1716, 6
        %v1745 = vor.u32 %v1743, %v1744
        %v1746 = vsel %vm1103, %v1742, %v1745
        %1747 = vrot.lane.b32.xlu0 %v1746, 96
        %v1748 = vpop.permute.xlu0 %1747
        %v1749 = vrot.slane %v1691, 6
        %v1750 = vrot.slane %v1692, 6
        %v1751 = vsel %vm1113, %v1749, %v1750
        %v1753 = vsel %vm1117, %v1691, %v1701
        %v1755 = vsel %vm1120, %v1753, %v1708
        %v1757 = vsel %vm1123, %v1755, %v1722
        %v1761 = vsel %vm1117, %v1725, %v1734
        %v1763 = vsel %vm1120, %v1761, %v1739
        %v1765 = vsel %vm1123, %v1763, %v1748
        %v1768 = vlaneseq
        %v1769 = vshrl.u32 %v1768, 7
        %v1770 = vsub.s32 0, %v1769
        %v1771 = vrot.slane %v1527, %v1770
        %v1772 = vlaneseq
        %v1773 = vshrl.u32 %v1772, 7
        %v1774 = vsub.s32 1, %v1773
        %v1775 = vrot.slane %v1527, %v1774
        %v1814 = vunpack.c.l.b16 %v1491
        %v1815 = vunpack.c.h.b16 %v1491
        %v1816 = vunpack.c.l.b16 %v1492
        %v1817 = vunpack.c.h.b16 %v1492
        %v1818 = vunpack.c.l.b16 %v1493
        %v1819 = vunpack.c.h.b16 %v1493
        %v1820 = vunpack.c.l.b16 %v1494
        %v1821 = vunpack.c.h.b16 %v1494
        %v1822 = vunpack.c.l.b16 %v1495
        %v1823 = vunpack.c.h.b16 %v1495
        %v1824 = vunpack.c.l.b16 %v1496
        %v1825 = vunpack.c.h.b16 %v1496
        %v1826 = vunpack.c.l.b16 %v1497
        %v1827 = vunpack.c.h.b16 %v1497
        %v1828 = vunpack.c.l.b16 %v1498
        %v1829 = vunpack.c.h.b16 %v1498
        %v1830 = vunpack.c.l.b16 %v1499
        %v1831 = vunpack.c.h.b16 %v1499
        %v1832 = vunpack.c.l.b16 %v1500
        %v1833 = vunpack.c.h.b16 %v1500
        %v1834 = vunpack.c.l.b16 %v1501
        %v1835 = vunpack.c.h.b16 %v1501
        %v1836 = vunpack.c.l.b16 %v1502
        %v1837 = vunpack.c.h.b16 %v1502
        %v1838 = vunpack.c.l.b16 %v1503
        %v1839 = vunpack.c.h.b16 %v1503
        %v1840 = vunpack.c.l.b16 %v1504
        %v1841 = vunpack.c.h.b16 %v1504
        %v1842 = vunpack.c.l.b16 %v1505
        %v1843 = vunpack.c.h.b16 %v1505
        %v1844 = vunpack.c.l.b16 %v1506
        %v1845 = vunpack.c.h.b16 %v1506
        %v1846 = vunpack.c.l.b16 %v1507
        %v1847 = vunpack.c.h.b16 %v1507
        %v1848 = vunpack.c.l.b16 %v1508
        %v1849 = vunpack.c.h.b16 %v1508
        %v1850 = vunpack.c.l.b16 %v1509
        %v1851 = vunpack.c.h.b16 %v1509
        %v1852 = vunpack.c.l.b16 %v1510
        %v1853 = vunpack.c.h.b16 %v1510
        %v1854 = vunpack.c.l.b16 %v1511
        %v1855 = vunpack.c.h.b16 %v1511
        %v1856 = vunpack.c.l.b16 %v1512
        %v1857 = vunpack.c.h.b16 %v1512
        %v1858 = vunpack.c.l.b16 %v1513
        %v1859 = vunpack.c.h.b16 %v1513
        %v1860 = vunpack.c.l.b16 %v1514
        %v1861 = vunpack.c.h.b16 %v1514
        %v1862 = vunpack.c.l.b16 %v1515
        %v1863 = vunpack.c.h.b16 %v1515
        %v1864 = vunpack.c.l.b16 %v1516
        %v1865 = vunpack.c.h.b16 %v1516
        %v1866 = vunpack.c.l.b16 %v1517
        %v1867 = vunpack.c.h.b16 %v1517
        %v1868 = vunpack.c.l.b16 %v1518
        %v1869 = vunpack.c.h.b16 %v1518
        %v1870 = vunpack.c.l.b16 %v1519
        %v1871 = vunpack.c.h.b16 %v1519
        %v1872 = vunpack.c.l.b16 %v1520
        %v1873 = vunpack.c.h.b16 %v1520
        %v1874 = vunpack.c.l.b16 %v1521
        %v1875 = vunpack.c.h.b16 %v1521
        %v1876 = vunpack.c.l.b16 %v1522
        %v1877 = vunpack.c.h.b16 %v1522
        %v1878 = vunpack.c.l.b16 %v1523
        %v1879 = vunpack.c.h.b16 %v1523
        %v1880 = vunpack.c.l.b16 %v1524
        %v1881 = vunpack.c.h.b16 %v1524
        %v1882 = vunpack.c.l.b16 %v1525
        %v1883 = vunpack.c.h.b16 %v1525
        %v1884 = vunpack.c.l.b16 %v1526
        %v1885 = vunpack.c.h.b16 %v1526
        %v1886 = vpack.c.b16 %v1816, %v1814
        %v1887 = vpack.c.b16 %v1817, %v1815
        %v1888 = vpack.c.b16 %v1820, %v1818
        %v1889 = vpack.c.b16 %v1821, %v1819
        %v1890 = vpack.c.b16 %v1824, %v1822
        %v1891 = vpack.c.b16 %v1825, %v1823
        %v1892 = vpack.c.b16 %v1828, %v1826
        %v1893 = vpack.c.b16 %v1829, %v1827
        %v1894 = vpack.c.b16 %v1832, %v1830
        %v1895 = vpack.c.b16 %v1833, %v1831
        %v1896 = vpack.c.b16 %v1836, %v1834
        %v1897 = vpack.c.b16 %v1837, %v1835
        %v1898 = vpack.c.b16 %v1840, %v1838
        %v1899 = vpack.c.b16 %v1841, %v1839
        %v1900 = vpack.c.b16 %v1844, %v1842
        %v1901 = vpack.c.b16 %v1845, %v1843
        %v1902 = vpack.c.b16 %v1848, %v1846
        %v1903 = vpack.c.b16 %v1849, %v1847
        %v1904 = vpack.c.b16 %v1852, %v1850
        %v1905 = vpack.c.b16 %v1853, %v1851
        %v1906 = vpack.c.b16 %v1856, %v1854
        %v1907 = vpack.c.b16 %v1857, %v1855
        %v1908 = vpack.c.b16 %v1860, %v1858
        %v1909 = vpack.c.b16 %v1861, %v1859
        %v1910 = vpack.c.b16 %v1864, %v1862
        %v1911 = vpack.c.b16 %v1865, %v1863
        %v1912 = vpack.c.b16 %v1868, %v1866
        %v1913 = vpack.c.b16 %v1869, %v1867
        %v1914 = vpack.c.b16 %v1872, %v1870
        %v1915 = vpack.c.b16 %v1873, %v1871
        %v1916 = vpack.c.b16 %v1876, %v1874
        %v1917 = vpack.c.b16 %v1877, %v1875
        %v1918 = vpack.c.b16 %v1880, %v1878
        %v1919 = vpack.c.b16 %v1881, %v1879
        %v1920 = vpack.c.b16 %v1884, %v1882
        %v1921 = vpack.c.b16 %v1885, %v1883
        %v1959 = vsel %vm1117, %v1751, 0
        %1961 = vmatprep.subr.bf16.mxu0 %v1887
        %1962 = vmatpush1.bf16.msra.mxu0 %v1886
        %1963 = vmatprep.subr.bf16.mxu0 %v1889
        %1964 = vmatpush1.bf16.msra.mxu0 %v1888
        %1965 = vmatprep.subr.bf16.mxu0 %v1891
        %1966 = vmatpush1.bf16.msra.mxu0 %v1890
        %1967 = vmatprep.subr.bf16.mxu0 %v1893
        %1968 = vmatpush1.bf16.msra.mxu0 %v1892
        %1969 = vmatprep.subr.bf16.mxu0 %v1895
        %1970 = vmatpush1.bf16.msra.mxu0 %v1894
        %1971 = vmatprep.subr.bf16.mxu0 %v1897
        %1972 = vmatpush1.bf16.msra.mxu0 %v1896
        %1973 = vmatprep.subr.bf16.mxu0 %v1899
        %1974 = vmatpush1.bf16.msra.mxu0 %v1898
        %1975 = vmatprep.subr.bf16.mxu0 %v1901
        %1976 = vmatpush1.bf16.msra.mxu0 %v1900
        %1977 = vmatprep.subr.bf16.mxu0 %v1903
        %1978 = vmatpush1.bf16.msra.mxu0 %v1902
        %1979 = vmatprep.subr.bf16.mxu0 %v1905
        %1980 = vmatpush1.bf16.msra.mxu0 %v1904
        %1981 = vmatprep.subr.bf16.mxu0 %v1907
        %1982 = vmatpush1.bf16.msra.mxu0 %v1906
        %1983 = vmatprep.subr.bf16.mxu0 %v1909
        %1984 = vmatpush1.bf16.msra.mxu0 %v1908
        %1985 = vmatprep.subr.bf16.mxu0 %v1911
        %1986 = vmatpush1.bf16.msra.mxu0 %v1910
        %1987 = vmatprep.subr.bf16.mxu0 %v1913
        %1988 = vmatpush1.bf16.msra.mxu0 %v1912
        %1989 = vmatprep.subr.bf16.mxu0 %v1915
        %1990 = vmatpush1.bf16.msra.mxu0 %v1914
        %1991 = vmatprep.subr.bf16.mxu0 %v1917
        %1992 = vmatpush1.bf16.msra.mxu0 %v1916
        %1993 = vmatprep.mubr.bf16.mxu0 %v1765
        %1994 = vmatmul.mubr.bf16.gmra.mrb[0].mxu0 %v1757
        %v1995 = vpop.f32.mrb[0].mxu0
        %v1996 = vadd.f32 %v1771, %v1995
        %v1997 = vpop.f32.mrb[0].mxu0
        %v1998 = vadd.f32 %v1775, %v1997
        %v1999 = vpop.f32.mrb[0].mxu0
        %v2000 = vadd.f32 %v1771, %v1999
        %v2001 = vpop.f32.mrb[0].mxu0
        %v2002 = vadd.f32 %v1775, %v2001
        %2003 = vdwg.mxu0
        %2004 = vmatprep.subr.bf16.mxu0 %v1919
        %2005 = vmatpush1.bf16.msra.mxu0 %v1918
        %2006 = vmatprep.subr.bf16.mxu0 %v1921
        %2007 = vmatpush1.bf16.msra.mxu0 %v1920
        %2008 = vmatprep.subr.bf16.mxu0 0
        %2009 = vmatpush1.bf16.msra.mxu0 0
        %2010 = vmatprep.subr.bf16.mxu0 0
        %2011 = vmatpush1.bf16.msra.mxu0 0
        %2012 = vmatprep.subr.bf16.mxu0 0
        %2013 = vmatpush1.bf16.msra.mxu0 0
        %2014 = vmatprep.subr.bf16.mxu0 0
        %2015 = vmatpush1.bf16.msra.mxu0 0
        %2016 = vmatprep.subr.bf16.mxu0 0
        %2017 = vmatpush1.bf16.msra.mxu0 0
        %2018 = vmatprep.subr.bf16.mxu0 0
        %2019 = vmatpush1.bf16.msra.mxu0 0
        %2020 = vmatprep.subr.bf16.mxu0 0
        %2021 = vmatpush1.bf16.msra.mxu0 0
        %2022 = vmatprep.subr.bf16.mxu0 0
        %2023 = vmatpush1.bf16.msra.mxu0 0
        %2024 = vmatprep.subr.bf16.mxu0 0
        %2025 = vmatpush1.bf16.msra.mxu0 0
        %2026 = vmatprep.subr.bf16.mxu0 0
        %2027 = vmatpush1.bf16.msra.mxu0 0
        %2028 = vmatprep.subr.bf16.mxu0 0
        %2029 = vmatpush1.bf16.msra.mxu0 0
        %2030 = vmatprep.subr.bf16.mxu0 0
        %2031 = vmatpush1.bf16.msra.mxu0 0
        %2032 = vmatprep.subr.bf16.mxu0 0
        %2033 = vmatpush1.bf16.msra.mxu0 0
        %2034 = vmatprep.subr.bf16.mxu0 0
        %2035 = vmatpush1.bf16.msra.mxu0 0
        %2036 = vmatprep.mubr.bf16.mxu0 0
        %2037 = vmatmul.mubr.bf16.gmra.mrb[0].mxu0 %v1959
        %v2038 = vpop.f32.mrb[0].mxu0
        %v2039 = vadd.f32 %v1996, %v2038
        %v2040 = vpop.f32.mrb[0].mxu0
        %v2041 = vadd.f32 %v1998, %v2040
        %v2042 = vpop.f32.mrb[0].mxu0
        %v2043 = vadd.f32 %v2000, %v2042
        %v2044 = vpop.f32.mrb[0].mxu0
        %v2045 = vadd.f32 %v2002, %v2044
        %2046 = vdwg.mxu0
        %v2047 = vmax.f32 %v2039, 0.0
        %v2048 = vmax.f32 %v2041, 0.0
        %v2049 = vmax.f32 %v2043, 0.0
        %v2050 = vmax.f32 %v2045, 0.0
        %vm2051 = vcmask 1041408
        %v2052 = vrot.slane %v1028, 6
        %v2053 = vrot.slane %v1033, 6
        %v2054 = vsel %vm2051, %v2052, %v2053
        %v2055 = vrot.slane %v1038, 6
        %v2056 = vsel %vm2051, %v2053, %v2055
        %v2059 = vmul.f32 %v2047, %v2054
        %v2060 = vmul.f32 %v2048, %v2054
        %v2061 = vmul.f32 %v2049, %v2056
        %v2062 = vmul.f32 %v2050, %v2056
        %vm2063 = vcmask 1046528
        %v2064 = vsel %vm2063, %v2061, -inf
        %v2065 = vmax.f32 %v2059, %v2064
        %v2066 = vrot.slane %v2065, 4
        %v2067 = vmax.f32 %v2065, %v2066
        %v2068 = vrot.slane %v2067, 2
        %v2069 = vmax.f32 %v2067, %v2068
        %v2070 = vrot.slane %v2069, 1
        %v2071 = vmax.f32 %v2069, %v2070
        %v2072 = vsel %vm2063, %v2062, -inf
        %v2073 = vmax.f32 %v2060, %v2072
        %v2074 = vrot.slane %v2073, 4
        %v2075 = vmax.f32 %v2073, %v2074
        %v2076 = vrot.slane %v2075, 2
        %v2077 = vmax.f32 %v2075, %v2076
        %v2078 = vrot.slane %v2077, 1
        %v2079 = vmax.f32 %v2077, %v2078
        %v2080 = vpack.c.bf16 %v2071, %v2071
        %v2081 = vpack.c.bf16 %v2079, %v2079
        %v2082 = vld [vmem:[%s10] sm:$0xf]
        %v2083 = vld [vmem:[%s10 + $0x4] sm:$0xf]
        %v2084 = vld [vmem:[%s10 + $0x8] sm:$0xf]
        %v2085 = vld [vmem:[%s10 + $0xc] sm:$0xf]
        %v2086 = vld [vmem:[%s10 + $0x10] sm:$0xf]
        %v2087 = vld [vmem:[%s10 + $0x14] sm:$0xf]
        %v2088 = vld [vmem:[%s10 + $0x18] sm:$0xf]
        %v2089 = vld [vmem:[%s10 + $0x1c] sm:$0xf]
        %v2090 = vld [vmem:[%s10 + $0x20] sm:$0xf]
        %v2091 = vld [vmem:[%s10 + $0x24] sm:$0xf]
        %v2092 = vld [vmem:[%s10 + $0x28] sm:$0xf]
        %v2093 = vld [vmem:[%s10 + $0x2c] sm:$0xf]
        %v2094 = vld [vmem:[%s10 + $0x30] sm:$0xf]
        %v2095 = vld [vmem:[%s10 + $0x34] sm:$0xf]
        %v2096 = vld [vmem:[%s10 + $0x38] sm:$0xf]
        %v2097 = vld [vmem:[%s10 + $0x3c] sm:$0xf]
        %v2098 = vld [vmem:[%s10 + $0x40] sm:$0xf]
        %v2099 = vld [vmem:[%s10 + $0x44] sm:$0xf]
        %v2100 = vld [vmem:[%s10 + $0x48] sm:$0xf]
        %v2101 = vld [vmem:[%s10 + $0x4c] sm:$0xf]
        %v2102 = vld [vmem:[%s10 + $0x50] sm:$0xf]
        %v2103 = vld [vmem:[%s10 + $0x54] sm:$0xf]
        %v2104 = vld [vmem:[%s10 + $0x58] sm:$0xf]
        %v2105 = vld [vmem:[%s10 + $0x5c] sm:$0xf]
        %v2106 = vld [vmem:[%s10 + $0x60] sm:$0xf]
        %v2107 = vld [vmem:[%s10 + $0x64] sm:$0xf]
        %v2108 = vld [vmem:[%s10 + $0x68] sm:$0xf]
        %v2109 = vld [vmem:[%s10 + $0x6c] sm:$0xf]
        %v2110 = vld [vmem:[%s10 + $0x70] sm:$0xf]
        %v2111 = vld [vmem:[%s10 + $0x74] sm:$0xf]
        %v2112 = vld [vmem:[%s10 + $0x78] sm:$0xf]
        %v2113 = vld [vmem:[%s10 + $0x7c] sm:$0xf]
        %v2114 = vld [vmem:[%s11] sm:$0x1]
        %v2147 = vunpack.c.l.b16 %v2082
        %v2148 = vunpack.c.l.b16 %v2083
        %v2149 = vunpack.c.l.b16 %v2084
        %v2150 = vunpack.c.l.b16 %v2085
        %v2151 = vunpack.c.l.b16 %v2086
        %v2152 = vunpack.c.l.b16 %v2087
        %v2153 = vunpack.c.l.b16 %v2088
        %v2154 = vunpack.c.l.b16 %v2089
        %v2155 = vunpack.c.l.b16 %v2090
        %v2156 = vunpack.c.l.b16 %v2091
        %v2157 = vunpack.c.l.b16 %v2092
        %v2158 = vunpack.c.l.b16 %v2093
        %v2159 = vunpack.c.l.b16 %v2094
        %v2160 = vunpack.c.l.b16 %v2095
        %v2161 = vunpack.c.l.b16 %v2096
        %v2162 = vunpack.c.l.b16 %v2097
        %v2163 = vunpack.c.l.b16 %v2098
        %v2164 = vunpack.c.l.b16 %v2099
        %v2165 = vunpack.c.l.b16 %v2100
        %v2166 = vunpack.c.l.b16 %v2101
        %v2167 = vunpack.c.l.b16 %v2102
        %v2168 = vunpack.c.l.b16 %v2103
        %v2169 = vunpack.c.l.b16 %v2104
        %v2170 = vunpack.c.l.b16 %v2105
        %v2171 = vunpack.c.l.b16 %v2106
        %v2172 = vunpack.c.l.b16 %v2107
        %v2173 = vunpack.c.l.b16 %v2108
        %v2174 = vunpack.c.l.b16 %v2109
        %v2175 = vunpack.c.l.b16 %v2110
        %v2176 = vunpack.c.l.b16 %v2111
        %v2177 = vunpack.c.l.b16 %v2112
        %v2178 = vunpack.c.l.b16 %v2113
        %v2179 = vpack.c.b16 %v2148, %v2147
        %v2180 = vpack.c.b16 %v2150, %v2149
        %v2181 = vpack.c.b16 %v2152, %v2151
        %v2182 = vpack.c.b16 %v2154, %v2153
        %v2183 = vpack.c.b16 %v2156, %v2155
        %v2184 = vpack.c.b16 %v2158, %v2157
        %v2185 = vpack.c.b16 %v2160, %v2159
        %v2186 = vpack.c.b16 %v2162, %v2161
        %v2187 = vpack.c.b16 %v2164, %v2163
        %v2188 = vpack.c.b16 %v2166, %v2165
        %v2189 = vpack.c.b16 %v2168, %v2167
        %v2190 = vpack.c.b16 %v2170, %v2169
        %v2191 = vpack.c.b16 %v2172, %v2171
        %v2192 = vpack.c.b16 %v2174, %v2173
        %v2193 = vpack.c.b16 %v2176, %v2175
        %v2194 = vpack.c.b16 %v2178, %v2177
        %2211 = vmatprep.subr.bf16.mxu0 0
        %2212 = vmatpush1.bf16.msra.mxu0 %v2179
        %2213 = vmatprep.subr.bf16.mxu0 0
        %2214 = vmatpush1.bf16.msra.mxu0 %v2180
        %2215 = vmatprep.subr.bf16.mxu0 0
        %2216 = vmatpush1.bf16.msra.mxu0 %v2181
        %2217 = vmatprep.subr.bf16.mxu0 0
        %2218 = vmatpush1.bf16.msra.mxu0 %v2182
        %2219 = vmatprep.subr.bf16.mxu0 0
        %2220 = vmatpush1.bf16.msra.mxu0 %v2183
        %2221 = vmatprep.subr.bf16.mxu0 0
        %2222 = vmatpush1.bf16.msra.mxu0 %v2184
        %2223 = vmatprep.subr.bf16.mxu0 0
        %2224 = vmatpush1.bf16.msra.mxu0 %v2185
        %2225 = vmatprep.subr.bf16.mxu0 0
        %2226 = vmatpush1.bf16.msra.mxu0 %v2186
        %2227 = vmatprep.subr.bf16.mxu0 0
        %2228 = vmatpush1.bf16.msra.mxu0 %v2187
        %2229 = vmatprep.subr.bf16.mxu0 0
        %2230 = vmatpush1.bf16.msra.mxu0 %v2188
        %2231 = vmatprep.subr.bf16.mxu0 0
        %2232 = vmatpush1.bf16.msra.mxu0 %v2189
        %2233 = vmatprep.subr.bf16.mxu0 0
        %2234 = vmatpush1.bf16.msra.mxu0 %v2190
        %2235 = vmatprep.subr.bf16.mxu0 0
        %2236 = vmatpush1.bf16.msra.mxu0 %v2191
        %2237 = vmatprep.subr.bf16.mxu0 0
        %2238 = vmatpush1.bf16.msra.mxu0 %v2192
        %2239 = vmatprep.subr.bf16.mxu0 0
        %2240 = vmatpush1.bf16.msra.mxu0 %v2193
        %2241 = vmatprep.subr.bf16.mxu0 0
        %2242 = vmatpush1.bf16.msra.mxu0 %v2194
        %2243 = vmatprep.mubr.bf16.mxu0 %v2081
        %2244 = vmatmul.mubr.bf16.gmra.mrb[0].mxu0 %v2080
        %v2245 = vpop.f32.mrb[0].mxu0
        %v2246 = vadd.f32 %v2114, %v2245
        %v2247 = vpop.f32.mrb[0].mxu0
        %v2248 = vpop.f32.mrb[0].mxu0
        %v2249 = vpop.f32.mrb[0].mxu0
        %2250 = vdwg.mxu0
        %v2251 = vmax.f32 %v2246, 0.0
        %v2252 = vpack.c.bf16 %v2251, %v2251
        %v2253 = vld [vmem:[%s12] sm:$0xff]
        %v2254 = vld [vmem:[%s12 + $0x8] sm:$0xf]
        %v2255 = vld [vmem:[%s12 + $0xc] sm:$0xff]
        %v2256 = vld [vmem:[%s12 + $0x14] sm:$0xf]
        %v2257 = vld [vmem:[%s12 + $0x18] sm:$0xff]
        %v2258 = vld [vmem:[%s12 + $0x20] sm:$0xf]
        %v2259 = vld [vmem:[%s12 + $0x24] sm:$0xff]
        %v2260 = vld [vmem:[%s12 + $0x2c] sm:$0xf]
        %v2261 = vld [vmem:[%s12 + $0x30] sm:$0xff]
        %v2262 = vld [vmem:[%s12 + $0x38] sm:$0xf]
        %v2263 = vld [vmem:[%s12 + $0x3c] sm:$0xff]
        %v2264 = vld [vmem:[%s12 + $0x44] sm:$0xf]
        %v2265 = vld [vmem:[%s13] sm:$0x7]
        %v2278 = vunpack.c.l.b16 %v2253
        %v2279 = vunpack.c.h.b16 %v2253
        %v2280 = vunpack.c.l.b16 %v2254
        %v2281 = vunpack.c.l.b16 %v2255
        %v2282 = vunpack.c.h.b16 %v2255
        %v2283 = vunpack.c.l.b16 %v2256
        %v2284 = vunpack.c.l.b16 %v2257
        %v2285 = vunpack.c.h.b16 %v2257
        %v2286 = vunpack.c.l.b16 %v2258
        %v2287 = vunpack.c.l.b16 %v2259
        %v2288 = vunpack.c.h.b16 %v2259
        %v2289 = vunpack.c.l.b16 %v2260
        %v2290 = vunpack.c.l.b16 %v2261
        %v2291 = vunpack.c.h.b16 %v2261
        %v2292 = vunpack.c.l.b16 %v2262
        %v2293 = vunpack.c.l.b16 %v2263
        %v2294 = vunpack.c.h.b16 %v2263
        %v2295 = vunpack.c.l.b16 %v2264
        %v2296 = vpack.c.b16 %v2281, %v2278
        %v2297 = vpack.c.b16 %v2282, %v2279
        %v2298 = vpack.c.b16 %v2283, %v2280
        %v2299 = vpack.c.b16 %v2287, %v2284
        %v2300 = vpack.c.b16 %v2288, %v2285
        %v2301 = vpack.c.b16 %v2289, %v2286
        %v2302 = vpack.c.b16 %v2293, %v2290
        %v2303 = vpack.c.b16 %v2294, %v2291
        %v2304 = vpack.c.b16 %v2295, %v2292
        %v2315 = vlaneseq
        %v2316 = vshrl.u32 %v2315, 7
        %v2317 = vsub.s32 0, %v2316
        %v2318 = vrot.slane %v2265, %v2317
        %v2319 = vlaneseq
        %v2320 = vshrl.u32 %v2319, 7
        %v2321 = vsub.s32 1, %v2320
        %v2322 = vrot.slane %v2265, %v2321
        %v2323 = vlaneseq
        %v2324 = vshrl.u32 %v2323, 7
        %v2325 = vsub.s32 2, %v2324
        %v2326 = vrot.slane %v2265, %v2325
        %vm2330 = vcmask 392192
        %v2332 = vsel %vm2330, %v2252, 0
        %2334 = vmatprep.subr.bf16.mxu0 %v2297
        %2335 = vmatpush1.bf16.msra.mxu0 %v2296
        %2336 = vmatprep.subr.bf16.mxu0 %v2300
        %2337 = vmatpush1.bf16.msra.mxu0 %v2299
        %2338 = vmatprep.subr.bf16.mxu0 %v2303
        %2339 = vmatpush1.bf16.msra.mxu0 %v2302
        %2340 = vmatprep.subr.bf16.mxu0 0
        %2341 = vmatpush1.bf16.msra.mxu0 0
        %2342 = vmatprep.subr.bf16.mxu0 0
        %2343 = vmatpush1.bf16.msra.mxu0 0
        %2344 = vmatprep.subr.bf16.mxu0 0
        %2345 = vmatpush1.bf16.msra.mxu0 0
        %2346 = vmatprep.subr.bf16.mxu0 0
        %2347 = vmatpush1.bf16.msra.mxu0 0
        %2348 = vmatprep.subr.bf16.mxu0 0
        %2349 = vmatpush1.bf16.msra.mxu0 0
        %2350 = vmatprep.subr.bf16.mxu0 0
        %2351 = vmatpush1.bf16.msra.mxu0 0
        %2352 = vmatprep.subr.bf16.mxu0 0
        %2353 = vmatpush1.bf16.msra.mxu0 0
        %2354 = vmatprep.subr.bf16.mxu0 0
        %2355 = vmatpush1.bf16.msra.mxu0 0
        %2356 = vmatprep.subr.bf16.mxu0 0
        %2357 = vmatpush1.bf16.msra.mxu0 0
        %2358 = vmatprep.subr.bf16.mxu0 0
        %2359 = vmatpush1.bf16.msra.mxu0 0
        %2360 = vmatprep.subr.bf16.mxu0 0
        %2361 = vmatpush1.bf16.msra.mxu0 0
        %2362 = vmatprep.subr.bf16.mxu0 0
        %2363 = vmatpush1.bf16.msra.mxu0 0
        %2364 = vmatprep.subr.bf16.mxu0 0
        %2365 = vmatpush1.bf16.msra.mxu0 0
        %2366 = vmatprep.mubr.bf16.mxu0 0
        %2367 = vmatmul.mubr.bf16.gmra.mrb[0].mxu0 %v2332
        %v2368 = vpop.f32.mrb[0].mxu0
        %v2369 = vadd.f32 %v2318, %v2368
        %v2370 = vpop.f32.mrb[0].mxu0
        %v2371 = vadd.f32 %v2322, %v2370
        %v2372 = vpop.f32.mrb[0].mxu0
        %v2373 = vpop.f32.mrb[0].mxu0
        %2374 = vdwg.mxu0
        %2375 = vmatprep.subr.bf16.mxu0 0
        %2376 = vmatpush1.bf16.msra.mxu0 %v2298
        %2377 = vmatprep.subr.bf16.mxu0 0
        %2378 = vmatpush1.bf16.msra.mxu0 %v2301
        %2379 = vmatprep.subr.bf16.mxu0 0
        %2380 = vmatpush1.bf16.msra.mxu0 %v2304
        %2381 = vmatprep.subr.bf16.mxu0 0
        %2382 = vmatpush1.bf16.msra.mxu0 0
        %2383 = vmatprep.subr.bf16.mxu0 0
        %2384 = vmatpush1.bf16.msra.mxu0 0
        %2385 = vmatprep.subr.bf16.mxu0 0
        %2386 = vmatpush1.bf16.msra.mxu0 0
        %2387 = vmatprep.subr.bf16.mxu0 0
        %2388 = vmatpush1.bf16.msra.mxu0 0
        %2389 = vmatprep.subr.bf16.mxu0 0
        %2390 = vmatpush1.bf16.msra.mxu0 0
        %2391 = vmatprep.subr.bf16.mxu0 0
        %2392 = vmatpush1.bf16.msra.mxu0 0
        %2393 = vmatprep.subr.bf16.mxu0 0
        %2394 = vmatpush1.bf16.msra.mxu0 0
        %2395 = vmatprep.subr.bf16.mxu0 0
        %2396 = vmatpush1.bf16.msra.mxu0 0
        %2397 = vmatprep.subr.bf16.mxu0 0
        %2398 = vmatpush1.bf16.msra.mxu0 0
        %2399 = vmatprep.subr.bf16.mxu0 0
        %2400 = vmatpush1.bf16.msra.mxu0 0
        %2401 = vmatprep.subr.bf16.mxu0 0
        %2402 = vmatpush1.bf16.msra.mxu0 0
        %2403 = vmatprep.subr.bf16.mxu0 0
        %2404 = vmatpush1.bf16.msra.mxu0 0
        %2405 = vmatprep.subr.bf16.mxu0 0
        %2406 = vmatpush1.bf16.msra.mxu0 0
        %2407 = vmatprep.mubr.bf16.mxu0 0
        %2408 = vmatmul.mubr.bf16.gmra.mrb[0].mxu0 %v2332
        %v2409 = vpop.f32.mrb[0].mxu0
        %v2410 = vadd.f32 %v2326, %v2409
        %v2411 = vpop.f32.mrb[0].mxu0
        %v2412 = vpop.f32.mrb[0].mxu0
        %v2413 = vpop.f32.mrb[0].mxu0
        %2414 = vdwg.mxu0
        %v2415 = vmax.f32 %v2369, 0.0
        %v2416 = vmax.f32 %v2371, 0.0
        %v2417 = vmax.f32 %v2410, 0.0
        %v2418 = vpack.c.bf16 %v2415, %v2415
        %v2419 = vpack.c.bf16 %v2416, %v2416
        %v2420 = vpack.c.bf16 %v2417, %v2417
        %v2421 = vld [vmem:[%s14] sm:$0xf]
        %v2422 = vld [vmem:[%s14 + $0x4] sm:$0xf]
        %v2423 = vld [vmem:[%s14 + $0x8] sm:$0xf]
        %v2424 = vld [vmem:[%s14 + $0xc] sm:$0xf]
        %v2425 = vld [vmem:[%s14 + $0x10] sm:$0xf]
        %v2426 = vld [vmem:[%s14 + $0x14] sm:$0xf]
        %v2427 = vld [vmem:[%s14 + $0x18] sm:$0xf]
        %v2428 = vld [vmem:[%s14 + $0x1c] sm:$0xf]
        %v2429 = vld [vmem:[%s14 + $0x20] sm:$0xf]
        %v2430 = vld [vmem:[%s14 + $0x24] sm:$0xf]
        %v2431 = vld [vmem:[%s14 + $0x28] sm:$0xf]
        %v2432 = vld [vmem:[%s14 + $0x2c] sm:$0xf]
        %v2433 = vld [vmem:[%s14 + $0x30] sm:$0xf]
        %v2434 = vld [vmem:[%s14 + $0x34] sm:$0xf]
        %v2435 = vld [vmem:[%s14 + $0x38] sm:$0xf]
        %v2436 = vld [vmem:[%s14 + $0x3c] sm:$0xf]
        %v2437 = vld [vmem:[%s14 + $0x40] sm:$0xf]
        %v2438 = vld [vmem:[%s14 + $0x44] sm:$0xf]
        %v2439 = vld [vmem:[%s14 + $0x48] sm:$0xf]
        %v2440 = vld [vmem:[%s14 + $0x4c] sm:$0xf]
        %v2441 = vld [vmem:[%s14 + $0x50] sm:$0xf]
        %v2442 = vld [vmem:[%s14 + $0x54] sm:$0xf]
        %v2443 = vld [vmem:[%s14 + $0x58] sm:$0xf]
        %v2444 = vld [vmem:[%s14 + $0x5c] sm:$0xf]
        %v2445 = vld [vmem:[%s14 + $0x60] sm:$0xf]
        %v2446 = vld [vmem:[%s14 + $0x64] sm:$0xf]
        %v2447 = vld [vmem:[%s14 + $0x68] sm:$0xf]
        %v2448 = vld [vmem:[%s14 + $0x6c] sm:$0xf]
        %v2449 = vld [vmem:[%s14 + $0x70] sm:$0xf]
        %v2450 = vld [vmem:[%s14 + $0x74] sm:$0xf]
        %v2451 = vld [vmem:[%s14 + $0x78] sm:$0xf]
        %v2452 = vld [vmem:[%s14 + $0x7c] sm:$0xf]
        %v2453 = vld [vmem:[%s14 + $0x80] sm:$0xf]
        %v2454 = vld [vmem:[%s14 + $0x84] sm:$0xf]
        %v2455 = vld [vmem:[%s14 + $0x88] sm:$0xf]
        %v2456 = vld [vmem:[%s14 + $0x8c] sm:$0xf]
        %v2457 = vld [vmem:[%s14 + $0x90] sm:$0xf]
        %v2458 = vld [vmem:[%s14 + $0x94] sm:$0xf]
        %v2459 = vld [vmem:[%s14 + $0x98] sm:$0xf]
        %v2460 = vld [vmem:[%s14 + $0x9c] sm:$0xf]
        %v2461 = vld [vmem:[%s14 + $0xa0] sm:$0xf]
        %v2462 = vld [vmem:[%s14 + $0xa4] sm:$0xf]
        %v2463 = vld [vmem:[%s14 + $0xa8] sm:$0xf]
        %v2464 = vld [vmem:[%s14 + $0xac] sm:$0xf]
        %v2465 = vld [vmem:[%s14 + $0xb0] sm:$0xf]
        %v2466 = vld [vmem:[%s14 + $0xb4] sm:$0xf]
        %v2467 = vld [vmem:[%s14 + $0xb8] sm:$0xf]
        %v2468 = vld [vmem:[%s14 + $0xbc] sm:$0xf]
        %v2469 = vld [vmem:[%s15] sm:$0x1]
        %v2518 = vunpack.c.l.b16 %v2421
        %v2519 = vunpack.c.l.b16 %v2422
        %v2520 = vunpack.c.l.b16 %v2423
        %v2521 = vunpack.c.l.b16 %v2424
        %v2522 = vunpack.c.l.b16 %v2425
        %v2523 = vunpack.c.l.b16 %v2426
        %v2524 = vunpack.c.l.b16 %v2427
        %v2525 = vunpack.c.l.b16 %v2428
        %v2526 = vunpack.c.l.b16 %v2429
        %v2527 = vunpack.c.l.b16 %v2430
        %v2528 = vunpack.c.l.b16 %v2431
        %v2529 = vunpack.c.l.b16 %v2432
        %v2530 = vunpack.c.l.b16 %v2433
        %v2531 = vunpack.c.l.b16 %v2434
        %v2532 = vunpack.c.l.b16 %v2435
        %v2533 = vunpack.c.l.b16 %v2436
        %v2534 = vunpack.c.l.b16 %v2437
        %v2535 = vunpack.c.l.b16 %v2438
        %v2536 = vunpack.c.l.b16 %v2439
        %v2537 = vunpack.c.l.b16 %v2440
        %v2538 = vunpack.c.l.b16 %v2441
        %v2539 = vunpack.c.l.b16 %v2442
        %v2540 = vunpack.c.l.b16 %v2443
        %v2541 = vunpack.c.l.b16 %v2444
        %v2542 = vunpack.c.l.b16 %v2445
        %v2543 = vunpack.c.l.b16 %v2446
        %v2544 = vunpack.c.l.b16 %v2447
        %v2545 = vunpack.c.l.b16 %v2448
        %v2546 = vunpack.c.l.b16 %v2449
        %v2547 = vunpack.c.l.b16 %v2450
        %v2548 = vunpack.c.l.b16 %v2451
        %v2549 = vunpack.c.l.b16 %v2452
        %v2550 = vunpack.c.l.b16 %v2453
        %v2551 = vunpack.c.l.b16 %v2454
        %v2552 = vunpack.c.l.b16 %v2455
        %v2553 = vunpack.c.l.b16 %v2456
        %v2554 = vunpack.c.l.b16 %v2457
        %v2555 = vunpack.c.l.b16 %v2458
        %v2556 = vunpack.c.l.b16 %v2459
        %v2557 = vunpack.c.l.b16 %v2460
        %v2558 = vunpack.c.l.b16 %v2461
        %v2559 = vunpack.c.l.b16 %v2462
        %v2560 = vunpack.c.l.b16 %v2463
        %v2561 = vunpack.c.l.b16 %v2464
        %v2562 = vunpack.c.l.b16 %v2465
        %v2563 = vunpack.c.l.b16 %v2466
        %v2564 = vunpack.c.l.b16 %v2467
        %v2565 = vunpack.c.l.b16 %v2468
        %v2566 = vpack.c.b16 %v2519, %v2518
        %v2567 = vpack.c.b16 %v2521, %v2520
        %v2568 = vpack.c.b16 %v2523, %v2522
        %v2569 = vpack.c.b16 %v2525, %v2524
        %v2570 = vpack.c.b16 %v2527, %v2526
        %v2571 = vpack.c.b16 %v2529, %v2528
        %v2572 = vpack.c.b16 %v2531, %v2530
        %v2573 = vpack.c.b16 %v2533, %v2532
        %v2574 = vpack.c.b16 %v2535, %v2534
        %v2575 = vpack.c.b16 %v2537, %v2536
        %v2576 = vpack.c.b16 %v2539, %v2538
        %v2577 = vpack.c.b16 %v2541, %v2540
        %v2578 = vpack.c.b16 %v2543, %v2542
        %v2579 = vpack.c.b16 %v2545, %v2544
        %v2580 = vpack.c.b16 %v2547, %v2546
        %v2581 = vpack.c.b16 %v2549, %v2548
        %v2582 = vpack.c.b16 %v2551, %v2550
        %v2583 = vpack.c.b16 %v2553, %v2552
        %v2584 = vpack.c.b16 %v2555, %v2554
        %v2585 = vpack.c.b16 %v2557, %v2556
        %v2586 = vpack.c.b16 %v2559, %v2558
        %v2587 = vpack.c.b16 %v2561, %v2560
        %v2588 = vpack.c.b16 %v2563, %v2562
        %v2589 = vpack.c.b16 %v2565, %v2564
        %2614 = vmatprep.subr.bf16.mxu0 0
        %2615 = vmatpush1.bf16.msra.mxu0 %v2566
        %2616 = vmatprep.subr.bf16.mxu0 0
        %2617 = vmatpush1.bf16.msra.mxu0 %v2567
        %2618 = vmatprep.subr.bf16.mxu0 0
        %2619 = vmatpush1.bf16.msra.mxu0 %v2568
        %2620 = vmatprep.subr.bf16.mxu0 0
        %2621 = vmatpush1.bf16.msra.mxu0 %v2569
        %2622 = vmatprep.subr.bf16.mxu0 0
        %2623 = vmatpush1.bf16.msra.mxu0 %v2570
        %2624 = vmatprep.subr.bf16.mxu0 0
        %2625 = vmatpush1.bf16.msra.mxu0 %v2571
        %2626 = vmatprep.subr.bf16.mxu0 0
        %2627 = vmatpush1.bf16.msra.mxu0 %v2572
        %2628 = vmatprep.subr.bf16.mxu0 0
        %2629 = vmatpush1.bf16.msra.mxu0 %v2573
        %2630 = vmatprep.subr.bf16.mxu0 0
        %2631 = vmatpush1.bf16.msra.mxu0 %v2574
        %2632 = vmatprep.subr.bf16.mxu0 0
        %2633 = vmatpush1.bf16.msra.mxu0 %v2575
        %2634 = vmatprep.subr.bf16.mxu0 0
        %2635 = vmatpush1.bf16.msra.mxu0 %v2576
        %2636 = vmatprep.subr.bf16.mxu0 0
        %2637 = vmatpush1.bf16.msra.mxu0 %v2577
        %2638 = vmatprep.subr.bf16.mxu0 0
        %2639 = vmatpush1.bf16.msra.mxu0 %v2578
        %2640 = vmatprep.subr.bf16.mxu0 0
        %2641 = vmatpush1.bf16.msra.mxu0 %v2579
        %2642 = vmatprep.subr.bf16.mxu0 0
        %2643 = vmatpush1.bf16.msra.mxu0 %v2580
        %2644 = vmatprep.subr.bf16.mxu0 0
        %2645 = vmatpush1.bf16.msra.mxu0 %v2581
        %2646 = vmatprep.mubr.bf16.mxu0 %v2419
        %2647 = vmatmul.mubr.bf16.gmra.mrb[0].mxu0 %v2418
        %v2648 = vpop.f32.mrb[0].mxu0
        %v2649 = vadd.f32 %v2469, %v2648
        %v2650 = vpop.f32.mrb[0].mxu0
        %v2651 = vpop.f32.mrb[0].mxu0
        %v2652 = vpop.f32.mrb[0].mxu0
        %2653 = vdwg.mxu0
        %2654 = vmatprep.subr.bf16.mxu0 0
        %2655 = vmatpush1.bf16.msra.mxu0 %v2582
        %2656 = vmatprep.subr.bf16.mxu0 0
        %2657 = vmatpush1.bf16.msra.mxu0 %v2583
        %2658 = vmatprep.subr.bf16.mxu0 0
        %2659 = vmatpush1.bf16.msra.mxu0 %v2584
        %2660 = vmatprep.subr.bf16.mxu0 0
        %2661 = vmatpush1.bf16.msra.mxu0 %v2585
        %2662 = vmatprep.subr.bf16.mxu0 0
        %2663 = vmatpush1.bf16.msra.mxu0 %v2586
        %2664 = vmatprep.subr.bf16.mxu0 0
        %2665 = vmatpush1.bf16.msra.mxu0 %v2587
        %2666 = vmatprep.subr.bf16.mxu0 0
        %2667 = vmatpush1.bf16.msra.mxu0 %v2588
        %2668 = vmatprep.subr.bf16.mxu0 0
        %2669 = vmatpush1.bf16.msra.mxu0 %v2589
        %2670 = vmatprep.subr.bf16.mxu0 0
        %2671 = vmatpush1.bf16.msra.mxu0 0
        %2672 = vmatprep.subr.bf16.mxu0 0
        %2673 = vmatpush1.bf16.msra.mxu0 0
        %2674 = vmatprep.subr.bf16.mxu0 0
        %2675 = vmatpush1.bf16.msra.mxu0 0
        %2676 = vmatprep.subr.bf16.mxu0 0
        %2677 = vmatpush1.bf16.msra.mxu0 0
        %2678 = vmatprep.subr.bf16.mxu0 0
        %2679 = vmatpush1.bf16.msra.mxu0 0
        %2680 = vmatprep.subr.bf16.mxu0 0
        %2681 = vmatpush1.bf16.msra.mxu0 0
        %2682 = vmatprep.subr.bf16.mxu0 0
        %2683 = vmatpush1.bf16.msra.mxu0 0
        %2684 = vmatprep.subr.bf16.mxu0 0
        %2685 = vmatpush1.bf16.msra.mxu0 0
        %2686 = vmatprep.mubr.bf16.mxu0 0
        %2687 = vmatmul.mubr.bf16.gmra.mrb[0].mxu0 %v2420
        %v2688 = vpop.f32.mrb[0].mxu0
        %v2689 = vadd.f32 %v2649, %v2688
        %v2690 = vpop.f32.mrb[0].mxu0
        %v2691 = vpop.f32.mrb[0].mxu0
        %v2692 = vpop.f32.mrb[0].mxu0
        %2693 = vdwg.mxu0
        %v2694 = vmax.f32 %v2689, 0.0
        %v2695 = vpack.c.bf16 %v2694, %v2694
        %v2696 = vld [vmem:[%s16] sm:$0xff]
        %v2697 = vld [vmem:[%s16 + $0x8] sm:$0xf]
        %v2698 = vld [vmem:[%s16 + $0xc] sm:$0xff]
        %v2699 = vld [vmem:[%s16 + $0x14] sm:$0xf]
        %v2700 = vld [vmem:[%s16 + $0x18] sm:$0xff]
        %v2701 = vld [vmem:[%s16 + $0x20] sm:$0xf]
        %v2702 = vld [vmem:[%s16 + $0x24] sm:$0xff]
        %v2703 = vld [vmem:[%s16 + $0x2c] sm:$0xf]
        %v2704 = vld [vmem:[%s16 + $0x30] sm:$0xff]
        %v2705 = vld [vmem:[%s16 + $0x38] sm:$0xf]
        %v2706 = vld [vmem:[%s16 + $0x3c] sm:$0xff]
        %v2707 = vld [vmem:[%s16 + $0x44] sm:$0xf]
        %v2708 = vld [vmem:[%s17] sm:$0x7]
        %v2721 = vunpack.c.l.b16 %v2696
        %v2722 = vunpack.c.h.b16 %v2696
        %v2723 = vunpack.c.l.b16 %v2697
        %v2724 = vunpack.c.l.b16 %v2698
        %v2725 = vunpack.c.h.b16 %v2698
        %v2726 = vunpack.c.l.b16 %v2699
        %v2727 = vunpack.c.l.b16 %v2700
        %v2728 = vunpack.c.h.b16 %v2700
        %v2729 = vunpack.c.l.b16 %v2701
        %v2730 = vunpack.c.l.b16 %v2702
        %v2731 = vunpack.c.h.b16 %v2702
        %v2732 = vunpack.c.l.b16 %v2703
        %v2733 = vunpack.c.l.b16 %v2704
        %v2734 = vunpack.c.h.b16 %v2704
        %v2735 = vunpack.c.l.b16 %v2705
        %v2736 = vunpack.c.l.b16 %v2706
        %v2737 = vunpack.c.h.b16 %v2706
        %v2738 = vunpack.c.l.b16 %v2707
        %v2739 = vpack.c.b16 %v2724, %v2721
        %v2740 = vpack.c.b16 %v2725, %v2722
        %v2741 = vpack.c.b16 %v2726, %v2723
        %v2742 = vpack.c.b16 %v2730, %v2727
        %v2743 = vpack.c.b16 %v2731, %v2728
        %v2744 = vpack.c.b16 %v2732, %v2729
        %v2745 = vpack.c.b16 %v2736, %v2733
        %v2746 = vpack.c.b16 %v2737, %v2734
        %v2747 = vpack.c.b16 %v2738, %v2735
        %v2758 = vlaneseq
        %v2759 = vshrl.u32 %v2758, 7
        %v2760 = vsub.s32 0, %v2759
        %v2761 = vrot.slane %v2708, %v2760
        %v2762 = vlaneseq
        %v2763 = vshrl.u32 %v2762, 7
        %v2764 = vsub.s32 1, %v2763
        %v2765 = vrot.slane %v2708, %v2764
        %v2766 = vlaneseq
        %v2767 = vshrl.u32 %v2766, 7
        %v2768 = vsub.s32 2, %v2767
        %v2769 = vrot.slane %v2708, %v2768
        %v2774 = vsel %vm2330, %v2695, 0
        %2776 = vmatprep.subr.bf16.mxu0 %v2740
        %2777 = vmatpush1.bf16.msra.mxu0 %v2739
        %2778 = vmatprep.subr.bf16.mxu0 %v2743
        %2779 = vmatpush1.bf16.msra.mxu0 %v2742
        %2780 = vmatprep.subr.bf16.mxu0 %v2746
        %2781 = vmatpush1.bf16.msra.mxu0 %v2745
        %2782 = vmatprep.subr.bf16.mxu0 0
        %2783 = vmatpush1.bf16.msra.mxu0 0
        %2784 = vmatprep.subr.bf16.mxu0 0
        %2785 = vmatpush1.bf16.msra.mxu0 0
        %2786 = vmatprep.subr.bf16.mxu0 0
        %2787 = vmatpush1.bf16.msra.mxu0 0
        %2788 = vmatprep.subr.bf16.mxu0 0
        %2789 = vmatpush1.bf16.msra.mxu0 0
        %2790 = vmatprep.subr.bf16.mxu0 0
        %2791 = vmatpush1.bf16.msra.mxu0 0
        %2792 = vmatprep.subr.bf16.mxu0 0
        %2793 = vmatpush1.bf16.msra.mxu0 0
        %2794 = vmatprep.subr.bf16.mxu0 0
        %2795 = vmatpush1.bf16.msra.mxu0 0
        %2796 = vmatprep.subr.bf16.mxu0 0
        %2797 = vmatpush1.bf16.msra.mxu0 0
        %2798 = vmatprep.subr.bf16.mxu0 0
        %2799 = vmatpush1.bf16.msra.mxu0 0
        %2800 = vmatprep.subr.bf16.mxu0 0
        %2801 = vmatpush1.bf16.msra.mxu0 0
        %2802 = vmatprep.subr.bf16.mxu0 0
        %2803 = vmatpush1.bf16.msra.mxu0 0
        %2804 = vmatprep.subr.bf16.mxu0 0
        %2805 = vmatpush1.bf16.msra.mxu0 0
        %2806 = vmatprep.subr.bf16.mxu0 0
        %2807 = vmatpush1.bf16.msra.mxu0 0
        %2808 = vmatprep.mubr.bf16.mxu0 0
        %2809 = vmatmul.mubr.bf16.gmra.mrb[0].mxu0 %v2774
        %v2810 = vpop.f32.mrb[0].mxu0
        %v2811 = vadd.f32 %v2761, %v2810
        %v2812 = vpop.f32.mrb[0].mxu0
        %v2813 = vadd.f32 %v2765, %v2812
        %v2814 = vpop.f32.mrb[0].mxu0
        %v2815 = vpop.f32.mrb[0].mxu0
        %2816 = vdwg.mxu0
        %2817 = vmatprep.subr.bf16.mxu0 0
        %2818 = vmatpush1.bf16.msra.mxu0 %v2741
        %2819 = vmatprep.subr.bf16.mxu0 0
        %2820 = vmatpush1.bf16.msra.mxu0 %v2744
        %2821 = vmatprep.subr.bf16.mxu0 0
        %2822 = vmatpush1.bf16.msra.mxu0 %v2747
        %2823 = vmatprep.subr.bf16.mxu0 0
        %2824 = vmatpush1.bf16.msra.mxu0 0
        %2825 = vmatprep.subr.bf16.mxu0 0
        %2826 = vmatpush1.bf16.msra.mxu0 0
        %2827 = vmatprep.subr.bf16.mxu0 0
        %2828 = vmatpush1.bf16.msra.mxu0 0
        %2829 = vmatprep.subr.bf16.mxu0 0
        %2830 = vmatpush1.bf16.msra.mxu0 0
        %2831 = vmatprep.subr.bf16.mxu0 0
        %2832 = vmatpush1.bf16.msra.mxu0 0
        %2833 = vmatprep.subr.bf16.mxu0 0
        %2834 = vmatpush1.bf16.msra.mxu0 0
        %2835 = vmatprep.subr.bf16.mxu0 0
        %2836 = vmatpush1.bf16.msra.mxu0 0
        %2837 = vmatprep.subr.bf16.mxu0 0
        %2838 = vmatpush1.bf16.msra.mxu0 0
        %2839 = vmatprep.subr.bf16.mxu0 0
        %2840 = vmatpush1.bf16.msra.mxu0 0
        %2841 = vmatprep.subr.bf16.mxu0 0
        %2842 = vmatpush1.bf16.msra.mxu0 0
        %2843 = vmatprep.subr.bf16.mxu0 0
        %2844 = vmatpush1.bf16.msra.mxu0 0
        %2845 = vmatprep.subr.bf16.mxu0 0
        %2846 = vmatpush1.bf16.msra.mxu0 0
        %2847 = vmatprep.subr.bf16.mxu0 0
        %2848 = vmatpush1.bf16.msra.mxu0 0
        %2849 = vmatprep.mubr.bf16.mxu0 0
        %2850 = vmatmul.mubr.bf16.gmra.mrb[0].mxu0 %v2774
        %v2851 = vpop.f32.mrb[0].mxu0
        %v2852 = vadd.f32 %v2769, %v2851
        %v2853 = vpop.f32.mrb[0].mxu0
        %v2854 = vpop.f32.mrb[0].mxu0
        %v2855 = vpop.f32.mrb[0].mxu0
        %2856 = vdwg.mxu0
        %v2857 = vmax.f32 %v2811, 0.0
        %v2858 = vmax.f32 %v2813, 0.0
        %v2859 = vmax.f32 %v2852, 0.0
        %v2860 = vpack.c.bf16 %v2857, %v2857
        %v2861 = vpack.c.bf16 %v2858, %v2858
        %v2862 = vpack.c.bf16 %v2859, %v2859
        %v2863 = vld [vmem:[%s18] sm:$0xf]
        %v2864 = vld [vmem:[%s18 + $0x4] sm:$0xf]
        %v2865 = vld [vmem:[%s18 + $0x8] sm:$0xf]
        %v2866 = vld [vmem:[%s18 + $0xc] sm:$0xf]
        %v2867 = vld [vmem:[%s18 + $0x10] sm:$0xf]
        %v2868 = vld [vmem:[%s18 + $0x14] sm:$0xf]
        %v2869 = vld [vmem:[%s18 + $0x18] sm:$0xf]
        %v2870 = vld [vmem:[%s18 + $0x1c] sm:$0xf]
        %v2871 = vld [vmem:[%s18 + $0x20] sm:$0xf]
        %v2872 = vld [vmem:[%s18 + $0x24] sm:$0xf]
        %v2873 = vld [vmem:[%s18 + $0x28] sm:$0xf]
        %v2874 = vld [vmem:[%s18 + $0x2c] sm:$0xf]
        %v2875 = vld [vmem:[%s18 + $0x30] sm:$0xf]
        %v2876 = vld [vmem:[%s18 + $0x34] sm:$0xf]
        %v2877 = vld [vmem:[%s18 + $0x38] sm:$0xf]
        %v2878 = vld [vmem:[%s18 + $0x3c] sm:$0xf]
        %v2879 = vld [vmem:[%s18 + $0x40] sm:$0xf]
        %v2880 = vld [vmem:[%s18 + $0x44] sm:$0xf]
        %v2881 = vld [vmem:[%s18 + $0x48] sm:$0xf]
        %v2882 = vld [vmem:[%s18 + $0x4c] sm:$0xf]
        %v2883 = vld [vmem:[%s18 + $0x50] sm:$0xf]
        %v2884 = vld [vmem:[%s18 + $0x54] sm:$0xf]
        %v2885 = vld [vmem:[%s18 + $0x58] sm:$0xf]
        %v2886 = vld [vmem:[%s18 + $0x5c] sm:$0xf]
        %v2887 = vld [vmem:[%s18 + $0x60] sm:$0xf]
        %v2888 = vld [vmem:[%s18 + $0x64] sm:$0xf]
        %v2889 = vld [vmem:[%s18 + $0x68] sm:$0xf]
        %v2890 = vld [vmem:[%s18 + $0x6c] sm:$0xf]
        %v2891 = vld [vmem:[%s18 + $0x70] sm:$0xf]
        %v2892 = vld [vmem:[%s18 + $0x74] sm:$0xf]
        %v2893 = vld [vmem:[%s18 + $0x78] sm:$0xf]
        %v2894 = vld [vmem:[%s18 + $0x7c] sm:$0xf]
        %v2895 = vld [vmem:[%s18 + $0x80] sm:$0xf]
        %v2896 = vld [vmem:[%s18 + $0x84] sm:$0xf]
        %v2897 = vld [vmem:[%s18 + $0x88] sm:$0xf]
        %v2898 = vld [vmem:[%s18 + $0x8c] sm:$0xf]
        %v2899 = vld [vmem:[%s18 + $0x90] sm:$0xf]
        %v2900 = vld [vmem:[%s18 + $0x94] sm:$0xf]
        %v2901 = vld [vmem:[%s18 + $0x98] sm:$0xf]
        %v2902 = vld [vmem:[%s18 + $0x9c] sm:$0xf]
        %v2903 = vld [vmem:[%s18 + $0xa0] sm:$0xf]
        %v2904 = vld [vmem:[%s18 + $0xa4] sm:$0xf]
        %v2905 = vld [vmem:[%s18 + $0xa8] sm:$0xf]
        %v2906 = vld [vmem:[%s18 + $0xac] sm:$0xf]
        %v2907 = vld [vmem:[%s18 + $0xb0] sm:$0xf]
        %v2908 = vld [vmem:[%s18 + $0xb4] sm:$0xf]
        %v2909 = vld [vmem:[%s18 + $0xb8] sm:$0xf]
        %v2910 = vld [vmem:[%s18 + $0xbc] sm:$0xf]
        %v2911 = vld [vmem:[%s19] sm:$0x1]
        %v2960 = vunpack.c.l.b16 %v2863
        %v2961 = vunpack.c.l.b16 %v2864
        %v2962 = vunpack.c.l.b16 %v2865
        %v2963 = vunpack.c.l.b16 %v2866
        %v2964 = vunpack.c.l.b16 %v2867
        %v2965 = vunpack.c.l.b16 %v2868
        %v2966 = vunpack.c.l.b16 %v2869
        %v2967 = vunpack.c.l.b16 %v2870
        %v2968 = vunpack.c.l.b16 %v2871
        %v2969 = vunpack.c.l.b16 %v2872
        %v2970 = vunpack.c.l.b16 %v2873
        %v2971 = vunpack.c.l.b16 %v2874
        %v2972 = vunpack.c.l.b16 %v2875
        %v2973 = vunpack.c.l.b16 %v2876
        %v2974 = vunpack.c.l.b16 %v2877
        %v2975 = vunpack.c.l.b16 %v2878
        %v2976 = vunpack.c.l.b16 %v2879
        %v2977 = vunpack.c.l.b16 %v2880
        %v2978 = vunpack.c.l.b16 %v2881
        %v2979 = vunpack.c.l.b16 %v2882
        %v2980 = vunpack.c.l.b16 %v2883
        %v2981 = vunpack.c.l.b16 %v2884
        %v2982 = vunpack.c.l.b16 %v2885
        %v2983 = vunpack.c.l.b16 %v2886
        %v2984 = vunpack.c.l.b16 %v2887
        %v2985 = vunpack.c.l.b16 %v2888
        %v2986 = vunpack.c.l.b16 %v2889
        %v2987 = vunpack.c.l.b16 %v2890
        %v2988 = vunpack.c.l.b16 %v2891
        %v2989 = vunpack.c.l.b16 %v2892
        %v2990 = vunpack.c.l.b16 %v2893
        %v2991 = vunpack.c.l.b16 %v2894
        %v2992 = vunpack.c.l.b16 %v2895
        %v2993 = vunpack.c.l.b16 %v2896
        %v2994 = vunpack.c.l.b16 %v2897
        %v2995 = vunpack.c.l.b16 %v2898
        %v2996 = vunpack.c.l.b16 %v2899
        %v2997 = vunpack.c.l.b16 %v2900
        %v2998 = vunpack.c.l.b16 %v2901
        %v2999 = vunpack.c.l.b16 %v2902
        %v3000 = vunpack.c.l.b16 %v2903
        %v3001 = vunpack.c.l.b16 %v2904
        %v3002 = vunpack.c.l.b16 %v2905
        %v3003 = vunpack.c.l.b16 %v2906
        %v3004 = vunpack.c.l.b16 %v2907
        %v3005 = vunpack.c.l.b16 %v2908
        %v3006 = vunpack.c.l.b16 %v2909
        %v3007 = vunpack.c.l.b16 %v2910
        %v3008 = vpack.c.b16 %v2961, %v2960
        %v3009 = vpack.c.b16 %v2963, %v2962
        %v3010 = vpack.c.b16 %v2965, %v2964
        %v3011 = vpack.c.b16 %v2967, %v2966
        %v3012 = vpack.c.b16 %v2969, %v2968
        %v3013 = vpack.c.b16 %v2971, %v2970
        %v3014 = vpack.c.b16 %v2973, %v2972
        %v3015 = vpack.c.b16 %v2975, %v2974
        %v3016 = vpack.c.b16 %v2977, %v2976
        %v3017 = vpack.c.b16 %v2979, %v2978
        %v3018 = vpack.c.b16 %v2981, %v2980
        %v3019 = vpack.c.b16 %v2983, %v2982
        %v3020 = vpack.c.b16 %v2985, %v2984
        %v3021 = vpack.c.b16 %v2987, %v2986
        %v3022 = vpack.c.b16 %v2989, %v2988
        %v3023 = vpack.c.b16 %v2991, %v2990
        %v3024 = vpack.c.b16 %v2993, %v2992
        %v3025 = vpack.c.b16 %v2995, %v2994
        %v3026 = vpack.c.b16 %v2997, %v2996
        %v3027 = vpack.c.b16 %v2999, %v2998
        %v3028 = vpack.c.b16 %v3001, %v3000
        %v3029 = vpack.c.b16 %v3003, %v3002
        %v3030 = vpack.c.b16 %v3005, %v3004
        %v3031 = vpack.c.b16 %v3007, %v3006
        %3056 = vmatprep.subr.bf16.mxu0 0
        %3057 = vmatpush1.bf16.msra.mxu0 %v3008
        %3058 = vmatprep.subr.bf16.mxu0 0
        %3059 = vmatpush1.bf16.msra.mxu0 %v3009
        %3060 = vmatprep.subr.bf16.mxu0 0
        %3061 = vmatpush1.bf16.msra.mxu0 %v3010
        %3062 = vmatprep.subr.bf16.mxu0 0
        %3063 = vmatpush1.bf16.msra.mxu0 %v3011
        %3064 = vmatprep.subr.bf16.mxu0 0
        %3065 = vmatpush1.bf16.msra.mxu0 %v3012
        %3066 = vmatprep.subr.bf16.mxu0 0
        %3067 = vmatpush1.bf16.msra.mxu0 %v3013
        %3068 = vmatprep.subr.bf16.mxu0 0
        %3069 = vmatpush1.bf16.msra.mxu0 %v3014
        %3070 = vmatprep.subr.bf16.mxu0 0
        %3071 = vmatpush1.bf16.msra.mxu0 %v3015
        %3072 = vmatprep.subr.bf16.mxu0 0
        %3073 = vmatpush1.bf16.msra.mxu0 %v3016
        %3074 = vmatprep.subr.bf16.mxu0 0
        %3075 = vmatpush1.bf16.msra.mxu0 %v3017
        %3076 = vmatprep.subr.bf16.mxu0 0
        %3077 = vmatpush1.bf16.msra.mxu0 %v3018
        %3078 = vmatprep.subr.bf16.mxu0 0
        %3079 = vmatpush1.bf16.msra.mxu0 %v3019
        %3080 = vmatprep.subr.bf16.mxu0 0
        %3081 = vmatpush1.bf16.msra.mxu0 %v3020
        %3082 = vmatprep.subr.bf16.mxu0 0
        %3083 = vmatpush1.bf16.msra.mxu0 %v3021
        %3084 = vmatprep.subr.bf16.mxu0 0
        %3085 = vmatpush1.bf16.msra.mxu0 %v3022
        %3086 = vmatprep.subr.bf16.mxu0 0
        %3087 = vmatpush1.bf16.msra.mxu0 %v3023
        %3088 = vmatprep.mubr.bf16.mxu0 %v2861
        %3089 = vmatmul.mubr.bf16.gmra.mrb[0].mxu0 %v2860
        %v3090 = vpop.f32.mrb[0].mxu0
        %v3091 = vadd.f32 %v2911, %v3090
        %v3092 = vpop.f32.mrb[0].mxu0
        %v3093 = vpop.f32.mrb[0].mxu0
        %v3094 = vpop.f32.mrb[0].mxu0
        %3095 = vdwg.mxu0
        %3096 = vmatprep.subr.bf16.mxu0 0
        %3097 = vmatpush1.bf16.msra.mxu0 %v3024
        %3098 = vmatprep.subr.bf16.mxu0 0
        %3099 = vmatpush1.bf16.msra.mxu0 %v3025
        %3100 = vmatprep.subr.bf16.mxu0 0
        %3101 = vmatpush1.bf16.msra.mxu0 %v3026
        %3102 = vmatprep.subr.bf16.mxu0 0
        %3103 = vmatpush1.bf16.msra.mxu0 %v3027
        %3104 = vmatprep.subr.bf16.mxu0 0
        %3105 = vmatpush1.bf16.msra.mxu0 %v3028
        %3106 = vmatprep.subr.bf16.mxu0 0
        %3107 = vmatpush1.bf16.msra.mxu0 %v3029
        %3108 = vmatprep.subr.bf16.mxu0 0
        %3109 = vmatpush1.bf16.msra.mxu0 %v3030
        %3110 = vmatprep.subr.bf16.mxu0 0
        %3111 = vmatpush1.bf16.msra.mxu0 %v3031
        %3112 = vmatprep.subr.bf16.mxu0 0
        %3113 = vmatpush1.bf16.msra.mxu0 0
        %3114 = vmatprep.subr.bf16.mxu0 0
        %3115 = vmatpush1.bf16.msra.mxu0 0
        %3116 = vmatprep.subr.bf16.mxu0 0
        %3117 = vmatpush1.bf16.msra.mxu0 0
        %3118 = vmatprep.subr.bf16.mxu0 0
        %3119 = vmatpush1.bf16.msra.mxu0 0
        %3120 = vmatprep.subr.bf16.mxu0 0
        %3121 = vmatpush1.bf16.msra.mxu0 0
        %3122 = vmatprep.subr.bf16.mxu0 0
        %3123 = vmatpush1.bf16.msra.mxu0 0
        %3124 = vmatprep.subr.bf16.mxu0 0
        %3125 = vmatpush1.bf16.msra.mxu0 0
        %3126 = vmatprep.subr.bf16.mxu0 0
        %3127 = vmatpush1.bf16.msra.mxu0 0
        %3128 = vmatprep.mubr.bf16.mxu0 0
        %3129 = vmatmul.mubr.bf16.gmra.mrb[0].mxu0 %v2862
        %v3130 = vpop.f32.mrb[0].mxu0
        %v3131 = vadd.f32 %v3091, %v3130
        %v3132 = vpop.f32.mrb[0].mxu0
        %v3133 = vpop.f32.mrb[0].mxu0
        %v3134 = vpop.f32.mrb[0].mxu0
        %3135 = vdwg.mxu0
        %v3136 = vmax.f32 %v3131, 0.0
        %v3137 = vpack.c.bf16 %v3136, %v3136
        %v3138 = vld [vmem:[%s20] sm:$0xff]
        %v3139 = vld [vmem:[%s20 + $0x8] sm:$0xff]
        %v3140 = vld [vmem:[%s20 + $0x10] sm:$0xff]
        %v3141 = vld [vmem:[%s20 + $0x18] sm:$0xff]
        %v3142 = vld [vmem:[%s20 + $0x20] sm:$0xff]
        %v3143 = vld [vmem:[%s20 + $0x28] sm:$0xff]
        %v3144 = vld [vmem:[%s20 + $0x30] sm:$0xff]
        %v3145 = vld [vmem:[%s20 + $0x38] sm:$0xff]
        %v3146 = vld [vmem:[%s20 + $0x40] sm:$0xff]
        %v3147 = vld [vmem:[%s20 + $0x48] sm:$0xff]
        %v3148 = vld [vmem:[%s20 + $0x50] sm:$0xff]
        %v3149 = vld [vmem:[%s20 + $0x58] sm:$0xff]
        %v3150 = vld [vmem:[%s20 + $0x60] sm:$0xff]
        %v3151 = vld [vmem:[%s20 + $0x68] sm:$0xff]
        %v3152 = vld [vmem:[%s20 + $0x70] sm:$0xff]
        %v3153 = vld [vmem:[%s20 + $0x78] sm:$0xff]
        %v3154 = vld [vmem:[%s21] sm:$0xf]
        %v3171 = vunpack.c.l.b16 %v3138
        %v3172 = vunpack.c.h.b16 %v3138
        %v3173 = vunpack.c.l.b16 %v3139
        %v3174 = vunpack.c.h.b16 %v3139
        %v3175 = vunpack.c.l.b16 %v3140
        %v3176 = vunpack.c.h.b16 %v3140
        %v3177 = vunpack.c.l.b16 %v3141
        %v3178 = vunpack.c.h.b16 %v3141
        %v3179 = vunpack.c.l.b16 %v3142
        %v3180 = vunpack.c.h.b16 %v3142
        %v3181 = vunpack.c.l.b16 %v3143
        %v3182 = vunpack.c.h.b16 %v3143
        %v3183 = vunpack.c.l.b16 %v3144
        %v3184 = vunpack.c.h.b16 %v3144
        %v3185 = vunpack.c.l.b16 %v3145
        %v3186 = vunpack.c.h.b16 %v3145
        %v3187 = vunpack.c.l.b16 %v3146
        %v3188 = vunpack.c.h.b16 %v3146
        %v3189 = vunpack.c.l.b16 %v3147
        %v3190 = vunpack.c.h.b16 %v3147
        %v3191 = vunpack.c.l.b16 %v3148
        %v3192 = vunpack.c.h.b16 %v3148
        %v3193 = vunpack.c.l.b16 %v3149
        %v3194 = vunpack.c.h.b16 %v3149
        %v3195 = vunpack.c.l.b16 %v3150
        %v3196 = vunpack.c.h.b16 %v3150
        %v3197 = vunpack.c.l.b16 %v3151
        %v3198 = vunpack.c.h.b16 %v3151
        %v3199 = vunpack.c.l.b16 %v3152
        %v3200 = vunpack.c.h.b16 %v3152
        %v3201 = vunpack.c.l.b16 %v3153
        %v3202 = vunpack.c.h.b16 %v3153
        %v3203 = vpack.c.b16 %v3175, %v3171
        %v3204 = vpack.c.b16 %v3176, %v3172
        %v3205 = vpack.c.b16 %v3177, %v3173
        %v3206 = vpack.c.b16 %v3178, %v3174
        %v3207 = vpack.c.b16 %v3183, %v3179
        %v3208 = vpack.c.b16 %v3184, %v3180
        %v3209 = vpack.c.b16 %v3185, %v3181
        %v3210 = vpack.c.b16 %v3186, %v3182
        %v3211 = vpack.c.b16 %v3191, %v3187
        %v3212 = vpack.c.b16 %v3192, %v3188
        %v3213 = vpack.c.b16 %v3193, %v3189
        %v3214 = vpack.c.b16 %v3194, %v3190
        %v3215 = vpack.c.b16 %v3199, %v3195
        %v3216 = vpack.c.b16 %v3200, %v3196
        %v3217 = vpack.c.b16 %v3201, %v3197
        %v3218 = vpack.c.b16 %v3202, %v3198
        %v3236 = vlaneseq
        %v3237 = vshrl.u32 %v3236, 7
        %v3238 = vsub.s32 0, %v3237
        %v3239 = vrot.slane %v3154, %v3238
        %v3240 = vlaneseq
        %v3241 = vshrl.u32 %v3240, 7
        %v3242 = vsub.s32 1, %v3241
        %v3243 = vrot.slane %v3154, %v3242
        %v3244 = vlaneseq
        %v3245 = vshrl.u32 %v3244, 7
        %v3246 = vsub.s32 2, %v3245
        %v3247 = vrot.slane %v3154, %v3246
        %v3248 = vlaneseq
        %v3249 = vshrl.u32 %v3248, 7
        %v3250 = vsub.s32 3, %v3249
        %v3251 = vrot.slane %v3154, %v3250
        %v3257 = vsel %vm1120, %v3137, 0
        %3259 = vmatprep.subr.bf16.mxu0 %v3204
        %3260 = vmatpush1.bf16.msra.mxu0 %v3203
        %3261 = vmatprep.subr.bf16.mxu0 %v3208
        %3262 = vmatpush1.bf16.msra.mxu0 %v3207
        %3263 = vmatprep.subr.bf16.mxu0 %v3212
        %3264 = vmatpush1.bf16.msra.mxu0 %v3211
        %3265 = vmatprep.subr.bf16.mxu0 %v3216
        %3266 = vmatpush1.bf16.msra.mxu0 %v3215
        %3267 = vmatprep.subr.bf16.mxu0 0
        %3268 = vmatpush1.bf16.msra.mxu0 0
        %3269 = vmatprep.subr.bf16.mxu0 0
        %3270 = vmatpush1.bf16.msra.mxu0 0
        %3271 = vmatprep.subr.bf16.mxu0 0
        %3272 = vmatpush1.bf16.msra.mxu0 0
        %3273 = vmatprep.subr.bf16.mxu0 0
        %3274 = vmatpush1.bf16.msra.mxu0 0
        %3275 = vmatprep.subr.bf16.mxu0 0
        %3276 = vmatpush1.bf16.msra.mxu0 0
        %3277 = vmatprep.subr.bf16.mxu0 0
        %3278 = vmatpush1.bf16.msra.mxu0 0
        %3279 = vmatprep.subr.bf16.mxu0 0
        %3280 = vmatpush1.bf16.msra.mxu0 0
        %3281 = vmatprep.subr.bf16.mxu0 0
        %3282 = vmatpush1.bf16.msra.mxu0 0
        %3283 = vmatprep.subr.bf16.mxu0 0
        %3284 = vmatpush1.bf16.msra.mxu0 0
        %3285 = vmatprep.subr.bf16.mxu0 0
        %3286 = vmatpush1.bf16.msra.mxu0 0
        %3287 = vmatprep.subr.bf16.mxu0 0
        %3288 = vmatpush1.bf16.msra.mxu0 0
        %3289 = vmatprep.subr.bf16.mxu0 0
        %3290 = vmatpush1.bf16.msra.mxu0 0
        %3291 = vmatprep.mubr.bf16.mxu0 0
        %3292 = vmatmul.mubr.bf16.gmra.mrb[0].mxu0 %v3257
        %v3293 = vpop.f32.mrb[0].mxu0
        %v3294 = vadd.f32 %v3239, %v3293
        %v3295 = vpop.f32.mrb[0].mxu0
        %v3296 = vadd.f32 %v3243, %v3295
        %v3297 = vpop.f32.mrb[0].mxu0
        %v3298 = vpop.f32.mrb[0].mxu0
        %3299 = vdwg.mxu0
        %3300 = vmatprep.subr.bf16.mxu0 %v3206
        %3301 = vmatpush1.bf16.msra.mxu0 %v3205
        %3302 = vmatprep.subr.bf16.mxu0 %v3210
        %3303 = vmatpush1.bf16.msra.mxu0 %v3209
        %3304 = vmatprep.subr.bf16.mxu0 %v3214
        %3305 = vmatpush1.bf16.msra.mxu0 %v3213
        %3306 = vmatprep.subr.bf16.mxu0 %v3218
        %3307 = vmatpush1.bf16.msra.mxu0 %v3217
        %3308 = vmatprep.subr.bf16.mxu0 0
        %3309 = vmatpush1.bf16.msra.mxu0 0
        %3310 = vmatprep.subr.bf16.mxu0 0
        %3311 = vmatpush1.bf16.msra.mxu0 0
        %3312 = vmatprep.subr.bf16.mxu0 0
        %3313 = vmatpush1.bf16.msra.mxu0 0
        %3314 = vmatprep.subr.bf16.mxu0 0
        %3315 = vmatpush1.bf16.msra.mxu0 0
        %3316 = vmatprep.subr.bf16.mxu0 0
        %3317 = vmatpush1.bf16.msra.mxu0 0
        %3318 = vmatprep.subr.bf16.mxu0 0
        %3319 = vmatpush1.bf16.msra.mxu0 0
        %3320 = vmatprep.subr.bf16.mxu0 0
        %3321 = vmatpush1.bf16.msra.mxu0 0
        %3322 = vmatprep.subr.bf16.mxu0 0
        %3323 = vmatpush1.bf16.msra.mxu0 0
        %3324 = vmatprep.subr.bf16.mxu0 0
        %3325 = vmatpush1.bf16.msra.mxu0 0
        %3326 = vmatprep.subr.bf16.mxu0 0
        %3327 = vmatpush1.bf16.msra.mxu0 0
        %3328 = vmatprep.subr.bf16.mxu0 0
        %3329 = vmatpush1.bf16.msra.mxu0 0
        %3330 = vmatprep.subr.bf16.mxu0 0
        %3331 = vmatpush1.bf16.msra.mxu0 0
        %3332 = vmatprep.mubr.bf16.mxu0 0
        %3333 = vmatmul.mubr.bf16.gmra.mrb[0].mxu0 %v3257
        %v3334 = vpop.f32.mrb[0].mxu0
        %v3335 = vadd.f32 %v3247, %v3334
        %v3336 = vpop.f32.mrb[0].mxu0
        %v3337 = vadd.f32 %v3251, %v3336
        %v3338 = vpop.f32.mrb[0].mxu0
        %v3339 = vpop.f32.mrb[0].mxu0
        %3340 = vdwg.mxu0
        %v3341 = vmax.f32 %v3294, 0.0
        %v3342 = vmax.f32 %v3296, 0.0
        %v3343 = vmax.f32 %v3335, 0.0
        %v3344 = vmax.f32 %v3337, 0.0
        %v3345 = vpack.c.bf16 %v3341, %v3341
        %v3346 = vpack.c.bf16 %v3342, %v3342
        %v3347 = vpack.c.bf16 %v3343, %v3343
        %v3348 = vpack.c.bf16 %v3344, %v3344
        %v3349 = vld [vmem:[%s22] sm:$0xf]
        %v3350 = vld [vmem:[%s22 + $0x4] sm:$0xf]
        %v3351 = vld [vmem:[%s22 + $0x8] sm:$0xf]
        %v3352 = vld [vmem:[%s22 + $0xc] sm:$0xf]
        %v3353 = vld [vmem:[%s22 + $0x10] sm:$0xf]
        %v3354 = vld [vmem:[%s22 + $0x14] sm:$0xf]
        %v3355 = vld [vmem:[%s22 + $0x18] sm:$0xf]
        %v3356 = vld [vmem:[%s22 + $0x1c] sm:$0xf]
        %v3357 = vld [vmem:[%s22 + $0x20] sm:$0xf]
        %v3358 = vld [vmem:[%s22 + $0x24] sm:$0xf]
        %v3359 = vld [vmem:[%s22 + $0x28] sm:$0xf]
        %v3360 = vld [vmem:[%s22 + $0x2c] sm:$0xf]
        %v3361 = vld [vmem:[%s22 + $0x30] sm:$0xf]
        %v3362 = vld [vmem:[%s22 + $0x34] sm:$0xf]
        %v3363 = vld [vmem:[%s22 + $0x38] sm:$0xf]
        %v3364 = vld [vmem:[%s22 + $0x3c] sm:$0xf]
        %v3365 = vld [vmem:[%s22 + $0x40] sm:$0xf]
        %v3366 = vld [vmem:[%s22 + $0x44] sm:$0xf]
        %v3367 = vld [vmem:[%s22 + $0x48] sm:$0xf]
        %v3368 = vld [vmem:[%s22 + $0x4c] sm:$0xf]
        %v3369 = vld [vmem:[%s22 + $0x50] sm:$0xf]
        %v3370 = vld [vmem:[%s22 + $0x54] sm:$0xf]
        %v3371 = vld [vmem:[%s22 + $0x58] sm:$0xf]
        %v3372 = vld [vmem:[%s22 + $0x5c] sm:$0xf]
        %v3373 = vld [vmem:[%s22 + $0x60] sm:$0xf]
        %v3374 = vld [vmem:[%s22 + $0x64] sm:$0xf]
        %v3375 = vld [vmem:[%s22 + $0x68] sm:$0xf]
        %v3376 = vld [vmem:[%s22 + $0x6c] sm:$0xf]
        %v3377 = vld [vmem:[%s22 + $0x70] sm:$0xf]
        %v3378 = vld [vmem:[%s22 + $0x74] sm:$0xf]
        %v3379 = vld [vmem:[%s22 + $0x78] sm:$0xf]
        %v3380 = vld [vmem:[%s22 + $0x7c] sm:$0xf]
        %v3381 = vld [vmem:[%s22 + $0x80] sm:$0xf]
        %v3382 = vld [vmem:[%s22 + $0x84] sm:$0xf]
        %v3383 = vld [vmem:[%s22 + $0x88] sm:$0xf]
        %v3384 = vld [vmem:[%s22 + $0x8c] sm:$0xf]
        %v3385 = vld [vmem:[%s22 + $0x90] sm:$0xf]
        %v3386 = vld [vmem:[%s22 + $0x94] sm:$0xf]
        %v3387 = vld [vmem:[%s22 + $0x98] sm:$0xf]
        %v3388 = vld [vmem:[%s22 + $0x9c] sm:$0xf]
        %v3389 = vld [vmem:[%s22 + $0xa0] sm:$0xf]
        %v3390 = vld [vmem:[%s22 + $0xa4] sm:$0xf]
        %v3391 = vld [vmem:[%s22 + $0xa8] sm:$0xf]
        %v3392 = vld [vmem:[%s22 + $0xac] sm:$0xf]
        %v3393 = vld [vmem:[%s22 + $0xb0] sm:$0xf]
        %v3394 = vld [vmem:[%s22 + $0xb4] sm:$0xf]
        %v3395 = vld [vmem:[%s22 + $0xb8] sm:$0xf]
        %v3396 = vld [vmem:[%s22 + $0xbc] sm:$0xf]
        %v3397 = vld [vmem:[%s22 + $0xc0] sm:$0xf]
        %v3398 = vld [vmem:[%s22 + $0xc4] sm:$0xf]
        %v3399 = vld [vmem:[%s22 + $0xc8] sm:$0xf]
        %v3400 = vld [vmem:[%s22 + $0xcc] sm:$0xf]
        %v3401 = vld [vmem:[%s22 + $0xd0] sm:$0xf]
        %v3402 = vld [vmem:[%s22 + $0xd4] sm:$0xf]
        %v3403 = vld [vmem:[%s22 + $0xd8] sm:$0xf]
        %v3404 = vld [vmem:[%s22 + $0xdc] sm:$0xf]
        %v3405 = vld [vmem:[%s22 + $0xe0] sm:$0xf]
        %v3406 = vld [vmem:[%s22 + $0xe4] sm:$0xf]
        %v3407 = vld [vmem:[%s22 + $0xe8] sm:$0xf]
        %v3408 = vld [vmem:[%s22 + $0xec] sm:$0xf]
        %v3409 = vld [vmem:[%s22 + $0xf0] sm:$0xf]
        %v3410 = vld [vmem:[%s22 + $0xf4] sm:$0xf]
        %v3411 = vld [vmem:[%s22 + $0xf8] sm:$0xf]
        %v3412 = vld [vmem:[%s22 + $0xfc] sm:$0xf]
        %v3413 = vld [vmem:[%s23] sm:$0x1]
        %v3478 = vunpack.c.l.b16 %v3349
        %v3479 = vunpack.c.l.b16 %v3350
        %v3480 = vunpack.c.l.b16 %v3351
        %v3481 = vunpack.c.l.b16 %v3352
        %v3482 = vunpack.c.l.b16 %v3353
        %v3483 = vunpack.c.l.b16 %v3354
        %v3484 = vunpack.c.l.b16 %v3355
        %v3485 = vunpack.c.l.b16 %v3356
        %v3486 = vunpack.c.l.b16 %v3357
        %v3487 = vunpack.c.l.b16 %v3358
        %v3488 = vunpack.c.l.b16 %v3359
        %v3489 = vunpack.c.l.b16 %v3360
        %v3490 = vunpack.c.l.b16 %v3361
        %v3491 = vunpack.c.l.b16 %v3362
        %v3492 = vunpack.c.l.b16 %v3363
        %v3493 = vunpack.c.l.b16 %v3364
        %v3494 = vunpack.c.l.b16 %v3365
        %v3495 = vunpack.c.l.b16 %v3366
        %v3496 = vunpack.c.l.b16 %v3367
        %v3497 = vunpack.c.l.b16 %v3368
        %v3498 = vunpack.c.l.b16 %v3369
        %v3499 = vunpack.c.l.b16 %v3370
        %v3500 = vunpack.c.l.b16 %v3371
        %v3501 = vunpack.c.l.b16 %v3372
        %v3502 = vunpack.c.l.b16 %v3373
        %v3503 = vunpack.c.l.b16 %v3374
        %v3504 = vunpack.c.l.b16 %v3375
        %v3505 = vunpack.c.l.b16 %v3376
        %v3506 = vunpack.c.l.b16 %v3377
        %v3507 = vunpack.c.l.b16 %v3378
        %v3508 = vunpack.c.l.b16 %v3379
        %v3509 = vunpack.c.l.b16 %v3380
        %v3510 = vunpack.c.l.b16 %v3381
        %v3511 = vunpack.c.l.b16 %v3382
        %v3512 = vunpack.c.l.b16 %v3383
        %v3513 = vunpack.c.l.b16 %v3384
        %v3514 = vunpack.c.l.b16 %v3385
        %v3515 = vunpack.c.l.b16 %v3386
        %v3516 = vunpack.c.l.b16 %v3387
        %v3517 = vunpack.c.l.b16 %v3388
        %v3518 = vunpack.c.l.b16 %v3389
        %v3519 = vunpack.c.l.b16 %v3390
        %v3520 = vunpack.c.l.b16 %v3391
        %v3521 = vunpack.c.l.b16 %v3392
        %v3522 = vunpack.c.l.b16 %v3393
        %v3523 = vunpack.c.l.b16 %v3394
        %v3524 = vunpack.c.l.b16 %v3395
        %v3525 = vunpack.c.l.b16 %v3396
        %v3526 = vunpack.c.l.b16 %v3397
        %v3527 = vunpack.c.l.b16 %v3398
        %v3528 = vunpack.c.l.b16 %v3399
        %v3529 = vunpack.c.l.b16 %v3400
        %v3530 = vunpack.c.l.b16 %v3401
        %v3531 = vunpack.c.l.b16 %v3402
        %v3532 = vunpack.c.l.b16 %v3403
        %v3533 = vunpack.c.l.b16 %v3404
        %v3534 = vunpack.c.l.b16 %v3405
        %v3535 = vunpack.c.l.b16 %v3406
        %v3536 = vunpack.c.l.b16 %v3407
        %v3537 = vunpack.c.l.b16 %v3408
        %v3538 = vunpack.c.l.b16 %v3409
        %v3539 = vunpack.c.l.b16 %v3410
        %v3540 = vunpack.c.l.b16 %v3411
        %v3541 = vunpack.c.l.b16 %v3412
        %v3542 = vpack.c.b16 %v3479, %v3478
        %v3543 = vpack.c.b16 %v3481, %v3480
        %v3544 = vpack.c.b16 %v3483, %v3482
        %v3545 = vpack.c.b16 %v3485, %v3484
        %v3546 = vpack.c.b16 %v3487, %v3486
        %v3547 = vpack.c.b16 %v3489, %v3488
        %v3548 = vpack.c.b16 %v3491, %v3490
        %v3549 = vpack.c.b16 %v3493, %v3492
        %v3550 = vpack.c.b16 %v3495, %v3494
        %v3551 = vpack.c.b16 %v3497, %v3496
        %v3552 = vpack.c.b16 %v3499, %v3498
        %v3553 = vpack.c.b16 %v3501, %v3500
        %v3554 = vpack.c.b16 %v3503, %v3502
        %v3555 = vpack.c.b16 %v3505, %v3504
        %v3556 = vpack.c.b16 %v3507, %v3506
        %v3557 = vpack.c.b16 %v3509, %v3508
        %v3558 = vpack.c.b16 %v3511, %v3510
        %v3559 = vpack.c.b16 %v3513, %v3512
        %v3560 = vpack.c.b16 %v3515, %v3514
        %v3561 = vpack.c.b16 %v3517, %v3516
        %v3562 = vpack.c.b16 %v3519, %v3518
        %v3563 = vpack.c.b16 %v3521, %v3520
        %v3564 = vpack.c.b16 %v3523, %v3522
        %v3565 = vpack.c.b16 %v3525, %v3524
        %v3566 = vpack.c.b16 %v3527, %v3526
        %v3567 = vpack.c.b16 %v3529, %v3528
        %v3568 = vpack.c.b16 %v3531, %v3530
        %v3569 = vpack.c.b16 %v3533, %v3532
        %v3570 = vpack.c.b16 %v3535, %v3534
        %v3571 = vpack.c.b16 %v3537, %v3536
        %v3572 = vpack.c.b16 %v3539, %v3538
        %v3573 = vpack.c.b16 %v3541, %v3540
        %3606 = vmatprep.subr.bf16.mxu0 0
        %3607 = vmatpush1.bf16.msra.mxu0 %v3542
        %3608 = vmatprep.subr.bf16.mxu0 0
        %3609 = vmatpush1.bf16.msra.mxu0 %v3543
        %3610 = vmatprep.subr.bf16.mxu0 0
        %3611 = vmatpush1.bf16.msra.mxu0 %v3544
        %3612 = vmatprep.subr.bf16.mxu0 0
        %3613 = vmatpush1.bf16.msra.mxu0 %v3545
        %3614 = vmatprep.subr.bf16.mxu0 0
        %3615 = vmatpush1.bf16.msra.mxu0 %v3546
        %3616 = vmatprep.subr.bf16.mxu0 0
        %3617 = vmatpush1.bf16.msra.mxu0 %v3547
        %3618 = vmatprep.subr.bf16.mxu0 0
        %3619 = vmatpush1.bf16.msra.mxu0 %v3548
        %3620 = vmatprep.subr.bf16.mxu0 0
        %3621 = vmatpush1.bf16.msra.mxu0 %v3549
        %3622 = vmatprep.subr.bf16.mxu0 0
        %3623 = vmatpush1.bf16.msra.mxu0 %v3550
        %3624 = vmatprep.subr.bf16.mxu0 0
        %3625 = vmatpush1.bf16.msra.mxu0 %v3551
        %3626 = vmatprep.subr.bf16.mxu0 0
        %3627 = vmatpush1.bf16.msra.mxu0 %v3552
        %3628 = vmatprep.subr.bf16.mxu0 0
        %3629 = vmatpush1.bf16.msra.mxu0 %v3553
        %3630 = vmatprep.subr.bf16.mxu0 0
        %3631 = vmatpush1.bf16.msra.mxu0 %v3554
        %3632 = vmatprep.subr.bf16.mxu0 0
        %3633 = vmatpush1.bf16.msra.mxu0 %v3555
        %3634 = vmatprep.subr.bf16.mxu0 0
        %3635 = vmatpush1.bf16.msra.mxu0 %v3556
        %3636 = vmatprep.subr.bf16.mxu0 0
        %3637 = vmatpush1.bf16.msra.mxu0 %v3557
        %3638 = vmatprep.mubr.bf16.mxu0 %v3346
        %3639 = vmatmul.mubr.bf16.gmra.mrb[0].mxu0 %v3345
        %v3640 = vpop.f32.mrb[0].mxu0
        %v3641 = vadd.f32 %v3413, %v3640
        %v3642 = vpop.f32.mrb[0].mxu0
        %v3643 = vpop.f32.mrb[0].mxu0
        %v3644 = vpop.f32.mrb[0].mxu0
        %3645 = vdwg.mxu0
        %3646 = vmatprep.subr.bf16.mxu0 0
        %3647 = vmatpush1.bf16.msra.mxu0 %v3558
        %3648 = vmatprep.subr.bf16.mxu0 0
        %3649 = vmatpush1.bf16.msra.mxu0 %v3559
        %3650 = vmatprep.subr.bf16.mxu0 0
        %3651 = vmatpush1.bf16.msra.mxu0 %v3560
        %3652 = vmatprep.subr.bf16.mxu0 0
        %3653 = vmatpush1.bf16.msra.mxu0 %v3561
        %3654 = vmatprep.subr.bf16.mxu0 0
        %3655 = vmatpush1.bf16.msra.mxu0 %v3562
        %3656 = vmatprep.subr.bf16.mxu0 0
        %3657 = vmatpush1.bf16.msra.mxu0 %v3563
        %3658 = vmatprep.subr.bf16.mxu0 0
        %3659 = vmatpush1.bf16.msra.mxu0 %v3564
        %3660 = vmatprep.subr.bf16.mxu0 0
        %3661 = vmatpush1.bf16.msra.mxu0 %v3565
        %3662 = vmatprep.subr.bf16.mxu0 0
        %3663 = vmatpush1.bf16.msra.mxu0 %v3566
        %3664 = vmatprep.subr.bf16.mxu0 0
        %3665 = vmatpush1.bf16.msra.mxu0 %v3567
        %3666 = vmatprep.subr.bf16.mxu0 0
        %3667 = vmatpush1.bf16.msra.mxu0 %v3568
        %3668 = vmatprep.subr.bf16.mxu0 0
        %3669 = vmatpush1.bf16.msra.mxu0 %v3569
        %3670 = vmatprep.subr.bf16.mxu0 0
        %3671 = vmatpush1.bf16.msra.mxu0 %v3570
        %3672 = vmatprep.subr.bf16.mxu0 0
        %3673 = vmatpush1.bf16.msra.mxu0 %v3571
        %3674 = vmatprep.subr.bf16.mxu0 0
        %3675 = vmatpush1.bf16.msra.mxu0 %v3572
        %3676 = vmatprep.subr.bf16.mxu0 0
        %3677 = vmatpush1.bf16.msra.mxu0 %v3573
        %3678 = vmatprep.mubr.bf16.mxu0 %v3348
        %3679 = vmatmul.mubr.bf16.gmra.mrb[0].mxu0 %v3347
        %v3680 = vpop.f32.mrb[0].mxu0
        %v3681 = vadd.f32 %v3641, %v3680
        %v3682 = vpop.f32.mrb[0].mxu0
        %v3683 = vpop.f32.mrb[0].mxu0
        %v3684 = vpop.f32.mrb[0].mxu0
        %3685 = vdwg.mxu0
        %v3686 = vmax.f32 %v3681, 0.0
        %v3687 = vpack.c.bf16 %v3686, %v3686
        %v3688 = vld [vmem:[%s24] sm:$0xff]
        %v3689 = vld [vmem:[%s24 + $0x8] sm:$0xff]
        %v3690 = vld [vmem:[%s24 + $0x10] sm:$0xff]
        %v3691 = vld [vmem:[%s24 + $0x18] sm:$0xff]
        %v3692 = vld [vmem:[%s24 + $0x20] sm:$0xff]
        %v3693 = vld [vmem:[%s24 + $0x28] sm:$0xff]
        %v3694 = vld [vmem:[%s24 + $0x30] sm:$0xff]
        %v3695 = vld [vmem:[%s24 + $0x38] sm:$0xff]
        %v3696 = vld [vmem:[%s24 + $0x40] sm:$0xff]
        %v3697 = vld [vmem:[%s24 + $0x48] sm:$0xff]
        %v3698 = vld [vmem:[%s24 + $0x50] sm:$0xff]
        %v3699 = vld [vmem:[%s24 + $0x58] sm:$0xff]
        %v3700 = vld [vmem:[%s24 + $0x60] sm:$0xff]
        %v3701 = vld [vmem:[%s24 + $0x68] sm:$0xff]
        %v3702 = vld [vmem:[%s24 + $0x70] sm:$0xff]
        %v3703 = vld [vmem:[%s24 + $0x78] sm:$0xff]
        %v3704 = vld [vmem:[%s25] sm:$0xf]
        %v3721 = vunpack.c.l.b16 %v3688
        %v3722 = vunpack.c.h.b16 %v3688
        %v3723 = vunpack.c.l.b16 %v3689
        %v3724 = vunpack.c.h.b16 %v3689
        %v3725 = vunpack.c.l.b16 %v3690
        %v3726 = vunpack.c.h.b16 %v3690
        %v3727 = vunpack.c.l.b16 %v3691
        %v3728 = vunpack.c.h.b16 %v3691
        %v3729 = vunpack.c.l.b16 %v3692
        %v3730 = vunpack.c.h.b16 %v3692
        %v3731 = vunpack.c.l.b16 %v3693
        %v3732 = vunpack.c.h.b16 %v3693
        %v3733 = vunpack.c.l.b16 %v3694
        %v3734 = vunpack.c.h.b16 %v3694
        %v3735 = vunpack.c.l.b16 %v3695
        %v3736 = vunpack.c.h.b16 %v3695
        %v3737 = vunpack.c.l.b16 %v3696
        %v3738 = vunpack.c.h.b16 %v3696
        %v3739 = vunpack.c.l.b16 %v3697
        %v3740 = vunpack.c.h.b16 %v3697
        %v3741 = vunpack.c.l.b16 %v3698
        %v3742 = vunpack.c.h.b16 %v3698
        %v3743 = vunpack.c.l.b16 %v3699
        %v3744 = vunpack.c.h.b16 %v3699
        %v3745 = vunpack.c.l.b16 %v3700
        %v3746 = vunpack.c.h.b16 %v3700
        %v3747 = vunpack.c.l.b16 %v3701
        %v3748 = vunpack.c.h.b16 %v3701
        %v3749 = vunpack.c.l.b16 %v3702
        %v3750 = vunpack.c.h.b16 %v3702
        %v3751 = vunpack.c.l.b16 %v3703
        %v3752 = vunpack.c.h.b16 %v3703
        %v3753 = vpack.c.b16 %v3725, %v3721
        %v3754 = vpack.c.b16 %v3726, %v3722
        %v3755 = vpack.c.b16 %v3727, %v3723
        %v3756 = vpack.c.b16 %v3728, %v3724
        %v3757 = vpack.c.b16 %v3733, %v3729
        %v3758 = vpack.c.b16 %v3734, %v3730
        %v3759 = vpack.c.b16 %v3735, %v3731
        %v3760 = vpack.c.b16 %v3736, %v3732
        %v3761 = vpack.c.b16 %v3741, %v3737
        %v3762 = vpack.c.b16 %v3742, %v3738
        %v3763 = vpack.c.b16 %v3743, %v3739
        %v3764 = vpack.c.b16 %v3744, %v3740
        %v3765 = vpack.c.b16 %v3749, %v3745
        %v3766 = vpack.c.b16 %v3750, %v3746
        %v3767 = vpack.c.b16 %v3751, %v3747
        %v3768 = vpack.c.b16 %v3752, %v3748
        %v3786 = vlaneseq
        %v3787 = vshrl.u32 %v3786, 7
        %v3788 = vsub.s32 0, %v3787
        %v3789 = vrot.slane %v3704, %v3788
        %v3790 = vlaneseq
        %v3791 = vshrl.u32 %v3790, 7
        %v3792 = vsub.s32 1, %v3791
        %v3793 = vrot.slane %v3704, %v3792
        %v3794 = vlaneseq
        %v3795 = vshrl.u32 %v3794, 7
        %v3796 = vsub.s32 2, %v3795
        %v3797 = vrot.slane %v3704, %v3796
        %v3798 = vlaneseq
        %v3799 = vshrl.u32 %v3798, 7
        %v3800 = vsub.s32 3, %v3799
        %v3801 = vrot.slane %v3704, %v3800
        %v3807 = vsel %vm1120, %v3687, 0
        %3809 = vmatprep.subr.bf16.mxu0 %v3754
        %3810 = vmatpush1.bf16.msra.mxu0 %v3753
        %3811 = vmatprep.subr.bf16.mxu0 %v3758
        %3812 = vmatpush1.bf16.msra.mxu0 %v3757
        %3813 = vmatprep.subr.bf16.mxu0 %v3762
        %3814 = vmatpush1.bf16.msra.mxu0 %v3761
        %3815 = vmatprep.subr.bf16.mxu0 %v3766
        %3816 = vmatpush1.bf16.msra.mxu0 %v3765
        %3817 = vmatprep.subr.bf16.mxu0 0
        %3818 = vmatpush1.bf16.msra.mxu0 0
        %3819 = vmatprep.subr.bf16.mxu0 0
        %3820 = vmatpush1.bf16.msra.mxu0 0
        %3821 = vmatprep.subr.bf16.mxu0 0
        %3822 = vmatpush1.bf16.msra.mxu0 0
        %3823 = vmatprep.subr.bf16.mxu0 0
        %3824 = vmatpush1.bf16.msra.mxu0 0
        %3825 = vmatprep.subr.bf16.mxu0 0
        %3826 = vmatpush1.bf16.msra.mxu0 0
        %3827 = vmatprep.subr.bf16.mxu0 0
        %3828 = vmatpush1.bf16.msra.mxu0 0
        %3829 = vmatprep.subr.bf16.mxu0 0
        %3830 = vmatpush1.bf16.msra.mxu0 0
        %3831 = vmatprep.subr.bf16.mxu0 0
        %3832 = vmatpush1.bf16.msra.mxu0 0
        %3833 = vmatprep.subr.bf16.mxu0 0
        %3834 = vmatpush1.bf16.msra.mxu0 0
        %3835 = vmatprep.subr.bf16.mxu0 0
        %3836 = vmatpush1.bf16.msra.mxu0 0
        %3837 = vmatprep.subr.bf16.mxu0 0
        %3838 = vmatpush1.bf16.msra.mxu0 0
        %3839 = vmatprep.subr.bf16.mxu0 0
        %3840 = vmatpush1.bf16.msra.mxu0 0
        %3841 = vmatprep.mubr.bf16.mxu0 0
        %3842 = vmatmul.mubr.bf16.gmra.mrb[0].mxu0 %v3807
        %v3843 = vpop.f32.mrb[0].mxu0
        %v3844 = vadd.f32 %v3789, %v3843
        %v3845 = vpop.f32.mrb[0].mxu0
        %v3846 = vadd.f32 %v3793, %v3845
        %v3847 = vpop.f32.mrb[0].mxu0
        %v3848 = vpop.f32.mrb[0].mxu0
        %3849 = vdwg.mxu0
        %3850 = vmatprep.subr.bf16.mxu0 %v3756
        %3851 = vmatpush1.bf16.msra.mxu0 %v3755
        %3852 = vmatprep.subr.bf16.mxu0 %v3760
        %3853 = vmatpush1.bf16.msra.mxu0 %v3759
        %3854 = vmatprep.subr.bf16.mxu0 %v3764
        %3855 = vmatpush1.bf16.msra.mxu0 %v3763
        %3856 = vmatprep.subr.bf16.mxu0 %v3768
        %3857 = vmatpush1.bf16.msra.mxu0 %v3767
        %3858 = vmatprep.subr.bf16.mxu0 0
        %3859 = vmatpush1.bf16.msra.mxu0 0
        %3860 = vmatprep.subr.bf16.mxu0 0
        %3861 = vmatpush1.bf16.msra.mxu0 0
        %3862 = vmatprep.subr.bf16.mxu0 0
        %3863 = vmatpush1.bf16.msra.mxu0 0
        %3864 = vmatprep.subr.bf16.mxu0 0
        %3865 = vmatpush1.bf16.msra.mxu0 0
        %3866 = vmatprep.subr.bf16.mxu0 0
        %3867 = vmatpush1.bf16.msra.mxu0 0
        %3868 = vmatprep.subr.bf16.mxu0 0
        %3869 = vmatpush1.bf16.msra.mxu0 0
        %3870 = vmatprep.subr.bf16.mxu0 0
        %3871 = vmatpush1.bf16.msra.mxu0 0
        %3872 = vmatprep.subr.bf16.mxu0 0
        %3873 = vmatpush1.bf16.msra.mxu0 0
        %3874 = vmatprep.subr.bf16.mxu0 0
        %3875 = vmatpush1.bf16.msra.mxu0 0
        %3876 = vmatprep.subr.bf16.mxu0 0
        %3877 = vmatpush1.bf16.msra.mxu0 0
        %3878 = vmatprep.subr.bf16.mxu0 0
        %3879 = vmatpush1.bf16.msra.mxu0 0
        %3880 = vmatprep.subr.bf16.mxu0 0
        %3881 = vmatpush1.bf16.msra.mxu0 0
        %3882 = vmatprep.mubr.bf16.mxu0 0
        %3883 = vmatmul.mubr.bf16.gmra.mrb[0].mxu0 %v3807
        %v3884 = vpop.f32.mrb[0].mxu0
        %v3885 = vadd.f32 %v3797, %v3884
        %v3886 = vpop.f32.mrb[0].mxu0
        %v3887 = vadd.f32 %v3801, %v3886
        %v3888 = vpop.f32.mrb[0].mxu0
        %v3889 = vpop.f32.mrb[0].mxu0
        %3890 = vdwg.mxu0
        %v3891 = vmax.f32 %v3844, 0.0
        %v3892 = vmax.f32 %v3846, 0.0
        %v3893 = vmax.f32 %v3885, 0.0
        %v3894 = vmax.f32 %v3887, 0.0
        %v3895 = vpack.c.bf16 %v3891, %v3891
        %v3896 = vpack.c.bf16 %v3892, %v3892
        %v3897 = vpack.c.bf16 %v3893, %v3893
        %v3898 = vpack.c.bf16 %v3894, %v3894
        %v3899 = vld [vmem:[%s26] sm:$0xf]
        %v3900 = vld [vmem:[%s26 + $0x4] sm:$0xf]
        %v3901 = vld [vmem:[%s26 + $0x8] sm:$0xf]
        %v3902 = vld [vmem:[%s26 + $0xc] sm:$0xf]
        %v3903 = vld [vmem:[%s26 + $0x10] sm:$0xf]
        %v3904 = vld [vmem:[%s26 + $0x14] sm:$0xf]
        %v3905 = vld [vmem:[%s26 + $0x18] sm:$0xf]
        %v3906 = vld [vmem:[%s26 + $0x1c] sm:$0xf]
        %v3907 = vld [vmem:[%s26 + $0x20] sm:$0xf]
        %v3908 = vld [vmem:[%s26 + $0x24] sm:$0xf]
        %v3909 = vld [vmem:[%s26 + $0x28] sm:$0xf]
        %v3910 = vld [vmem:[%s26 + $0x2c] sm:$0xf]
        %v3911 = vld [vmem:[%s26 + $0x30] sm:$0xf]
        %v3912 = vld [vmem:[%s26 + $0x34] sm:$0xf]
        %v3913 = vld [vmem:[%s26 + $0x38] sm:$0xf]
        %v3914 = vld [vmem:[%s26 + $0x3c] sm:$0xf]
        %v3915 = vld [vmem:[%s26 + $0x40] sm:$0xf]
        %v3916 = vld [vmem:[%s26 + $0x44] sm:$0xf]
        %v3917 = vld [vmem:[%s26 + $0x48] sm:$0xf]
        %v3918 = vld [vmem:[%s26 + $0x4c] sm:$0xf]
        %v3919 = vld [vmem:[%s26 + $0x50] sm:$0xf]
        %v3920 = vld [vmem:[%s26 + $0x54] sm:$0xf]
        %v3921 = vld [vmem:[%s26 + $0x58] sm:$0xf]
        %v3922 = vld [vmem:[%s26 + $0x5c] sm:$0xf]
        %v3923 = vld [vmem:[%s26 + $0x60] sm:$0xf]
        %v3924 = vld [vmem:[%s26 + $0x64] sm:$0xf]
        %v3925 = vld [vmem:[%s26 + $0x68] sm:$0xf]
        %v3926 = vld [vmem:[%s26 + $0x6c] sm:$0xf]
        %v3927 = vld [vmem:[%s26 + $0x70] sm:$0xf]
        %v3928 = vld [vmem:[%s26 + $0x74] sm:$0xf]
        %v3929 = vld [vmem:[%s26 + $0x78] sm:$0xf]
        %v3930 = vld [vmem:[%s26 + $0x7c] sm:$0xf]
        %v3931 = vld [vmem:[%s26 + $0x80] sm:$0xf]
        %v3932 = vld [vmem:[%s26 + $0x84] sm:$0xf]
        %v3933 = vld [vmem:[%s26 + $0x88] sm:$0xf]
        %v3934 = vld [vmem:[%s26 + $0x8c] sm:$0xf]
        %v3935 = vld [vmem:[%s26 + $0x90] sm:$0xf]
        %v3936 = vld [vmem:[%s26 + $0x94] sm:$0xf]
        %v3937 = vld [vmem:[%s26 + $0x98] sm:$0xf]
        %v3938 = vld [vmem:[%s26 + $0x9c] sm:$0xf]
        %v3939 = vld [vmem:[%s26 + $0xa0] sm:$0xf]
        %v3940 = vld [vmem:[%s26 + $0xa4] sm:$0xf]
        %v3941 = vld [vmem:[%s26 + $0xa8] sm:$0xf]
        %v3942 = vld [vmem:[%s26 + $0xac] sm:$0xf]
        %v3943 = vld [vmem:[%s26 + $0xb0] sm:$0xf]
        %v3944 = vld [vmem:[%s26 + $0xb4] sm:$0xf]
        %v3945 = vld [vmem:[%s26 + $0xb8] sm:$0xf]
        %v3946 = vld [vmem:[%s26 + $0xbc] sm:$0xf]
        %v3947 = vld [vmem:[%s26 + $0xc0] sm:$0xf]
        %v3948 = vld [vmem:[%s26 + $0xc4] sm:$0xf]
        %v3949 = vld [vmem:[%s26 + $0xc8] sm:$0xf]
        %v3950 = vld [vmem:[%s26 + $0xcc] sm:$0xf]
        %v3951 = vld [vmem:[%s26 + $0xd0] sm:$0xf]
        %v3952 = vld [vmem:[%s26 + $0xd4] sm:$0xf]
        %v3953 = vld [vmem:[%s26 + $0xd8] sm:$0xf]
        %v3954 = vld [vmem:[%s26 + $0xdc] sm:$0xf]
        %v3955 = vld [vmem:[%s26 + $0xe0] sm:$0xf]
        %v3956 = vld [vmem:[%s26 + $0xe4] sm:$0xf]
        %v3957 = vld [vmem:[%s26 + $0xe8] sm:$0xf]
        %v3958 = vld [vmem:[%s26 + $0xec] sm:$0xf]
        %v3959 = vld [vmem:[%s26 + $0xf0] sm:$0xf]
        %v3960 = vld [vmem:[%s26 + $0xf4] sm:$0xf]
        %v3961 = vld [vmem:[%s26 + $0xf8] sm:$0xf]
        %v3962 = vld [vmem:[%s26 + $0xfc] sm:$0xf]
        %v3963 = vld [vmem:[%s27] sm:$0x1]
        %v4028 = vunpack.c.l.b16 %v3899
        %v4029 = vunpack.c.l.b16 %v3900
        %v4030 = vunpack.c.l.b16 %v3901
        %v4031 = vunpack.c.l.b16 %v3902
        %v4032 = vunpack.c.l.b16 %v3903
        %v4033 = vunpack.c.l.b16 %v3904
        %v4034 = vunpack.c.l.b16 %v3905
        %v4035 = vunpack.c.l.b16 %v3906
        %v4036 = vunpack.c.l.b16 %v3907
        %v4037 = vunpack.c.l.b16 %v3908
        %v4038 = vunpack.c.l.b16 %v3909
        %v4039 = vunpack.c.l.b16 %v3910
        %v4040 = vunpack.c.l.b16 %v3911
        %v4041 = vunpack.c.l.b16 %v3912
        %v4042 = vunpack.c.l.b16 %v3913
        %v4043 = vunpack.c.l.b16 %v3914
        %v4044 = vunpack.c.l.b16 %v3915
        %v4045 = vunpack.c.l.b16 %v3916
        %v4046 = vunpack.c.l.b16 %v3917
        %v4047 = vunpack.c.l.b16 %v3918
        %v4048 = vunpack.c.l.b16 %v3919
        %v4049 = vunpack.c.l.b16 %v3920
        %v4050 = vunpack.c.l.b16 %v3921
        %v4051 = vunpack.c.l.b16 %v3922
        %v4052 = vunpack.c.l.b16 %v3923
        %v4053 = vunpack.c.l.b16 %v3924
        %v4054 = vunpack.c.l.b16 %v3925
        %v4055 = vunpack.c.l.b16 %v3926
        %v4056 = vunpack.c.l.b16 %v3927
        %v4057 = vunpack.c.l.b16 %v3928
        %v4058 = vunpack.c.l.b16 %v3929
        %v4059 = vunpack.c.l.b16 %v3930
        %v4060 = vunpack.c.l.b16 %v3931
        %v4061 = vunpack.c.l.b16 %v3932
        %v4062 = vunpack.c.l.b16 %v3933
        %v4063 = vunpack.c.l.b16 %v3934
        %v4064 = vunpack.c.l.b16 %v3935
        %v4065 = vunpack.c.l.b16 %v3936
        %v4066 = vunpack.c.l.b16 %v3937
        %v4067 = vunpack.c.l.b16 %v3938
        %v4068 = vunpack.c.l.b16 %v3939
        %v4069 = vunpack.c.l.b16 %v3940
        %v4070 = vunpack.c.l.b16 %v3941
        %v4071 = vunpack.c.l.b16 %v3942
        %v4072 = vunpack.c.l.b16 %v3943
        %v4073 = vunpack.c.l.b16 %v3944
        %v4074 = vunpack.c.l.b16 %v3945
        %v4075 = vunpack.c.l.b16 %v3946
        %v4076 = vunpack.c.l.b16 %v3947
        %v4077 = vunpack.c.l.b16 %v3948
        %v4078 = vunpack.c.l.b16 %v3949
        %v4079 = vunpack.c.l.b16 %v3950
        %v4080 = vunpack.c.l.b16 %v3951
        %v4081 = vunpack.c.l.b16 %v3952
        %v4082 = vunpack.c.l.b16 %v3953
        %v4083 = vunpack.c.l.b16 %v3954
        %v4084 = vunpack.c.l.b16 %v3955
        %v4085 = vunpack.c.l.b16 %v3956
        %v4086 = vunpack.c.l.b16 %v3957
        %v4087 = vunpack.c.l.b16 %v3958
        %v4088 = vunpack.c.l.b16 %v3959
        %v4089 = vunpack.c.l.b16 %v3960
        %v4090 = vunpack.c.l.b16 %v3961
        %v4091 = vunpack.c.l.b16 %v3962
        %v4092 = vpack.c.b16 %v4029, %v4028
        %v4093 = vpack.c.b16 %v4031, %v4030
        %v4094 = vpack.c.b16 %v4033, %v4032
        %v4095 = vpack.c.b16 %v4035, %v4034
        %v4096 = vpack.c.b16 %v4037, %v4036
        %v4097 = vpack.c.b16 %v4039, %v4038
        %v4098 = vpack.c.b16 %v4041, %v4040
        %v4099 = vpack.c.b16 %v4043, %v4042
        %v4100 = vpack.c.b16 %v4045, %v4044
        %v4101 = vpack.c.b16 %v4047, %v4046
        %v4102 = vpack.c.b16 %v4049, %v4048
        %v4103 = vpack.c.b16 %v4051, %v4050
        %v4104 = vpack.c.b16 %v4053, %v4052
        %v4105 = vpack.c.b16 %v4055, %v4054
        %v4106 = vpack.c.b16 %v4057, %v4056
        %v4107 = vpack.c.b16 %v4059, %v4058
        %v4108 = vpack.c.b16 %v4061, %v4060
        %v4109 = vpack.c.b16 %v4063, %v4062
        %v4110 = vpack.c.b16 %v4065, %v4064
        %v4111 = vpack.c.b16 %v4067, %v4066
        %v4112 = vpack.c.b16 %v4069, %v4068
        %v4113 = vpack.c.b16 %v4071, %v4070
        %v4114 = vpack.c.b16 %v4073, %v4072
        %v4115 = vpack.c.b16 %v4075, %v4074
        %v4116 = vpack.c.b16 %v4077, %v4076
        %v4117 = vpack.c.b16 %v4079, %v4078
        %v4118 = vpack.c.b16 %v4081, %v4080
        %v4119 = vpack.c.b16 %v4083, %v4082
        %v4120 = vpack.c.b16 %v4085, %v4084
        %v4121 = vpack.c.b16 %v4087, %v4086
        %v4122 = vpack.c.b16 %v4089, %v4088
        %v4123 = vpack.c.b16 %v4091, %v4090
        %4156 = vmatprep.subr.bf16.mxu0 0
        %4157 = vmatpush1.bf16.msra.mxu0 %v4092
        %4158 = vmatprep.subr.bf16.mxu0 0
        %4159 = vmatpush1.bf16.msra.mxu0 %v4093
        %4160 = vmatprep.subr.bf16.mxu0 0
        %4161 = vmatpush1.bf16.msra.mxu0 %v4094
        %4162 = vmatprep.subr.bf16.mxu0 0
        %4163 = vmatpush1.bf16.msra.mxu0 %v4095
        %4164 = vmatprep.subr.bf16.mxu0 0
        %4165 = vmatpush1.bf16.msra.mxu0 %v4096
        %4166 = vmatprep.subr.bf16.mxu0 0
        %4167 = vmatpush1.bf16.msra.mxu0 %v4097
        %4168 = vmatprep.subr.bf16.mxu0 0
        %4169 = vmatpush1.bf16.msra.mxu0 %v4098
        %4170 = vmatprep.subr.bf16.mxu0 0
        %4171 = vmatpush1.bf16.msra.mxu0 %v4099
        %4172 = vmatprep.subr.bf16.mxu0 0
        %4173 = vmatpush1.bf16.msra.mxu0 %v4100
        %4174 = vmatprep.subr.bf16.mxu0 0
        %4175 = vmatpush1.bf16.msra.mxu0 %v4101
        %4176 = vmatprep.subr.bf16.mxu0 0
        %4177 = vmatpush1.bf16.msra.mxu0 %v4102
        %4178 = vmatprep.subr.bf16.mxu0 0
        %4179 = vmatpush1.bf16.msra.mxu0 %v4103
        %4180 = vmatprep.subr.bf16.mxu0 0
        %4181 = vmatpush1.bf16.msra.mxu0 %v4104
        %4182 = vmatprep.subr.bf16.mxu0 0
        %4183 = vmatpush1.bf16.msra.mxu0 %v4105
        %4184 = vmatprep.subr.bf16.mxu0 0
        %4185 = vmatpush1.bf16.msra.mxu0 %v4106
        %4186 = vmatprep.subr.bf16.mxu0 0
        %4187 = vmatpush1.bf16.msra.mxu0 %v4107
        %4188 = vmatprep.mubr.bf16.mxu0 %v3896
        %4189 = vmatmul.mubr.bf16.gmra.mrb[0].mxu0 %v3895
        %v4190 = vpop.f32.mrb[0].mxu0
        %v4191 = vadd.f32 %v3963, %v4190
        %v4192 = vpop.f32.mrb[0].mxu0
        %v4193 = vpop.f32.mrb[0].mxu0
        %v4194 = vpop.f32.mrb[0].mxu0
        %4195 = vdwg.mxu0
        %4196 = vmatprep.subr.bf16.mxu0 0
        %4197 = vmatpush1.bf16.msra.mxu0 %v4108
        %4198 = vmatprep.subr.bf16.mxu0 0
        %4199 = vmatpush1.bf16.msra.mxu0 %v4109
        %4200 = vmatprep.subr.bf16.mxu0 0
        %4201 = vmatpush1.bf16.msra.mxu0 %v4110
        %4202 = vmatprep.subr.bf16.mxu0 0
        %4203 = vmatpush1.bf16.msra.mxu0 %v4111
        %4204 = vmatprep.subr.bf16.mxu0 0
        %4205 = vmatpush1.bf16.msra.mxu0 %v4112
        %4206 = vmatprep.subr.bf16.mxu0 0
        %4207 = vmatpush1.bf16.msra.mxu0 %v4113
        %4208 = vmatprep.subr.bf16.mxu0 0
        %4209 = vmatpush1.bf16.msra.mxu0 %v4114
        %4210 = vmatprep.subr.bf16.mxu0 0
        %4211 = vmatpush1.bf16.msra.mxu0 %v4115
        %4212 = vmatprep.subr.bf16.mxu0 0
        %4213 = vmatpush1.bf16.msra.mxu0 %v4116
        %4214 = vmatprep.subr.bf16.mxu0 0
        %4215 = vmatpush1.bf16.msra.mxu0 %v4117
        %4216 = vmatprep.subr.bf16.mxu0 0
        %4217 = vmatpush1.bf16.msra.mxu0 %v4118
        %4218 = vmatprep.subr.bf16.mxu0 0
        %4219 = vmatpush1.bf16.msra.mxu0 %v4119
        %4220 = vmatprep.subr.bf16.mxu0 0
        %4221 = vmatpush1.bf16.msra.mxu0 %v4120
        %4222 = vmatprep.subr.bf16.mxu0 0
        %4223 = vmatpush1.bf16.msra.mxu0 %v4121
        %4224 = vmatprep.subr.bf16.mxu0 0
        %4225 = vmatpush1.bf16.msra.mxu0 %v4122
        %4226 = vmatprep.subr.bf16.mxu0 0
        %4227 = vmatpush1.bf16.msra.mxu0 %v4123
        %4228 = vmatprep.mubr.bf16.mxu0 %v3898
        %4229 = vmatmul.mubr.bf16.gmra.mrb[0].mxu0 %v3897
        %v4230 = vpop.f32.mrb[0].mxu0
        %v4231 = vadd.f32 %v4191, %v4230
        %v4232 = vpop.f32.mrb[0].mxu0
        %v4233 = vpop.f32.mrb[0].mxu0
        %v4234 = vpop.f32.mrb[0].mxu0
        %4235 = vdwg.mxu0
        %v4236 = vmax.f32 %v4231, 0.0
        %4237 = vst [vmem:[%s837] sm:$0x1] %v4236
        %s4238 = sand.u32 %s643, 1
        %s4239 = scalar_lea.sflag [#allocation4], %s4238
        %s4240 = sand.u32 %s643, 1
        %s4241 = scalar_lea.vmem [#allocation3], %s4240
        // Predicated region
        $region133: #{squeezenet_forward.5} parent=131 // pred_check
          %p4242 = pneg %p653
        $region134: #{squeezenet_forward.5} parent=131 // pred_check_branch
          %4244 = sbr.rel (%p4242) target = $region136
        $region135: #{squeezenet_forward.5} parent=131 // pred_region
          %s4246 = ssub.s32 16, 16
          %4247 = vsyncadd %s4239, %s4246
          %s4248 = smul.addr %s42, 16
          %s4249 = scalar_lea.hbm %s28, %s4248
          %s4251 = sshll.u32 %s4241, 4
          %s4252 = int_to_ptr.vmem [resolvable:$true] %s4251
          %4254 = dma.vmem_to_hbm [thread:$0]  %s4252, 16, %s4249, %s4239
        $region136: #{squeezenet_forward.5} parent=131 // pred_fallthru
          _
      $region132: #{squeezenet_forward.5} parent=5 // pred_fallthru
        _
      %p4255 = scmp.le.s32.totalorder 2, %s37
      // Predicated region
      $region137: #{squeezenet_forward.5} parent=5 // pred_check
        %p4256 = pneg %p4255
      $region138: #{squeezenet_forward.5} parent=5 // pred_check_branch
        %4258 = sbr.rel (%p4256) target = $region140
      $region139: #{squeezenet_forward.5} parent=5 // pred_region
        %s4259 = ssub.s32 %s37, 2
        // Predicated region
        $region141: #{squeezenet_forward.5} parent=139 // pred_check
          %p4260 = pneg %p659
        $region142: #{squeezenet_forward.5} parent=139 // pred_check_branch
          %4262 = sbr.rel (%p4260) target = $region144
        $region143: #{squeezenet_forward.5} parent=139 // pred_region
          %s4263 = sand.u32 %s644, 1
          %s4264 = scalar_lea.sflag [#allocation4], %s4263
          %s4265 = sand.u32 %s644, 1
          %s4266 = scalar_lea.vmem [#allocation3], %s4265
          %4267 = dma.done %s4264, 16
        $region144: #{squeezenet_forward.5} parent=139 // pred_fallthru
          _
      $region140: #{squeezenet_forward.5} parent=5 // pred_fallthru
        _
    $region6: #{squeezenet_forward.5} parent=1 // loop_footer
      %s41 = sadd.s32 1, %s37
    $region7: #{squeezenet_forward.5} parent=1 // loop_footer_branch
      %36 = sbr.rel target = $region3
    $region8: #{squeezenet_forward.5} parent=1 // loop_exit
      _
    %4268 = vsyncpa [#allocation4], 1
    %s4269 = scalar_lea.sflag [#allocation4], 1
    %4270 = vsyncpa %s4269, 1

</llo_original>
